<compile_context>
chip_gen: v7x
topology: tpu7x:2x2x1
jax: 0.10.0
libtpu: 0.0.40
codegen_flags: <defaults>
</compile_context>

<pallas_src>
import functools

import jax
import jax.numpy as jnp
import numpy as np
from jax import lax
from jax.experimental import pallas as pl
from jax.experimental.pallas import tpu as pltpu


# ------------------------------ fused kernel -------------------------------- #

def fused_enhance_kernel(xp_ref, w_in_ref, b_in_ref,
                         w_blk_ref, b_blk_ref, gamma_ref, beta_ref,
                         w_out_ref, b_out_ref,
                         o_ref, fea_ref, *, layers):
    """Entire EnhanceNetwork forward on a whole (small) image held in VMEM.

    xp_ref : (N, H+2, W+2, 3)  zero-padded input image
    w_*    : im2col weights (9*Cin, Cout); b_*/gamma/beta: (1, C)
    o_ref  : (N, H, W, 3) output
    fea_ref: (N, H+2, W+2, C) VMEM scratch holding the padded feature map
    """
    N, H, W, _ = o_ref.shape
    C = fea_ref.shape[-1]
    inv_n = 1.0 / float(N * H * W)

    def im2col(fp, cin):
        # fp: (N, H+2, W+2, cin) value -> (N*H*W, 9*cin), tap-major columns.
        cols = []
        for dy in range(3):
            for dx in range(3):
                cols.append(fp[:, dy:dy + H, dx:dx + W, :].reshape(N * H * W, cin))
        return jnp.concatenate(cols, axis=-1)

    # ---- in_conv: ReLU(Conv2d(3->C)); result -> interior of padded scratch --
    fea_ref[...] = jnp.zeros_like(fea_ref)          # zero the halo once
    xp = xp_ref[...]
    a0 = jnp.dot(im2col(xp, 3), w_in_ref[...],
                 preferred_element_type=jnp.float32) + b_in_ref[...]
    fea_ref[:, 1:1 + H, 1:1 + W, :] = jnp.maximum(a0, 0.0).reshape(N, H, W, C)

    # ---- hoist loop-invariant loads (weights / BN params) --------------------
    w_blk = w_blk_ref[...]
    b_blk = b_blk_ref[...]
    gamma = gamma_ref[...]
    beta = beta_ref[...]

    # ---- `layers` residual blocks with shared weights ------------------------
    def block_body(_, carry):
        fp = fea_ref[...]                                        # (N,H+2,W+2,C)
        acc = jnp.dot(im2col(fp, C), w_blk,
                      preferred_element_type=jnp.float32) + b_blk  # (NHW, C)
        # one-pass biased batch statistics per channel (eps = 1e-5)
        mean = jnp.sum(acc, axis=0, keepdims=True) * inv_n
        var = jnp.maximum(
            jnp.sum(acc * acc, axis=0, keepdims=True) * inv_n - mean * mean, 0.0)
        bn = (acc - mean) * lax.rsqrt(var + 1e-5) * gamma + beta
        act = jnp.maximum(bn, 0.0)
        res = fp[:, 1:1 + H, 1:1 + W, :].reshape(N * H * W, C)    # residual
        fea_ref[:, 1:1 + H, 1:1 + W, :] = (res + act).reshape(N, H, W, C)
        return carry

    lax.fori_loop(0, layers, block_body, 0)

    # ---- out_conv: Sigmoid(Conv2d(C->3)) + x, clamp to [1e-4, 1] -------------
    fp = fea_ref[...]
    a2 = jnp.dot(im2col(fp, C), w_out_ref[...],
                 preferred_element_type=jnp.float32) + b_out_ref[...]
    sig = jax.nn.sigmoid(a2).reshape(N, H, W, 3)
    x_in = xp_ref[:, 1:1 + H, 1:1 + W, :]
    o_ref[...] = jnp.clip(sig + x_in, 0.0001, 1.0)


# -------------------------------- wrapper ----------------------------------- #

def _full_spec(shape):
    # whole array as a single VMEM block (last two dims == full dims -> OK)
    return pl.BlockSpec(shape, lambda i: (0,) * len(shape))


def enhance_forward(x, params, layers):
    """x: (N, H, W, 3) float32 in NHWC."""
    N, H, W, _ = x.shape
    C = params["w_in"].shape[-1]

    xp = jnp.pad(x, ((0, 0), (1, 1), (1, 1), (0, 0)))   # single host-side pad

    args = (
        xp,
        params["w_in"].reshape(9 * 3, C), params["b_in"],
        params["w_blk"].reshape(9 * C, C), params["b_blk"],
        params["gamma"], params["beta"],
        params["w_out"].reshape(9 * C, 3), params["b_out"],
    )
    out_shape = (N, H, W, 3)

    return pl.pallas_call(
        functools.partial(fused_enhance_kernel, layers=layers),
        out_shape=jax.ShapeDtypeStruct(out_shape, jnp.float32),
        grid=(1,),
        in_specs=[_full_spec(a.shape) for a in args],
        out_specs=_full_spec(out_shape),
        scratch_shapes=[pltpu.VMEM((N, H + 2, W + 2, C), jnp.float32)],
    )(*args)


# --------------------------- pure-JAX reference ----------------------------- #

def _conv_ref(x, w9, b, H, W):
    xp = jnp.pad(x, ((0, 0), (1, 1), (1, 1), (0, 0)))
    N = x.shape[0]
    Cout = w9.shape[-1]
    acc = jnp.zeros((N, H, W, Cout), jnp.float32)
    for k in range(9):
        dy, dx = k // 3, k % 3
        acc = acc + jnp.einsum("nhwc,co->nhwo", xp[:, dy:dy + H, dx:dx + W, :], w9[k])
    return acc + b.reshape(1, 1, 1, Cout)


def enhance_ref(x, params, layers):
    N, H, W, _ = x.shape
    fea = jnp.maximum(_conv_ref(x, params["w_in"], params["b_in"], H, W), 0.0)
    for _ in range(layers):
        c = _conv_ref(fea, params["w_blk"], params["b_blk"], H, W)
        mean = jnp.mean(c, axis=(0, 1, 2), keepdims=True)
        var = jnp.mean((c - mean) ** 2, axis=(0, 1, 2), keepdims=True)
        bn = (c - mean) * lax.rsqrt(var + 1e-5) * params["gamma"].reshape(1, 1, 1, -1) \
             + params["beta"].reshape(1, 1, 1, -1)
        fea = fea + jnp.maximum(bn, 0.0)
    out = jax.nn.sigmoid(_conv_ref(fea, params["w_out"], params["b_out"], H, W))
    return jnp.clip(out + x, 0.0001, 1.0)


# --------------------------------- main -------------------------------------- #

if __name__ == "__main__":
    N, H, W = 2, 16, 16       # batch, spatial
    C = 8                     # channels
    LAYERS = 2

    key = jax.random.PRNGKey(0)
    k_x, k_wi, k_bi, k_wb, k_bb, k_wo, k_bo = jax.random.split(key, 7)

    x = jax.random.uniform(k_x, (N, H, W, 3), jnp.float32)

    def conv_w(k, cin, cout):
        # deterministic synthetic init; stored as (kh*kw, Cin, Cout)
        w = jax.random.normal(k, (3, 3, cin, cout), jnp.float32) * (1.0 / np.sqrt(9 * cin))
        return w.reshape(9, cin, cout)

    params = {
        "w_in":  conv_w(k_wi, 3, C),
        "b_in":  (jax.random.normal(k_bi, (C,), jnp.float32) * 0.01).reshape(1, C),
        "w_blk": conv_w(k_wb, C, C),
        "b_blk": (jax.random.normal(k_bb, (C,), jnp.float32) * 0.01).reshape(1, C),
        "gamma": jnp.ones((1, C), jnp.float32),   # BatchNorm2d default init
        "beta":  jnp.zeros((1, C), jnp.float32),
        "w_out": conv_w(k_wo, C, 3),
        "b_out": (jax.random.normal(k_bo, (3,), jnp.float32) * 0.01).reshape(1, 3),
    }

    out = enhance_forward(x, params, LAYERS)
    out = jax.block_until_ready(out)

    ref = jax.block_until_ready(enhance_ref(x, params, LAYERS))
    np.testing.assert_allclose(np.asarray(out), np.asarray(ref), rtol=1e-3, atol=1e-4)

    print("KERNEL_OK")
</pallas_src>

<mosaic_0001>
module attributes {stable_mosaic.version = 11 : i64} {
  func.func @fused_enhance_kernel(%arg0: i32, %arg1: memref<2x18x18x3xf32, #tpu.memory_space<vmem>>, %arg2: memref<27x8xf32, #tpu.memory_space<vmem>>, %arg3: memref<1x8xf32, #tpu.memory_space<vmem>>, %arg4: memref<72x8xf32, #tpu.memory_space<vmem>>, %arg5: memref<1x8xf32, #tpu.memory_space<vmem>>, %arg6: memref<1x8xf32, #tpu.memory_space<vmem>>, %arg7: memref<1x8xf32, #tpu.memory_space<vmem>>, %arg8: memref<72x3xf32, #tpu.memory_space<vmem>>, %arg9: memref<1x3xf32, #tpu.memory_space<vmem>>, %arg10: memref<2x16x16x3xf32, #tpu.memory_space<vmem>>, %arg11: memref<2x18x18x8xf32, #tpu.memory_space<vmem>>) attributes {dimension_semantics = [#tpu.dimension_semantics<arbitrary>], iteration_bounds = array<i64: 1>, scalar_prefetch = 0 : i64, scratch_operands = 1 : i64, tpu.core_type = #tpu.core_type<tc>, window_params = [{pipeline_mode = #tpu.pipeline_mode<synchronous>, transform_indices = @transform_0, window_bounds = array<i64: 2, 18, 18, 3>}, {pipeline_mode = #tpu.pipeline_mode<synchronous>, transform_indices = @transform_1, window_bounds = array<i64: 27, 8>}, {pipeline_mode = #tpu.pipeline_mode<synchronous>, transform_indices = @transform_2, window_bounds = array<i64: 1, 8>}, {pipeline_mode = #tpu.pipeline_mode<synchronous>, transform_indices = @transform_3, window_bounds = array<i64: 72, 8>}, {pipeline_mode = #tpu.pipeline_mode<synchronous>, transform_indices = @transform_4, window_bounds = array<i64: 1, 8>}, {pipeline_mode = #tpu.pipeline_mode<synchronous>, transform_indices = @transform_5, window_bounds = array<i64: 1, 8>}, {pipeline_mode = #tpu.pipeline_mode<synchronous>, transform_indices = @transform_6, window_bounds = array<i64: 1, 8>}, {pipeline_mode = #tpu.pipeline_mode<synchronous>, transform_indices = @transform_7, window_bounds = array<i64: 72, 3>}, {pipeline_mode = #tpu.pipeline_mode<synchronous>, transform_indices = @transform_8, window_bounds = array<i64: 1, 3>}, {pipeline_mode = #tpu.pipeline_mode<synchronous>, transform_indices = @transform_9, window_bounds = array<i64: 2, 16, 16, 3>}]} {
    %cst = arith.constant 0.000000e+00 : f32
    %0 = vector.broadcast %cst : f32 to vector<2x18x18x8xf32>
    %c0 = arith.constant 0 : index
    %c0_0 = arith.constant 0 : index
    %c0_1 = arith.constant 0 : index
    %c0_2 = arith.constant 0 : index
    %1 = vector.load %arg11[%c0, %c0_0, %c0_1, %c0_2] : memref<2x18x18x8xf32, #tpu.memory_space<vmem>>, vector<2x18x18x8xf32>
    tpu.vector_store %arg11[%c0, %c0_0, %c0_1, %c0_2], %0 {strides = array<i32>} : memref<2x18x18x8xf32, #tpu.memory_space<vmem>>, vector<2x18x18x8xf32>,
    %c0_3 = arith.constant 0 : index
    %c0_4 = arith.constant 0 : index
    %c0_5 = arith.constant 0 : index
    %c0_6 = arith.constant 0 : index
    %2 = vector.load %arg1[%c0_3, %c0_4, %c0_5, %c0_6] : memref<2x18x18x3xf32, #tpu.memory_space<vmem>>, vector<2x18x18x3xf32>
    %3 = vector.extract_strided_slice %2 {offsets = [0, 0, 0, 0], sizes = [2, 16, 16, 3], strides = [1, 1, 1, 1]} : vector<2x18x18x3xf32> to vector<2x16x16x3xf32>
    %4 = vector.shape_cast %3 : vector<2x16x16x3xf32> to vector<512x3xf32>
    %5 = vector.extract_strided_slice %2 {offsets = [0, 0, 1, 0], sizes = [2, 16, 16, 3], strides = [1, 1, 1, 1]} : vector<2x18x18x3xf32> to vector<2x16x16x3xf32>
    %6 = vector.shape_cast %5 : vector<2x16x16x3xf32> to vector<512x3xf32>
    %7 = vector.extract_strided_slice %2 {offsets = [0, 0, 2, 0], sizes = [2, 16, 16, 3], strides = [1, 1, 1, 1]} : vector<2x18x18x3xf32> to vector<2x16x16x3xf32>
    %8 = vector.shape_cast %7 : vector<2x16x16x3xf32> to vector<512x3xf32>
    %9 = vector.extract_strided_slice %2 {offsets = [0, 1, 0, 0], sizes = [2, 16, 16, 3], strides = [1, 1, 1, 1]} : vector<2x18x18x3xf32> to vector<2x16x16x3xf32>
    %10 = vector.shape_cast %9 : vector<2x16x16x3xf32> to vector<512x3xf32>
    %11 = vector.extract_strided_slice %2 {offsets = [0, 1, 1, 0], sizes = [2, 16, 16, 3], strides = [1, 1, 1, 1]} : vector<2x18x18x3xf32> to vector<2x16x16x3xf32>
    %12 = vector.shape_cast %11 : vector<2x16x16x3xf32> to vector<512x3xf32>
    %13 = vector.extract_strided_slice %2 {offsets = [0, 1, 2, 0], sizes = [2, 16, 16, 3], strides = [1, 1, 1, 1]} : vector<2x18x18x3xf32> to vector<2x16x16x3xf32>
    %14 = vector.shape_cast %13 : vector<2x16x16x3xf32> to vector<512x3xf32>
    %15 = vector.extract_strided_slice %2 {offsets = [0, 2, 0, 0], sizes = [2, 16, 16, 3], strides = [1, 1, 1, 1]} : vector<2x18x18x3xf32> to vector<2x16x16x3xf32>
    %16 = vector.shape_cast %15 : vector<2x16x16x3xf32> to vector<512x3xf32>
    %17 = vector.extract_strided_slice %2 {offsets = [0, 2, 1, 0], sizes = [2, 16, 16, 3], strides = [1, 1, 1, 1]} : vector<2x18x18x3xf32> to vector<2x16x16x3xf32>
    %18 = vector.shape_cast %17 : vector<2x16x16x3xf32> to vector<512x3xf32>
    %19 = vector.extract_strided_slice %2 {offsets = [0, 2, 2, 0], sizes = [2, 16, 16, 3], strides = [1, 1, 1, 1]} : vector<2x18x18x3xf32> to vector<2x16x16x3xf32>
    %20 = vector.shape_cast %19 : vector<2x16x16x3xf32> to vector<512x3xf32>
    %21 = tpu.concatenate %4, %6, %8, %10, %12, %14, %16, %18, %20 in 1 : vector<512x3xf32>, vector<512x3xf32>, vector<512x3xf32>, vector<512x3xf32>, vector<512x3xf32>, vector<512x3xf32>, vector<512x3xf32>, vector<512x3xf32>, vector<512x3xf32> -> vector<512x27xf32>
    %c0_7 = arith.constant 0 : index
    %c0_8 = arith.constant 0 : index
    %22 = vector.load %arg2[%c0_7, %c0_8] : memref<27x8xf32, #tpu.memory_space<vmem>>, vector<27x8xf32>
    %cst_9 = arith.constant dense<0.000000e+00> : vector<512x8xf32>
    %23 = tpu.matmul %21, %22, %cst_9 {dimension_numbers = #tpu.dot_dimension_numbers<[1], [0], [0], [1], [0, 0, 1, 1], [], []>} : vector<512x27xf32>, vector<27x8xf32>, vector<512x8xf32> -> vector<512x8xf32>
    %c0_10 = arith.constant 0 : index
    %c0_11 = arith.constant 0 : index
    %24 = vector.load %arg3[%c0_10, %c0_11] : memref<1x8xf32, #tpu.memory_space<vmem>>, vector<1x8xf32>
    %25 = vector.broadcast %24 : vector<1x8xf32> to vector<512x8xf32>
    %26 = arith.addf %23, %25 : vector<512x8xf32>
    %cst_12 = arith.constant 0.000000e+00 : f32
    %27 = vector.broadcast %cst_12 : f32 to vector<512x8xf32>
    %28 = arith.maximumf %26, %27 : vector<512x8xf32>
    %29 = vector.shape_cast %28 : vector<512x8xf32> to vector<2x16x16x8xf32>
    %c0_13 = arith.constant 0 : index
    %c1 = arith.constant 1 : index
    %c1_14 = arith.constant 1 : index
    %c0_15 = arith.constant 0 : index
    %30 = vector.load %arg11[%c0_13, %c1, %c1_14, %c0_15] : memref<2x18x18x8xf32, #tpu.memory_space<vmem>>, vector<2x16x16x8xf32>
    tpu.vector_store %arg11[%c0_13, %c1, %c1_14, %c0_15], %29 {strides = array<i32>} : memref<2x18x18x8xf32, #tpu.memory_space<vmem>>, vector<2x16x16x8xf32>,
    %c0_16 = arith.constant 0 : index
    %c0_17 = arith.constant 0 : index
    %31 = vector.load %arg4[%c0_16, %c0_17] : memref<72x8xf32, #tpu.memory_space<vmem>>, vector<72x8xf32>
    %c0_18 = arith.constant 0 : index
    %c0_19 = arith.constant 0 : index
    %32 = vector.load %arg5[%c0_18, %c0_19] : memref<1x8xf32, #tpu.memory_space<vmem>>, vector<1x8xf32>
    %c0_20 = arith.constant 0 : index
    %c0_21 = arith.constant 0 : index
    %33 = vector.load %arg6[%c0_20, %c0_21] : memref<1x8xf32, #tpu.memory_space<vmem>>, vector<1x8xf32>
    %c0_22 = arith.constant 0 : index
    %c0_23 = arith.constant 0 : index
    %34 = vector.load %arg7[%c0_22, %c0_23] : memref<1x8xf32, #tpu.memory_space<vmem>>, vector<1x8xf32>
    %c0_i32 = arith.constant 0 : i32
    %c2_i32 = arith.constant 2 : i32
    %35 = arith.addi %c0_i32, %c2_i32 : i32
    %c1_i32 = arith.constant 1 : i32
    scf.for %arg12 = %c0_i32 to %35 step %c1_i32  : i32 {
      %c0_44 = arith.constant 0 : index
      %c0_45 = arith.constant 0 : index
      %c0_46 = arith.constant 0 : index
      %c0_47 = arith.constant 0 : index
      %74 = vector.load %arg11[%c0_44, %c0_45, %c0_46, %c0_47] : memref<2x18x18x8xf32, #tpu.memory_space<vmem>>, vector<2x18x18x8xf32>
      %75 = vector.extract_strided_slice %74 {offsets = [0, 0, 0, 0], sizes = [2, 16, 16, 8], strides = [1, 1, 1, 1]} : vector<2x18x18x8xf32> to vector<2x16x16x8xf32>
      %76 = vector.shape_cast %75 : vector<2x16x16x8xf32> to vector<512x8xf32>
      %77 = vector.extract_strided_slice %74 {offsets = [0, 0, 1, 0], sizes = [2, 16, 16, 8], strides = [1, 1, 1, 1]} : vector<2x18x18x8xf32> to vector<2x16x16x8xf32>
      %78 = vector.shape_cast %77 : vector<2x16x16x8xf32> to vector<512x8xf32>
      %79 = vector.extract_strided_slice %74 {offsets = [0, 0, 2, 0], sizes = [2, 16, 16, 8], strides = [1, 1, 1, 1]} : vector<2x18x18x8xf32> to vector<2x16x16x8xf32>
      %80 = vector.shape_cast %79 : vector<2x16x16x8xf32> to vector<512x8xf32>
      %81 = vector.extract_strided_slice %74 {offsets = [0, 1, 0, 0], sizes = [2, 16, 16, 8], strides = [1, 1, 1, 1]} : vector<2x18x18x8xf32> to vector<2x16x16x8xf32>
      %82 = vector.shape_cast %81 : vector<2x16x16x8xf32> to vector<512x8xf32>
      %83 = vector.extract_strided_slice %74 {offsets = [0, 1, 1, 0], sizes = [2, 16, 16, 8], strides = [1, 1, 1, 1]} : vector<2x18x18x8xf32> to vector<2x16x16x8xf32>
      %84 = vector.shape_cast %83 : vector<2x16x16x8xf32> to vector<512x8xf32>
      %85 = vector.extract_strided_slice %74 {offsets = [0, 1, 2, 0], sizes = [2, 16, 16, 8], strides = [1, 1, 1, 1]} : vector<2x18x18x8xf32> to vector<2x16x16x8xf32>
      %86 = vector.shape_cast %85 : vector<2x16x16x8xf32> to vector<512x8xf32>
      %87 = vector.extract_strided_slice %74 {offsets = [0, 2, 0, 0], sizes = [2, 16, 16, 8], strides = [1, 1, 1, 1]} : vector<2x18x18x8xf32> to vector<2x16x16x8xf32>
      %88 = vector.shape_cast %87 : vector<2x16x16x8xf32> to vector<512x8xf32>
      %89 = vector.extract_strided_slice %74 {offsets = [0, 2, 1, 0], sizes = [2, 16, 16, 8], strides = [1, 1, 1, 1]} : vector<2x18x18x8xf32> to vector<2x16x16x8xf32>
      %90 = vector.shape_cast %89 : vector<2x16x16x8xf32> to vector<512x8xf32>
      %91 = vector.extract_strided_slice %74 {offsets = [0, 2, 2, 0], sizes = [2, 16, 16, 8], strides = [1, 1, 1, 1]} : vector<2x18x18x8xf32> to vector<2x16x16x8xf32>
      %92 = vector.shape_cast %91 : vector<2x16x16x8xf32> to vector<512x8xf32>
      %93 = tpu.concatenate %76, %78, %80, %82, %84, %86, %88, %90, %92 in 1 : vector<512x8xf32>, vector<512x8xf32>, vector<512x8xf32>, vector<512x8xf32>, vector<512x8xf32>, vector<512x8xf32>, vector<512x8xf32>, vector<512x8xf32>, vector<512x8xf32> -> vector<512x72xf32>
      %cst_48 = arith.constant dense<0.000000e+00> : vector<512x8xf32>
      %94 = tpu.matmul %93, %31, %cst_48 {dimension_numbers = #tpu.dot_dimension_numbers<[1], [0], [0], [1], [0, 0, 1, 1], [], []>} : vector<512x72xf32>, vector<72x8xf32>, vector<512x8xf32> -> vector<512x8xf32>
      %95 = vector.broadcast %32 : vector<1x8xf32> to vector<512x8xf32>
      %96 = arith.addf %94, %95 : vector<512x8xf32>
      %cst_49 = arith.constant dense<0.000000e+00> : vector<8xf32>
      %97 = vector.multi_reduction <add>, %96, %cst_49 [0] : vector<512x8xf32> to vector<8xf32>
      %98 = vector.shape_cast %97 : vector<8xf32> to vector<1x8xf32>
      %cst_50 = arith.constant 0.001953125 : f32
      %99 = vector.broadcast %cst_50 : f32 to vector<1x8xf32>
      %100 = arith.mulf %98, %99 : vector<1x8xf32>
      %101 = arith.mulf %96, %96 : vector<512x8xf32>
      %cst_51 = arith.constant dense<0.000000e+00> : vector<8xf32>
      %102 = vector.multi_reduction <add>, %101, %cst_51 [0] : vector<512x8xf32> to vector<8xf32>
      %103 = vector.shape_cast %102 : vector<8xf32> to vector<1x8xf32>
      %cst_52 = arith.constant 0.001953125 : f32
      %104 = vector.broadcast %cst_52 : f32 to vector<1x8xf32>
      %105 = arith.mulf %103, %104 : vector<1x8xf32>
      %106 = arith.mulf %100, %100 : vector<1x8xf32>
      %107 = arith.subf %105, %106 : vector<1x8xf32>
      %cst_53 = arith.constant 0.000000e+00 : f32
      %108 = vector.broadcast %cst_53 : f32 to vector<1x8xf32>
      %109 = arith.maximumf %107, %108 : vector<1x8xf32>
      %110 = vector.broadcast %100 : vector<1x8xf32> to vector<512x8xf32>
      %111 = arith.subf %96, %110 : vector<512x8xf32>
      %cst_54 = arith.constant 9.99999974E-6 : f32
      %112 = vector.broadcast %cst_54 : f32 to vector<1x8xf32>
      %113 = arith.addf %109, %112 : vector<1x8xf32>
      %114 = math.rsqrt %113 : vector<1x8xf32>
      %115 = vector.broadcast %114 : vector<1x8xf32> to vector<512x8xf32>
      %116 = arith.mulf %111, %115 : vector<512x8xf32>
      %117 = vector.broadcast %33 : vector<1x8xf32> to vector<512x8xf32>
      %118 = arith.mulf %116, %117 : vector<512x8xf32>
      %119 = vector.broadcast %34 : vector<1x8xf32> to vector<512x8xf32>
      %120 = arith.addf %118, %119 : vector<512x8xf32>
      %cst_55 = arith.constant 0.000000e+00 : f32
      %121 = vector.broadcast %cst_55 : f32 to vector<512x8xf32>
      %122 = arith.maximumf %120, %121 : vector<512x8xf32>
      %123 = vector.extract_strided_slice %74 {offsets = [0, 1, 1, 0], sizes = [2, 16, 16, 8], strides = [1, 1, 1, 1]} : vector<2x18x18x8xf32> to vector<2x16x16x8xf32>
      %124 = vector.shape_cast %123 : vector<2x16x16x8xf32> to vector<512x8xf32>
      %125 = arith.addf %124, %122 : vector<512x8xf32>
      %126 = vector.shape_cast %125 : vector<512x8xf32> to vector<2x16x16x8xf32>
      %c0_56 = arith.constant 0 : index
      %c1_57 = arith.constant 1 : index
      %c1_58 = arith.constant 1 : index
      %c0_59 = arith.constant 0 : index
      %127 = vector.load %arg11[%c0_56, %c1_57, %c1_58, %c0_59] : memref<2x18x18x8xf32, #tpu.memory_space<vmem>>, vector<2x16x16x8xf32>
      tpu.vector_store %arg11[%c0_56, %c1_57, %c1_58, %c0_59], %126 {strides = array<i32>} : memref<2x18x18x8xf32, #tpu.memory_space<vmem>>, vector<2x16x16x8xf32>,
    }
    %c0_24 = arith.constant 0 : index
    %c0_25 = arith.constant 0 : index
    %c0_26 = arith.constant 0 : index
    %c0_27 = arith.constant 0 : index
    %36 = vector.load %arg11[%c0_24, %c0_25, %c0_26, %c0_27] : memref<2x18x18x8xf32, #tpu.memory_space<vmem>>, vector<2x18x18x8xf32>
    %37 = vector.extract_strided_slice %36 {offsets = [0, 0, 0, 0], sizes = [2, 16, 16, 8], strides = [1, 1, 1, 1]} : vector<2x18x18x8xf32> to vector<2x16x16x8xf32>
    %38 = vector.shape_cast %37 : vector<2x16x16x8xf32> to vector<512x8xf32>
    %39 = vector.extract_strided_slice %36 {offsets = [0, 0, 1, 0], sizes = [2, 16, 16, 8], strides = [1, 1, 1, 1]} : vector<2x18x18x8xf32> to vector<2x16x16x8xf32>
    %40 = vector.shape_cast %39 : vector<2x16x16x8xf32> to vector<512x8xf32>
    %41 = vector.extract_strided_slice %36 {offsets = [0, 0, 2, 0], sizes = [2, 16, 16, 8], strides = [1, 1, 1, 1]} : vector<2x18x18x8xf32> to vector<2x16x16x8xf32>
    %42 = vector.shape_cast %41 : vector<2x16x16x8xf32> to vector<512x8xf32>
    %43 = vector.extract_strided_slice %36 {offsets = [0, 1, 0, 0], sizes = [2, 16, 16, 8], strides = [1, 1, 1, 1]} : vector<2x18x18x8xf32> to vector<2x16x16x8xf32>
    %44 = vector.shape_cast %43 : vector<2x16x16x8xf32> to vector<512x8xf32>
    %45 = vector.extract_strided_slice %36 {offsets = [0, 1, 1, 0], sizes = [2, 16, 16, 8], strides = [1, 1, 1, 1]} : vector<2x18x18x8xf32> to vector<2x16x16x8xf32>
    %46 = vector.shape_cast %45 : vector<2x16x16x8xf32> to vector<512x8xf32>
    %47 = vector.extract_strided_slice %36 {offsets = [0, 1, 2, 0], sizes = [2, 16, 16, 8], strides = [1, 1, 1, 1]} : vector<2x18x18x8xf32> to vector<2x16x16x8xf32>
    %48 = vector.shape_cast %47 : vector<2x16x16x8xf32> to vector<512x8xf32>
    %49 = vector.extract_strided_slice %36 {offsets = [0, 2, 0, 0], sizes = [2, 16, 16, 8], strides = [1, 1, 1, 1]} : vector<2x18x18x8xf32> to vector<2x16x16x8xf32>
    %50 = vector.shape_cast %49 : vector<2x16x16x8xf32> to vector<512x8xf32>
    %51 = vector.extract_strided_slice %36 {offsets = [0, 2, 1, 0], sizes = [2, 16, 16, 8], strides = [1, 1, 1, 1]} : vector<2x18x18x8xf32> to vector<2x16x16x8xf32>
    %52 = vector.shape_cast %51 : vector<2x16x16x8xf32> to vector<512x8xf32>
    %53 = vector.extract_strided_slice %36 {offsets = [0, 2, 2, 0], sizes = [2, 16, 16, 8], strides = [1, 1, 1, 1]} : vector<2x18x18x8xf32> to vector<2x16x16x8xf32>
    %54 = vector.shape_cast %53 : vector<2x16x16x8xf32> to vector<512x8xf32>
    %55 = tpu.concatenate %38, %40, %42, %44, %46, %48, %50, %52, %54 in 1 : vector<512x8xf32>, vector<512x8xf32>, vector<512x8xf32>, vector<512x8xf32>, vector<512x8xf32>, vector<512x8xf32>, vector<512x8xf32>, vector<512x8xf32>, vector<512x8xf32> -> vector<512x72xf32>
    %c0_28 = arith.constant 0 : index
    %c0_29 = arith.constant 0 : index
    %56 = vector.load %arg8[%c0_28, %c0_29] : memref<72x3xf32, #tpu.memory_space<vmem>>, vector<72x3xf32>
    %cst_30 = arith.constant dense<0.000000e+00> : vector<512x3xf32>
    %57 = tpu.matmul %55, %56, %cst_30 {dimension_numbers = #tpu.dot_dimension_numbers<[1], [0], [0], [1], [0, 0, 1, 1], [], []>} : vector<512x72xf32>, vector<72x3xf32>, vector<512x3xf32> -> vector<512x3xf32>
    %c0_31 = arith.constant 0 : index
    %c0_32 = arith.constant 0 : index
    %58 = vector.load %arg9[%c0_31, %c0_32] : memref<1x3xf32, #tpu.memory_space<vmem>>, vector<1x3xf32>
    %59 = vector.broadcast %58 : vector<1x3xf32> to vector<512x3xf32>
    %60 = arith.addf %57, %59 : vector<512x3xf32>
    %61 = arith.negf %60 : vector<512x3xf32>
    %62 = math.exp %61 : vector<512x3xf32>
    %cst_33 = arith.constant 1.000000e+00 : f32
    %63 = vector.broadcast %cst_33 : f32 to vector<512x3xf32>
    %64 = arith.addf %63, %62 : vector<512x3xf32>
    %65 = arith.divf %63, %64 : vector<512x3xf32>
    %66 = vector.shape_cast %65 : vector<512x3xf32> to vector<2x16x16x3xf32>
    %c0_34 = arith.constant 0 : index
    %c1_35 = arith.constant 1 : index
    %c1_36 = arith.constant 1 : index
    %c0_37 = arith.constant 0 : index
    %67 = vector.load %arg1[%c0_34, %c1_35, %c1_36, %c0_37] : memref<2x18x18x3xf32, #tpu.memory_space<vmem>>, vector<2x16x16x3xf32>
    %68 = arith.addf %66, %67 : vector<2x16x16x3xf32>
    %cst_38 = arith.constant 9.99999974E-5 : f32
    %cst_39 = arith.constant 1.000000e+00 : f32
    %69 = vector.broadcast %cst_38 : f32 to vector<2x16x16x3xf32>
    %70 = arith.maximumf %69, %68 : vector<2x16x16x3xf32>
    %71 = vector.broadcast %cst_39 : f32 to vector<2x16x16x3xf32>
    %72 = arith.minimumf %71, %70 : vector<2x16x16x3xf32>
    %c0_40 = arith.constant 0 : index
    %c0_41 = arith.constant 0 : index
    %c0_42 = arith.constant 0 : index
    %c0_43 = arith.constant 0 : index
    %73 = vector.load %arg10[%c0_40, %c0_41, %c0_42, %c0_43] : memref<2x16x16x3xf32, #tpu.memory_space<vmem>>, vector<2x16x16x3xf32>
    tpu.vector_store %arg10[%c0_40, %c0_41, %c0_42, %c0_43], %72 {strides = array<i32>} : memref<2x16x16x3xf32, #tpu.memory_space<vmem>>, vector<2x16x16x3xf32>,
    return
  }
  func.func @transform_0(%arg0: i32) -> (i32, i32, i32, i32) {
    %c0_i32 = arith.constant 0 : i32
    %c0_i32_0 = arith.constant 0 : i32
    %c0_i32_1 = arith.constant 0 : i32
    %c0_i32_2 = arith.constant 0 : i32
    %c0_i32_3 = arith.constant 0 : i32
    return %c0_i32, %c0_i32_0, %c0_i32_1, %c0_i32_2 : i32, i32, i32, i32
  }
  func.func @transform_1(%arg0: i32) -> (i32, i32) {
    %c0_i32 = arith.constant 0 : i32
    %c0_i32_0 = arith.constant 0 : i32
    %c0_i32_1 = arith.constant 0 : i32
    return %c0_i32, %c0_i32_0 : i32, i32
  }
  func.func @transform_2(%arg0: i32) -> (i32, i32) {
    %c0_i32 = arith.constant 0 : i32
    %c0_i32_0 = arith.constant 0 : i32
    %c0_i32_1 = arith.constant 0 : i32
    return %c0_i32, %c0_i32_0 : i32, i32
  }
  func.func @transform_3(%arg0: i32) -> (i32, i32) {
    %c0_i32 = arith.constant 0 : i32
    %c0_i32_0 = arith.constant 0 : i32
    %c0_i32_1 = arith.constant 0 : i32
    return %c0_i32, %c0_i32_0 : i32, i32
  }
  func.func @transform_4(%arg0: i32) -> (i32, i32) {
    %c0_i32 = arith.constant 0 : i32
    %c0_i32_0 = arith.constant 0 : i32
    %c0_i32_1 = arith.constant 0 : i32
    return %c0_i32, %c0_i32_0 : i32, i32
  }
  func.func @transform_5(%arg0: i32) -> (i32, i32) {
    %c0_i32 = arith.constant 0 : i32
    %c0_i32_0 = arith.constant 0 : i32
    %c0_i32_1 = arith.constant 0 : i32
    return %c0_i32, %c0_i32_0 : i32, i32
  }
  func.func @transform_6(%arg0: i32) -> (i32, i32) {
    %c0_i32 = arith.constant 0 : i32
    %c0_i32_0 = arith.constant 0 : i32
    %c0_i32_1 = arith.constant 0 : i32
    return %c0_i32, %c0_i32_0 : i32, i32
  }
  func.func @transform_7(%arg0: i32) -> (i32, i32) {
    %c0_i32 = arith.constant 0 : i32
    %c0_i32_0 = arith.constant 0 : i32
    %c0_i32_1 = arith.constant 0 : i32
    return %c0_i32, %c0_i32_0 : i32, i32
  }
  func.func @transform_8(%arg0: i32) -> (i32, i32) {
    %c0_i32 = arith.constant 0 : i32
    %c0_i32_0 = arith.constant 0 : i32
    %c0_i32_1 = arith.constant 0 : i32
    return %c0_i32, %c0_i32_0 : i32, i32
  }
  func.func @transform_9(%arg0: i32) -> (i32, i32, i32, i32) {
    %c0_i32 = arith.constant 0 : i32
    %c0_i32_0 = arith.constant 0 : i32
    %c0_i32_1 = arith.constant 0 : i32
    %c0_i32_2 = arith.constant 0 : i32
    %c0_i32_3 = arith.constant 0 : i32
    return %c0_i32, %c0_i32_0, %c0_i32_1, %c0_i32_2 : i32, i32, i32, i32
  }
}

</mosaic_0001>

<llo_original>
// kernel: tpu_custom_call.1
$region0: #{tpu_custom_call.1}
  #allocation0 [shape = 'u32[]', space=smem, size = 0x4, offset = 0x4, fixed_abs, tag = 'smem constant byte address 0x4 - core index']
  #allocation1 [shape = 'u32[144,128]{1,0:T(1,128)}', space=vmem, size = 0x12000, scoped, tag = 'internal scratch']
  #allocation2 [shape = 'f32[2,18,18,8]{3,2,1,0:T(8,128)}', space=vmem, size = 0x6c000, scoped, tag = 'scratch operand']
  %s0 = inlined_call_operand.vmem [shape: f32[2,18,18,3], index: 0, kind: input, shape index: {}]
  %s1 = inlined_call_operand.vmem [shape: f32[27,8], index: 1, kind: input, shape index: {}]
  %s2 = inlined_call_operand.vmem [shape: f32[1,8], index: 2, kind: input, shape index: {}]
  %s3 = inlined_call_operand.vmem [shape: f32[72,8], index: 3, kind: input, shape index: {}]
  %s4 = inlined_call_operand.vmem [shape: f32[1,8], index: 4, kind: input, shape index: {}]
  %s5 = inlined_call_operand.vmem [shape: f32[1,8], index: 5, kind: input, shape index: {}]
  %s6 = inlined_call_operand.vmem [shape: f32[1,8], index: 6, kind: input, shape index: {}]
  %s7 = inlined_call_operand.vmem [shape: f32[72,3], index: 7, kind: input, shape index: {}]
  %s8 = inlined_call_operand.vmem [shape: f32[1,3], index: 8, kind: input, shape index: {}]
  %s9 = inlined_call_operand.vmem [shape: f32[2,16,16,3], index: 9, kind: output, shape index: {}]
  %s10 = sld [smem:[#allocation0]]
  $region53: #{tpu_custom_call.1} parent=0
    _
  %s12 = ssub.s32 1, %s10
  %s13 = scalar_select 0, %s12, %s10
  // Predicated region
  $region2: #{tpu_custom_call.1} parent=0 // pred_check
    _
  $region3: #{tpu_custom_call.1} parent=0 // pred_check_branch
    %15 = sbr.rel (0) target = $region5
  $region4: #{tpu_custom_call.1} parent=0 // pred_region
    _
  $region5: #{tpu_custom_call.1} parent=0 // pred_fallthru
    _
  // Predicated region
  $region6: #{tpu_custom_call.1} parent=0 // pred_check
    _
  $region7: #{tpu_custom_call.1} parent=0 // pred_check_branch
    %17 = sbr.rel (0) target = $region9
  $region8: #{tpu_custom_call.1} parent=0 // pred_region
    _
  $region9: #{tpu_custom_call.1} parent=0 // pred_fallthru
    _
  // Predicated region
  $region10: #{tpu_custom_call.1} parent=0 // pred_check
    _
  $region11: #{tpu_custom_call.1} parent=0 // pred_check_branch
    %19 = sbr.rel (0) target = $region13
  $region12: #{tpu_custom_call.1} parent=0 // pred_region
    _
  $region13: #{tpu_custom_call.1} parent=0 // pred_fallthru
    _
  // Predicated region
  $region14: #{tpu_custom_call.1} parent=0 // pred_check
    _
  $region15: #{tpu_custom_call.1} parent=0 // pred_check_branch
    %21 = sbr.rel (0) target = $region17
  $region16: #{tpu_custom_call.1} parent=0 // pred_region
    _
  $region17: #{tpu_custom_call.1} parent=0 // pred_fallthru
    _
  // Predicated region
  $region18: #{tpu_custom_call.1} parent=0 // pred_check
    _
  $region19: #{tpu_custom_call.1} parent=0 // pred_check_branch
    %23 = sbr.rel (0) target = $region21
  $region20: #{tpu_custom_call.1} parent=0 // pred_region
    _
  $region21: #{tpu_custom_call.1} parent=0 // pred_fallthru
    _
  // Predicated region
  $region22: #{tpu_custom_call.1} parent=0 // pred_check
    _
  $region23: #{tpu_custom_call.1} parent=0 // pred_check_branch
    %25 = sbr.rel (0) target = $region25
  $region24: #{tpu_custom_call.1} parent=0 // pred_region
    _
  $region25: #{tpu_custom_call.1} parent=0 // pred_fallthru
    _
  // Predicated region
  $region26: #{tpu_custom_call.1} parent=0 // pred_check
    _
  $region27: #{tpu_custom_call.1} parent=0 // pred_check_branch
    %27 = sbr.rel (0) target = $region29
  $region28: #{tpu_custom_call.1} parent=0 // pred_region
    _
  $region29: #{tpu_custom_call.1} parent=0 // pred_fallthru
    _
  // Predicated region
  $region30: #{tpu_custom_call.1} parent=0 // pred_check
    _
  $region31: #{tpu_custom_call.1} parent=0 // pred_check_branch
    %29 = sbr.rel (0) target = $region33
  $region32: #{tpu_custom_call.1} parent=0 // pred_region
    _
  $region33: #{tpu_custom_call.1} parent=0 // pred_fallthru
    _
  // Predicated region
  $region34: #{tpu_custom_call.1} parent=0 // pred_check
    _
  $region35: #{tpu_custom_call.1} parent=0 // pred_check_branch
    %31 = sbr.rel (0) target = $region37
  $region36: #{tpu_custom_call.1} parent=0 // pred_region
    _
  $region37: #{tpu_custom_call.1} parent=0 // pred_fallthru
    _
  %vm32 = vcmask 64512
  %33 = vst.msk [vmem:[#allocation2] sm:$0xff] %vm32, 0.0
  %34 = vst.msk [vmem:[#allocation2 + $0x8] sm:$0xff] %vm32, 0.0
  %vm35 = vcmask 58368
  %36 = vst.msk [vmem:[#allocation2 + $0x10] sm:$0x3] %vm35, 0.0
  %37 = vst.msk [vmem:[#allocation2 + $0x18] sm:$0xff] %vm32, 0.0
  %38 = vst.msk [vmem:[#allocation2 + $0x20] sm:$0xff] %vm32, 0.0
  %39 = vst.msk [vmem:[#allocation2 + $0x28] sm:$0x3] %vm35, 0.0
  %40 = vst.msk [vmem:[#allocation2 + $0x30] sm:$0xff] %vm32, 0.0
  %41 = vst.msk [vmem:[#allocation2 + $0x38] sm:$0xff] %vm32, 0.0
  %42 = vst.msk [vmem:[#allocation2 + $0x40] sm:$0x3] %vm35, 0.0
  %43 = vst.msk [vmem:[#allocation2 + $0x48] sm:$0xff] %vm32, 0.0
  %44 = vst.msk [vmem:[#allocation2 + $0x50] sm:$0xff] %vm32, 0.0
  %45 = vst.msk [vmem:[#allocation2 + $0x58] sm:$0x3] %vm35, 0.0
  %46 = vst.msk [vmem:[#allocation2 + $0x60] sm:$0xff] %vm32, 0.0
  %47 = vst.msk [vmem:[#allocation2 + $0x68] sm:$0xff] %vm32, 0.0
  %48 = vst.msk [vmem:[#allocation2 + $0x70] sm:$0x3] %vm35, 0.0
  %49 = vst.msk [vmem:[#allocation2 + $0x78] sm:$0xff] %vm32, 0.0
  %50 = vst.msk [vmem:[#allocation2 + $0x80] sm:$0xff] %vm32, 0.0
  %51 = vst.msk [vmem:[#allocation2 + $0x88] sm:$0x3] %vm35, 0.0
  %52 = vst.msk [vmem:[#allocation2 + $0x90] sm:$0xff] %vm32, 0.0
  %53 = vst.msk [vmem:[#allocation2 + $0x98] sm:$0xff] %vm32, 0.0
  %54 = vst.msk [vmem:[#allocation2 + $0xa0] sm:$0x3] %vm35, 0.0
  %55 = vst.msk [vmem:[#allocation2 + $0xa8] sm:$0xff] %vm32, 0.0
  %56 = vst.msk [vmem:[#allocation2 + $0xb0] sm:$0xff] %vm32, 0.0
  %57 = vst.msk [vmem:[#allocation2 + $0xb8] sm:$0x3] %vm35, 0.0
  %58 = vst.msk [vmem:[#allocation2 + $0xc0] sm:$0xff] %vm32, 0.0
  %59 = vst.msk [vmem:[#allocation2 + $0xc8] sm:$0xff] %vm32, 0.0
  %60 = vst.msk [vmem:[#allocation2 + $0xd0] sm:$0x3] %vm35, 0.0
  %61 = vst.msk [vmem:[#allocation2 + $0xd8] sm:$0xff] %vm32, 0.0
  %62 = vst.msk [vmem:[#allocation2 + $0xe0] sm:$0xff] %vm32, 0.0
  %63 = vst.msk [vmem:[#allocation2 + $0xe8] sm:$0x3] %vm35, 0.0
  %64 = vst.msk [vmem:[#allocation2 + $0xf0] sm:$0xff] %vm32, 0.0
  %65 = vst.msk [vmem:[#allocation2 + $0xf8] sm:$0xff] %vm32, 0.0
  %66 = vst.msk [vmem:[#allocation2 + $0x100] sm:$0x3] %vm35, 0.0
  %67 = vst.msk [vmem:[#allocation2 + $0x108] sm:$0xff] %vm32, 0.0
  %68 = vst.msk [vmem:[#allocation2 + $0x110] sm:$0xff] %vm32, 0.0
  %69 = vst.msk [vmem:[#allocation2 + $0x118] sm:$0x3] %vm35, 0.0
  %70 = vst.msk [vmem:[#allocation2 + $0x120] sm:$0xff] %vm32, 0.0
  %71 = vst.msk [vmem:[#allocation2 + $0x128] sm:$0xff] %vm32, 0.0
  %72 = vst.msk [vmem:[#allocation2 + $0x130] sm:$0x3] %vm35, 0.0
  %73 = vst.msk [vmem:[#allocation2 + $0x138] sm:$0xff] %vm32, 0.0
  %74 = vst.msk [vmem:[#allocation2 + $0x140] sm:$0xff] %vm32, 0.0
  %75 = vst.msk [vmem:[#allocation2 + $0x148] sm:$0x3] %vm35, 0.0
  %76 = vst.msk [vmem:[#allocation2 + $0x150] sm:$0xff] %vm32, 0.0
  %77 = vst.msk [vmem:[#allocation2 + $0x158] sm:$0xff] %vm32, 0.0
  %78 = vst.msk [vmem:[#allocation2 + $0x160] sm:$0x3] %vm35, 0.0
  %79 = vst.msk [vmem:[#allocation2 + $0x168] sm:$0xff] %vm32, 0.0
  %80 = vst.msk [vmem:[#allocation2 + $0x170] sm:$0xff] %vm32, 0.0
  %81 = vst.msk [vmem:[#allocation2 + $0x178] sm:$0x3] %vm35, 0.0
  %82 = vst.msk [vmem:[#allocation2 + $0x180] sm:$0xff] %vm32, 0.0
  %83 = vst.msk [vmem:[#allocation2 + $0x188] sm:$0xff] %vm32, 0.0
  %84 = vst.msk [vmem:[#allocation2 + $0x190] sm:$0x3] %vm35, 0.0
  %85 = vst.msk [vmem:[#allocation2 + $0x198] sm:$0xff] %vm32, 0.0
  %86 = vst.msk [vmem:[#allocation2 + $0x1a0] sm:$0xff] %vm32, 0.0
  %87 = vst.msk [vmem:[#allocation2 + $0x1a8] sm:$0x3] %vm35, 0.0
  %88 = vst.msk [vmem:[#allocation2 + $0x1b0] sm:$0xff] %vm32, 0.0
  %89 = vst.msk [vmem:[#allocation2 + $0x1b8] sm:$0xff] %vm32, 0.0
  %90 = vst.msk [vmem:[#allocation2 + $0x1c0] sm:$0x3] %vm35, 0.0
  %91 = vst.msk [vmem:[#allocation2 + $0x1c8] sm:$0xff] %vm32, 0.0
  %92 = vst.msk [vmem:[#allocation2 + $0x1d0] sm:$0xff] %vm32, 0.0
  %93 = vst.msk [vmem:[#allocation2 + $0x1d8] sm:$0x3] %vm35, 0.0
  %94 = vst.msk [vmem:[#allocation2 + $0x1e0] sm:$0xff] %vm32, 0.0
  %95 = vst.msk [vmem:[#allocation2 + $0x1e8] sm:$0xff] %vm32, 0.0
  %96 = vst.msk [vmem:[#allocation2 + $0x1f0] sm:$0x3] %vm35, 0.0
  %97 = vst.msk [vmem:[#allocation2 + $0x1f8] sm:$0xff] %vm32, 0.0
  %98 = vst.msk [vmem:[#allocation2 + $0x200] sm:$0xff] %vm32, 0.0
  %99 = vst.msk [vmem:[#allocation2 + $0x208] sm:$0x3] %vm35, 0.0
  %100 = vst.msk [vmem:[#allocation2 + $0x210] sm:$0xff] %vm32, 0.0
  %101 = vst.msk [vmem:[#allocation2 + $0x218] sm:$0xff] %vm32, 0.0
  %102 = vst.msk [vmem:[#allocation2 + $0x220] sm:$0x3] %vm35, 0.0
  %103 = vst.msk [vmem:[#allocation2 + $0x228] sm:$0xff] %vm32, 0.0
  %104 = vst.msk [vmem:[#allocation2 + $0x230] sm:$0xff] %vm32, 0.0
  %105 = vst.msk [vmem:[#allocation2 + $0x238] sm:$0x3] %vm35, 0.0
  %106 = vst.msk [vmem:[#allocation2 + $0x240] sm:$0xff] %vm32, 0.0
  %107 = vst.msk [vmem:[#allocation2 + $0x248] sm:$0xff] %vm32, 0.0
  %108 = vst.msk [vmem:[#allocation2 + $0x250] sm:$0x3] %vm35, 0.0
  %109 = vst.msk [vmem:[#allocation2 + $0x258] sm:$0xff] %vm32, 0.0
  %110 = vst.msk [vmem:[#allocation2 + $0x260] sm:$0xff] %vm32, 0.0
  %111 = vst.msk [vmem:[#allocation2 + $0x268] sm:$0x3] %vm35, 0.0
  %112 = vst.msk [vmem:[#allocation2 + $0x270] sm:$0xff] %vm32, 0.0
  %113 = vst.msk [vmem:[#allocation2 + $0x278] sm:$0xff] %vm32, 0.0
  %114 = vst.msk [vmem:[#allocation2 + $0x280] sm:$0x3] %vm35, 0.0
  %115 = vst.msk [vmem:[#allocation2 + $0x288] sm:$0xff] %vm32, 0.0
  %116 = vst.msk [vmem:[#allocation2 + $0x290] sm:$0xff] %vm32, 0.0
  %117 = vst.msk [vmem:[#allocation2 + $0x298] sm:$0x3] %vm35, 0.0
  %118 = vst.msk [vmem:[#allocation2 + $0x2a0] sm:$0xff] %vm32, 0.0
  %119 = vst.msk [vmem:[#allocation2 + $0x2a8] sm:$0xff] %vm32, 0.0
  %120 = vst.msk [vmem:[#allocation2 + $0x2b0] sm:$0x3] %vm35, 0.0
  %121 = vst.msk [vmem:[#allocation2 + $0x2b8] sm:$0xff] %vm32, 0.0
  %122 = vst.msk [vmem:[#allocation2 + $0x2c0] sm:$0xff] %vm32, 0.0
  %123 = vst.msk [vmem:[#allocation2 + $0x2c8] sm:$0x3] %vm35, 0.0
  %124 = vst.msk [vmem:[#allocation2 + $0x2d0] sm:$0xff] %vm32, 0.0
  %125 = vst.msk [vmem:[#allocation2 + $0x2d8] sm:$0xff] %vm32, 0.0
  %126 = vst.msk [vmem:[#allocation2 + $0x2e0] sm:$0x3] %vm35, 0.0
  %127 = vst.msk [vmem:[#allocation2 + $0x2e8] sm:$0xff] %vm32, 0.0
  %128 = vst.msk [vmem:[#allocation2 + $0x2f0] sm:$0xff] %vm32, 0.0
  %129 = vst.msk [vmem:[#allocation2 + $0x2f8] sm:$0x3] %vm35, 0.0
  %130 = vst.msk [vmem:[#allocation2 + $0x300] sm:$0xff] %vm32, 0.0
  %131 = vst.msk [vmem:[#allocation2 + $0x308] sm:$0xff] %vm32, 0.0
  %132 = vst.msk [vmem:[#allocation2 + $0x310] sm:$0x3] %vm35, 0.0
  %133 = vst.msk [vmem:[#allocation2 + $0x318] sm:$0xff] %vm32, 0.0
  %134 = vst.msk [vmem:[#allocation2 + $0x320] sm:$0xff] %vm32, 0.0
  %135 = vst.msk [vmem:[#allocation2 + $0x328] sm:$0x3] %vm35, 0.0
  %136 = vst.msk [vmem:[#allocation2 + $0x330] sm:$0xff] %vm32, 0.0
  %137 = vst.msk [vmem:[#allocation2 + $0x338] sm:$0xff] %vm32, 0.0
  %138 = vst.msk [vmem:[#allocation2 + $0x340] sm:$0x3] %vm35, 0.0
  %139 = vst.msk [vmem:[#allocation2 + $0x348] sm:$0xff] %vm32, 0.0
  %140 = vst.msk [vmem:[#allocation2 + $0x350] sm:$0xff] %vm32, 0.0
  %141 = vst.msk [vmem:[#allocation2 + $0x358] sm:$0x3] %vm35, 0.0
  %v142 = vld [vmem:[%s0] sm:$0xff]
  %v143 = vld [vmem:[%s0 + $0x8] sm:$0xff]
  %v144 = vld [vmem:[%s0 + $0x10] sm:$0x3]
  %v145 = vld [vmem:[%s0 + $0x18] sm:$0xff]
  %v146 = vld [vmem:[%s0 + $0x20] sm:$0xff]
  %v147 = vld [vmem:[%s0 + $0x28] sm:$0x3]
  %v148 = vld [vmem:[%s0 + $0x30] sm:$0xff]
  %v149 = vld [vmem:[%s0 + $0x38] sm:$0xff]
  %v150 = vld [vmem:[%s0 + $0x40] sm:$0x3]
  %v151 = vld [vmem:[%s0 + $0x48] sm:$0xff]
  %v152 = vld [vmem:[%s0 + $0x50] sm:$0xff]
  %v153 = vld [vmem:[%s0 + $0x58] sm:$0x3]
  %v154 = vld [vmem:[%s0 + $0x60] sm:$0xff]
  %v155 = vld [vmem:[%s0 + $0x68] sm:$0xff]
  %v156 = vld [vmem:[%s0 + $0x70] sm:$0x3]
  %v157 = vld [vmem:[%s0 + $0x78] sm:$0xff]
  %v158 = vld [vmem:[%s0 + $0x80] sm:$0xff]
  %v159 = vld [vmem:[%s0 + $0x88] sm:$0x3]
  %v160 = vld [vmem:[%s0 + $0x90] sm:$0xff]
  %v161 = vld [vmem:[%s0 + $0x98] sm:$0xff]
  %v162 = vld [vmem:[%s0 + $0xa0] sm:$0x3]
  %v163 = vld [vmem:[%s0 + $0xa8] sm:$0xff]
  %v164 = vld [vmem:[%s0 + $0xb0] sm:$0xff]
  %v165 = vld [vmem:[%s0 + $0xb8] sm:$0x3]
  %v166 = vld [vmem:[%s0 + $0xc0] sm:$0xff]
  %v167 = vld [vmem:[%s0 + $0xc8] sm:$0xff]
  %v168 = vld [vmem:[%s0 + $0xd0] sm:$0x3]
  %v169 = vld [vmem:[%s0 + $0xd8] sm:$0xff]
  %v170 = vld [vmem:[%s0 + $0xe0] sm:$0xff]
  %v171 = vld [vmem:[%s0 + $0xe8] sm:$0x3]
  %v172 = vld [vmem:[%s0 + $0xf0] sm:$0xff]
  %v173 = vld [vmem:[%s0 + $0xf8] sm:$0xff]
  %v174 = vld [vmem:[%s0 + $0x100] sm:$0x3]
  %v175 = vld [vmem:[%s0 + $0x108] sm:$0xff]
  %v176 = vld [vmem:[%s0 + $0x110] sm:$0xff]
  %v177 = vld [vmem:[%s0 + $0x118] sm:$0x3]
  %v178 = vld [vmem:[%s0 + $0x120] sm:$0xff]
  %v179 = vld [vmem:[%s0 + $0x128] sm:$0xff]
  %v180 = vld [vmem:[%s0 + $0x130] sm:$0x3]
  %v181 = vld [vmem:[%s0 + $0x138] sm:$0xff]
  %v182 = vld [vmem:[%s0 + $0x140] sm:$0xff]
  %v183 = vld [vmem:[%s0 + $0x148] sm:$0x3]
  %v184 = vld [vmem:[%s0 + $0x150] sm:$0xff]
  %v185 = vld [vmem:[%s0 + $0x158] sm:$0xff]
  %v186 = vld [vmem:[%s0 + $0x160] sm:$0x3]
  %v187 = vld [vmem:[%s0 + $0x168] sm:$0xff]
  %v188 = vld [vmem:[%s0 + $0x170] sm:$0xff]
  %v189 = vld [vmem:[%s0 + $0x178] sm:$0x3]
  %v190 = vld [vmem:[%s0 + $0x180] sm:$0xff]
  %v191 = vld [vmem:[%s0 + $0x188] sm:$0xff]
  %v192 = vld [vmem:[%s0 + $0x190] sm:$0x3]
  %v193 = vld [vmem:[%s0 + $0x198] sm:$0xff]
  %v194 = vld [vmem:[%s0 + $0x1a0] sm:$0xff]
  %v195 = vld [vmem:[%s0 + $0x1a8] sm:$0x3]
  %v196 = vld [vmem:[%s0 + $0x1b0] sm:$0xff]
  %v197 = vld [vmem:[%s0 + $0x1b8] sm:$0xff]
  %v198 = vld [vmem:[%s0 + $0x1c0] sm:$0x3]
  %v199 = vld [vmem:[%s0 + $0x1c8] sm:$0xff]
  %v200 = vld [vmem:[%s0 + $0x1d0] sm:$0xff]
  %v201 = vld [vmem:[%s0 + $0x1d8] sm:$0x3]
  %v202 = vld [vmem:[%s0 + $0x1e0] sm:$0xff]
  %v203 = vld [vmem:[%s0 + $0x1e8] sm:$0xff]
  %v204 = vld [vmem:[%s0 + $0x1f0] sm:$0x3]
  %v205 = vld [vmem:[%s0 + $0x1f8] sm:$0xff]
  %v206 = vld [vmem:[%s0 + $0x200] sm:$0xff]
  %v207 = vld [vmem:[%s0 + $0x208] sm:$0x3]
  %v208 = vld [vmem:[%s0 + $0x210] sm:$0xff]
  %v209 = vld [vmem:[%s0 + $0x218] sm:$0xff]
  %v210 = vld [vmem:[%s0 + $0x220] sm:$0x3]
  %v211 = vld [vmem:[%s0 + $0x228] sm:$0xff]
  %v212 = vld [vmem:[%s0 + $0x230] sm:$0xff]
  %v213 = vld [vmem:[%s0 + $0x238] sm:$0x3]
  %v214 = vld [vmem:[%s0 + $0x240] sm:$0xff]
  %v215 = vld [vmem:[%s0 + $0x248] sm:$0xff]
  %v216 = vld [vmem:[%s0 + $0x250] sm:$0x3]
  %v217 = vld [vmem:[%s0 + $0x258] sm:$0xff]
  %v218 = vld [vmem:[%s0 + $0x260] sm:$0xff]
  %v219 = vld [vmem:[%s0 + $0x268] sm:$0x3]
  %v220 = vld [vmem:[%s0 + $0x270] sm:$0xff]
  %v221 = vld [vmem:[%s0 + $0x278] sm:$0xff]
  %v222 = vld [vmem:[%s0 + $0x280] sm:$0x3]
  %v223 = vld [vmem:[%s0 + $0x288] sm:$0xff]
  %v224 = vld [vmem:[%s0 + $0x290] sm:$0xff]
  %v225 = vld [vmem:[%s0 + $0x298] sm:$0x3]
  %v226 = vld [vmem:[%s0 + $0x2a0] sm:$0xff]
  %v227 = vld [vmem:[%s0 + $0x2a8] sm:$0xff]
  %v228 = vld [vmem:[%s0 + $0x2b0] sm:$0x3]
  %v229 = vld [vmem:[%s0 + $0x2b8] sm:$0xff]
  %v230 = vld [vmem:[%s0 + $0x2c0] sm:$0xff]
  %v231 = vld [vmem:[%s0 + $0x2c8] sm:$0x3]
  %v232 = vld [vmem:[%s0 + $0x2d0] sm:$0xff]
  %v233 = vld [vmem:[%s0 + $0x2d8] sm:$0xff]
  %v234 = vld [vmem:[%s0 + $0x2e0] sm:$0x3]
  %v235 = vld [vmem:[%s0 + $0x2e8] sm:$0xff]
  %v236 = vld [vmem:[%s0 + $0x2f0] sm:$0xff]
  %v237 = vld [vmem:[%s0 + $0x2f8] sm:$0x3]
  %v238 = vld [vmem:[%s0 + $0x300] sm:$0xff]
  %v239 = vld [vmem:[%s0 + $0x308] sm:$0xff]
  %v240 = vld [vmem:[%s0 + $0x310] sm:$0x3]
  %v241 = vld [vmem:[%s0 + $0x318] sm:$0xff]
  %v242 = vld [vmem:[%s0 + $0x320] sm:$0xff]
  %v243 = vld [vmem:[%s0 + $0x328] sm:$0x3]
  %v244 = vld [vmem:[%s0 + $0x330] sm:$0xff]
  %v245 = vld [vmem:[%s0 + $0x338] sm:$0xff]
  %v246 = vld [vmem:[%s0 + $0x340] sm:$0x3]
  %v247 = vld [vmem:[%s0 + $0x348] sm:$0xff]
  %v248 = vld [vmem:[%s0 + $0x350] sm:$0xff]
  %v249 = vld [vmem:[%s0 + $0x358] sm:$0x3]
  %vm346 = vcmask 1046528
  %v347 = vrot.slane %v142, 1
  %v348 = vrot.slane %v143, 1
  %v349 = vsel %vm346, %v347, %v348
  %v350 = vrot.slane %v144, 1
  %v351 = vsel %vm346, %v348, %v350
  %v352 = vrot.slane %v145, 1
  %v353 = vrot.slane %v146, 1
  %v354 = vsel %vm346, %v352, %v353
  %v355 = vrot.slane %v147, 1
  %v356 = vsel %vm346, %v353, %v355
  %v357 = vrot.slane %v148, 1
  %v358 = vrot.slane %v149, 1
  %v359 = vsel %vm346, %v357, %v358
  %v360 = vrot.slane %v150, 1
  %v361 = vsel %vm346, %v358, %v360
  %v362 = vrot.slane %v151, 1
  %v363 = vrot.slane %v152, 1
  %v364 = vsel %vm346, %v362, %v363
  %v365 = vrot.slane %v153, 1
  %v366 = vsel %vm346, %v363, %v365
  %v367 = vrot.slane %v154, 1
  %v368 = vrot.slane %v155, 1
  %v369 = vsel %vm346, %v367, %v368
  %v370 = vrot.slane %v156, 1
  %v371 = vsel %vm346, %v368, %v370
  %v372 = vrot.slane %v157, 1
  %v373 = vrot.slane %v158, 1
  %v374 = vsel %vm346, %v372, %v373
  %v375 = vrot.slane %v159, 1
  %v376 = vsel %vm346, %v373, %v375
  %v377 = vrot.slane %v160, 1
  %v378 = vrot.slane %v161, 1
  %v379 = vsel %vm346, %v377, %v378
  %v380 = vrot.slane %v162, 1
  %v381 = vsel %vm346, %v378, %v380
  %v382 = vrot.slane %v163, 1
  %v383 = vrot.slane %v164, 1
  %v384 = vsel %vm346, %v382, %v383
  %v385 = vrot.slane %v165, 1
  %v386 = vsel %vm346, %v383, %v385
  %v387 = vrot.slane %v166, 1
  %v388 = vrot.slane %v167, 1
  %v389 = vsel %vm346, %v387, %v388
  %v390 = vrot.slane %v168, 1
  %v391 = vsel %vm346, %v388, %v390
  %v392 = vrot.slane %v169, 1
  %v393 = vrot.slane %v170, 1
  %v394 = vsel %vm346, %v392, %v393
  %v395 = vrot.slane %v171, 1
  %v396 = vsel %vm346, %v393, %v395
  %v397 = vrot.slane %v172, 1
  %v398 = vrot.slane %v173, 1
  %v399 = vsel %vm346, %v397, %v398
  %v400 = vrot.slane %v174, 1
  %v401 = vsel %vm346, %v398, %v400
  %v402 = vrot.slane %v175, 1
  %v403 = vrot.slane %v176, 1
  %v404 = vsel %vm346, %v402, %v403
  %v405 = vrot.slane %v177, 1
  %v406 = vsel %vm346, %v403, %v405
  %v407 = vrot.slane %v178, 1
  %v408 = vrot.slane %v179, 1
  %v409 = vsel %vm346, %v407, %v408
  %v410 = vrot.slane %v180, 1
  %v411 = vsel %vm346, %v408, %v410
  %v412 = vrot.slane %v181, 1
  %v413 = vrot.slane %v182, 1
  %v414 = vsel %vm346, %v412, %v413
  %v415 = vrot.slane %v183, 1
  %v416 = vsel %vm346, %v413, %v415
  %v417 = vrot.slane %v184, 1
  %v418 = vrot.slane %v185, 1
  %v419 = vsel %vm346, %v417, %v418
  %v420 = vrot.slane %v186, 1
  %v421 = vsel %vm346, %v418, %v420
  %v422 = vrot.slane %v187, 1
  %v423 = vrot.slane %v188, 1
  %v424 = vsel %vm346, %v422, %v423
  %v425 = vrot.slane %v189, 1
  %v426 = vsel %vm346, %v423, %v425
  %v427 = vrot.slane %v196, 1
  %v428 = vrot.slane %v197, 1
  %v429 = vsel %vm346, %v427, %v428
  %v430 = vrot.slane %v198, 1
  %v431 = vsel %vm346, %v428, %v430
  %v432 = vrot.slane %v199, 1
  %v433 = vrot.slane %v200, 1
  %v434 = vsel %vm346, %v432, %v433
  %v435 = vrot.slane %v201, 1
  %v436 = vsel %vm346, %v433, %v435
  %v437 = vrot.slane %v202, 1
  %v438 = vrot.slane %v203, 1
  %v439 = vsel %vm346, %v437, %v438
  %v440 = vrot.slane %v204, 1
  %v441 = vsel %vm346, %v438, %v440
  %v442 = vrot.slane %v205, 1
  %v443 = vrot.slane %v206, 1
  %v444 = vsel %vm346, %v442, %v443
  %v445 = vrot.slane %v207, 1
  %v446 = vsel %vm346, %v443, %v445
  %v447 = vrot.slane %v208, 1
  %v448 = vrot.slane %v209, 1
  %v449 = vsel %vm346, %v447, %v448
  %v450 = vrot.slane %v210, 1
  %v451 = vsel %vm346, %v448, %v450
  %v452 = vrot.slane %v211, 1
  %v453 = vrot.slane %v212, 1
  %v454 = vsel %vm346, %v452, %v453
  %v455 = vrot.slane %v213, 1
  %v456 = vsel %vm346, %v453, %v455
  %v457 = vrot.slane %v214, 1
  %v458 = vrot.slane %v215, 1
  %v459 = vsel %vm346, %v457, %v458
  %v460 = vrot.slane %v216, 1
  %v461 = vsel %vm346, %v458, %v460
  %v462 = vrot.slane %v217, 1
  %v463 = vrot.slane %v218, 1
  %v464 = vsel %vm346, %v462, %v463
  %v465 = vrot.slane %v219, 1
  %v466 = vsel %vm346, %v463, %v465
  %v467 = vrot.slane %v220, 1
  %v468 = vrot.slane %v221, 1
  %v469 = vsel %vm346, %v467, %v468
  %v470 = vrot.slane %v222, 1
  %v471 = vsel %vm346, %v468, %v470
  %v472 = vrot.slane %v223, 1
  %v473 = vrot.slane %v224, 1
  %v474 = vsel %vm346, %v472, %v473
  %v475 = vrot.slane %v225, 1
  %v476 = vsel %vm346, %v473, %v475
  %v477 = vrot.slane %v226, 1
  %v478 = vrot.slane %v227, 1
  %v479 = vsel %vm346, %v477, %v478
  %v480 = vrot.slane %v228, 1
  %v481 = vsel %vm346, %v478, %v480
  %v482 = vrot.slane %v229, 1
  %v483 = vrot.slane %v230, 1
  %v484 = vsel %vm346, %v482, %v483
  %v485 = vrot.slane %v231, 1
  %v486 = vsel %vm346, %v483, %v485
  %v487 = vrot.slane %v232, 1
  %v488 = vrot.slane %v233, 1
  %v489 = vsel %vm346, %v487, %v488
  %v490 = vrot.slane %v234, 1
  %v491 = vsel %vm346, %v488, %v490
  %v492 = vrot.slane %v235, 1
  %v493 = vrot.slane %v236, 1
  %v494 = vsel %vm346, %v492, %v493
  %v495 = vrot.slane %v237, 1
  %v496 = vsel %vm346, %v493, %v495
  %v497 = vrot.slane %v238, 1
  %v498 = vrot.slane %v239, 1
  %v499 = vsel %vm346, %v497, %v498
  %v500 = vrot.slane %v240, 1
  %v501 = vsel %vm346, %v498, %v500
  %v502 = vrot.slane %v241, 1
  %v503 = vrot.slane %v242, 1
  %v504 = vsel %vm346, %v502, %v503
  %v505 = vrot.slane %v243, 1
  %v506 = vsel %vm346, %v503, %v505
  %vm507 = vcmask 1045504
  %v508 = vrot.slane %v142, 2
  %v509 = vrot.slane %v143, 2
  %v510 = vsel %vm507, %v508, %v509
  %v511 = vrot.slane %v144, 2
  %v512 = vsel %vm507, %v509, %v511
  %v513 = vrot.slane %v145, 2
  %v514 = vrot.slane %v146, 2
  %v515 = vsel %vm507, %v513, %v514
  %v516 = vrot.slane %v147, 2
  %v517 = vsel %vm507, %v514, %v516
  %v518 = vrot.slane %v148, 2
  %v519 = vrot.slane %v149, 2
  %v520 = vsel %vm507, %v518, %v519
  %v521 = vrot.slane %v150, 2
  %v522 = vsel %vm507, %v519, %v521
  %v523 = vrot.slane %v151, 2
  %v524 = vrot.slane %v152, 2
  %v525 = vsel %vm507, %v523, %v524
  %v526 = vrot.slane %v153, 2
  %v527 = vsel %vm507, %v524, %v526
  %v528 = vrot.slane %v154, 2
  %v529 = vrot.slane %v155, 2
  %v530 = vsel %vm507, %v528, %v529
  %v531 = vrot.slane %v156, 2
  %v532 = vsel %vm507, %v529, %v531
  %v533 = vrot.slane %v157, 2
  %v534 = vrot.slane %v158, 2
  %v535 = vsel %vm507, %v533, %v534
  %v536 = vrot.slane %v159, 2
  %v537 = vsel %vm507, %v534, %v536
  %v538 = vrot.slane %v160, 2
  %v539 = vrot.slane %v161, 2
  %v540 = vsel %vm507, %v538, %v539
  %v541 = vrot.slane %v162, 2
  %v542 = vsel %vm507, %v539, %v541
  %v543 = vrot.slane %v163, 2
  %v544 = vrot.slane %v164, 2
  %v545 = vsel %vm507, %v543, %v544
  %v546 = vrot.slane %v165, 2
  %v547 = vsel %vm507, %v544, %v546
  %v548 = vrot.slane %v166, 2
  %v549 = vrot.slane %v167, 2
  %v550 = vsel %vm507, %v548, %v549
  %v551 = vrot.slane %v168, 2
  %v552 = vsel %vm507, %v549, %v551
  %v553 = vrot.slane %v169, 2
  %v554 = vrot.slane %v170, 2
  %v555 = vsel %vm507, %v553, %v554
  %v556 = vrot.slane %v171, 2
  %v557 = vsel %vm507, %v554, %v556
  %v558 = vrot.slane %v172, 2
  %v559 = vrot.slane %v173, 2
  %v560 = vsel %vm507, %v558, %v559
  %v561 = vrot.slane %v174, 2
  %v562 = vsel %vm507, %v559, %v561
  %v563 = vrot.slane %v175, 2
  %v564 = vrot.slane %v176, 2
  %v565 = vsel %vm507, %v563, %v564
  %v566 = vrot.slane %v177, 2
  %v567 = vsel %vm507, %v564, %v566
  %v568 = vrot.slane %v178, 2
  %v569 = vrot.slane %v179, 2
  %v570 = vsel %vm507, %v568, %v569
  %v571 = vrot.slane %v180, 2
  %v572 = vsel %vm507, %v569, %v571
  %v573 = vrot.slane %v181, 2
  %v574 = vrot.slane %v182, 2
  %v575 = vsel %vm507, %v573, %v574
  %v576 = vrot.slane %v183, 2
  %v577 = vsel %vm507, %v574, %v576
  %v578 = vrot.slane %v184, 2
  %v579 = vrot.slane %v185, 2
  %v580 = vsel %vm507, %v578, %v579
  %v581 = vrot.slane %v186, 2
  %v582 = vsel %vm507, %v579, %v581
  %v583 = vrot.slane %v187, 2
  %v584 = vrot.slane %v188, 2
  %v585 = vsel %vm507, %v583, %v584
  %v586 = vrot.slane %v189, 2
  %v587 = vsel %vm507, %v584, %v586
  %v588 = vrot.slane %v196, 2
  %v589 = vrot.slane %v197, 2
  %v590 = vsel %vm507, %v588, %v589
  %v591 = vrot.slane %v198, 2
  %v592 = vsel %vm507, %v589, %v591
  %v593 = vrot.slane %v199, 2
  %v594 = vrot.slane %v200, 2
  %v595 = vsel %vm507, %v593, %v594
  %v596 = vrot.slane %v201, 2
  %v597 = vsel %vm507, %v594, %v596
  %v598 = vrot.slane %v202, 2
  %v599 = vrot.slane %v203, 2
  %v600 = vsel %vm507, %v598, %v599
  %v601 = vrot.slane %v204, 2
  %v602 = vsel %vm507, %v599, %v601
  %v603 = vrot.slane %v205, 2
  %v604 = vrot.slane %v206, 2
  %v605 = vsel %vm507, %v603, %v604
  %v606 = vrot.slane %v207, 2
  %v607 = vsel %vm507, %v604, %v606
  %v608 = vrot.slane %v208, 2
  %v609 = vrot.slane %v209, 2
  %v610 = vsel %vm507, %v608, %v609
  %v611 = vrot.slane %v210, 2
  %v612 = vsel %vm507, %v609, %v611
  %v613 = vrot.slane %v211, 2
  %v614 = vrot.slane %v212, 2
  %v615 = vsel %vm507, %v613, %v614
  %v616 = vrot.slane %v213, 2
  %v617 = vsel %vm507, %v614, %v616
  %v618 = vrot.slane %v214, 2
  %v619 = vrot.slane %v215, 2
  %v620 = vsel %vm507, %v618, %v619
  %v621 = vrot.slane %v216, 2
  %v622 = vsel %vm507, %v619, %v621
  %v623 = vrot.slane %v217, 2
  %v624 = vrot.slane %v218, 2
  %v625 = vsel %vm507, %v623, %v624
  %v626 = vrot.slane %v219, 2
  %v627 = vsel %vm507, %v624, %v626
  %v628 = vrot.slane %v220, 2
  %v629 = vrot.slane %v221, 2
  %v630 = vsel %vm507, %v628, %v629
  %v631 = vrot.slane %v222, 2
  %v632 = vsel %vm507, %v629, %v631
  %v633 = vrot.slane %v223, 2
  %v634 = vrot.slane %v224, 2
  %v635 = vsel %vm507, %v633, %v634
  %v636 = vrot.slane %v225, 2
  %v637 = vsel %vm507, %v634, %v636
  %v638 = vrot.slane %v226, 2
  %v639 = vrot.slane %v227, 2
  %v640 = vsel %vm507, %v638, %v639
  %v641 = vrot.slane %v228, 2
  %v642 = vsel %vm507, %v639, %v641
  %v643 = vrot.slane %v229, 2
  %v644 = vrot.slane %v230, 2
  %v645 = vsel %vm507, %v643, %v644
  %v646 = vrot.slane %v231, 2
  %v647 = vsel %vm507, %v644, %v646
  %v648 = vrot.slane %v232, 2
  %v649 = vrot.slane %v233, 2
  %v650 = vsel %vm507, %v648, %v649
  %v651 = vrot.slane %v234, 2
  %v652 = vsel %vm507, %v649, %v651
  %v653 = vrot.slane %v235, 2
  %v654 = vrot.slane %v236, 2
  %v655 = vsel %vm507, %v653, %v654
  %v656 = vrot.slane %v237, 2
  %v657 = vsel %vm507, %v654, %v656
  %v658 = vrot.slane %v238, 2
  %v659 = vrot.slane %v239, 2
  %v660 = vsel %vm507, %v658, %v659
  %v661 = vrot.slane %v240, 2
  %v662 = vsel %vm507, %v659, %v661
  %v663 = vrot.slane %v241, 2
  %v664 = vrot.slane %v242, 2
  %v665 = vsel %vm507, %v663, %v664
  %v666 = vrot.slane %v243, 2
  %v667 = vsel %vm507, %v664, %v666
  %v674 = vrot.slane %v190, 1
  %v675 = vrot.slane %v191, 1
  %v676 = vsel %vm346, %v674, %v675
  %v677 = vrot.slane %v192, 1
  %v678 = vsel %vm346, %v675, %v677
  %v679 = vrot.slane %v244, 1
  %v680 = vrot.slane %v245, 1
  %v681 = vsel %vm346, %v679, %v680
  %v682 = vrot.slane %v246, 1
  %v683 = vsel %vm346, %v680, %v682
  %v684 = vrot.slane %v190, 2
  %v685 = vrot.slane %v191, 2
  %v686 = vsel %vm507, %v684, %v685
  %v687 = vrot.slane %v192, 2
  %v688 = vsel %vm507, %v685, %v687
  %v689 = vrot.slane %v244, 2
  %v690 = vrot.slane %v245, 2
  %v691 = vsel %vm507, %v689, %v690
  %v692 = vrot.slane %v246, 2
  %v693 = vsel %vm507, %v690, %v692
  %v700 = vrot.slane %v193, 1
  %v701 = vrot.slane %v194, 1
  %v702 = vsel %vm346, %v700, %v701
  %v703 = vrot.slane %v195, 1
  %v704 = vsel %vm346, %v701, %v703
  %v705 = vrot.slane %v247, 1
  %v706 = vrot.slane %v248, 1
  %v707 = vsel %vm346, %v705, %v706
  %v708 = vrot.slane %v249, 1
  %v709 = vsel %vm346, %v706, %v708
  %v710 = vrot.slane %v193, 2
  %v711 = vrot.slane %v194, 2
  %v712 = vsel %vm507, %v710, %v711
  %v713 = vrot.slane %v195, 2
  %v714 = vsel %vm507, %v711, %v713
  %v715 = vrot.slane %v247, 2
  %v716 = vrot.slane %v248, 2
  %v717 = vsel %vm507, %v715, %v716
  %v718 = vrot.slane %v249, 2
  %v719 = vsel %vm507, %v716, %v718
  %720 = vrot.lane.b32.xlu0 %v349, 3
  %v721 = vpop.permute.xlu0 %720
  %722 = vrot.lane.b32.xlu0 %v351, 3
  %v723 = vpop.permute.xlu0 %722
  %724 = vrot.lane.b32.xlu0 %v354, 3
  %v725 = vpop.permute.xlu0 %724
  %726 = vrot.lane.b32.xlu0 %v356, 3
  %v727 = vpop.permute.xlu0 %726
  %728 = vrot.lane.b32.xlu0 %v359, 3
  %v729 = vpop.permute.xlu0 %728
  %730 = vrot.lane.b32.xlu0 %v361, 3
  %v731 = vpop.permute.xlu0 %730
  %732 = vrot.lane.b32.xlu0 %v364, 3
  %v733 = vpop.permute.xlu0 %732
  %734 = vrot.lane.b32.xlu0 %v366, 3
  %v735 = vpop.permute.xlu0 %734
  %736 = vrot.lane.b32.xlu0 %v369, 3
  %v737 = vpop.permute.xlu0 %736
  %738 = vrot.lane.b32.xlu0 %v371, 3
  %v739 = vpop.permute.xlu0 %738
  %740 = vrot.lane.b32.xlu0 %v374, 3
  %v741 = vpop.permute.xlu0 %740
  %742 = vrot.lane.b32.xlu0 %v376, 3
  %v743 = vpop.permute.xlu0 %742
  %744 = vrot.lane.b32.xlu0 %v379, 3
  %v745 = vpop.permute.xlu0 %744
  %746 = vrot.lane.b32.xlu0 %v381, 3
  %v747 = vpop.permute.xlu0 %746
  %748 = vrot.lane.b32.xlu0 %v384, 3
  %v749 = vpop.permute.xlu0 %748
  %750 = vrot.lane.b32.xlu0 %v386, 3
  %v751 = vpop.permute.xlu0 %750
  %752 = vrot.lane.b32.xlu0 %v389, 3
  %v753 = vpop.permute.xlu0 %752
  %754 = vrot.lane.b32.xlu0 %v391, 3
  %v755 = vpop.permute.xlu0 %754
  %756 = vrot.lane.b32.xlu0 %v394, 3
  %v757 = vpop.permute.xlu0 %756
  %758 = vrot.lane.b32.xlu0 %v396, 3
  %v759 = vpop.permute.xlu0 %758
  %760 = vrot.lane.b32.xlu0 %v399, 3
  %v761 = vpop.permute.xlu0 %760
  %762 = vrot.lane.b32.xlu0 %v401, 3
  %v763 = vpop.permute.xlu0 %762
  %764 = vrot.lane.b32.xlu0 %v404, 3
  %v765 = vpop.permute.xlu0 %764
  %766 = vrot.lane.b32.xlu0 %v406, 3
  %v767 = vpop.permute.xlu0 %766
  %768 = vrot.lane.b32.xlu0 %v409, 3
  %v769 = vpop.permute.xlu0 %768
  %770 = vrot.lane.b32.xlu0 %v411, 3
  %v771 = vpop.permute.xlu0 %770
  %772 = vrot.lane.b32.xlu0 %v414, 3
  %v773 = vpop.permute.xlu0 %772
  %774 = vrot.lane.b32.xlu0 %v416, 3
  %v775 = vpop.permute.xlu0 %774
  %776 = vrot.lane.b32.xlu0 %v419, 3
  %v777 = vpop.permute.xlu0 %776
  %778 = vrot.lane.b32.xlu0 %v421, 3
  %v779 = vpop.permute.xlu0 %778
  %780 = vrot.lane.b32.xlu0 %v424, 3
  %v781 = vpop.permute.xlu0 %780
  %782 = vrot.lane.b32.xlu0 %v426, 3
  %v783 = vpop.permute.xlu0 %782
  %784 = vrot.lane.b32.xlu0 %v429, 3
  %v785 = vpop.permute.xlu0 %784
  %786 = vrot.lane.b32.xlu0 %v431, 3
  %v787 = vpop.permute.xlu0 %786
  %788 = vrot.lane.b32.xlu0 %v434, 3
  %v789 = vpop.permute.xlu0 %788
  %790 = vrot.lane.b32.xlu0 %v436, 3
  %v791 = vpop.permute.xlu0 %790
  %792 = vrot.lane.b32.xlu0 %v439, 3
  %v793 = vpop.permute.xlu0 %792
  %794 = vrot.lane.b32.xlu0 %v441, 3
  %v795 = vpop.permute.xlu0 %794
  %796 = vrot.lane.b32.xlu0 %v444, 3
  %v797 = vpop.permute.xlu0 %796
  %798 = vrot.lane.b32.xlu0 %v446, 3
  %v799 = vpop.permute.xlu0 %798
  %800 = vrot.lane.b32.xlu0 %v449, 3
  %v801 = vpop.permute.xlu0 %800
  %802 = vrot.lane.b32.xlu0 %v451, 3
  %v803 = vpop.permute.xlu0 %802
  %804 = vrot.lane.b32.xlu0 %v454, 3
  %v805 = vpop.permute.xlu0 %804
  %806 = vrot.lane.b32.xlu0 %v456, 3
  %v807 = vpop.permute.xlu0 %806
  %808 = vrot.lane.b32.xlu0 %v459, 3
  %v809 = vpop.permute.xlu0 %808
  %810 = vrot.lane.b32.xlu0 %v461, 3
  %v811 = vpop.permute.xlu0 %810
  %812 = vrot.lane.b32.xlu0 %v464, 3
  %v813 = vpop.permute.xlu0 %812
  %814 = vrot.lane.b32.xlu0 %v466, 3
  %v815 = vpop.permute.xlu0 %814
  %816 = vrot.lane.b32.xlu0 %v469, 3
  %v817 = vpop.permute.xlu0 %816
  %818 = vrot.lane.b32.xlu0 %v471, 3
  %v819 = vpop.permute.xlu0 %818
  %820 = vrot.lane.b32.xlu0 %v474, 3
  %v821 = vpop.permute.xlu0 %820
  %822 = vrot.lane.b32.xlu0 %v476, 3
  %v823 = vpop.permute.xlu0 %822
  %824 = vrot.lane.b32.xlu0 %v479, 3
  %v825 = vpop.permute.xlu0 %824
  %826 = vrot.lane.b32.xlu0 %v481, 3
  %v827 = vpop.permute.xlu0 %826
  %828 = vrot.lane.b32.xlu0 %v484, 3
  %v829 = vpop.permute.xlu0 %828
  %830 = vrot.lane.b32.xlu0 %v486, 3
  %v831 = vpop.permute.xlu0 %830
  %832 = vrot.lane.b32.xlu0 %v489, 3
  %v833 = vpop.permute.xlu0 %832
  %834 = vrot.lane.b32.xlu0 %v491, 3
  %v835 = vpop.permute.xlu0 %834
  %836 = vrot.lane.b32.xlu0 %v494, 3
  %v837 = vpop.permute.xlu0 %836
  %838 = vrot.lane.b32.xlu0 %v496, 3
  %v839 = vpop.permute.xlu0 %838
  %840 = vrot.lane.b32.xlu0 %v499, 3
  %v841 = vpop.permute.xlu0 %840
  %842 = vrot.lane.b32.xlu0 %v501, 3
  %v843 = vpop.permute.xlu0 %842
  %844 = vrot.lane.b32.xlu0 %v504, 3
  %v845 = vpop.permute.xlu0 %844
  %846 = vrot.lane.b32.xlu0 %v506, 3
  %v847 = vpop.permute.xlu0 %846
  %912 = vrot.lane.b32.xlu0 %v510, 6
  %v913 = vpop.permute.xlu0 %912
  %914 = vrot.lane.b32.xlu0 %v512, 6
  %v915 = vpop.permute.xlu0 %914
  %916 = vrot.lane.b32.xlu0 %v515, 6
  %v917 = vpop.permute.xlu0 %916
  %918 = vrot.lane.b32.xlu0 %v517, 6
  %v919 = vpop.permute.xlu0 %918
  %920 = vrot.lane.b32.xlu0 %v520, 6
  %v921 = vpop.permute.xlu0 %920
  %922 = vrot.lane.b32.xlu0 %v522, 6
  %v923 = vpop.permute.xlu0 %922
  %924 = vrot.lane.b32.xlu0 %v525, 6
  %v925 = vpop.permute.xlu0 %924
  %926 = vrot.lane.b32.xlu0 %v527, 6
  %v927 = vpop.permute.xlu0 %926
  %928 = vrot.lane.b32.xlu0 %v530, 6
  %v929 = vpop.permute.xlu0 %928
  %930 = vrot.lane.b32.xlu0 %v532, 6
  %v931 = vpop.permute.xlu0 %930
  %932 = vrot.lane.b32.xlu0 %v535, 6
  %v933 = vpop.permute.xlu0 %932
  %934 = vrot.lane.b32.xlu0 %v537, 6
  %v935 = vpop.permute.xlu0 %934
  %936 = vrot.lane.b32.xlu0 %v540, 6
  %v937 = vpop.permute.xlu0 %936
  %938 = vrot.lane.b32.xlu0 %v542, 6
  %v939 = vpop.permute.xlu0 %938
  %940 = vrot.lane.b32.xlu0 %v545, 6
  %v941 = vpop.permute.xlu0 %940
  %942 = vrot.lane.b32.xlu0 %v547, 6
  %v943 = vpop.permute.xlu0 %942
  %944 = vrot.lane.b32.xlu0 %v550, 6
  %v945 = vpop.permute.xlu0 %944
  %946 = vrot.lane.b32.xlu0 %v552, 6
  %v947 = vpop.permute.xlu0 %946
  %948 = vrot.lane.b32.xlu0 %v555, 6
  %v949 = vpop.permute.xlu0 %948
  %950 = vrot.lane.b32.xlu0 %v557, 6
  %v951 = vpop.permute.xlu0 %950
  %952 = vrot.lane.b32.xlu0 %v560, 6
  %v953 = vpop.permute.xlu0 %952
  %954 = vrot.lane.b32.xlu0 %v562, 6
  %v955 = vpop.permute.xlu0 %954
  %956 = vrot.lane.b32.xlu0 %v565, 6
  %v957 = vpop.permute.xlu0 %956
  %958 = vrot.lane.b32.xlu0 %v567, 6
  %v959 = vpop.permute.xlu0 %958
  %960 = vrot.lane.b32.xlu0 %v570, 6
  %v961 = vpop.permute.xlu0 %960
  %962 = vrot.lane.b32.xlu0 %v572, 6
  %v963 = vpop.permute.xlu0 %962
  %964 = vrot.lane.b32.xlu0 %v575, 6
  %v965 = vpop.permute.xlu0 %964
  %966 = vrot.lane.b32.xlu0 %v577, 6
  %v967 = vpop.permute.xlu0 %966
  %968 = vrot.lane.b32.xlu0 %v580, 6
  %v969 = vpop.permute.xlu0 %968
  %970 = vrot.lane.b32.xlu0 %v582, 6
  %v971 = vpop.permute.xlu0 %970
  %972 = vrot.lane.b32.xlu0 %v585, 6
  %v973 = vpop.permute.xlu0 %972
  %974 = vrot.lane.b32.xlu0 %v587, 6
  %v975 = vpop.permute.xlu0 %974
  %976 = vrot.lane.b32.xlu0 %v590, 6
  %v977 = vpop.permute.xlu0 %976
  %978 = vrot.lane.b32.xlu0 %v592, 6
  %v979 = vpop.permute.xlu0 %978
  %980 = vrot.lane.b32.xlu0 %v595, 6
  %v981 = vpop.permute.xlu0 %980
  %982 = vrot.lane.b32.xlu0 %v597, 6
  %v983 = vpop.permute.xlu0 %982
  %984 = vrot.lane.b32.xlu0 %v600, 6
  %v985 = vpop.permute.xlu0 %984
  %986 = vrot.lane.b32.xlu0 %v602, 6
  %v987 = vpop.permute.xlu0 %986
  %988 = vrot.lane.b32.xlu0 %v605, 6
  %v989 = vpop.permute.xlu0 %988
  %990 = vrot.lane.b32.xlu0 %v607, 6
  %v991 = vpop.permute.xlu0 %990
  %992 = vrot.lane.b32.xlu0 %v610, 6
  %v993 = vpop.permute.xlu0 %992
  %994 = vrot.lane.b32.xlu0 %v612, 6
  %v995 = vpop.permute.xlu0 %994
  %996 = vrot.lane.b32.xlu0 %v615, 6
  %v997 = vpop.permute.xlu0 %996
  %998 = vrot.lane.b32.xlu0 %v617, 6
  %v999 = vpop.permute.xlu0 %998
  %1000 = vrot.lane.b32.xlu0 %v620, 6
  %v1001 = vpop.permute.xlu0 %1000
  %1002 = vrot.lane.b32.xlu0 %v622, 6
  %v1003 = vpop.permute.xlu0 %1002
  %1004 = vrot.lane.b32.xlu0 %v625, 6
  %v1005 = vpop.permute.xlu0 %1004
  %1006 = vrot.lane.b32.xlu0 %v627, 6
  %v1007 = vpop.permute.xlu0 %1006
  %1008 = vrot.lane.b32.xlu0 %v630, 6
  %v1009 = vpop.permute.xlu0 %1008
  %1010 = vrot.lane.b32.xlu0 %v632, 6
  %v1011 = vpop.permute.xlu0 %1010
  %1012 = vrot.lane.b32.xlu0 %v635, 6
  %v1013 = vpop.permute.xlu0 %1012
  %1014 = vrot.lane.b32.xlu0 %v637, 6
  %v1015 = vpop.permute.xlu0 %1014
  %1016 = vrot.lane.b32.xlu0 %v640, 6
  %v1017 = vpop.permute.xlu0 %1016
  %1018 = vrot.lane.b32.xlu0 %v642, 6
  %v1019 = vpop.permute.xlu0 %1018
  %1020 = vrot.lane.b32.xlu0 %v645, 6
  %v1021 = vpop.permute.xlu0 %1020
  %1022 = vrot.lane.b32.xlu0 %v647, 6
  %v1023 = vpop.permute.xlu0 %1022
  %1024 = vrot.lane.b32.xlu0 %v650, 6
  %v1025 = vpop.permute.xlu0 %1024
  %1026 = vrot.lane.b32.xlu0 %v652, 6
  %v1027 = vpop.permute.xlu0 %1026
  %1028 = vrot.lane.b32.xlu0 %v655, 6
  %v1029 = vpop.permute.xlu0 %1028
  %1030 = vrot.lane.b32.xlu0 %v657, 6
  %v1031 = vpop.permute.xlu0 %1030
  %1032 = vrot.lane.b32.xlu0 %v660, 6
  %v1033 = vpop.permute.xlu0 %1032
  %1034 = vrot.lane.b32.xlu0 %v662, 6
  %v1035 = vpop.permute.xlu0 %1034
  %1036 = vrot.lane.b32.xlu0 %v665, 6
  %v1037 = vpop.permute.xlu0 %1036
  %1038 = vrot.lane.b32.xlu0 %v667, 6
  %v1039 = vpop.permute.xlu0 %1038
  %1104 = vrot.lane.b32.xlu0 %v145, 9
  %v1105 = vpop.permute.xlu0 %1104
  %1106 = vrot.lane.b32.xlu0 %v146, 9
  %v1107 = vpop.permute.xlu0 %1106
  %1108 = vrot.lane.b32.xlu0 %v148, 9
  %v1109 = vpop.permute.xlu0 %1108
  %1110 = vrot.lane.b32.xlu0 %v149, 9
  %v1111 = vpop.permute.xlu0 %1110
  %1112 = vrot.lane.b32.xlu0 %v151, 9
  %v1113 = vpop.permute.xlu0 %1112
  %1114 = vrot.lane.b32.xlu0 %v152, 9
  %v1115 = vpop.permute.xlu0 %1114
  %1116 = vrot.lane.b32.xlu0 %v154, 9
  %v1117 = vpop.permute.xlu0 %1116
  %1118 = vrot.lane.b32.xlu0 %v155, 9
  %v1119 = vpop.permute.xlu0 %1118
  %1120 = vrot.lane.b32.xlu0 %v157, 9
  %v1121 = vpop.permute.xlu0 %1120
  %1122 = vrot.lane.b32.xlu0 %v158, 9
  %v1123 = vpop.permute.xlu0 %1122
  %1124 = vrot.lane.b32.xlu0 %v160, 9
  %v1125 = vpop.permute.xlu0 %1124
  %1126 = vrot.lane.b32.xlu0 %v161, 9
  %v1127 = vpop.permute.xlu0 %1126
  %1128 = vrot.lane.b32.xlu0 %v163, 9
  %v1129 = vpop.permute.xlu0 %1128
  %1130 = vrot.lane.b32.xlu0 %v164, 9
  %v1131 = vpop.permute.xlu0 %1130
  %1132 = vrot.lane.b32.xlu0 %v166, 9
  %v1133 = vpop.permute.xlu0 %1132
  %1134 = vrot.lane.b32.xlu0 %v167, 9
  %v1135 = vpop.permute.xlu0 %1134
  %1136 = vrot.lane.b32.xlu0 %v169, 9
  %v1137 = vpop.permute.xlu0 %1136
  %1138 = vrot.lane.b32.xlu0 %v170, 9
  %v1139 = vpop.permute.xlu0 %1138
  %1140 = vrot.lane.b32.xlu0 %v172, 9
  %v1141 = vpop.permute.xlu0 %1140
  %1142 = vrot.lane.b32.xlu0 %v173, 9
  %v1143 = vpop.permute.xlu0 %1142
  %1144 = vrot.lane.b32.xlu0 %v175, 9
  %v1145 = vpop.permute.xlu0 %1144
  %1146 = vrot.lane.b32.xlu0 %v176, 9
  %v1147 = vpop.permute.xlu0 %1146
  %1148 = vrot.lane.b32.xlu0 %v178, 9
  %v1149 = vpop.permute.xlu0 %1148
  %1150 = vrot.lane.b32.xlu0 %v179, 9
  %v1151 = vpop.permute.xlu0 %1150
  %1152 = vrot.lane.b32.xlu0 %v181, 9
  %v1153 = vpop.permute.xlu0 %1152
  %1154 = vrot.lane.b32.xlu0 %v182, 9
  %v1155 = vpop.permute.xlu0 %1154
  %1156 = vrot.lane.b32.xlu0 %v184, 9
  %v1157 = vpop.permute.xlu0 %1156
  %1158 = vrot.lane.b32.xlu0 %v185, 9
  %v1159 = vpop.permute.xlu0 %1158
  %1160 = vrot.lane.b32.xlu0 %v187, 9
  %v1161 = vpop.permute.xlu0 %1160
  %1162 = vrot.lane.b32.xlu0 %v188, 9
  %v1163 = vpop.permute.xlu0 %1162
  %1164 = vrot.lane.b32.xlu0 %v190, 9
  %v1165 = vpop.permute.xlu0 %1164
  %1166 = vrot.lane.b32.xlu0 %v191, 9
  %v1167 = vpop.permute.xlu0 %1166
  %1168 = vrot.lane.b32.xlu0 %v199, 9
  %v1169 = vpop.permute.xlu0 %1168
  %1170 = vrot.lane.b32.xlu0 %v200, 9
  %v1171 = vpop.permute.xlu0 %1170
  %1172 = vrot.lane.b32.xlu0 %v202, 9
  %v1173 = vpop.permute.xlu0 %1172
  %1174 = vrot.lane.b32.xlu0 %v203, 9
  %v1175 = vpop.permute.xlu0 %1174
  %1176 = vrot.lane.b32.xlu0 %v205, 9
  %v1177 = vpop.permute.xlu0 %1176
  %1178 = vrot.lane.b32.xlu0 %v206, 9
  %v1179 = vpop.permute.xlu0 %1178
  %1180 = vrot.lane.b32.xlu0 %v208, 9
  %v1181 = vpop.permute.xlu0 %1180
  %1182 = vrot.lane.b32.xlu0 %v209, 9
  %v1183 = vpop.permute.xlu0 %1182
  %1184 = vrot.lane.b32.xlu0 %v211, 9
  %v1185 = vpop.permute.xlu0 %1184
  %1186 = vrot.lane.b32.xlu0 %v212, 9
  %v1187 = vpop.permute.xlu0 %1186
  %1188 = vrot.lane.b32.xlu0 %v214, 9
  %v1189 = vpop.permute.xlu0 %1188
  %1190 = vrot.lane.b32.xlu0 %v215, 9
  %v1191 = vpop.permute.xlu0 %1190
  %1192 = vrot.lane.b32.xlu0 %v217, 9
  %v1193 = vpop.permute.xlu0 %1192
  %1194 = vrot.lane.b32.xlu0 %v218, 9
  %v1195 = vpop.permute.xlu0 %1194
  %1196 = vrot.lane.b32.xlu0 %v220, 9
  %v1197 = vpop.permute.xlu0 %1196
  %1198 = vrot.lane.b32.xlu0 %v221, 9
  %v1199 = vpop.permute.xlu0 %1198
  %1200 = vrot.lane.b32.xlu0 %v223, 9
  %v1201 = vpop.permute.xlu0 %1200
  %1202 = vrot.lane.b32.xlu0 %v224, 9
  %v1203 = vpop.permute.xlu0 %1202
  %1204 = vrot.lane.b32.xlu0 %v226, 9
  %v1205 = vpop.permute.xlu0 %1204
  %1206 = vrot.lane.b32.xlu0 %v227, 9
  %v1207 = vpop.permute.xlu0 %1206
  %1208 = vrot.lane.b32.xlu0 %v229, 9
  %v1209 = vpop.permute.xlu0 %1208
  %1210 = vrot.lane.b32.xlu0 %v230, 9
  %v1211 = vpop.permute.xlu0 %1210
  %1212 = vrot.lane.b32.xlu0 %v232, 9
  %v1213 = vpop.permute.xlu0 %1212
  %1214 = vrot.lane.b32.xlu0 %v233, 9
  %v1215 = vpop.permute.xlu0 %1214
  %1216 = vrot.lane.b32.xlu0 %v235, 9
  %v1217 = vpop.permute.xlu0 %1216
  %1218 = vrot.lane.b32.xlu0 %v236, 9
  %v1219 = vpop.permute.xlu0 %1218
  %1220 = vrot.lane.b32.xlu0 %v238, 9
  %v1221 = vpop.permute.xlu0 %1220
  %1222 = vrot.lane.b32.xlu0 %v239, 9
  %v1223 = vpop.permute.xlu0 %1222
  %1224 = vrot.lane.b32.xlu0 %v241, 9
  %v1225 = vpop.permute.xlu0 %1224
  %1226 = vrot.lane.b32.xlu0 %v242, 9
  %v1227 = vpop.permute.xlu0 %1226
  %1228 = vrot.lane.b32.xlu0 %v244, 9
  %v1229 = vpop.permute.xlu0 %1228
  %1230 = vrot.lane.b32.xlu0 %v245, 9
  %v1231 = vpop.permute.xlu0 %1230
  %1296 = vrot.lane.b32.xlu0 %v354, 12
  %v1297 = vpop.permute.xlu0 %1296
  %1298 = vrot.lane.b32.xlu0 %v356, 12
  %v1299 = vpop.permute.xlu0 %1298
  %1300 = vrot.lane.b32.xlu0 %v359, 12
  %v1301 = vpop.permute.xlu0 %1300
  %1302 = vrot.lane.b32.xlu0 %v361, 12
  %v1303 = vpop.permute.xlu0 %1302
  %1304 = vrot.lane.b32.xlu0 %v364, 12
  %v1305 = vpop.permute.xlu0 %1304
  %1306 = vrot.lane.b32.xlu0 %v366, 12
  %v1307 = vpop.permute.xlu0 %1306
  %1308 = vrot.lane.b32.xlu0 %v369, 12
  %v1309 = vpop.permute.xlu0 %1308
  %1310 = vrot.lane.b32.xlu0 %v371, 12
  %v1311 = vpop.permute.xlu0 %1310
  %1312 = vrot.lane.b32.xlu0 %v374, 12
  %v1313 = vpop.permute.xlu0 %1312
  %1314 = vrot.lane.b32.xlu0 %v376, 12
  %v1315 = vpop.permute.xlu0 %1314
  %1316 = vrot.lane.b32.xlu0 %v379, 12
  %v1317 = vpop.permute.xlu0 %1316
  %1318 = vrot.lane.b32.xlu0 %v381, 12
  %v1319 = vpop.permute.xlu0 %1318
  %1320 = vrot.lane.b32.xlu0 %v384, 12
  %v1321 = vpop.permute.xlu0 %1320
  %1322 = vrot.lane.b32.xlu0 %v386, 12
  %v1323 = vpop.permute.xlu0 %1322
  %1324 = vrot.lane.b32.xlu0 %v389, 12
  %v1325 = vpop.permute.xlu0 %1324
  %1326 = vrot.lane.b32.xlu0 %v391, 12
  %v1327 = vpop.permute.xlu0 %1326
  %1328 = vrot.lane.b32.xlu0 %v394, 12
  %v1329 = vpop.permute.xlu0 %1328
  %1330 = vrot.lane.b32.xlu0 %v396, 12
  %v1331 = vpop.permute.xlu0 %1330
  %1332 = vrot.lane.b32.xlu0 %v399, 12
  %v1333 = vpop.permute.xlu0 %1332
  %1334 = vrot.lane.b32.xlu0 %v401, 12
  %v1335 = vpop.permute.xlu0 %1334
  %1336 = vrot.lane.b32.xlu0 %v404, 12
  %v1337 = vpop.permute.xlu0 %1336
  %1338 = vrot.lane.b32.xlu0 %v406, 12
  %v1339 = vpop.permute.xlu0 %1338
  %1340 = vrot.lane.b32.xlu0 %v409, 12
  %v1341 = vpop.permute.xlu0 %1340
  %1342 = vrot.lane.b32.xlu0 %v411, 12
  %v1343 = vpop.permute.xlu0 %1342
  %1344 = vrot.lane.b32.xlu0 %v414, 12
  %v1345 = vpop.permute.xlu0 %1344
  %1346 = vrot.lane.b32.xlu0 %v416, 12
  %v1347 = vpop.permute.xlu0 %1346
  %1348 = vrot.lane.b32.xlu0 %v419, 12
  %v1349 = vpop.permute.xlu0 %1348
  %1350 = vrot.lane.b32.xlu0 %v421, 12
  %v1351 = vpop.permute.xlu0 %1350
  %1352 = vrot.lane.b32.xlu0 %v424, 12
  %v1353 = vpop.permute.xlu0 %1352
  %1354 = vrot.lane.b32.xlu0 %v426, 12
  %v1355 = vpop.permute.xlu0 %1354
  %1356 = vrot.lane.b32.xlu0 %v676, 12
  %v1357 = vpop.permute.xlu0 %1356
  %1358 = vrot.lane.b32.xlu0 %v678, 12
  %v1359 = vpop.permute.xlu0 %1358
  %1360 = vrot.lane.b32.xlu0 %v434, 12
  %v1361 = vpop.permute.xlu0 %1360
  %1362 = vrot.lane.b32.xlu0 %v436, 12
  %v1363 = vpop.permute.xlu0 %1362
  %1364 = vrot.lane.b32.xlu0 %v439, 12
  %v1365 = vpop.permute.xlu0 %1364
  %1366 = vrot.lane.b32.xlu0 %v441, 12
  %v1367 = vpop.permute.xlu0 %1366
  %1368 = vrot.lane.b32.xlu0 %v444, 12
  %v1369 = vpop.permute.xlu0 %1368
  %1370 = vrot.lane.b32.xlu0 %v446, 12
  %v1371 = vpop.permute.xlu0 %1370
  %1372 = vrot.lane.b32.xlu0 %v449, 12
  %v1373 = vpop.permute.xlu0 %1372
  %1374 = vrot.lane.b32.xlu0 %v451, 12
  %v1375 = vpop.permute.xlu0 %1374
  %1376 = vrot.lane.b32.xlu0 %v454, 12
  %v1377 = vpop.permute.xlu0 %1376
  %1378 = vrot.lane.b32.xlu0 %v456, 12
  %v1379 = vpop.permute.xlu0 %1378
  %1380 = vrot.lane.b32.xlu0 %v459, 12
  %v1381 = vpop.permute.xlu0 %1380
  %1382 = vrot.lane.b32.xlu0 %v461, 12
  %v1383 = vpop.permute.xlu0 %1382
  %1384 = vrot.lane.b32.xlu0 %v464, 12
  %v1385 = vpop.permute.xlu0 %1384
  %1386 = vrot.lane.b32.xlu0 %v466, 12
  %v1387 = vpop.permute.xlu0 %1386
  %1388 = vrot.lane.b32.xlu0 %v469, 12
  %v1389 = vpop.permute.xlu0 %1388
  %1390 = vrot.lane.b32.xlu0 %v471, 12
  %v1391 = vpop.permute.xlu0 %1390
  %1392 = vrot.lane.b32.xlu0 %v474, 12
  %v1393 = vpop.permute.xlu0 %1392
  %1394 = vrot.lane.b32.xlu0 %v476, 12
  %v1395 = vpop.permute.xlu0 %1394
  %1396 = vrot.lane.b32.xlu0 %v479, 12
  %v1397 = vpop.permute.xlu0 %1396
  %1398 = vrot.lane.b32.xlu0 %v481, 12
  %v1399 = vpop.permute.xlu0 %1398
  %1400 = vrot.lane.b32.xlu0 %v484, 12
  %v1401 = vpop.permute.xlu0 %1400
  %1402 = vrot.lane.b32.xlu0 %v486, 12
  %v1403 = vpop.permute.xlu0 %1402
  %1404 = vrot.lane.b32.xlu0 %v489, 12
  %v1405 = vpop.permute.xlu0 %1404
  %1406 = vrot.lane.b32.xlu0 %v491, 12
  %v1407 = vpop.permute.xlu0 %1406
  %1408 = vrot.lane.b32.xlu0 %v494, 12
  %v1409 = vpop.permute.xlu0 %1408
  %1410 = vrot.lane.b32.xlu0 %v496, 12
  %v1411 = vpop.permute.xlu0 %1410
  %1412 = vrot.lane.b32.xlu0 %v499, 12
  %v1413 = vpop.permute.xlu0 %1412
  %1414 = vrot.lane.b32.xlu0 %v501, 12
  %v1415 = vpop.permute.xlu0 %1414
  %1416 = vrot.lane.b32.xlu0 %v504, 12
  %v1417 = vpop.permute.xlu0 %1416
  %1418 = vrot.lane.b32.xlu0 %v506, 12
  %v1419 = vpop.permute.xlu0 %1418
  %1420 = vrot.lane.b32.xlu0 %v681, 12
  %v1421 = vpop.permute.xlu0 %1420
  %1422 = vrot.lane.b32.xlu0 %v683, 12
  %v1423 = vpop.permute.xlu0 %1422
  %1488 = vrot.lane.b32.xlu0 %v515, 15
  %v1489 = vpop.permute.xlu0 %1488
  %1490 = vrot.lane.b32.xlu0 %v517, 15
  %v1491 = vpop.permute.xlu0 %1490
  %1492 = vrot.lane.b32.xlu0 %v520, 15
  %v1493 = vpop.permute.xlu0 %1492
  %1494 = vrot.lane.b32.xlu0 %v522, 15
  %v1495 = vpop.permute.xlu0 %1494
  %1496 = vrot.lane.b32.xlu0 %v525, 15
  %v1497 = vpop.permute.xlu0 %1496
  %1498 = vrot.lane.b32.xlu0 %v527, 15
  %v1499 = vpop.permute.xlu0 %1498
  %1500 = vrot.lane.b32.xlu0 %v530, 15
  %v1501 = vpop.permute.xlu0 %1500
  %1502 = vrot.lane.b32.xlu0 %v532, 15
  %v1503 = vpop.permute.xlu0 %1502
  %1504 = vrot.lane.b32.xlu0 %v535, 15
  %v1505 = vpop.permute.xlu0 %1504
  %1506 = vrot.lane.b32.xlu0 %v537, 15
  %v1507 = vpop.permute.xlu0 %1506
  %1508 = vrot.lane.b32.xlu0 %v540, 15
  %v1509 = vpop.permute.xlu0 %1508
  %1510 = vrot.lane.b32.xlu0 %v542, 15
  %v1511 = vpop.permute.xlu0 %1510
  %1512 = vrot.lane.b32.xlu0 %v545, 15
  %v1513 = vpop.permute.xlu0 %1512
  %1514 = vrot.lane.b32.xlu0 %v547, 15
  %v1515 = vpop.permute.xlu0 %1514
  %1516 = vrot.lane.b32.xlu0 %v550, 15
  %v1517 = vpop.permute.xlu0 %1516
  %1518 = vrot.lane.b32.xlu0 %v552, 15
  %v1519 = vpop.permute.xlu0 %1518
  %1520 = vrot.lane.b32.xlu0 %v555, 15
  %v1521 = vpop.permute.xlu0 %1520
  %1522 = vrot.lane.b32.xlu0 %v557, 15
  %v1523 = vpop.permute.xlu0 %1522
  %1524 = vrot.lane.b32.xlu0 %v560, 15
  %v1525 = vpop.permute.xlu0 %1524
  %1526 = vrot.lane.b32.xlu0 %v562, 15
  %v1527 = vpop.permute.xlu0 %1526
  %1528 = vrot.lane.b32.xlu0 %v565, 15
  %v1529 = vpop.permute.xlu0 %1528
  %1530 = vrot.lane.b32.xlu0 %v567, 15
  %v1531 = vpop.permute.xlu0 %1530
  %1532 = vrot.lane.b32.xlu0 %v570, 15
  %v1533 = vpop.permute.xlu0 %1532
  %1534 = vrot.lane.b32.xlu0 %v572, 15
  %v1535 = vpop.permute.xlu0 %1534
  %1536 = vrot.lane.b32.xlu0 %v575, 15
  %v1537 = vpop.permute.xlu0 %1536
  %1538 = vrot.lane.b32.xlu0 %v577, 15
  %v1539 = vpop.permute.xlu0 %1538
  %1540 = vrot.lane.b32.xlu0 %v580, 15
  %v1541 = vpop.permute.xlu0 %1540
  %1542 = vrot.lane.b32.xlu0 %v582, 15
  %v1543 = vpop.permute.xlu0 %1542
  %1544 = vrot.lane.b32.xlu0 %v585, 15
  %v1545 = vpop.permute.xlu0 %1544
  %1546 = vrot.lane.b32.xlu0 %v587, 15
  %v1547 = vpop.permute.xlu0 %1546
  %1548 = vrot.lane.b32.xlu0 %v686, 15
  %v1549 = vpop.permute.xlu0 %1548
  %1550 = vrot.lane.b32.xlu0 %v688, 15
  %v1551 = vpop.permute.xlu0 %1550
  %1552 = vrot.lane.b32.xlu0 %v595, 15
  %v1553 = vpop.permute.xlu0 %1552
  %1554 = vrot.lane.b32.xlu0 %v597, 15
  %v1555 = vpop.permute.xlu0 %1554
  %1556 = vrot.lane.b32.xlu0 %v600, 15
  %v1557 = vpop.permute.xlu0 %1556
  %1558 = vrot.lane.b32.xlu0 %v602, 15
  %v1559 = vpop.permute.xlu0 %1558
  %1560 = vrot.lane.b32.xlu0 %v605, 15
  %v1561 = vpop.permute.xlu0 %1560
  %1562 = vrot.lane.b32.xlu0 %v607, 15
  %v1563 = vpop.permute.xlu0 %1562
  %1564 = vrot.lane.b32.xlu0 %v610, 15
  %v1565 = vpop.permute.xlu0 %1564
  %1566 = vrot.lane.b32.xlu0 %v612, 15
  %v1567 = vpop.permute.xlu0 %1566
  %1568 = vrot.lane.b32.xlu0 %v615, 15
  %v1569 = vpop.permute.xlu0 %1568
  %1570 = vrot.lane.b32.xlu0 %v617, 15
  %v1571 = vpop.permute.xlu0 %1570
  %1572 = vrot.lane.b32.xlu0 %v620, 15
  %v1573 = vpop.permute.xlu0 %1572
  %1574 = vrot.lane.b32.xlu0 %v622, 15
  %v1575 = vpop.permute.xlu0 %1574
  %1576 = vrot.lane.b32.xlu0 %v625, 15
  %v1577 = vpop.permute.xlu0 %1576
  %1578 = vrot.lane.b32.xlu0 %v627, 15
  %v1579 = vpop.permute.xlu0 %1578
  %1580 = vrot.lane.b32.xlu0 %v630, 15
  %v1581 = vpop.permute.xlu0 %1580
  %1582 = vrot.lane.b32.xlu0 %v632, 15
  %v1583 = vpop.permute.xlu0 %1582
  %1584 = vrot.lane.b32.xlu0 %v635, 15
  %v1585 = vpop.permute.xlu0 %1584
  %1586 = vrot.lane.b32.xlu0 %v637, 15
  %v1587 = vpop.permute.xlu0 %1586
  %1588 = vrot.lane.b32.xlu0 %v640, 15
  %v1589 = vpop.permute.xlu0 %1588
  %1590 = vrot.lane.b32.xlu0 %v642, 15
  %v1591 = vpop.permute.xlu0 %1590
  %1592 = vrot.lane.b32.xlu0 %v645, 15
  %v1593 = vpop.permute.xlu0 %1592
  %1594 = vrot.lane.b32.xlu0 %v647, 15
  %v1595 = vpop.permute.xlu0 %1594
  %1596 = vrot.lane.b32.xlu0 %v650, 15
  %v1597 = vpop.permute.xlu0 %1596
  %1598 = vrot.lane.b32.xlu0 %v652, 15
  %v1599 = vpop.permute.xlu0 %1598
  %1600 = vrot.lane.b32.xlu0 %v655, 15
  %v1601 = vpop.permute.xlu0 %1600
  %1602 = vrot.lane.b32.xlu0 %v657, 15
  %v1603 = vpop.permute.xlu0 %1602
  %1604 = vrot.lane.b32.xlu0 %v660, 15
  %v1605 = vpop.permute.xlu0 %1604
  %1606 = vrot.lane.b32.xlu0 %v662, 15
  %v1607 = vpop.permute.xlu0 %1606
  %1608 = vrot.lane.b32.xlu0 %v665, 15
  %v1609 = vpop.permute.xlu0 %1608
  %1610 = vrot.lane.b32.xlu0 %v667, 15
  %v1611 = vpop.permute.xlu0 %1610
  %1612 = vrot.lane.b32.xlu0 %v691, 15
  %v1613 = vpop.permute.xlu0 %1612
  %1614 = vrot.lane.b32.xlu0 %v693, 15
  %v1615 = vpop.permute.xlu0 %1614
  %1680 = vrot.lane.b32.xlu0 %v148, 18
  %v1681 = vpop.permute.xlu0 %1680
  %1682 = vrot.lane.b32.xlu0 %v149, 18
  %v1683 = vpop.permute.xlu0 %1682
  %1684 = vrot.lane.b32.xlu0 %v151, 18
  %v1685 = vpop.permute.xlu0 %1684
  %1686 = vrot.lane.b32.xlu0 %v152, 18
  %v1687 = vpop.permute.xlu0 %1686
  %1688 = vrot.lane.b32.xlu0 %v154, 18
  %v1689 = vpop.permute.xlu0 %1688
  %1690 = vrot.lane.b32.xlu0 %v155, 18
  %v1691 = vpop.permute.xlu0 %1690
  %1692 = vrot.lane.b32.xlu0 %v157, 18
  %v1693 = vpop.permute.xlu0 %1692
  %1694 = vrot.lane.b32.xlu0 %v158, 18
  %v1695 = vpop.permute.xlu0 %1694
  %1696 = vrot.lane.b32.xlu0 %v160, 18
  %v1697 = vpop.permute.xlu0 %1696
  %1698 = vrot.lane.b32.xlu0 %v161, 18
  %v1699 = vpop.permute.xlu0 %1698
  %1700 = vrot.lane.b32.xlu0 %v163, 18
  %v1701 = vpop.permute.xlu0 %1700
  %1702 = vrot.lane.b32.xlu0 %v164, 18
  %v1703 = vpop.permute.xlu0 %1702
  %1704 = vrot.lane.b32.xlu0 %v166, 18
  %v1705 = vpop.permute.xlu0 %1704
  %1706 = vrot.lane.b32.xlu0 %v167, 18
  %v1707 = vpop.permute.xlu0 %1706
  %1708 = vrot.lane.b32.xlu0 %v169, 18
  %v1709 = vpop.permute.xlu0 %1708
  %1710 = vrot.lane.b32.xlu0 %v170, 18
  %v1711 = vpop.permute.xlu0 %1710
  %1712 = vrot.lane.b32.xlu0 %v172, 18
  %v1713 = vpop.permute.xlu0 %1712
  %1714 = vrot.lane.b32.xlu0 %v173, 18
  %v1715 = vpop.permute.xlu0 %1714
  %1716 = vrot.lane.b32.xlu0 %v175, 18
  %v1717 = vpop.permute.xlu0 %1716
  %1718 = vrot.lane.b32.xlu0 %v176, 18
  %v1719 = vpop.permute.xlu0 %1718
  %1720 = vrot.lane.b32.xlu0 %v178, 18
  %v1721 = vpop.permute.xlu0 %1720
  %1722 = vrot.lane.b32.xlu0 %v179, 18
  %v1723 = vpop.permute.xlu0 %1722
  %1724 = vrot.lane.b32.xlu0 %v181, 18
  %v1725 = vpop.permute.xlu0 %1724
  %1726 = vrot.lane.b32.xlu0 %v182, 18
  %v1727 = vpop.permute.xlu0 %1726
  %1728 = vrot.lane.b32.xlu0 %v184, 18
  %v1729 = vpop.permute.xlu0 %1728
  %1730 = vrot.lane.b32.xlu0 %v185, 18
  %v1731 = vpop.permute.xlu0 %1730
  %1732 = vrot.lane.b32.xlu0 %v187, 18
  %v1733 = vpop.permute.xlu0 %1732
  %1734 = vrot.lane.b32.xlu0 %v188, 18
  %v1735 = vpop.permute.xlu0 %1734
  %1736 = vrot.lane.b32.xlu0 %v190, 18
  %v1737 = vpop.permute.xlu0 %1736
  %1738 = vrot.lane.b32.xlu0 %v191, 18
  %v1739 = vpop.permute.xlu0 %1738
  %1740 = vrot.lane.b32.xlu0 %v193, 18
  %v1741 = vpop.permute.xlu0 %1740
  %1742 = vrot.lane.b32.xlu0 %v194, 18
  %v1743 = vpop.permute.xlu0 %1742
  %1744 = vrot.lane.b32.xlu0 %v202, 18
  %v1745 = vpop.permute.xlu0 %1744
  %1746 = vrot.lane.b32.xlu0 %v203, 18
  %v1747 = vpop.permute.xlu0 %1746
  %1748 = vrot.lane.b32.xlu0 %v205, 18
  %v1749 = vpop.permute.xlu0 %1748
  %1750 = vrot.lane.b32.xlu0 %v206, 18
  %v1751 = vpop.permute.xlu0 %1750
  %1752 = vrot.lane.b32.xlu0 %v208, 18
  %v1753 = vpop.permute.xlu0 %1752
  %1754 = vrot.lane.b32.xlu0 %v209, 18
  %v1755 = vpop.permute.xlu0 %1754
  %1756 = vrot.lane.b32.xlu0 %v211, 18
  %v1757 = vpop.permute.xlu0 %1756
  %1758 = vrot.lane.b32.xlu0 %v212, 18
  %v1759 = vpop.permute.xlu0 %1758
  %1760 = vrot.lane.b32.xlu0 %v214, 18
  %v1761 = vpop.permute.xlu0 %1760
  %1762 = vrot.lane.b32.xlu0 %v215, 18
  %v1763 = vpop.permute.xlu0 %1762
  %1764 = vrot.lane.b32.xlu0 %v217, 18
  %v1765 = vpop.permute.xlu0 %1764
  %1766 = vrot.lane.b32.xlu0 %v218, 18
  %v1767 = vpop.permute.xlu0 %1766
  %1768 = vrot.lane.b32.xlu0 %v220, 18
  %v1769 = vpop.permute.xlu0 %1768
  %1770 = vrot.lane.b32.xlu0 %v221, 18
  %v1771 = vpop.permute.xlu0 %1770
  %1772 = vrot.lane.b32.xlu0 %v223, 18
  %v1773 = vpop.permute.xlu0 %1772
  %1774 = vrot.lane.b32.xlu0 %v224, 18
  %v1775 = vpop.permute.xlu0 %1774
  %1776 = vrot.lane.b32.xlu0 %v226, 18
  %v1777 = vpop.permute.xlu0 %1776
  %1778 = vrot.lane.b32.xlu0 %v227, 18
  %v1779 = vpop.permute.xlu0 %1778
  %1780 = vrot.lane.b32.xlu0 %v229, 18
  %v1781 = vpop.permute.xlu0 %1780
  %1782 = vrot.lane.b32.xlu0 %v230, 18
  %v1783 = vpop.permute.xlu0 %1782
  %1784 = vrot.lane.b32.xlu0 %v232, 18
  %v1785 = vpop.permute.xlu0 %1784
  %1786 = vrot.lane.b32.xlu0 %v233, 18
  %v1787 = vpop.permute.xlu0 %1786
  %1788 = vrot.lane.b32.xlu0 %v235, 18
  %v1789 = vpop.permute.xlu0 %1788
  %1790 = vrot.lane.b32.xlu0 %v236, 18
  %v1791 = vpop.permute.xlu0 %1790
  %1792 = vrot.lane.b32.xlu0 %v238, 18
  %v1793 = vpop.permute.xlu0 %1792
  %1794 = vrot.lane.b32.xlu0 %v239, 18
  %v1795 = vpop.permute.xlu0 %1794
  %1796 = vrot.lane.b32.xlu0 %v241, 18
  %v1797 = vpop.permute.xlu0 %1796
  %1798 = vrot.lane.b32.xlu0 %v242, 18
  %v1799 = vpop.permute.xlu0 %1798
  %1800 = vrot.lane.b32.xlu0 %v244, 18
  %v1801 = vpop.permute.xlu0 %1800
  %1802 = vrot.lane.b32.xlu0 %v245, 18
  %v1803 = vpop.permute.xlu0 %1802
  %1804 = vrot.lane.b32.xlu0 %v247, 18
  %v1805 = vpop.permute.xlu0 %1804
  %1806 = vrot.lane.b32.xlu0 %v248, 18
  %v1807 = vpop.permute.xlu0 %1806
  %1872 = vrot.lane.b32.xlu0 %v359, 21
  %v1873 = vpop.permute.xlu0 %1872
  %1874 = vrot.lane.b32.xlu0 %v361, 21
  %v1875 = vpop.permute.xlu0 %1874
  %1876 = vrot.lane.b32.xlu0 %v364, 21
  %v1877 = vpop.permute.xlu0 %1876
  %1878 = vrot.lane.b32.xlu0 %v366, 21
  %v1879 = vpop.permute.xlu0 %1878
  %1880 = vrot.lane.b32.xlu0 %v369, 21
  %v1881 = vpop.permute.xlu0 %1880
  %1882 = vrot.lane.b32.xlu0 %v371, 21
  %v1883 = vpop.permute.xlu0 %1882
  %1884 = vrot.lane.b32.xlu0 %v374, 21
  %v1885 = vpop.permute.xlu0 %1884
  %1886 = vrot.lane.b32.xlu0 %v376, 21
  %v1887 = vpop.permute.xlu0 %1886
  %1888 = vrot.lane.b32.xlu0 %v379, 21
  %v1889 = vpop.permute.xlu0 %1888
  %1890 = vrot.lane.b32.xlu0 %v381, 21
  %v1891 = vpop.permute.xlu0 %1890
  %1892 = vrot.lane.b32.xlu0 %v384, 21
  %v1893 = vpop.permute.xlu0 %1892
  %1894 = vrot.lane.b32.xlu0 %v386, 21
  %v1895 = vpop.permute.xlu0 %1894
  %1896 = vrot.lane.b32.xlu0 %v389, 21
  %v1897 = vpop.permute.xlu0 %1896
  %1898 = vrot.lane.b32.xlu0 %v391, 21
  %v1899 = vpop.permute.xlu0 %1898
  %1900 = vrot.lane.b32.xlu0 %v394, 21
  %v1901 = vpop.permute.xlu0 %1900
  %1902 = vrot.lane.b32.xlu0 %v396, 21
  %v1903 = vpop.permute.xlu0 %1902
  %1904 = vrot.lane.b32.xlu0 %v399, 21
  %v1905 = vpop.permute.xlu0 %1904
  %1906 = vrot.lane.b32.xlu0 %v401, 21
  %v1907 = vpop.permute.xlu0 %1906
  %1908 = vrot.lane.b32.xlu0 %v404, 21
  %v1909 = vpop.permute.xlu0 %1908
  %1910 = vrot.lane.b32.xlu0 %v406, 21
  %v1911 = vpop.permute.xlu0 %1910
  %1912 = vrot.lane.b32.xlu0 %v409, 21
  %v1913 = vpop.permute.xlu0 %1912
  %1914 = vrot.lane.b32.xlu0 %v411, 21
  %v1915 = vpop.permute.xlu0 %1914
  %1916 = vrot.lane.b32.xlu0 %v414, 21
  %v1917 = vpop.permute.xlu0 %1916
  %1918 = vrot.lane.b32.xlu0 %v416, 21
  %v1919 = vpop.permute.xlu0 %1918
  %1920 = vrot.lane.b32.xlu0 %v419, 21
  %v1921 = vpop.permute.xlu0 %1920
  %1922 = vrot.lane.b32.xlu0 %v421, 21
  %v1923 = vpop.permute.xlu0 %1922
  %1924 = vrot.lane.b32.xlu0 %v424, 21
  %v1925 = vpop.permute.xlu0 %1924
  %1926 = vrot.lane.b32.xlu0 %v426, 21
  %v1927 = vpop.permute.xlu0 %1926
  %1928 = vrot.lane.b32.xlu0 %v676, 21
  %v1929 = vpop.permute.xlu0 %1928
  %1930 = vrot.lane.b32.xlu0 %v678, 21
  %v1931 = vpop.permute.xlu0 %1930
  %1932 = vrot.lane.b32.xlu0 %v702, 21
  %v1933 = vpop.permute.xlu0 %1932
  %1934 = vrot.lane.b32.xlu0 %v704, 21
  %v1935 = vpop.permute.xlu0 %1934
  %1936 = vrot.lane.b32.xlu0 %v439, 21
  %v1937 = vpop.permute.xlu0 %1936
  %1938 = vrot.lane.b32.xlu0 %v441, 21
  %v1939 = vpop.permute.xlu0 %1938
  %1940 = vrot.lane.b32.xlu0 %v444, 21
  %v1941 = vpop.permute.xlu0 %1940
  %1942 = vrot.lane.b32.xlu0 %v446, 21
  %v1943 = vpop.permute.xlu0 %1942
  %1944 = vrot.lane.b32.xlu0 %v449, 21
  %v1945 = vpop.permute.xlu0 %1944
  %1946 = vrot.lane.b32.xlu0 %v451, 21
  %v1947 = vpop.permute.xlu0 %1946
  %1948 = vrot.lane.b32.xlu0 %v454, 21
  %v1949 = vpop.permute.xlu0 %1948
  %1950 = vrot.lane.b32.xlu0 %v456, 21
  %v1951 = vpop.permute.xlu0 %1950
  %1952 = vrot.lane.b32.xlu0 %v459, 21
  %v1953 = vpop.permute.xlu0 %1952
  %1954 = vrot.lane.b32.xlu0 %v461, 21
  %v1955 = vpop.permute.xlu0 %1954
  %1956 = vrot.lane.b32.xlu0 %v464, 21
  %v1957 = vpop.permute.xlu0 %1956
  %1958 = vrot.lane.b32.xlu0 %v466, 21
  %v1959 = vpop.permute.xlu0 %1958
  %1960 = vrot.lane.b32.xlu0 %v469, 21
  %v1961 = vpop.permute.xlu0 %1960
  %1962 = vrot.lane.b32.xlu0 %v471, 21
  %v1963 = vpop.permute.xlu0 %1962
  %1964 = vrot.lane.b32.xlu0 %v474, 21
  %v1965 = vpop.permute.xlu0 %1964
  %1966 = vrot.lane.b32.xlu0 %v476, 21
  %v1967 = vpop.permute.xlu0 %1966
  %1968 = vrot.lane.b32.xlu0 %v479, 21
  %v1969 = vpop.permute.xlu0 %1968
  %1970 = vrot.lane.b32.xlu0 %v481, 21
  %v1971 = vpop.permute.xlu0 %1970
  %1972 = vrot.lane.b32.xlu0 %v484, 21
  %v1973 = vpop.permute.xlu0 %1972
  %1974 = vrot.lane.b32.xlu0 %v486, 21
  %v1975 = vpop.permute.xlu0 %1974
  %1976 = vrot.lane.b32.xlu0 %v489, 21
  %v1977 = vpop.permute.xlu0 %1976
  %1978 = vrot.lane.b32.xlu0 %v491, 21
  %v1979 = vpop.permute.xlu0 %1978
  %1980 = vrot.lane.b32.xlu0 %v494, 21
  %v1981 = vpop.permute.xlu0 %1980
  %1982 = vrot.lane.b32.xlu0 %v496, 21
  %v1983 = vpop.permute.xlu0 %1982
  %1984 = vrot.lane.b32.xlu0 %v499, 21
  %v1985 = vpop.permute.xlu0 %1984
  %1986 = vrot.lane.b32.xlu0 %v501, 21
  %v1987 = vpop.permute.xlu0 %1986
  %1988 = vrot.lane.b32.xlu0 %v504, 21
  %v1989 = vpop.permute.xlu0 %1988
  %1990 = vrot.lane.b32.xlu0 %v506, 21
  %v1991 = vpop.permute.xlu0 %1990
  %1992 = vrot.lane.b32.xlu0 %v681, 21
  %v1993 = vpop.permute.xlu0 %1992
  %1994 = vrot.lane.b32.xlu0 %v683, 21
  %v1995 = vpop.permute.xlu0 %1994
  %1996 = vrot.lane.b32.xlu0 %v707, 21
  %v1997 = vpop.permute.xlu0 %1996
  %1998 = vrot.lane.b32.xlu0 %v709, 21
  %v1999 = vpop.permute.xlu0 %1998
  %2064 = vrot.lane.b32.xlu0 %v520, 24
  %v2065 = vpop.permute.xlu0 %2064
  %2066 = vrot.lane.b32.xlu0 %v522, 24
  %v2067 = vpop.permute.xlu0 %2066
  %2068 = vrot.lane.b32.xlu0 %v525, 24
  %v2069 = vpop.permute.xlu0 %2068
  %2070 = vrot.lane.b32.xlu0 %v527, 24
  %v2071 = vpop.permute.xlu0 %2070
  %2072 = vrot.lane.b32.xlu0 %v530, 24
  %v2073 = vpop.permute.xlu0 %2072
  %2074 = vrot.lane.b32.xlu0 %v532, 24
  %v2075 = vpop.permute.xlu0 %2074
  %2076 = vrot.lane.b32.xlu0 %v535, 24
  %v2077 = vpop.permute.xlu0 %2076
  %2078 = vrot.lane.b32.xlu0 %v537, 24
  %v2079 = vpop.permute.xlu0 %2078
  %2080 = vrot.lane.b32.xlu0 %v540, 24
  %v2081 = vpop.permute.xlu0 %2080
  %2082 = vrot.lane.b32.xlu0 %v542, 24
  %v2083 = vpop.permute.xlu0 %2082
  %2084 = vrot.lane.b32.xlu0 %v545, 24
  %v2085 = vpop.permute.xlu0 %2084
  %2086 = vrot.lane.b32.xlu0 %v547, 24
  %v2087 = vpop.permute.xlu0 %2086
  %2088 = vrot.lane.b32.xlu0 %v550, 24
  %v2089 = vpop.permute.xlu0 %2088
  %2090 = vrot.lane.b32.xlu0 %v552, 24
  %v2091 = vpop.permute.xlu0 %2090
  %2092 = vrot.lane.b32.xlu0 %v555, 24
  %v2093 = vpop.permute.xlu0 %2092
  %2094 = vrot.lane.b32.xlu0 %v557, 24
  %v2095 = vpop.permute.xlu0 %2094
  %2096 = vrot.lane.b32.xlu0 %v560, 24
  %v2097 = vpop.permute.xlu0 %2096
  %2098 = vrot.lane.b32.xlu0 %v562, 24
  %v2099 = vpop.permute.xlu0 %2098
  %2100 = vrot.lane.b32.xlu0 %v565, 24
  %v2101 = vpop.permute.xlu0 %2100
  %2102 = vrot.lane.b32.xlu0 %v567, 24
  %v2103 = vpop.permute.xlu0 %2102
  %2104 = vrot.lane.b32.xlu0 %v570, 24
  %v2105 = vpop.permute.xlu0 %2104
  %2106 = vrot.lane.b32.xlu0 %v572, 24
  %v2107 = vpop.permute.xlu0 %2106
  %2108 = vrot.lane.b32.xlu0 %v575, 24
  %v2109 = vpop.permute.xlu0 %2108
  %2110 = vrot.lane.b32.xlu0 %v577, 24
  %v2111 = vpop.permute.xlu0 %2110
  %2112 = vrot.lane.b32.xlu0 %v580, 24
  %v2113 = vpop.permute.xlu0 %2112
  %2114 = vrot.lane.b32.xlu0 %v582, 24
  %v2115 = vpop.permute.xlu0 %2114
  %2116 = vrot.lane.b32.xlu0 %v585, 24
  %v2117 = vpop.permute.xlu0 %2116
  %2118 = vrot.lane.b32.xlu0 %v587, 24
  %v2119 = vpop.permute.xlu0 %2118
  %2120 = vrot.lane.b32.xlu0 %v686, 24
  %v2121 = vpop.permute.xlu0 %2120
  %2122 = vrot.lane.b32.xlu0 %v688, 24
  %v2123 = vpop.permute.xlu0 %2122
  %2124 = vrot.lane.b32.xlu0 %v712, 24
  %v2125 = vpop.permute.xlu0 %2124
  %2126 = vrot.lane.b32.xlu0 %v714, 24
  %v2127 = vpop.permute.xlu0 %2126
  %2128 = vrot.lane.b32.xlu0 %v600, 24
  %v2129 = vpop.permute.xlu0 %2128
  %2130 = vrot.lane.b32.xlu0 %v602, 24
  %v2131 = vpop.permute.xlu0 %2130
  %2132 = vrot.lane.b32.xlu0 %v605, 24
  %v2133 = vpop.permute.xlu0 %2132
  %2134 = vrot.lane.b32.xlu0 %v607, 24
  %v2135 = vpop.permute.xlu0 %2134
  %2136 = vrot.lane.b32.xlu0 %v610, 24
  %v2137 = vpop.permute.xlu0 %2136
  %2138 = vrot.lane.b32.xlu0 %v612, 24
  %v2139 = vpop.permute.xlu0 %2138
  %2140 = vrot.lane.b32.xlu0 %v615, 24
  %v2141 = vpop.permute.xlu0 %2140
  %2142 = vrot.lane.b32.xlu0 %v617, 24
  %v2143 = vpop.permute.xlu0 %2142
  %2144 = vrot.lane.b32.xlu0 %v620, 24
  %v2145 = vpop.permute.xlu0 %2144
  %2146 = vrot.lane.b32.xlu0 %v622, 24
  %v2147 = vpop.permute.xlu0 %2146
  %2148 = vrot.lane.b32.xlu0 %v625, 24
  %v2149 = vpop.permute.xlu0 %2148
  %2150 = vrot.lane.b32.xlu0 %v627, 24
  %v2151 = vpop.permute.xlu0 %2150
  %2152 = vrot.lane.b32.xlu0 %v630, 24
  %v2153 = vpop.permute.xlu0 %2152
  %2154 = vrot.lane.b32.xlu0 %v632, 24
  %v2155 = vpop.permute.xlu0 %2154
  %2156 = vrot.lane.b32.xlu0 %v635, 24
  %v2157 = vpop.permute.xlu0 %2156
  %2158 = vrot.lane.b32.xlu0 %v637, 24
  %v2159 = vpop.permute.xlu0 %2158
  %2160 = vrot.lane.b32.xlu0 %v640, 24
  %v2161 = vpop.permute.xlu0 %2160
  %2162 = vrot.lane.b32.xlu0 %v642, 24
  %v2163 = vpop.permute.xlu0 %2162
  %2164 = vrot.lane.b32.xlu0 %v645, 24
  %v2165 = vpop.permute.xlu0 %2164
  %2166 = vrot.lane.b32.xlu0 %v647, 24
  %v2167 = vpop.permute.xlu0 %2166
  %2168 = vrot.lane.b32.xlu0 %v650, 24
  %v2169 = vpop.permute.xlu0 %2168
  %2170 = vrot.lane.b32.xlu0 %v652, 24
  %v2171 = vpop.permute.xlu0 %2170
  %2172 = vrot.lane.b32.xlu0 %v655, 24
  %v2173 = vpop.permute.xlu0 %2172
  %2174 = vrot.lane.b32.xlu0 %v657, 24
  %v2175 = vpop.permute.xlu0 %2174
  %2176 = vrot.lane.b32.xlu0 %v660, 24
  %v2177 = vpop.permute.xlu0 %2176
  %2178 = vrot.lane.b32.xlu0 %v662, 24
  %v2179 = vpop.permute.xlu0 %2178
  %2180 = vrot.lane.b32.xlu0 %v665, 24
  %v2181 = vpop.permute.xlu0 %2180
  %2182 = vrot.lane.b32.xlu0 %v667, 24
  %v2183 = vpop.permute.xlu0 %2182
  %2184 = vrot.lane.b32.xlu0 %v691, 24
  %v2185 = vpop.permute.xlu0 %2184
  %2186 = vrot.lane.b32.xlu0 %v693, 24
  %v2187 = vpop.permute.xlu0 %2186
  %2188 = vrot.lane.b32.xlu0 %v717, 24
  %v2189 = vpop.permute.xlu0 %2188
  %2190 = vrot.lane.b32.xlu0 %v719, 24
  %v2191 = vpop.permute.xlu0 %2190
  %vm2256 = vcmask 23552
  %v2257 = vsel %vm2256, %v142, %v721
  %v2258 = vsel %vm2256, %v143, %v723
  %v2259 = vsel %vm2256, %v145, %v725
  %v2260 = vsel %vm2256, %v146, %v727
  %v2261 = vsel %vm2256, %v148, %v729
  %v2262 = vsel %vm2256, %v149, %v731
  %v2263 = vsel %vm2256, %v151, %v733
  %v2264 = vsel %vm2256, %v152, %v735
  %v2265 = vsel %vm2256, %v154, %v737
  %v2266 = vsel %vm2256, %v155, %v739
  %v2267 = vsel %vm2256, %v157, %v741
  %v2268 = vsel %vm2256, %v158, %v743
  %v2269 = vsel %vm2256, %v160, %v745
  %v2270 = vsel %vm2256, %v161, %v747
  %v2271 = vsel %vm2256, %v163, %v749
  %v2272 = vsel %vm2256, %v164, %v751
  %v2273 = vsel %vm2256, %v166, %v753
  %v2274 = vsel %vm2256, %v167, %v755
  %v2275 = vsel %vm2256, %v169, %v757
  %v2276 = vsel %vm2256, %v170, %v759
  %v2277 = vsel %vm2256, %v172, %v761
  %v2278 = vsel %vm2256, %v173, %v763
  %v2279 = vsel %vm2256, %v175, %v765
  %v2280 = vsel %vm2256, %v176, %v767
  %v2281 = vsel %vm2256, %v178, %v769
  %v2282 = vsel %vm2256, %v179, %v771
  %v2283 = vsel %vm2256, %v181, %v773
  %v2284 = vsel %vm2256, %v182, %v775
  %v2285 = vsel %vm2256, %v184, %v777
  %v2286 = vsel %vm2256, %v185, %v779
  %v2287 = vsel %vm2256, %v187, %v781
  %v2288 = vsel %vm2256, %v188, %v783
  %v2289 = vsel %vm2256, %v196, %v785
  %v2290 = vsel %vm2256, %v197, %v787
  %v2291 = vsel %vm2256, %v199, %v789
  %v2292 = vsel %vm2256, %v200, %v791
  %v2293 = vsel %vm2256, %v202, %v793
  %v2294 = vsel %vm2256, %v203, %v795
  %v2295 = vsel %vm2256, %v205, %v797
  %v2296 = vsel %vm2256, %v206, %v799
  %v2297 = vsel %vm2256, %v208, %v801
  %v2298 = vsel %vm2256, %v209, %v803
  %v2299 = vsel %vm2256, %v211, %v805
  %v2300 = vsel %vm2256, %v212, %v807
  %v2301 = vsel %vm2256, %v214, %v809
  %v2302 = vsel %vm2256, %v215, %v811
  %v2303 = vsel %vm2256, %v217, %v813
  %v2304 = vsel %vm2256, %v218, %v815
  %v2305 = vsel %vm2256, %v220, %v817
  %v2306 = vsel %vm2256, %v221, %v819
  %v2307 = vsel %vm2256, %v223, %v821
  %v2308 = vsel %vm2256, %v224, %v823
  %v2309 = vsel %vm2256, %v226, %v825
  %v2310 = vsel %vm2256, %v227, %v827
  %v2311 = vsel %vm2256, %v229, %v829
  %v2312 = vsel %vm2256, %v230, %v831
  %v2313 = vsel %vm2256, %v232, %v833
  %v2314 = vsel %vm2256, %v233, %v835
  %v2315 = vsel %vm2256, %v235, %v837
  %v2316 = vsel %vm2256, %v236, %v839
  %v2317 = vsel %vm2256, %v238, %v841
  %v2318 = vsel %vm2256, %v239, %v843
  %v2319 = vsel %vm2256, %v241, %v845
  %v2320 = vsel %vm2256, %v242, %v847
  %vm2321 = vcmask 48128
  %v2322 = vsel %vm2321, %v2257, %v913
  %v2323 = vsel %vm2321, %v2258, %v915
  %v2324 = vsel %vm2321, %v2259, %v917
  %v2325 = vsel %vm2321, %v2260, %v919
  %v2326 = vsel %vm2321, %v2261, %v921
  %v2327 = vsel %vm2321, %v2262, %v923
  %v2328 = vsel %vm2321, %v2263, %v925
  %v2329 = vsel %vm2321, %v2264, %v927
  %v2330 = vsel %vm2321, %v2265, %v929
  %v2331 = vsel %vm2321, %v2266, %v931
  %v2332 = vsel %vm2321, %v2267, %v933
  %v2333 = vsel %vm2321, %v2268, %v935
  %v2334 = vsel %vm2321, %v2269, %v937
  %v2335 = vsel %vm2321, %v2270, %v939
  %v2336 = vsel %vm2321, %v2271, %v941
  %v2337 = vsel %vm2321, %v2272, %v943
  %v2338 = vsel %vm2321, %v2273, %v945
  %v2339 = vsel %vm2321, %v2274, %v947
  %v2340 = vsel %vm2321, %v2275, %v949
  %v2341 = vsel %vm2321, %v2276, %v951
  %v2342 = vsel %vm2321, %v2277, %v953
  %v2343 = vsel %vm2321, %v2278, %v955
  %v2344 = vsel %vm2321, %v2279, %v957
  %v2345 = vsel %vm2321, %v2280, %v959
  %v2346 = vsel %vm2321, %v2281, %v961
  %v2347 = vsel %vm2321, %v2282, %v963
  %v2348 = vsel %vm2321, %v2283, %v965
  %v2349 = vsel %vm2321, %v2284, %v967
  %v2350 = vsel %vm2321, %v2285, %v969
  %v2351 = vsel %vm2321, %v2286, %v971
  %v2352 = vsel %vm2321, %v2287, %v973
  %v2353 = vsel %vm2321, %v2288, %v975
  %v2354 = vsel %vm2321, %v2289, %v977
  %v2355 = vsel %vm2321, %v2290, %v979
  %v2356 = vsel %vm2321, %v2291, %v981
  %v2357 = vsel %vm2321, %v2292, %v983
  %v2358 = vsel %vm2321, %v2293, %v985
  %v2359 = vsel %vm2321, %v2294, %v987
  %v2360 = vsel %vm2321, %v2295, %v989
  %v2361 = vsel %vm2321, %v2296, %v991
  %v2362 = vsel %vm2321, %v2297, %v993
  %v2363 = vsel %vm2321, %v2298, %v995
  %v2364 = vsel %vm2321, %v2299, %v997
  %v2365 = vsel %vm2321, %v2300, %v999
  %v2366 = vsel %vm2321, %v2301, %v1001
  %v2367 = vsel %vm2321, %v2302, %v1003
  %v2368 = vsel %vm2321, %v2303, %v1005
  %v2369 = vsel %vm2321, %v2304, %v1007
  %v2370 = vsel %vm2321, %v2305, %v1009
  %v2371 = vsel %vm2321, %v2306, %v1011
  %v2372 = vsel %vm2321, %v2307, %v1013
  %v2373 = vsel %vm2321, %v2308, %v1015
  %v2374 = vsel %vm2321, %v2309, %v1017
  %v2375 = vsel %vm2321, %v2310, %v1019
  %v2376 = vsel %vm2321, %v2311, %v1021
  %v2377 = vsel %vm2321, %v2312, %v1023
  %v2378 = vsel %vm2321, %v2313, %v1025
  %v2379 = vsel %vm2321, %v2314, %v1027
  %v2380 = vsel %vm2321, %v2315, %v1029
  %v2381 = vsel %vm2321, %v2316, %v1031
  %v2382 = vsel %vm2321, %v2317, %v1033
  %v2383 = vsel %vm2321, %v2318, %v1035
  %v2384 = vsel %vm2321, %v2319, %v1037
  %v2385 = vsel %vm2321, %v2320, %v1039
  %vm2386 = vcmask 72704
  %v2387 = vsel %vm2386, %v2322, %v1105
  %v2388 = vsel %vm2386, %v2323, %v1107
  %v2389 = vsel %vm2386, %v2324, %v1109
  %v2390 = vsel %vm2386, %v2325, %v1111
  %v2391 = vsel %vm2386, %v2326, %v1113
  %v2392 = vsel %vm2386, %v2327, %v1115
  %v2393 = vsel %vm2386, %v2328, %v1117
  %v2394 = vsel %vm2386, %v2329, %v1119
  %v2395 = vsel %vm2386, %v2330, %v1121
  %v2396 = vsel %vm2386, %v2331, %v1123
  %v2397 = vsel %vm2386, %v2332, %v1125
  %v2398 = vsel %vm2386, %v2333, %v1127
  %v2399 = vsel %vm2386, %v2334, %v1129
  %v2400 = vsel %vm2386, %v2335, %v1131
  %v2401 = vsel %vm2386, %v2336, %v1133
  %v2402 = vsel %vm2386, %v2337, %v1135
  %v2403 = vsel %vm2386, %v2338, %v1137
  %v2404 = vsel %vm2386, %v2339, %v1139
  %v2405 = vsel %vm2386, %v2340, %v1141
  %v2406 = vsel %vm2386, %v2341, %v1143
  %v2407 = vsel %vm2386, %v2342, %v1145
  %v2408 = vsel %vm2386, %v2343, %v1147
  %v2409 = vsel %vm2386, %v2344, %v1149
  %v2410 = vsel %vm2386, %v2345, %v1151
  %v2411 = vsel %vm2386, %v2346, %v1153
  %v2412 = vsel %vm2386, %v2347, %v1155
  %v2413 = vsel %vm2386, %v2348, %v1157
  %v2414 = vsel %vm2386, %v2349, %v1159
  %v2415 = vsel %vm2386, %v2350, %v1161
  %v2416 = vsel %vm2386, %v2351, %v1163
  %v2417 = vsel %vm2386, %v2352, %v1165
  %v2418 = vsel %vm2386, %v2353, %v1167
  %v2419 = vsel %vm2386, %v2354, %v1169
  %v2420 = vsel %vm2386, %v2355, %v1171
  %v2421 = vsel %vm2386, %v2356, %v1173
  %v2422 = vsel %vm2386, %v2357, %v1175
  %v2423 = vsel %vm2386, %v2358, %v1177
  %v2424 = vsel %vm2386, %v2359, %v1179
  %v2425 = vsel %vm2386, %v2360, %v1181
  %v2426 = vsel %vm2386, %v2361, %v1183
  %v2427 = vsel %vm2386, %v2362, %v1185
  %v2428 = vsel %vm2386, %v2363, %v1187
  %v2429 = vsel %vm2386, %v2364, %v1189
  %v2430 = vsel %vm2386, %v2365, %v1191
  %v2431 = vsel %vm2386, %v2366, %v1193
  %v2432 = vsel %vm2386, %v2367, %v1195
  %v2433 = vsel %vm2386, %v2368, %v1197
  %v2434 = vsel %vm2386, %v2369, %v1199
  %v2435 = vsel %vm2386, %v2370, %v1201
  %v2436 = vsel %vm2386, %v2371, %v1203
  %v2437 = vsel %vm2386, %v2372, %v1205
  %v2438 = vsel %vm2386, %v2373, %v1207
  %v2439 = vsel %vm2386, %v2374, %v1209
  %v2440 = vsel %vm2386, %v2375, %v1211
  %v2441 = vsel %vm2386, %v2376, %v1213
  %v2442 = vsel %vm2386, %v2377, %v1215
  %v2443 = vsel %vm2386, %v2378, %v1217
  %v2444 = vsel %vm2386, %v2379, %v1219
  %v2445 = vsel %vm2386, %v2380, %v1221
  %v2446 = vsel %vm2386, %v2381, %v1223
  %v2447 = vsel %vm2386, %v2382, %v1225
  %v2448 = vsel %vm2386, %v2383, %v1227
  %v2449 = vsel %vm2386, %v2384, %v1229
  %v2450 = vsel %vm2386, %v2385, %v1231
  %vm2451 = vcmask 97280
  %v2452 = vsel %vm2451, %v2387, %v1297
  %v2453 = vsel %vm2451, %v2388, %v1299
  %v2454 = vsel %vm2451, %v2389, %v1301
  %v2455 = vsel %vm2451, %v2390, %v1303
  %v2456 = vsel %vm2451, %v2391, %v1305
  %v2457 = vsel %vm2451, %v2392, %v1307
  %v2458 = vsel %vm2451, %v2393, %v1309
  %v2459 = vsel %vm2451, %v2394, %v1311
  %v2460 = vsel %vm2451, %v2395, %v1313
  %v2461 = vsel %vm2451, %v2396, %v1315
  %v2462 = vsel %vm2451, %v2397, %v1317
  %v2463 = vsel %vm2451, %v2398, %v1319
  %v2464 = vsel %vm2451, %v2399, %v1321
  %v2465 = vsel %vm2451, %v2400, %v1323
  %v2466 = vsel %vm2451, %v2401, %v1325
  %v2467 = vsel %vm2451, %v2402, %v1327
  %v2468 = vsel %vm2451, %v2403, %v1329
  %v2469 = vsel %vm2451, %v2404, %v1331
  %v2470 = vsel %vm2451, %v2405, %v1333
  %v2471 = vsel %vm2451, %v2406, %v1335
  %v2472 = vsel %vm2451, %v2407, %v1337
  %v2473 = vsel %vm2451, %v2408, %v1339
  %v2474 = vsel %vm2451, %v2409, %v1341
  %v2475 = vsel %vm2451, %v2410, %v1343
  %v2476 = vsel %vm2451, %v2411, %v1345
  %v2477 = vsel %vm2451, %v2412, %v1347
  %v2478 = vsel %vm2451, %v2413, %v1349
  %v2479 = vsel %vm2451, %v2414, %v1351
  %v2480 = vsel %vm2451, %v2415, %v1353
  %v2481 = vsel %vm2451, %v2416, %v1355
  %v2482 = vsel %vm2451, %v2417, %v1357
  %v2483 = vsel %vm2451, %v2418, %v1359
  %v2484 = vsel %vm2451, %v2419, %v1361
  %v2485 = vsel %vm2451, %v2420, %v1363
  %v2486 = vsel %vm2451, %v2421, %v1365
  %v2487 = vsel %vm2451, %v2422, %v1367
  %v2488 = vsel %vm2451, %v2423, %v1369
  %v2489 = vsel %vm2451, %v2424, %v1371
  %v2490 = vsel %vm2451, %v2425, %v1373
  %v2491 = vsel %vm2451, %v2426, %v1375
  %v2492 = vsel %vm2451, %v2427, %v1377
  %v2493 = vsel %vm2451, %v2428, %v1379
  %v2494 = vsel %vm2451, %v2429, %v1381
  %v2495 = vsel %vm2451, %v2430, %v1383
  %v2496 = vsel %vm2451, %v2431, %v1385
  %v2497 = vsel %vm2451, %v2432, %v1387
  %v2498 = vsel %vm2451, %v2433, %v1389
  %v2499 = vsel %vm2451, %v2434, %v1391
  %v2500 = vsel %vm2451, %v2435, %v1393
  %v2501 = vsel %vm2451, %v2436, %v1395
  %v2502 = vsel %vm2451, %v2437, %v1397
  %v2503 = vsel %vm2451, %v2438, %v1399
  %v2504 = vsel %vm2451, %v2439, %v1401
  %v2505 = vsel %vm2451, %v2440, %v1403
  %v2506 = vsel %vm2451, %v2441, %v1405
  %v2507 = vsel %vm2451, %v2442, %v1407
  %v2508 = vsel %vm2451, %v2443, %v1409
  %v2509 = vsel %vm2451, %v2444, %v1411
  %v2510 = vsel %vm2451, %v2445, %v1413
  %v2511 = vsel %vm2451, %v2446, %v1415
  %v2512 = vsel %vm2451, %v2447, %v1417
  %v2513 = vsel %vm2451, %v2448, %v1419
  %v2514 = vsel %vm2451, %v2449, %v1421
  %v2515 = vsel %vm2451, %v2450, %v1423
  %vm2516 = vcmask 121856
  %v2517 = vsel %vm2516, %v2452, %v1489
  %v2518 = vsel %vm2516, %v2453, %v1491
  %v2519 = vsel %vm2516, %v2454, %v1493
  %v2520 = vsel %vm2516, %v2455, %v1495
  %v2521 = vsel %vm2516, %v2456, %v1497
  %v2522 = vsel %vm2516, %v2457, %v1499
  %v2523 = vsel %vm2516, %v2458, %v1501
  %v2524 = vsel %vm2516, %v2459, %v1503
  %v2525 = vsel %vm2516, %v2460, %v1505
  %v2526 = vsel %vm2516, %v2461, %v1507
  %v2527 = vsel %vm2516, %v2462, %v1509
  %v2528 = vsel %vm2516, %v2463, %v1511
  %v2529 = vsel %vm2516, %v2464, %v1513
  %v2530 = vsel %vm2516, %v2465, %v1515
  %v2531 = vsel %vm2516, %v2466, %v1517
  %v2532 = vsel %vm2516, %v2467, %v1519
  %v2533 = vsel %vm2516, %v2468, %v1521
  %v2534 = vsel %vm2516, %v2469, %v1523
  %v2535 = vsel %vm2516, %v2470, %v1525
  %v2536 = vsel %vm2516, %v2471, %v1527
  %v2537 = vsel %vm2516, %v2472, %v1529
  %v2538 = vsel %vm2516, %v2473, %v1531
  %v2539 = vsel %vm2516, %v2474, %v1533
  %v2540 = vsel %vm2516, %v2475, %v1535
  %v2541 = vsel %vm2516, %v2476, %v1537
  %v2542 = vsel %vm2516, %v2477, %v1539
  %v2543 = vsel %vm2516, %v2478, %v1541
  %v2544 = vsel %vm2516, %v2479, %v1543
  %v2545 = vsel %vm2516, %v2480, %v1545
  %v2546 = vsel %vm2516, %v2481, %v1547
  %v2547 = vsel %vm2516, %v2482, %v1549
  %v2548 = vsel %vm2516, %v2483, %v1551
  %v2549 = vsel %vm2516, %v2484, %v1553
  %v2550 = vsel %vm2516, %v2485, %v1555
  %v2551 = vsel %vm2516, %v2486, %v1557
  %v2552 = vsel %vm2516, %v2487, %v1559
  %v2553 = vsel %vm2516, %v2488, %v1561
  %v2554 = vsel %vm2516, %v2489, %v1563
  %v2555 = vsel %vm2516, %v2490, %v1565
  %v2556 = vsel %vm2516, %v2491, %v1567
  %v2557 = vsel %vm2516, %v2492, %v1569
  %v2558 = vsel %vm2516, %v2493, %v1571
  %v2559 = vsel %vm2516, %v2494, %v1573
  %v2560 = vsel %vm2516, %v2495, %v1575
  %v2561 = vsel %vm2516, %v2496, %v1577
  %v2562 = vsel %vm2516, %v2497, %v1579
  %v2563 = vsel %vm2516, %v2498, %v1581
  %v2564 = vsel %vm2516, %v2499, %v1583
  %v2565 = vsel %vm2516, %v2500, %v1585
  %v2566 = vsel %vm2516, %v2501, %v1587
  %v2567 = vsel %vm2516, %v2502, %v1589
  %v2568 = vsel %vm2516, %v2503, %v1591
  %v2569 = vsel %vm2516, %v2504, %v1593
  %v2570 = vsel %vm2516, %v2505, %v1595
  %v2571 = vsel %vm2516, %v2506, %v1597
  %v2572 = vsel %vm2516, %v2507, %v1599
  %v2573 = vsel %vm2516, %v2508, %v1601
  %v2574 = vsel %vm2516, %v2509, %v1603
  %v2575 = vsel %vm2516, %v2510, %v1605
  %v2576 = vsel %vm2516, %v2511, %v1607
  %v2577 = vsel %vm2516, %v2512, %v1609
  %v2578 = vsel %vm2516, %v2513, %v1611
  %v2579 = vsel %vm2516, %v2514, %v1613
  %v2580 = vsel %vm2516, %v2515, %v1615
  %vm2581 = vcmask 146432
  %v2582 = vsel %vm2581, %v2517, %v1681
  %v2583 = vsel %vm2581, %v2518, %v1683
  %v2584 = vsel %vm2581, %v2519, %v1685
  %v2585 = vsel %vm2581, %v2520, %v1687
  %v2586 = vsel %vm2581, %v2521, %v1689
  %v2587 = vsel %vm2581, %v2522, %v1691
  %v2588 = vsel %vm2581, %v2523, %v1693
  %v2589 = vsel %vm2581, %v2524, %v1695
  %v2590 = vsel %vm2581, %v2525, %v1697
  %v2591 = vsel %vm2581, %v2526, %v1699
  %v2592 = vsel %vm2581, %v2527, %v1701
  %v2593 = vsel %vm2581, %v2528, %v1703
  %v2594 = vsel %vm2581, %v2529, %v1705
  %v2595 = vsel %vm2581, %v2530, %v1707
  %v2596 = vsel %vm2581, %v2531, %v1709
  %v2597 = vsel %vm2581, %v2532, %v1711
  %v2598 = vsel %vm2581, %v2533, %v1713
  %v2599 = vsel %vm2581, %v2534, %v1715
  %v2600 = vsel %vm2581, %v2535, %v1717
  %v2601 = vsel %vm2581, %v2536, %v1719
  %v2602 = vsel %vm2581, %v2537, %v1721
  %v2603 = vsel %vm2581, %v2538, %v1723
  %v2604 = vsel %vm2581, %v2539, %v1725
  %v2605 = vsel %vm2581, %v2540, %v1727
  %v2606 = vsel %vm2581, %v2541, %v1729
  %v2607 = vsel %vm2581, %v2542, %v1731
  %v2608 = vsel %vm2581, %v2543, %v1733
  %v2609 = vsel %vm2581, %v2544, %v1735
  %v2610 = vsel %vm2581, %v2545, %v1737
  %v2611 = vsel %vm2581, %v2546, %v1739
  %v2612 = vsel %vm2581, %v2547, %v1741
  %v2613 = vsel %vm2581, %v2548, %v1743
  %v2614 = vsel %vm2581, %v2549, %v1745
  %v2615 = vsel %vm2581, %v2550, %v1747
  %v2616 = vsel %vm2581, %v2551, %v1749
  %v2617 = vsel %vm2581, %v2552, %v1751
  %v2618 = vsel %vm2581, %v2553, %v1753
  %v2619 = vsel %vm2581, %v2554, %v1755
  %v2620 = vsel %vm2581, %v2555, %v1757
  %v2621 = vsel %vm2581, %v2556, %v1759
  %v2622 = vsel %vm2581, %v2557, %v1761
  %v2623 = vsel %vm2581, %v2558, %v1763
  %v2624 = vsel %vm2581, %v2559, %v1765
  %v2625 = vsel %vm2581, %v2560, %v1767
  %v2626 = vsel %vm2581, %v2561, %v1769
  %v2627 = vsel %vm2581, %v2562, %v1771
  %v2628 = vsel %vm2581, %v2563, %v1773
  %v2629 = vsel %vm2581, %v2564, %v1775
  %v2630 = vsel %vm2581, %v2565, %v1777
  %v2631 = vsel %vm2581, %v2566, %v1779
  %v2632 = vsel %vm2581, %v2567, %v1781
  %v2633 = vsel %vm2581, %v2568, %v1783
  %v2634 = vsel %vm2581, %v2569, %v1785
  %v2635 = vsel %vm2581, %v2570, %v1787
  %v2636 = vsel %vm2581, %v2571, %v1789
  %v2637 = vsel %vm2581, %v2572, %v1791
  %v2638 = vsel %vm2581, %v2573, %v1793
  %v2639 = vsel %vm2581, %v2574, %v1795
  %v2640 = vsel %vm2581, %v2575, %v1797
  %v2641 = vsel %vm2581, %v2576, %v1799
  %v2642 = vsel %vm2581, %v2577, %v1801
  %v2643 = vsel %vm2581, %v2578, %v1803
  %v2644 = vsel %vm2581, %v2579, %v1805
  %v2645 = vsel %vm2581, %v2580, %v1807
  %vm2646 = vcmask 171008
  %v2647 = vsel %vm2646, %v2582, %v1873
  %v2648 = vsel %vm2646, %v2583, %v1875
  %v2649 = vsel %vm2646, %v2584, %v1877
  %v2650 = vsel %vm2646, %v2585, %v1879
  %v2651 = vsel %vm2646, %v2586, %v1881
  %v2652 = vsel %vm2646, %v2587, %v1883
  %v2653 = vsel %vm2646, %v2588, %v1885
  %v2654 = vsel %vm2646, %v2589, %v1887
  %v2655 = vsel %vm2646, %v2590, %v1889
  %v2656 = vsel %vm2646, %v2591, %v1891
  %v2657 = vsel %vm2646, %v2592, %v1893
  %v2658 = vsel %vm2646, %v2593, %v1895
  %v2659 = vsel %vm2646, %v2594, %v1897
  %v2660 = vsel %vm2646, %v2595, %v1899
  %v2661 = vsel %vm2646, %v2596, %v1901
  %v2662 = vsel %vm2646, %v2597, %v1903
  %v2663 = vsel %vm2646, %v2598, %v1905
  %v2664 = vsel %vm2646, %v2599, %v1907
  %v2665 = vsel %vm2646, %v2600, %v1909
  %v2666 = vsel %vm2646, %v2601, %v1911
  %v2667 = vsel %vm2646, %v2602, %v1913
  %v2668 = vsel %vm2646, %v2603, %v1915
  %v2669 = vsel %vm2646, %v2604, %v1917
  %v2670 = vsel %vm2646, %v2605, %v1919
  %v2671 = vsel %vm2646, %v2606, %v1921
  %v2672 = vsel %vm2646, %v2607, %v1923
  %v2673 = vsel %vm2646, %v2608, %v1925
  %v2674 = vsel %vm2646, %v2609, %v1927
  %v2675 = vsel %vm2646, %v2610, %v1929
  %v2676 = vsel %vm2646, %v2611, %v1931
  %v2677 = vsel %vm2646, %v2612, %v1933
  %v2678 = vsel %vm2646, %v2613, %v1935
  %v2679 = vsel %vm2646, %v2614, %v1937
  %v2680 = vsel %vm2646, %v2615, %v1939
  %v2681 = vsel %vm2646, %v2616, %v1941
  %v2682 = vsel %vm2646, %v2617, %v1943
  %v2683 = vsel %vm2646, %v2618, %v1945
  %v2684 = vsel %vm2646, %v2619, %v1947
  %v2685 = vsel %vm2646, %v2620, %v1949
  %v2686 = vsel %vm2646, %v2621, %v1951
  %v2687 = vsel %vm2646, %v2622, %v1953
  %v2688 = vsel %vm2646, %v2623, %v1955
  %v2689 = vsel %vm2646, %v2624, %v1957
  %v2690 = vsel %vm2646, %v2625, %v1959
  %v2691 = vsel %vm2646, %v2626, %v1961
  %v2692 = vsel %vm2646, %v2627, %v1963
  %v2693 = vsel %vm2646, %v2628, %v1965
  %v2694 = vsel %vm2646, %v2629, %v1967
  %v2695 = vsel %vm2646, %v2630, %v1969
  %v2696 = vsel %vm2646, %v2631, %v1971
  %v2697 = vsel %vm2646, %v2632, %v1973
  %v2698 = vsel %vm2646, %v2633, %v1975
  %v2699 = vsel %vm2646, %v2634, %v1977
  %v2700 = vsel %vm2646, %v2635, %v1979
  %v2701 = vsel %vm2646, %v2636, %v1981
  %v2702 = vsel %vm2646, %v2637, %v1983
  %v2703 = vsel %vm2646, %v2638, %v1985
  %v2704 = vsel %vm2646, %v2639, %v1987
  %v2705 = vsel %vm2646, %v2640, %v1989
  %v2706 = vsel %vm2646, %v2641, %v1991
  %v2707 = vsel %vm2646, %v2642, %v1993
  %v2708 = vsel %vm2646, %v2643, %v1995
  %v2709 = vsel %vm2646, %v2644, %v1997
  %v2710 = vsel %vm2646, %v2645, %v1999
  %vm2711 = vcmask 195584
  %v2712 = vsel %vm2711, %v2647, %v2065
  %v2713 = vsel %vm2711, %v2648, %v2067
  %v2714 = vsel %vm2711, %v2649, %v2069
  %v2715 = vsel %vm2711, %v2650, %v2071
  %v2716 = vsel %vm2711, %v2651, %v2073
  %v2717 = vsel %vm2711, %v2652, %v2075
  %v2718 = vsel %vm2711, %v2653, %v2077
  %v2719 = vsel %vm2711, %v2654, %v2079
  %v2720 = vsel %vm2711, %v2655, %v2081
  %v2721 = vsel %vm2711, %v2656, %v2083
  %v2722 = vsel %vm2711, %v2657, %v2085
  %v2723 = vsel %vm2711, %v2658, %v2087
  %v2724 = vsel %vm2711, %v2659, %v2089
  %v2725 = vsel %vm2711, %v2660, %v2091
  %v2726 = vsel %vm2711, %v2661, %v2093
  %v2727 = vsel %vm2711, %v2662, %v2095
  %v2728 = vsel %vm2711, %v2663, %v2097
  %v2729 = vsel %vm2711, %v2664, %v2099
  %v2730 = vsel %vm2711, %v2665, %v2101
  %v2731 = vsel %vm2711, %v2666, %v2103
  %v2732 = vsel %vm2711, %v2667, %v2105
  %v2733 = vsel %vm2711, %v2668, %v2107
  %v2734 = vsel %vm2711, %v2669, %v2109
  %v2735 = vsel %vm2711, %v2670, %v2111
  %v2736 = vsel %vm2711, %v2671, %v2113
  %v2737 = vsel %vm2711, %v2672, %v2115
  %v2738 = vsel %vm2711, %v2673, %v2117
  %v2739 = vsel %vm2711, %v2674, %v2119
  %v2740 = vsel %vm2711, %v2675, %v2121
  %v2741 = vsel %vm2711, %v2676, %v2123
  %v2742 = vsel %vm2711, %v2677, %v2125
  %v2743 = vsel %vm2711, %v2678, %v2127
  %v2744 = vsel %vm2711, %v2679, %v2129
  %v2745 = vsel %vm2711, %v2680, %v2131
  %v2746 = vsel %vm2711, %v2681, %v2133
  %v2747 = vsel %vm2711, %v2682, %v2135
  %v2748 = vsel %vm2711, %v2683, %v2137
  %v2749 = vsel %vm2711, %v2684, %v2139
  %v2750 = vsel %vm2711, %v2685, %v2141
  %v2751 = vsel %vm2711, %v2686, %v2143
  %v2752 = vsel %vm2711, %v2687, %v2145
  %v2753 = vsel %vm2711, %v2688, %v2147
  %v2754 = vsel %vm2711, %v2689, %v2149
  %v2755 = vsel %vm2711, %v2690, %v2151
  %v2756 = vsel %vm2711, %v2691, %v2153
  %v2757 = vsel %vm2711, %v2692, %v2155
  %v2758 = vsel %vm2711, %v2693, %v2157
  %v2759 = vsel %vm2711, %v2694, %v2159
  %v2760 = vsel %vm2711, %v2695, %v2161
  %v2761 = vsel %vm2711, %v2696, %v2163
  %v2762 = vsel %vm2711, %v2697, %v2165
  %v2763 = vsel %vm2711, %v2698, %v2167
  %v2764 = vsel %vm2711, %v2699, %v2169
  %v2765 = vsel %vm2711, %v2700, %v2171
  %v2766 = vsel %vm2711, %v2701, %v2173
  %v2767 = vsel %vm2711, %v2702, %v2175
  %v2768 = vsel %vm2711, %v2703, %v2177
  %v2769 = vsel %vm2711, %v2704, %v2179
  %v2770 = vsel %vm2711, %v2705, %v2181
  %v2771 = vsel %vm2711, %v2706, %v2183
  %v2772 = vsel %vm2711, %v2707, %v2185
  %v2773 = vsel %vm2711, %v2708, %v2187
  %v2774 = vsel %vm2711, %v2709, %v2189
  %v2775 = vsel %vm2711, %v2710, %v2191
  %v2776 = vld [vmem:[%s1] sm:$0xff]
  %v2777 = vld [vmem:[%s1 + $0x8] sm:$0xff]
  %v2778 = vld [vmem:[%s1 + $0x10] sm:$0xff]
  %v2779 = vld [vmem:[%s1 + $0x18] sm:$0x7]
  %v2780 = vld [vmem:[%s2] sm:$0x1]
  %v2782 = vlaneseq
  %v2783 = vshrl.u32 %v2782, 7
  %v2784 = vsub.s32 0, %v2783
  %v2785 = vrot.slane %v2780, %v2784
  %vm2787 = vcmask 220160
  %v2789 = vsel %vm2787, %v2712, 0
  %v2792 = vsel %vm2787, %v2713, 0
  %v2795 = vsel %vm2787, %v2714, 0
  %v2798 = vsel %vm2787, %v2715, 0
  %v2801 = vsel %vm2787, %v2716, 0
  %v2804 = vsel %vm2787, %v2717, 0
  %v2807 = vsel %vm2787, %v2718, 0
  %v2810 = vsel %vm2787, %v2719, 0
  %v2813 = vsel %vm2787, %v2720, 0
  %v2816 = vsel %vm2787, %v2721, 0
  %v2819 = vsel %vm2787, %v2722, 0
  %v2822 = vsel %vm2787, %v2723, 0
  %v2825 = vsel %vm2787, %v2724, 0
  %v2828 = vsel %vm2787, %v2725, 0
  %v2831 = vsel %vm2787, %v2726, 0
  %v2834 = vsel %vm2787, %v2727, 0
  %v2837 = vsel %vm2787, %v2728, 0
  %v2840 = vsel %vm2787, %v2729, 0
  %v2843 = vsel %vm2787, %v2730, 0
  %v2846 = vsel %vm2787, %v2731, 0
  %v2849 = vsel %vm2787, %v2732, 0
  %v2852 = vsel %vm2787, %v2733, 0
  %v2855 = vsel %vm2787, %v2734, 0
  %v2858 = vsel %vm2787, %v2735, 0
  %v2861 = vsel %vm2787, %v2736, 0
  %v2864 = vsel %vm2787, %v2737, 0
  %v2867 = vsel %vm2787, %v2738, 0
  %v2870 = vsel %vm2787, %v2739, 0
  %v2873 = vsel %vm2787, %v2740, 0
  %v2876 = vsel %vm2787, %v2741, 0
  %v2879 = vsel %vm2787, %v2742, 0
  %v2882 = vsel %vm2787, %v2743, 0
  %v2885 = vsel %vm2787, %v2744, 0
  %v2888 = vsel %vm2787, %v2745, 0
  %v2891 = vsel %vm2787, %v2746, 0
  %v2894 = vsel %vm2787, %v2747, 0
  %v2897 = vsel %vm2787, %v2748, 0
  %v2900 = vsel %vm2787, %v2749, 0
  %v2903 = vsel %vm2787, %v2750, 0
  %v2906 = vsel %vm2787, %v2751, 0
  %v2909 = vsel %vm2787, %v2752, 0
  %v2912 = vsel %vm2787, %v2753, 0
  %v2915 = vsel %vm2787, %v2754, 0
  %v2918 = vsel %vm2787, %v2755, 0
  %v2921 = vsel %vm2787, %v2756, 0
  %v2924 = vsel %vm2787, %v2757, 0
  %v2927 = vsel %vm2787, %v2758, 0
  %v2930 = vsel %vm2787, %v2759, 0
  %v2933 = vsel %vm2787, %v2760, 0
  %v2936 = vsel %vm2787, %v2761, 0
  %v2939 = vsel %vm2787, %v2762, 0
  %v2942 = vsel %vm2787, %v2763, 0
  %v2945 = vsel %vm2787, %v2764, 0
  %v2948 = vsel %vm2787, %v2765, 0
  %v2951 = vsel %vm2787, %v2766, 0
  %v2954 = vsel %vm2787, %v2767, 0
  %v2957 = vsel %vm2787, %v2768, 0
  %v2960 = vsel %vm2787, %v2769, 0
  %v2963 = vsel %vm2787, %v2770, 0
  %v2966 = vsel %vm2787, %v2771, 0
  %v2969 = vsel %vm2787, %v2772, 0
  %v2972 = vsel %vm2787, %v2773, 0
  %v2975 = vsel %vm2787, %v2774, 0
  %v2978 = vsel %vm2787, %v2775, 0
  %vm2980 = vcmask 1042432
  %v2982 = vsel %vm2980, %v2779, 0
  %2984 = vmatprep.subr.mxu0 0.0
  %2985 = vmatpush1.msra.mxu0 %v2776
  %2986 = vmatprep.subr.mxu0 0.0
  %2987 = vmatpush1.msra.mxu0 %v2777
  %2988 = vmatprep.subr.mxu0 0.0
  %2989 = vmatpush1.msra.mxu0 %v2778
  %2990 = vmatprep.subr.mxu0 0.0
  %2991 = vmatpush1.msra.mxu0 %v2982
  %2992 = vmatprep.subr.mxu0 0.0
  %2993 = vmatpush1.msra.mxu0 0.0
  %2994 = vmatprep.subr.mxu0 0.0
  %2995 = vmatpush1.msra.mxu0 0.0
  %2996 = vmatprep.subr.mxu0 0.0
  %2997 = vmatpush1.msra.mxu0 0.0
  %2998 = vmatprep.subr.mxu0 0.0
  %2999 = vmatpush1.msra.mxu0 0.0
  %3000 = vmatprep.subr.mxu0 0.0
  %3001 = vmatpush1.msra.mxu0 0.0
  %3002 = vmatprep.subr.mxu0 0.0
  %3003 = vmatpush1.msra.mxu0 0.0
  %3004 = vmatprep.subr.mxu0 0.0
  %3005 = vmatpush1.msra.mxu0 0.0
  %3006 = vmatprep.subr.mxu0 0.0
  %3007 = vmatpush1.msra.mxu0 0.0
  %3008 = vmatprep.subr.mxu0 0.0
  %3009 = vmatpush1.msra.mxu0 0.0
  %3010 = vmatprep.subr.mxu0 0.0
  %3011 = vmatpush1.msra.mxu0 0.0
  %3012 = vmatprep.subr.mxu0 0.0
  %3013 = vmatpush1.msra.mxu0 0.0
  %3014 = vmatprep.subr.mxu0 0.0
  %3015 = vmatpush1.msra.mxu0 0.0
  %3016 = vmatprep.subr.mxu0 0.0
  %3017 = vmatpush1.msra.mxu0 0.0
  %3018 = vmatprep.subr.mxu0 0.0
  %3019 = vmatpush1.msra.mxu0 0.0
  %3020 = vmatprep.subr.mxu0 0.0
  %3021 = vmatpush1.msra.mxu0 0.0
  %3022 = vmatprep.subr.mxu0 0.0
  %3023 = vmatpush1.msra.mxu0 0.0
  %3024 = vmatprep.subr.mxu0 0.0
  %3025 = vmatpush1.msra.mxu0 0.0
  %3026 = vmatprep.subr.mxu0 0.0
  %3027 = vmatpush1.msra.mxu0 0.0
  %3028 = vmatprep.subr.mxu0 0.0
  %3029 = vmatpush1.msra.mxu0 0.0
  %3030 = vmatprep.subr.mxu0 0.0
  %3031 = vmatpush1.msra.mxu0 0.0
  %3032 = vmatprep.subr.mxu0 0.0
  %3033 = vmatpush1.msra.mxu0 0.0
  %3034 = vmatprep.subr.mxu0 0.0
  %3035 = vmatpush1.msra.mxu0 0.0
  %3036 = vmatprep.subr.mxu0 0.0
  %3037 = vmatpush1.msra.mxu0 0.0
  %3038 = vmatprep.subr.mxu0 0.0
  %3039 = vmatpush1.msra.mxu0 0.0
  %3040 = vmatprep.subr.mxu0 0.0
  %3041 = vmatpush1.msra.mxu0 0.0
  %3042 = vmatprep.subr.mxu0 0.0
  %3043 = vmatpush1.msra.mxu0 0.0
  %3044 = vmatprep.subr.mxu0 0.0
  %3045 = vmatpush1.msra.mxu0 0.0
  %3046 = vmatprep.subr.mxu0 0.0
  %3047 = vmatpush1.msra.mxu0 0.0
  %3048 = vmatprep.mubr.f32.mxu0 0.0
  %3049 = vmatmul.mubr.f32.gmra.mrb[0].mxu0 %v2789
  %v3050 = vpop.f32.mrb[0].mxu0
  %v3051 = vadd.f32 %v2785, %v3050
  %v3052 = vpop.f32.mrb[0].mxu0
  %3053 = vmatprep.mubr.f32.mxu0 0.0
  %3054 = vmatmul.mubr.f32.gmra.mrb[0].mxu0 %v2792
  %v3055 = vpop.f32.mrb[0].mxu0
  %v3056 = vadd.f32 %v2785, %v3055
  %v3057 = vpop.f32.mrb[0].mxu0
  %3058 = vmatprep.mubr.f32.mxu0 0.0
  %3059 = vmatmul.mubr.f32.gmra.mrb[0].mxu0 %v2795
  %v3060 = vpop.f32.mrb[0].mxu0
  %v3061 = vadd.f32 %v2785, %v3060
  %v3062 = vpop.f32.mrb[0].mxu0
  %3063 = vmatprep.mubr.f32.mxu0 0.0
  %3064 = vmatmul.mubr.f32.gmra.mrb[0].mxu0 %v2798
  %v3065 = vpop.f32.mrb[0].mxu0
  %v3066 = vadd.f32 %v2785, %v3065
  %v3067 = vpop.f32.mrb[0].mxu0
  %3068 = vmatprep.mubr.f32.mxu0 0.0
  %3069 = vmatmul.mubr.f32.gmra.mrb[0].mxu0 %v2801
  %v3070 = vpop.f32.mrb[0].mxu0
  %v3071 = vadd.f32 %v2785, %v3070
  %v3072 = vpop.f32.mrb[0].mxu0
  %3073 = vmatprep.mubr.f32.mxu0 0.0
  %3074 = vmatmul.mubr.f32.gmra.mrb[0].mxu0 %v2804
  %v3075 = vpop.f32.mrb[0].mxu0
  %v3076 = vadd.f32 %v2785, %v3075
  %v3077 = vpop.f32.mrb[0].mxu0
  %3078 = vmatprep.mubr.f32.mxu0 0.0
  %3079 = vmatmul.mubr.f32.gmra.mrb[0].mxu0 %v2807
  %v3080 = vpop.f32.mrb[0].mxu0
  %v3081 = vadd.f32 %v2785, %v3080
  %v3082 = vpop.f32.mrb[0].mxu0
  %3083 = vmatprep.mubr.f32.mxu0 0.0
  %3084 = vmatmul.mubr.f32.gmra.mrb[0].mxu0 %v2810
  %v3085 = vpop.f32.mrb[0].mxu0
  %v3086 = vadd.f32 %v2785, %v3085
  %v3087 = vpop.f32.mrb[0].mxu0
  %3088 = vmatprep.mubr.f32.mxu0 0.0
  %3089 = vmatmul.mubr.f32.gmra.mrb[0].mxu0 %v2813
  %v3090 = vpop.f32.mrb[0].mxu0
  %v3091 = vadd.f32 %v2785, %v3090
  %v3092 = vpop.f32.mrb[0].mxu0
  %3093 = vmatprep.mubr.f32.mxu0 0.0
  %3094 = vmatmul.mubr.f32.gmra.mrb[0].mxu0 %v2816
  %v3095 = vpop.f32.mrb[0].mxu0
  %v3096 = vadd.f32 %v2785, %v3095
  %v3097 = vpop.f32.mrb[0].mxu0
  %3098 = vmatprep.mubr.f32.mxu0 0.0
  %3099 = vmatmul.mubr.f32.gmra.mrb[0].mxu0 %v2819
  %v3100 = vpop.f32.mrb[0].mxu0
  %v3101 = vadd.f32 %v2785, %v3100
  %v3102 = vpop.f32.mrb[0].mxu0
  %3103 = vmatprep.mubr.f32.mxu0 0.0
  %3104 = vmatmul.mubr.f32.gmra.mrb[0].mxu0 %v2822
  %v3105 = vpop.f32.mrb[0].mxu0
  %v3106 = vadd.f32 %v2785, %v3105
  %v3107 = vpop.f32.mrb[0].mxu0
  %3108 = vmatprep.mubr.f32.mxu0 0.0
  %3109 = vmatmul.mubr.f32.gmra.mrb[0].mxu0 %v2825
  %v3110 = vpop.f32.mrb[0].mxu0
  %v3111 = vadd.f32 %v2785, %v3110
  %v3112 = vpop.f32.mrb[0].mxu0
  %3113 = vmatprep.mubr.f32.mxu0 0.0
  %3114 = vmatmul.mubr.f32.gmra.mrb[0].mxu0 %v2828
  %v3115 = vpop.f32.mrb[0].mxu0
  %v3116 = vadd.f32 %v2785, %v3115
  %v3117 = vpop.f32.mrb[0].mxu0
  %3118 = vmatprep.mubr.f32.mxu0 0.0
  %3119 = vmatmul.mubr.f32.gmra.mrb[0].mxu0 %v2831
  %v3120 = vpop.f32.mrb[0].mxu0
  %v3121 = vadd.f32 %v2785, %v3120
  %v3122 = vpop.f32.mrb[0].mxu0
  %3123 = vmatprep.mubr.f32.mxu0 0.0
  %3124 = vmatmul.mubr.f32.gmra.mrb[0].mxu0 %v2834
  %v3125 = vpop.f32.mrb[0].mxu0
  %v3126 = vadd.f32 %v2785, %v3125
  %v3127 = vpop.f32.mrb[0].mxu0
  %3128 = vmatprep.mubr.f32.mxu0 0.0
  %3129 = vmatmul.mubr.f32.gmra.mrb[0].mxu0 %v2837
  %v3130 = vpop.f32.mrb[0].mxu0
  %v3131 = vadd.f32 %v2785, %v3130
  %v3132 = vpop.f32.mrb[0].mxu0
  %3133 = vmatprep.mubr.f32.mxu0 0.0
  %3134 = vmatmul.mubr.f32.gmra.mrb[0].mxu0 %v2840
  %v3135 = vpop.f32.mrb[0].mxu0
  %v3136 = vadd.f32 %v2785, %v3135
  %v3137 = vpop.f32.mrb[0].mxu0
  %3138 = vmatprep.mubr.f32.mxu0 0.0
  %3139 = vmatmul.mubr.f32.gmra.mrb[0].mxu0 %v2843
  %v3140 = vpop.f32.mrb[0].mxu0
  %v3141 = vadd.f32 %v2785, %v3140
  %v3142 = vpop.f32.mrb[0].mxu0
  %3143 = vmatprep.mubr.f32.mxu0 0.0
  %3144 = vmatmul.mubr.f32.gmra.mrb[0].mxu0 %v2846
  %v3145 = vpop.f32.mrb[0].mxu0
  %v3146 = vadd.f32 %v2785, %v3145
  %v3147 = vpop.f32.mrb[0].mxu0
  %3148 = vmatprep.mubr.f32.mxu0 0.0
  %3149 = vmatmul.mubr.f32.gmra.mrb[0].mxu0 %v2849
  %v3150 = vpop.f32.mrb[0].mxu0
  %v3151 = vadd.f32 %v2785, %v3150
  %v3152 = vpop.f32.mrb[0].mxu0
  %3153 = vmatprep.mubr.f32.mxu0 0.0
  %3154 = vmatmul.mubr.f32.gmra.mrb[0].mxu0 %v2852
  %v3155 = vpop.f32.mrb[0].mxu0
  %v3156 = vadd.f32 %v2785, %v3155
  %v3157 = vpop.f32.mrb[0].mxu0
  %3158 = vmatprep.mubr.f32.mxu0 0.0
  %3159 = vmatmul.mubr.f32.gmra.mrb[0].mxu0 %v2855
  %v3160 = vpop.f32.mrb[0].mxu0
  %v3161 = vadd.f32 %v2785, %v3160
  %v3162 = vpop.f32.mrb[0].mxu0
  %3163 = vmatprep.mubr.f32.mxu0 0.0
  %3164 = vmatmul.mubr.f32.gmra.mrb[0].mxu0 %v2858
  %v3165 = vpop.f32.mrb[0].mxu0
  %v3166 = vadd.f32 %v2785, %v3165
  %v3167 = vpop.f32.mrb[0].mxu0
  %3168 = vmatprep.mubr.f32.mxu0 0.0
  %3169 = vmatmul.mubr.f32.gmra.mrb[0].mxu0 %v2861
  %v3170 = vpop.f32.mrb[0].mxu0
  %v3171 = vadd.f32 %v2785, %v3170
  %v3172 = vpop.f32.mrb[0].mxu0
  %3173 = vmatprep.mubr.f32.mxu0 0.0
  %3174 = vmatmul.mubr.f32.gmra.mrb[0].mxu0 %v2864
  %v3175 = vpop.f32.mrb[0].mxu0
  %v3176 = vadd.f32 %v2785, %v3175
  %v3177 = vpop.f32.mrb[0].mxu0
  %3178 = vmatprep.mubr.f32.mxu0 0.0
  %3179 = vmatmul.mubr.f32.gmra.mrb[0].mxu0 %v2867
  %v3180 = vpop.f32.mrb[0].mxu0
  %v3181 = vadd.f32 %v2785, %v3180
  %v3182 = vpop.f32.mrb[0].mxu0
  %3183 = vmatprep.mubr.f32.mxu0 0.0
  %3184 = vmatmul.mubr.f32.gmra.mrb[0].mxu0 %v2870
  %v3185 = vpop.f32.mrb[0].mxu0
  %v3186 = vadd.f32 %v2785, %v3185
  %v3187 = vpop.f32.mrb[0].mxu0
  %3188 = vmatprep.mubr.f32.mxu0 0.0
  %3189 = vmatmul.mubr.f32.gmra.mrb[0].mxu0 %v2873
  %v3190 = vpop.f32.mrb[0].mxu0
  %v3191 = vadd.f32 %v2785, %v3190
  %v3192 = vpop.f32.mrb[0].mxu0
  %3193 = vmatprep.mubr.f32.mxu0 0.0
  %3194 = vmatmul.mubr.f32.gmra.mrb[0].mxu0 %v2876
  %v3195 = vpop.f32.mrb[0].mxu0
  %v3196 = vadd.f32 %v2785, %v3195
  %v3197 = vpop.f32.mrb[0].mxu0
  %3198 = vmatprep.mubr.f32.mxu0 0.0
  %3199 = vmatmul.mubr.f32.gmra.mrb[0].mxu0 %v2879
  %v3200 = vpop.f32.mrb[0].mxu0
  %v3201 = vadd.f32 %v2785, %v3200
  %v3202 = vpop.f32.mrb[0].mxu0
  %3203 = vmatprep.mubr.f32.mxu0 0.0
  %3204 = vmatmul.mubr.f32.gmra.mrb[0].mxu0 %v2882
  %v3205 = vpop.f32.mrb[0].mxu0
  %v3206 = vadd.f32 %v2785, %v3205
  %v3207 = vpop.f32.mrb[0].mxu0
  %3208 = vmatprep.mubr.f32.mxu0 0.0
  %3209 = vmatmul.mubr.f32.gmra.mrb[0].mxu0 %v2885
  %v3210 = vpop.f32.mrb[0].mxu0
  %v3211 = vadd.f32 %v2785, %v3210
  %v3212 = vpop.f32.mrb[0].mxu0
  %3213 = vmatprep.mubr.f32.mxu0 0.0
  %3214 = vmatmul.mubr.f32.gmra.mrb[0].mxu0 %v2888
  %v3215 = vpop.f32.mrb[0].mxu0
  %v3216 = vadd.f32 %v2785, %v3215
  %v3217 = vpop.f32.mrb[0].mxu0
  %3218 = vmatprep.mubr.f32.mxu0 0.0
  %3219 = vmatmul.mubr.f32.gmra.mrb[0].mxu0 %v2891
  %v3220 = vpop.f32.mrb[0].mxu0
  %v3221 = vadd.f32 %v2785, %v3220
  %v3222 = vpop.f32.mrb[0].mxu0
  %3223 = vmatprep.mubr.f32.mxu0 0.0
  %3224 = vmatmul.mubr.f32.gmra.mrb[0].mxu0 %v2894
  %v3225 = vpop.f32.mrb[0].mxu0
  %v3226 = vadd.f32 %v2785, %v3225
  %v3227 = vpop.f32.mrb[0].mxu0
  %3228 = vmatprep.mubr.f32.mxu0 0.0
  %3229 = vmatmul.mubr.f32.gmra.mrb[0].mxu0 %v2897
  %v3230 = vpop.f32.mrb[0].mxu0
  %v3231 = vadd.f32 %v2785, %v3230
  %v3232 = vpop.f32.mrb[0].mxu0
  %3233 = vmatprep.mubr.f32.mxu0 0.0
  %3234 = vmatmul.mubr.f32.gmra.mrb[0].mxu0 %v2900
  %v3235 = vpop.f32.mrb[0].mxu0
  %v3236 = vadd.f32 %v2785, %v3235
  %v3237 = vpop.f32.mrb[0].mxu0
  %3238 = vmatprep.mubr.f32.mxu0 0.0
  %3239 = vmatmul.mubr.f32.gmra.mrb[0].mxu0 %v2903
  %v3240 = vpop.f32.mrb[0].mxu0
  %v3241 = vadd.f32 %v2785, %v3240
  %v3242 = vpop.f32.mrb[0].mxu0
  %3243 = vmatprep.mubr.f32.mxu0 0.0
  %3244 = vmatmul.mubr.f32.gmra.mrb[0].mxu0 %v2906
  %v3245 = vpop.f32.mrb[0].mxu0
  %v3246 = vadd.f32 %v2785, %v3245
  %v3247 = vpop.f32.mrb[0].mxu0
  %3248 = vmatprep.mubr.f32.mxu0 0.0
  %3249 = vmatmul.mubr.f32.gmra.mrb[0].mxu0 %v2909
  %v3250 = vpop.f32.mrb[0].mxu0
  %v3251 = vadd.f32 %v2785, %v3250
  %v3252 = vpop.f32.mrb[0].mxu0
  %3253 = vmatprep.mubr.f32.mxu0 0.0
  %3254 = vmatmul.mubr.f32.gmra.mrb[0].mxu0 %v2912
  %v3255 = vpop.f32.mrb[0].mxu0
  %v3256 = vadd.f32 %v2785, %v3255
  %v3257 = vpop.f32.mrb[0].mxu0
  %3258 = vmatprep.mubr.f32.mxu0 0.0
  %3259 = vmatmul.mubr.f32.gmra.mrb[0].mxu0 %v2915
  %v3260 = vpop.f32.mrb[0].mxu0
  %v3261 = vadd.f32 %v2785, %v3260
  %v3262 = vpop.f32.mrb[0].mxu0
  %3263 = vmatprep.mubr.f32.mxu0 0.0
  %3264 = vmatmul.mubr.f32.gmra.mrb[0].mxu0 %v2918
  %v3265 = vpop.f32.mrb[0].mxu0
  %v3266 = vadd.f32 %v2785, %v3265
  %v3267 = vpop.f32.mrb[0].mxu0
  %3268 = vmatprep.mubr.f32.mxu0 0.0
  %3269 = vmatmul.mubr.f32.gmra.mrb[0].mxu0 %v2921
  %v3270 = vpop.f32.mrb[0].mxu0
  %v3271 = vadd.f32 %v2785, %v3270
  %v3272 = vpop.f32.mrb[0].mxu0
  %3273 = vmatprep.mubr.f32.mxu0 0.0
  %3274 = vmatmul.mubr.f32.gmra.mrb[0].mxu0 %v2924
  %v3275 = vpop.f32.mrb[0].mxu0
  %v3276 = vadd.f32 %v2785, %v3275
  %v3277 = vpop.f32.mrb[0].mxu0
  %3278 = vmatprep.mubr.f32.mxu0 0.0
  %3279 = vmatmul.mubr.f32.gmra.mrb[0].mxu0 %v2927
  %v3280 = vpop.f32.mrb[0].mxu0
  %v3281 = vadd.f32 %v2785, %v3280
  %v3282 = vpop.f32.mrb[0].mxu0
  %3283 = vmatprep.mubr.f32.mxu0 0.0
  %3284 = vmatmul.mubr.f32.gmra.mrb[0].mxu0 %v2930
  %v3285 = vpop.f32.mrb[0].mxu0
  %v3286 = vadd.f32 %v2785, %v3285
  %v3287 = vpop.f32.mrb[0].mxu0
  %3288 = vmatprep.mubr.f32.mxu0 0.0
  %3289 = vmatmul.mubr.f32.gmra.mrb[0].mxu0 %v2933
  %v3290 = vpop.f32.mrb[0].mxu0
  %v3291 = vadd.f32 %v2785, %v3290
  %v3292 = vpop.f32.mrb[0].mxu0
  %3293 = vmatprep.mubr.f32.mxu0 0.0
  %3294 = vmatmul.mubr.f32.gmra.mrb[0].mxu0 %v2936
  %v3295 = vpop.f32.mrb[0].mxu0
  %v3296 = vadd.f32 %v2785, %v3295
  %v3297 = vpop.f32.mrb[0].mxu0
  %3298 = vmatprep.mubr.f32.mxu0 0.0
  %3299 = vmatmul.mubr.f32.gmra.mrb[0].mxu0 %v2939
  %v3300 = vpop.f32.mrb[0].mxu0
  %v3301 = vadd.f32 %v2785, %v3300
  %v3302 = vpop.f32.mrb[0].mxu0
  %3303 = vmatprep.mubr.f32.mxu0 0.0
  %3304 = vmatmul.mubr.f32.gmra.mrb[0].mxu0 %v2942
  %v3305 = vpop.f32.mrb[0].mxu0
  %v3306 = vadd.f32 %v2785, %v3305
  %v3307 = vpop.f32.mrb[0].mxu0
  %3308 = vmatprep.mubr.f32.mxu0 0.0
  %3309 = vmatmul.mubr.f32.gmra.mrb[0].mxu0 %v2945
  %v3310 = vpop.f32.mrb[0].mxu0
  %v3311 = vadd.f32 %v2785, %v3310
  %v3312 = vpop.f32.mrb[0].mxu0
  %3313 = vmatprep.mubr.f32.mxu0 0.0
  %3314 = vmatmul.mubr.f32.gmra.mrb[0].mxu0 %v2948
  %v3315 = vpop.f32.mrb[0].mxu0
  %v3316 = vadd.f32 %v2785, %v3315
  %v3317 = vpop.f32.mrb[0].mxu0
  %3318 = vmatprep.mubr.f32.mxu0 0.0
  %3319 = vmatmul.mubr.f32.gmra.mrb[0].mxu0 %v2951
  %v3320 = vpop.f32.mrb[0].mxu0
  %v3321 = vadd.f32 %v2785, %v3320
  %v3322 = vpop.f32.mrb[0].mxu0
  %3323 = vmatprep.mubr.f32.mxu0 0.0
  %3324 = vmatmul.mubr.f32.gmra.mrb[0].mxu0 %v2954
  %v3325 = vpop.f32.mrb[0].mxu0
  %v3326 = vadd.f32 %v2785, %v3325
  %v3327 = vpop.f32.mrb[0].mxu0
  %3328 = vmatprep.mubr.f32.mxu0 0.0
  %3329 = vmatmul.mubr.f32.gmra.mrb[0].mxu0 %v2957
  %v3330 = vpop.f32.mrb[0].mxu0
  %v3331 = vadd.f32 %v2785, %v3330
  %v3332 = vpop.f32.mrb[0].mxu0
  %3333 = vmatprep.mubr.f32.mxu0 0.0
  %3334 = vmatmul.mubr.f32.gmra.mrb[0].mxu0 %v2960
  %v3335 = vpop.f32.mrb[0].mxu0
  %v3336 = vadd.f32 %v2785, %v3335
  %v3337 = vpop.f32.mrb[0].mxu0
  %3338 = vmatprep.mubr.f32.mxu0 0.0
  %3339 = vmatmul.mubr.f32.gmra.mrb[0].mxu0 %v2963
  %v3340 = vpop.f32.mrb[0].mxu0
  %v3341 = vadd.f32 %v2785, %v3340
  %v3342 = vpop.f32.mrb[0].mxu0
  %3343 = vmatprep.mubr.f32.mxu0 0.0
  %3344 = vmatmul.mubr.f32.gmra.mrb[0].mxu0 %v2966
  %v3345 = vpop.f32.mrb[0].mxu0
  %v3346 = vadd.f32 %v2785, %v3345
  %v3347 = vpop.f32.mrb[0].mxu0
  %3348 = vmatprep.mubr.f32.mxu0 0.0
  %3349 = vmatmul.mubr.f32.gmra.mrb[0].mxu0 %v2969
  %v3350 = vpop.f32.mrb[0].mxu0
  %v3351 = vadd.f32 %v2785, %v3350
  %v3352 = vpop.f32.mrb[0].mxu0
  %3353 = vmatprep.mubr.f32.mxu0 0.0
  %3354 = vmatmul.mubr.f32.gmra.mrb[0].mxu0 %v2972
  %v3355 = vpop.f32.mrb[0].mxu0
  %v3356 = vadd.f32 %v2785, %v3355
  %v3357 = vpop.f32.mrb[0].mxu0
  %3358 = vmatprep.mubr.f32.mxu0 0.0
  %3359 = vmatmul.mubr.f32.gmra.mrb[0].mxu0 %v2975
  %v3360 = vpop.f32.mrb[0].mxu0
  %v3361 = vadd.f32 %v2785, %v3360
  %v3362 = vpop.f32.mrb[0].mxu0
  %3363 = vmatprep.mubr.f32.mxu0 0.0
  %3364 = vmatmul.mubr.f32.gmra.mrb[0].mxu0 %v2978
  %v3365 = vpop.f32.mrb[0].mxu0
  %v3366 = vadd.f32 %v2785, %v3365
  %v3367 = vpop.f32.mrb[0].mxu0
  %3368 = vdwg.mxu0
  %v3369 = vmax.f32 %v3051, 0.0
  %v3370 = vmax.f32 %v3056, 0.0
  %v3371 = vmax.f32 %v3061, 0.0
  %v3372 = vmax.f32 %v3066, 0.0
  %v3373 = vmax.f32 %v3071, 0.0
  %v3374 = vmax.f32 %v3076, 0.0
  %v3375 = vmax.f32 %v3081, 0.0
  %v3376 = vmax.f32 %v3086, 0.0
  %v3377 = vmax.f32 %v3091, 0.0
  %v3378 = vmax.f32 %v3096, 0.0
  %v3379 = vmax.f32 %v3101, 0.0
  %v3380 = vmax.f32 %v3106, 0.0
  %v3381 = vmax.f32 %v3111, 0.0
  %v3382 = vmax.f32 %v3116, 0.0
  %v3383 = vmax.f32 %v3121, 0.0
  %v3384 = vmax.f32 %v3126, 0.0
  %v3385 = vmax.f32 %v3131, 0.0
  %v3386 = vmax.f32 %v3136, 0.0
  %v3387 = vmax.f32 %v3141, 0.0
  %v3388 = vmax.f32 %v3146, 0.0
  %v3389 = vmax.f32 %v3151, 0.0
  %v3390 = vmax.f32 %v3156, 0.0
  %v3391 = vmax.f32 %v3161, 0.0
  %v3392 = vmax.f32 %v3166, 0.0
  %v3393 = vmax.f32 %v3171, 0.0
  %v3394 = vmax.f32 %v3176, 0.0
  %v3395 = vmax.f32 %v3181, 0.0
  %v3396 = vmax.f32 %v3186, 0.0
  %v3397 = vmax.f32 %v3191, 0.0
  %v3398 = vmax.f32 %v3196, 0.0
  %v3399 = vmax.f32 %v3201, 0.0
  %v3400 = vmax.f32 %v3206, 0.0
  %v3401 = vmax.f32 %v3211, 0.0
  %v3402 = vmax.f32 %v3216, 0.0
  %v3403 = vmax.f32 %v3221, 0.0
  %v3404 = vmax.f32 %v3226, 0.0
  %v3405 = vmax.f32 %v3231, 0.0
  %v3406 = vmax.f32 %v3236, 0.0
  %v3407 = vmax.f32 %v3241, 0.0
  %v3408 = vmax.f32 %v3246, 0.0
  %v3409 = vmax.f32 %v3251, 0.0
  %v3410 = vmax.f32 %v3256, 0.0
  %v3411 = vmax.f32 %v3261, 0.0
  %v3412 = vmax.f32 %v3266, 0.0
  %v3413 = vmax.f32 %v3271, 0.0
  %v3414 = vmax.f32 %v3276, 0.0
  %v3415 = vmax.f32 %v3281, 0.0
  %v3416 = vmax.f32 %v3286, 0.0
  %v3417 = vmax.f32 %v3291, 0.0
  %v3418 = vmax.f32 %v3296, 0.0
  %v3419 = vmax.f32 %v3301, 0.0
  %v3420 = vmax.f32 %v3306, 0.0
  %v3421 = vmax.f32 %v3311, 0.0
  %v3422 = vmax.f32 %v3316, 0.0
  %v3423 = vmax.f32 %v3321, 0.0
  %v3424 = vmax.f32 %v3326, 0.0
  %v3425 = vmax.f32 %v3331, 0.0
  %v3426 = vmax.f32 %v3336, 0.0
  %v3427 = vmax.f32 %v3341, 0.0
  %v3428 = vmax.f32 %v3346, 0.0
  %v3429 = vmax.f32 %v3351, 0.0
  %v3430 = vmax.f32 %v3356, 0.0
  %v3431 = vmax.f32 %v3361, 0.0
  %v3432 = vmax.f32 %v3366, 0.0
  %s3433 = scalar_lea.vmem [#allocation2], 24
  %3434 = vst.msk [vmem:[%s3433 + $0x1] sm:$0xff] %vm32, %v3369
  %3435 = vst.msk [vmem:[%s3433 + $0x9] sm:$0xff] %vm32, %v3370
  %3436 = vst.msk [vmem:[%s3433 + $0x19] sm:$0xff] %vm32, %v3371
  %3437 = vst.msk [vmem:[%s3433 + $0x21] sm:$0xff] %vm32, %v3372
  %3438 = vst.msk [vmem:[%s3433 + $0x31] sm:$0xff] %vm32, %v3373
  %3439 = vst.msk [vmem:[%s3433 + $0x39] sm:$0xff] %vm32, %v3374
  %3440 = vst.msk [vmem:[%s3433 + $0x49] sm:$0xff] %vm32, %v3375
  %3441 = vst.msk [vmem:[%s3433 + $0x51] sm:$0xff] %vm32, %v3376
  %3442 = vst.msk [vmem:[%s3433 + $0x61] sm:$0xff] %vm32, %v3377
  %3443 = vst.msk [vmem:[%s3433 + $0x69] sm:$0xff] %vm32, %v3378
  %3444 = vst.msk [vmem:[%s3433 + $0x79] sm:$0xff] %vm32, %v3379
  %3445 = vst.msk [vmem:[%s3433 + $0x81] sm:$0xff] %vm32, %v3380
  %3446 = vst.msk [vmem:[%s3433 + $0x91] sm:$0xff] %vm32, %v3381
  %3447 = vst.msk [vmem:[%s3433 + $0x99] sm:$0xff] %vm32, %v3382
  %3448 = vst.msk [vmem:[%s3433 + $0xa9] sm:$0xff] %vm32, %v3383
  %3449 = vst.msk [vmem:[%s3433 + $0xb1] sm:$0xff] %vm32, %v3384
  %3450 = vst.msk [vmem:[%s3433 + $0xc1] sm:$0xff] %vm32, %v3385
  %3451 = vst.msk [vmem:[%s3433 + $0xc9] sm:$0xff] %vm32, %v3386
  %3452 = vst.msk [vmem:[%s3433 + $0xd9] sm:$0xff] %vm32, %v3387
  %3453 = vst.msk [vmem:[%s3433 + $0xe1] sm:$0xff] %vm32, %v3388
  %3454 = vst.msk [vmem:[%s3433 + $0xf1] sm:$0xff] %vm32, %v3389
  %3455 = vst.msk [vmem:[%s3433 + $0xf9] sm:$0xff] %vm32, %v3390
  %3456 = vst.msk [vmem:[%s3433 + $0x109] sm:$0xff] %vm32, %v3391
  %3457 = vst.msk [vmem:[%s3433 + $0x111] sm:$0xff] %vm32, %v3392
  %3458 = vst.msk [vmem:[%s3433 + $0x121] sm:$0xff] %vm32, %v3393
  %3459 = vst.msk [vmem:[%s3433 + $0x129] sm:$0xff] %vm32, %v3394
  %3460 = vst.msk [vmem:[%s3433 + $0x139] sm:$0xff] %vm32, %v3395
  %3461 = vst.msk [vmem:[%s3433 + $0x141] sm:$0xff] %vm32, %v3396
  %3462 = vst.msk [vmem:[%s3433 + $0x151] sm:$0xff] %vm32, %v3397
  %3463 = vst.msk [vmem:[%s3433 + $0x159] sm:$0xff] %vm32, %v3398
  %3464 = vst.msk [vmem:[%s3433 + $0x169] sm:$0xff] %vm32, %v3399
  %3465 = vst.msk [vmem:[%s3433 + $0x171] sm:$0xff] %vm32, %v3400
  %3466 = vst.msk [vmem:[%s3433 + $0x1b1] sm:$0xff] %vm32, %v3401
  %3467 = vst.msk [vmem:[%s3433 + $0x1b9] sm:$0xff] %vm32, %v3402
  %3468 = vst.msk [vmem:[%s3433 + $0x1c9] sm:$0xff] %vm32, %v3403
  %3469 = vst.msk [vmem:[%s3433 + $0x1d1] sm:$0xff] %vm32, %v3404
  %3470 = vst.msk [vmem:[%s3433 + $0x1e1] sm:$0xff] %vm32, %v3405
  %3471 = vst.msk [vmem:[%s3433 + $0x1e9] sm:$0xff] %vm32, %v3406
  %3472 = vst.msk [vmem:[%s3433 + $0x1f9] sm:$0xff] %vm32, %v3407
  %3473 = vst.msk [vmem:[%s3433 + $0x201] sm:$0xff] %vm32, %v3408
  %3474 = vst.msk [vmem:[%s3433 + $0x211] sm:$0xff] %vm32, %v3409
  %3475 = vst.msk [vmem:[%s3433 + $0x219] sm:$0xff] %vm32, %v3410
  %3476 = vst.msk [vmem:[%s3433 + $0x229] sm:$0xff] %vm32, %v3411
  %3477 = vst.msk [vmem:[%s3433 + $0x231] sm:$0xff] %vm32, %v3412
  %3478 = vst.msk [vmem:[%s3433 + $0x241] sm:$0xff] %vm32, %v3413
  %3479 = vst.msk [vmem:[%s3433 + $0x249] sm:$0xff] %vm32, %v3414
  %3480 = vst.msk [vmem:[%s3433 + $0x259] sm:$0xff] %vm32, %v3415
  %3481 = vst.msk [vmem:[%s3433 + $0x261] sm:$0xff] %vm32, %v3416
  %3482 = vst.msk [vmem:[%s3433 + $0x271] sm:$0xff] %vm32, %v3417
  %3483 = vst.msk [vmem:[%s3433 + $0x279] sm:$0xff] %vm32, %v3418
  %3484 = vst.msk [vmem:[%s3433 + $0x289] sm:$0xff] %vm32, %v3419
  %3485 = vst.msk [vmem:[%s3433 + $0x291] sm:$0xff] %vm32, %v3420
  %3486 = vst.msk [vmem:[%s3433 + $0x2a1] sm:$0xff] %vm32, %v3421
  %3487 = vst.msk [vmem:[%s3433 + $0x2a9] sm:$0xff] %vm32, %v3422
  %3488 = vst.msk [vmem:[%s3433 + $0x2b9] sm:$0xff] %vm32, %v3423
  %3489 = vst.msk [vmem:[%s3433 + $0x2c1] sm:$0xff] %vm32, %v3424
  %3490 = vst.msk [vmem:[%s3433 + $0x2d1] sm:$0xff] %vm32, %v3425
  %3491 = vst.msk [vmem:[%s3433 + $0x2d9] sm:$0xff] %vm32, %v3426
  %3492 = vst.msk [vmem:[%s3433 + $0x2e9] sm:$0xff] %vm32, %v3427
  %3493 = vst.msk [vmem:[%s3433 + $0x2f1] sm:$0xff] %vm32, %v3428
  %3494 = vst.msk [vmem:[%s3433 + $0x301] sm:$0xff] %vm32, %v3429
  %3495 = vst.msk [vmem:[%s3433 + $0x309] sm:$0xff] %vm32, %v3430
  %3496 = vst.msk [vmem:[%s3433 + $0x319] sm:$0xff] %vm32, %v3431
  %3497 = vst.msk [vmem:[%s3433 + $0x321] sm:$0xff] %vm32, %v3432
  %v3498 = vld [vmem:[%s3] sm:$0xff]
  %v3499 = vld [vmem:[%s3 + $0x8] sm:$0xff]
  %v3500 = vld [vmem:[%s3 + $0x10] sm:$0xff]
  %v3501 = vld [vmem:[%s3 + $0x18] sm:$0xff]
  %v3502 = vld [vmem:[%s3 + $0x20] sm:$0xff]
  %v3503 = vld [vmem:[%s3 + $0x28] sm:$0xff]
  %v3504 = vld [vmem:[%s3 + $0x30] sm:$0xff]
  %v3505 = vld [vmem:[%s3 + $0x38] sm:$0xff]
  %v3506 = vld [vmem:[%s3 + $0x40] sm:$0xff]
  %v3507 = vld [vmem:[%s4] sm:$0x1]
  %v3508 = vld [vmem:[%s5] sm:$0x1]
  %v3509 = vld [vmem:[%s6] sm:$0x1]
  loop: start=0, step=1, limit=2
  $region38: #{tpu_custom_call.1} parent=0 // loop_pre_header
    _
  $region39: #{tpu_custom_call.1} parent=0 // loop_header
    %s3511 = sphi 0, %s3515
    %p3512 = scmp.ge.s32.totalorder %s3511, 2
  $region40: #{tpu_custom_call.1} parent=0 // loop_header_branch
    %3514 = sbr.rel (%p3512) target = $region44
  $region41: #{tpu_custom_call.1} parent=0 // loop_body
    %v3516 = vld [vmem:[#allocation2] sm:$0xff]
    %v3517 = vld [vmem:[#allocation2 + $0x8] sm:$0xff]
    %v3518 = vld [vmem:[#allocation2 + $0x10] sm:$0x3]
    %v3519 = vld [vmem:[#allocation2 + $0x18] sm:$0xff]
    %v3520 = vld [vmem:[#allocation2 + $0x20] sm:$0xff]
    %v3521 = vld [vmem:[#allocation2 + $0x28] sm:$0x3]
    %v3522 = vld [vmem:[#allocation2 + $0x30] sm:$0xff]
    %v3523 = vld [vmem:[#allocation2 + $0x38] sm:$0xff]
    %v3524 = vld [vmem:[#allocation2 + $0x40] sm:$0x3]
    %v3525 = vld [vmem:[#allocation2 + $0x48] sm:$0xff]
    %v3526 = vld [vmem:[#allocation2 + $0x50] sm:$0xff]
    %v3527 = vld [vmem:[#allocation2 + $0x58] sm:$0x3]
    %v3528 = vld [vmem:[#allocation2 + $0x60] sm:$0xff]
    %v3529 = vld [vmem:[#allocation2 + $0x68] sm:$0xff]
    %v3530 = vld [vmem:[#allocation2 + $0x70] sm:$0x3]
    %v3531 = vld [vmem:[#allocation2 + $0x78] sm:$0xff]
    %v3532 = vld [vmem:[#allocation2 + $0x80] sm:$0xff]
    %v3533 = vld [vmem:[#allocation2 + $0x88] sm:$0x3]
    %v3534 = vld [vmem:[#allocation2 + $0x90] sm:$0xff]
    %v3535 = vld [vmem:[#allocation2 + $0x98] sm:$0xff]
    %v3536 = vld [vmem:[#allocation2 + $0xa0] sm:$0x3]
    %v3537 = vld [vmem:[#allocation2 + $0xa8] sm:$0xff]
    %v3538 = vld [vmem:[#allocation2 + $0xb0] sm:$0xff]
    %v3539 = vld [vmem:[#allocation2 + $0xb8] sm:$0x3]
    %v3540 = vld [vmem:[#allocation2 + $0xc0] sm:$0xff]
    %v3541 = vld [vmem:[#allocation2 + $0xc8] sm:$0xff]
    %v3542 = vld [vmem:[#allocation2 + $0xd0] sm:$0x3]
    %v3543 = vld [vmem:[#allocation2 + $0xd8] sm:$0xff]
    %v3544 = vld [vmem:[#allocation2 + $0xe0] sm:$0xff]
    %v3545 = vld [vmem:[#allocation2 + $0xe8] sm:$0x3]
    %v3546 = vld [vmem:[#allocation2 + $0xf0] sm:$0xff]
    %v3547 = vld [vmem:[#allocation2 + $0xf8] sm:$0xff]
    %v3548 = vld [vmem:[#allocation2 + $0x100] sm:$0x3]
    %v3549 = vld [vmem:[#allocation2 + $0x108] sm:$0xff]
    %v3550 = vld [vmem:[#allocation2 + $0x110] sm:$0xff]
    %v3551 = vld [vmem:[#allocation2 + $0x118] sm:$0x3]
    %v3552 = vld [vmem:[#allocation2 + $0x120] sm:$0xff]
    %v3553 = vld [vmem:[#allocation2 + $0x128] sm:$0xff]
    %v3554 = vld [vmem:[#allocation2 + $0x130] sm:$0x3]
    %v3555 = vld [vmem:[#allocation2 + $0x138] sm:$0xff]
    %v3556 = vld [vmem:[#allocation2 + $0x140] sm:$0xff]
    %v3557 = vld [vmem:[#allocation2 + $0x148] sm:$0x3]
    %v3558 = vld [vmem:[#allocation2 + $0x150] sm:$0xff]
    %v3559 = vld [vmem:[#allocation2 + $0x158] sm:$0xff]
    %v3560 = vld [vmem:[#allocation2 + $0x160] sm:$0x3]
    %v3561 = vld [vmem:[#allocation2 + $0x168] sm:$0xff]
    %v3562 = vld [vmem:[#allocation2 + $0x170] sm:$0xff]
    %v3563 = vld [vmem:[#allocation2 + $0x178] sm:$0x3]
    %v3564 = vld [vmem:[#allocation2 + $0x180] sm:$0xff]
    %v3565 = vld [vmem:[#allocation2 + $0x188] sm:$0xff]
    %v3566 = vld [vmem:[#allocation2 + $0x190] sm:$0x3]
    %v3567 = vld [vmem:[#allocation2 + $0x198] sm:$0xff]
    %v3568 = vld [vmem:[#allocation2 + $0x1a0] sm:$0xff]
    %v3569 = vld [vmem:[#allocation2 + $0x1a8] sm:$0x3]
    %v3570 = vld [vmem:[#allocation2 + $0x1b0] sm:$0xff]
    %v3571 = vld [vmem:[#allocation2 + $0x1b8] sm:$0xff]
    %v3572 = vld [vmem:[#allocation2 + $0x1c0] sm:$0x3]
    %v3573 = vld [vmem:[#allocation2 + $0x1c8] sm:$0xff]
    %v3574 = vld [vmem:[#allocation2 + $0x1d0] sm:$0xff]
    %v3575 = vld [vmem:[#allocation2 + $0x1d8] sm:$0x3]
    %v3576 = vld [vmem:[#allocation2 + $0x1e0] sm:$0xff]
    %v3577 = vld [vmem:[#allocation2 + $0x1e8] sm:$0xff]
    %v3578 = vld [vmem:[#allocation2 + $0x1f0] sm:$0x3]
    %v3579 = vld [vmem:[#allocation2 + $0x1f8] sm:$0xff]
    %v3580 = vld [vmem:[#allocation2 + $0x200] sm:$0xff]
    %v3581 = vld [vmem:[#allocation2 + $0x208] sm:$0x3]
    %v3582 = vld [vmem:[#allocation2 + $0x210] sm:$0xff]
    %v3583 = vld [vmem:[#allocation2 + $0x218] sm:$0xff]
    %v3584 = vld [vmem:[#allocation2 + $0x220] sm:$0x3]
    %v3585 = vld [vmem:[#allocation2 + $0x228] sm:$0xff]
    %v3586 = vld [vmem:[#allocation2 + $0x230] sm:$0xff]
    %v3587 = vld [vmem:[#allocation2 + $0x238] sm:$0x3]
    %v3588 = vld [vmem:[#allocation2 + $0x240] sm:$0xff]
    %v3589 = vld [vmem:[#allocation2 + $0x248] sm:$0xff]
    %v3590 = vld [vmem:[#allocation2 + $0x250] sm:$0x3]
    %v3591 = vld [vmem:[#allocation2 + $0x258] sm:$0xff]
    %v3592 = vld [vmem:[#allocation2 + $0x260] sm:$0xff]
    %v3593 = vld [vmem:[#allocation2 + $0x268] sm:$0x3]
    %v3594 = vld [vmem:[#allocation2 + $0x270] sm:$0xff]
    %v3595 = vld [vmem:[#allocation2 + $0x278] sm:$0xff]
    %v3596 = vld [vmem:[#allocation2 + $0x280] sm:$0x3]
    %v3597 = vld [vmem:[#allocation2 + $0x288] sm:$0xff]
    %v3598 = vld [vmem:[#allocation2 + $0x290] sm:$0xff]
    %v3599 = vld [vmem:[#allocation2 + $0x298] sm:$0x3]
    %v3600 = vld [vmem:[#allocation2 + $0x2a0] sm:$0xff]
    %v3601 = vld [vmem:[#allocation2 + $0x2a8] sm:$0xff]
    %v3602 = vld [vmem:[#allocation2 + $0x2b0] sm:$0x3]
    %v3603 = vld [vmem:[#allocation2 + $0x2b8] sm:$0xff]
    %v3604 = vld [vmem:[#allocation2 + $0x2c0] sm:$0xff]
    %v3605 = vld [vmem:[#allocation2 + $0x2c8] sm:$0x3]
    %v3606 = vld [vmem:[#allocation2 + $0x2d0] sm:$0xff]
    %v3607 = vld [vmem:[#allocation2 + $0x2d8] sm:$0xff]
    %v3608 = vld [vmem:[#allocation2 + $0x2e0] sm:$0x3]
    %v3609 = vld [vmem:[#allocation2 + $0x2e8] sm:$0xff]
    %v3610 = vld [vmem:[#allocation2 + $0x2f0] sm:$0xff]
    %v3611 = vld [vmem:[#allocation2 + $0x2f8] sm:$0x3]
    %v3612 = vld [vmem:[#allocation2 + $0x300] sm:$0xff]
    %v3613 = vld [vmem:[#allocation2 + $0x308] sm:$0xff]
    %v3614 = vld [vmem:[#allocation2 + $0x310] sm:$0x3]
    %v3615 = vld [vmem:[#allocation2 + $0x318] sm:$0xff]
    %v3616 = vld [vmem:[#allocation2 + $0x320] sm:$0xff]
    %v3617 = vld [vmem:[#allocation2 + $0x328] sm:$0x3]
    %v3618 = vld [vmem:[#allocation2 + $0x330] sm:$0xff]
    %v3619 = vld [vmem:[#allocation2 + $0x338] sm:$0xff]
    %v3620 = vld [vmem:[#allocation2 + $0x340] sm:$0x3]
    %v3621 = vld [vmem:[#allocation2 + $0x348] sm:$0xff]
    %v3622 = vld [vmem:[#allocation2 + $0x350] sm:$0xff]
    %v3623 = vld [vmem:[#allocation2 + $0x358] sm:$0x3]
    %v3720 = vrot.slane %v3516, 1
    %v3721 = vrot.slane %v3517, 1
    %v3722 = vsel %vm346, %v3720, %v3721
    %v3723 = vrot.slane %v3518, 1
    %v3724 = vsel %vm346, %v3721, %v3723
    %v3725 = vrot.slane %v3519, 1
    %v3726 = vrot.slane %v3520, 1
    %v3727 = vsel %vm346, %v3725, %v3726
    %v3728 = vrot.slane %v3521, 1
    %v3729 = vsel %vm346, %v3726, %v3728
    %v3730 = vrot.slane %v3522, 1
    %v3731 = vrot.slane %v3523, 1
    %v3732 = vsel %vm346, %v3730, %v3731
    %v3733 = vrot.slane %v3524, 1
    %v3734 = vsel %vm346, %v3731, %v3733
    %v3735 = vrot.slane %v3525, 1
    %v3736 = vrot.slane %v3526, 1
    %v3737 = vsel %vm346, %v3735, %v3736
    %v3738 = vrot.slane %v3527, 1
    %v3739 = vsel %vm346, %v3736, %v3738
    %v3740 = vrot.slane %v3528, 1
    %v3741 = vrot.slane %v3529, 1
    %v3742 = vsel %vm346, %v3740, %v3741
    %v3743 = vrot.slane %v3530, 1
    %v3744 = vsel %vm346, %v3741, %v3743
    %v3745 = vrot.slane %v3531, 1
    %v3746 = vrot.slane %v3532, 1
    %v3747 = vsel %vm346, %v3745, %v3746
    %v3748 = vrot.slane %v3533, 1
    %v3749 = vsel %vm346, %v3746, %v3748
    %v3750 = vrot.slane %v3534, 1
    %v3751 = vrot.slane %v3535, 1
    %v3752 = vsel %vm346, %v3750, %v3751
    %v3753 = vrot.slane %v3536, 1
    %v3754 = vsel %vm346, %v3751, %v3753
    %v3755 = vrot.slane %v3537, 1
    %v3756 = vrot.slane %v3538, 1
    %v3757 = vsel %vm346, %v3755, %v3756
    %v3758 = vrot.slane %v3539, 1
    %v3759 = vsel %vm346, %v3756, %v3758
    %v3760 = vrot.slane %v3540, 1
    %v3761 = vrot.slane %v3541, 1
    %v3762 = vsel %vm346, %v3760, %v3761
    %v3763 = vrot.slane %v3542, 1
    %v3764 = vsel %vm346, %v3761, %v3763
    %v3765 = vrot.slane %v3543, 1
    %v3766 = vrot.slane %v3544, 1
    %v3767 = vsel %vm346, %v3765, %v3766
    %v3768 = vrot.slane %v3545, 1
    %v3769 = vsel %vm346, %v3766, %v3768
    %v3770 = vrot.slane %v3546, 1
    %v3771 = vrot.slane %v3547, 1
    %v3772 = vsel %vm346, %v3770, %v3771
    %v3773 = vrot.slane %v3548, 1
    %v3774 = vsel %vm346, %v3771, %v3773
    %v3775 = vrot.slane %v3549, 1
    %v3776 = vrot.slane %v3550, 1
    %v3777 = vsel %vm346, %v3775, %v3776
    %v3778 = vrot.slane %v3551, 1
    %v3779 = vsel %vm346, %v3776, %v3778
    %v3780 = vrot.slane %v3552, 1
    %v3781 = vrot.slane %v3553, 1
    %v3782 = vsel %vm346, %v3780, %v3781
    %v3783 = vrot.slane %v3554, 1
    %v3784 = vsel %vm346, %v3781, %v3783
    %v3785 = vrot.slane %v3555, 1
    %v3786 = vrot.slane %v3556, 1
    %v3787 = vsel %vm346, %v3785, %v3786
    %v3788 = vrot.slane %v3557, 1
    %v3789 = vsel %vm346, %v3786, %v3788
    %v3790 = vrot.slane %v3558, 1
    %v3791 = vrot.slane %v3559, 1
    %v3792 = vsel %vm346, %v3790, %v3791
    %v3793 = vrot.slane %v3560, 1
    %v3794 = vsel %vm346, %v3791, %v3793
    %v3795 = vrot.slane %v3561, 1
    %v3796 = vrot.slane %v3562, 1
    %v3797 = vsel %vm346, %v3795, %v3796
    %v3798 = vrot.slane %v3563, 1
    %v3799 = vsel %vm346, %v3796, %v3798
    %v3800 = vrot.slane %v3570, 1
    %v3801 = vrot.slane %v3571, 1
    %v3802 = vsel %vm346, %v3800, %v3801
    %v3803 = vrot.slane %v3572, 1
    %v3804 = vsel %vm346, %v3801, %v3803
    %v3805 = vrot.slane %v3573, 1
    %v3806 = vrot.slane %v3574, 1
    %v3807 = vsel %vm346, %v3805, %v3806
    %v3808 = vrot.slane %v3575, 1
    %v3809 = vsel %vm346, %v3806, %v3808
    %v3810 = vrot.slane %v3576, 1
    %v3811 = vrot.slane %v3577, 1
    %v3812 = vsel %vm346, %v3810, %v3811
    %v3813 = vrot.slane %v3578, 1
    %v3814 = vsel %vm346, %v3811, %v3813
    %v3815 = vrot.slane %v3579, 1
    %v3816 = vrot.slane %v3580, 1
    %v3817 = vsel %vm346, %v3815, %v3816
    %v3818 = vrot.slane %v3581, 1
    %v3819 = vsel %vm346, %v3816, %v3818
    %v3820 = vrot.slane %v3582, 1
    %v3821 = vrot.slane %v3583, 1
    %v3822 = vsel %vm346, %v3820, %v3821
    %v3823 = vrot.slane %v3584, 1
    %v3824 = vsel %vm346, %v3821, %v3823
    %v3825 = vrot.slane %v3585, 1
    %v3826 = vrot.slane %v3586, 1
    %v3827 = vsel %vm346, %v3825, %v3826
    %v3828 = vrot.slane %v3587, 1
    %v3829 = vsel %vm346, %v3826, %v3828
    %v3830 = vrot.slane %v3588, 1
    %v3831 = vrot.slane %v3589, 1
    %v3832 = vsel %vm346, %v3830, %v3831
    %v3833 = vrot.slane %v3590, 1
    %v3834 = vsel %vm346, %v3831, %v3833
    %v3835 = vrot.slane %v3591, 1
    %v3836 = vrot.slane %v3592, 1
    %v3837 = vsel %vm346, %v3835, %v3836
    %v3838 = vrot.slane %v3593, 1
    %v3839 = vsel %vm346, %v3836, %v3838
    %v3840 = vrot.slane %v3594, 1
    %v3841 = vrot.slane %v3595, 1
    %v3842 = vsel %vm346, %v3840, %v3841
    %v3843 = vrot.slane %v3596, 1
    %v3844 = vsel %vm346, %v3841, %v3843
    %v3845 = vrot.slane %v3597, 1
    %v3846 = vrot.slane %v3598, 1
    %v3847 = vsel %vm346, %v3845, %v3846
    %v3848 = vrot.slane %v3599, 1
    %v3849 = vsel %vm346, %v3846, %v3848
    %v3850 = vrot.slane %v3600, 1
    %v3851 = vrot.slane %v3601, 1
    %v3852 = vsel %vm346, %v3850, %v3851
    %v3853 = vrot.slane %v3602, 1
    %v3854 = vsel %vm346, %v3851, %v3853
    %v3855 = vrot.slane %v3603, 1
    %v3856 = vrot.slane %v3604, 1
    %v3857 = vsel %vm346, %v3855, %v3856
    %v3858 = vrot.slane %v3605, 1
    %v3859 = vsel %vm346, %v3856, %v3858
    %v3860 = vrot.slane %v3606, 1
    %v3861 = vrot.slane %v3607, 1
    %v3862 = vsel %vm346, %v3860, %v3861
    %v3863 = vrot.slane %v3608, 1
    %v3864 = vsel %vm346, %v3861, %v3863
    %v3865 = vrot.slane %v3609, 1
    %v3866 = vrot.slane %v3610, 1
    %v3867 = vsel %vm346, %v3865, %v3866
    %v3868 = vrot.slane %v3611, 1
    %v3869 = vsel %vm346, %v3866, %v3868
    %v3870 = vrot.slane %v3612, 1
    %v3871 = vrot.slane %v3613, 1
    %v3872 = vsel %vm346, %v3870, %v3871
    %v3873 = vrot.slane %v3614, 1
    %v3874 = vsel %vm346, %v3871, %v3873
    %v3875 = vrot.slane %v3615, 1
    %v3876 = vrot.slane %v3616, 1
    %v3877 = vsel %vm346, %v3875, %v3876
    %v3878 = vrot.slane %v3617, 1
    %v3879 = vsel %vm346, %v3876, %v3878
    %v3880 = vrot.slane %v3516, 2
    %v3881 = vrot.slane %v3517, 2
    %v3882 = vsel %vm507, %v3880, %v3881
    %v3883 = vrot.slane %v3518, 2
    %v3884 = vsel %vm507, %v3881, %v3883
    %v3885 = vrot.slane %v3519, 2
    %v3886 = vrot.slane %v3520, 2
    %v3887 = vsel %vm507, %v3885, %v3886
    %v3888 = vrot.slane %v3521, 2
    %v3889 = vsel %vm507, %v3886, %v3888
    %v3890 = vrot.slane %v3522, 2
    %v3891 = vrot.slane %v3523, 2
    %v3892 = vsel %vm507, %v3890, %v3891
    %v3893 = vrot.slane %v3524, 2
    %v3894 = vsel %vm507, %v3891, %v3893
    %v3895 = vrot.slane %v3525, 2
    %v3896 = vrot.slane %v3526, 2
    %v3897 = vsel %vm507, %v3895, %v3896
    %v3898 = vrot.slane %v3527, 2
    %v3899 = vsel %vm507, %v3896, %v3898
    %v3900 = vrot.slane %v3528, 2
    %v3901 = vrot.slane %v3529, 2
    %v3902 = vsel %vm507, %v3900, %v3901
    %v3903 = vrot.slane %v3530, 2
    %v3904 = vsel %vm507, %v3901, %v3903
    %v3905 = vrot.slane %v3531, 2
    %v3906 = vrot.slane %v3532, 2
    %v3907 = vsel %vm507, %v3905, %v3906
    %v3908 = vrot.slane %v3533, 2
    %v3909 = vsel %vm507, %v3906, %v3908
    %v3910 = vrot.slane %v3534, 2
    %v3911 = vrot.slane %v3535, 2
    %v3912 = vsel %vm507, %v3910, %v3911
    %v3913 = vrot.slane %v3536, 2
    %v3914 = vsel %vm507, %v3911, %v3913
    %v3915 = vrot.slane %v3537, 2
    %v3916 = vrot.slane %v3538, 2
    %v3917 = vsel %vm507, %v3915, %v3916
    %v3918 = vrot.slane %v3539, 2
    %v3919 = vsel %vm507, %v3916, %v3918
    %v3920 = vrot.slane %v3540, 2
    %v3921 = vrot.slane %v3541, 2
    %v3922 = vsel %vm507, %v3920, %v3921
    %v3923 = vrot.slane %v3542, 2
    %v3924 = vsel %vm507, %v3921, %v3923
    %v3925 = vrot.slane %v3543, 2
    %v3926 = vrot.slane %v3544, 2
    %v3927 = vsel %vm507, %v3925, %v3926
    %v3928 = vrot.slane %v3545, 2
    %v3929 = vsel %vm507, %v3926, %v3928
    %v3930 = vrot.slane %v3546, 2
    %v3931 = vrot.slane %v3547, 2
    %v3932 = vsel %vm507, %v3930, %v3931
    %v3933 = vrot.slane %v3548, 2
    %v3934 = vsel %vm507, %v3931, %v3933
    %v3935 = vrot.slane %v3549, 2
    %v3936 = vrot.slane %v3550, 2
    %v3937 = vsel %vm507, %v3935, %v3936
    %v3938 = vrot.slane %v3551, 2
    %v3939 = vsel %vm507, %v3936, %v3938
    %v3940 = vrot.slane %v3552, 2
    %v3941 = vrot.slane %v3553, 2
    %v3942 = vsel %vm507, %v3940, %v3941
    %v3943 = vrot.slane %v3554, 2
    %v3944 = vsel %vm507, %v3941, %v3943
    %v3945 = vrot.slane %v3555, 2
    %v3946 = vrot.slane %v3556, 2
    %v3947 = vsel %vm507, %v3945, %v3946
    %v3948 = vrot.slane %v3557, 2
    %v3949 = vsel %vm507, %v3946, %v3948
    %v3950 = vrot.slane %v3558, 2
    %v3951 = vrot.slane %v3559, 2
    %v3952 = vsel %vm507, %v3950, %v3951
    %v3953 = vrot.slane %v3560, 2
    %v3954 = vsel %vm507, %v3951, %v3953
    %v3955 = vrot.slane %v3561, 2
    %v3956 = vrot.slane %v3562, 2
    %v3957 = vsel %vm507, %v3955, %v3956
    %v3958 = vrot.slane %v3563, 2
    %v3959 = vsel %vm507, %v3956, %v3958
    %v3960 = vrot.slane %v3570, 2
    %v3961 = vrot.slane %v3571, 2
    %v3962 = vsel %vm507, %v3960, %v3961
    %v3963 = vrot.slane %v3572, 2
    %v3964 = vsel %vm507, %v3961, %v3963
    %v3965 = vrot.slane %v3573, 2
    %v3966 = vrot.slane %v3574, 2
    %v3967 = vsel %vm507, %v3965, %v3966
    %v3968 = vrot.slane %v3575, 2
    %v3969 = vsel %vm507, %v3966, %v3968
    %v3970 = vrot.slane %v3576, 2
    %v3971 = vrot.slane %v3577, 2
    %v3972 = vsel %vm507, %v3970, %v3971
    %v3973 = vrot.slane %v3578, 2
    %v3974 = vsel %vm507, %v3971, %v3973
    %v3975 = vrot.slane %v3579, 2
    %v3976 = vrot.slane %v3580, 2
    %v3977 = vsel %vm507, %v3975, %v3976
    %v3978 = vrot.slane %v3581, 2
    %v3979 = vsel %vm507, %v3976, %v3978
    %v3980 = vrot.slane %v3582, 2
    %v3981 = vrot.slane %v3583, 2
    %v3982 = vsel %vm507, %v3980, %v3981
    %v3983 = vrot.slane %v3584, 2
    %v3984 = vsel %vm507, %v3981, %v3983
    %v3985 = vrot.slane %v3585, 2
    %v3986 = vrot.slane %v3586, 2
    %v3987 = vsel %vm507, %v3985, %v3986
    %v3988 = vrot.slane %v3587, 2
    %v3989 = vsel %vm507, %v3986, %v3988
    %v3990 = vrot.slane %v3588, 2
    %v3991 = vrot.slane %v3589, 2
    %v3992 = vsel %vm507, %v3990, %v3991
    %v3993 = vrot.slane %v3590, 2
    %v3994 = vsel %vm507, %v3991, %v3993
    %v3995 = vrot.slane %v3591, 2
    %v3996 = vrot.slane %v3592, 2
    %v3997 = vsel %vm507, %v3995, %v3996
    %v3998 = vrot.slane %v3593, 2
    %v3999 = vsel %vm507, %v3996, %v3998
    %v4000 = vrot.slane %v3594, 2
    %v4001 = vrot.slane %v3595, 2
    %v4002 = vsel %vm507, %v4000, %v4001
    %v4003 = vrot.slane %v3596, 2
    %v4004 = vsel %vm507, %v4001, %v4003
    %v4005 = vrot.slane %v3597, 2
    %v4006 = vrot.slane %v3598, 2
    %v4007 = vsel %vm507, %v4005, %v4006
    %v4008 = vrot.slane %v3599, 2
    %v4009 = vsel %vm507, %v4006, %v4008
    %v4010 = vrot.slane %v3600, 2
    %v4011 = vrot.slane %v3601, 2
    %v4012 = vsel %vm507, %v4010, %v4011
    %v4013 = vrot.slane %v3602, 2
    %v4014 = vsel %vm507, %v4011, %v4013
    %v4015 = vrot.slane %v3603, 2
    %v4016 = vrot.slane %v3604, 2
    %v4017 = vsel %vm507, %v4015, %v4016
    %v4018 = vrot.slane %v3605, 2
    %v4019 = vsel %vm507, %v4016, %v4018
    %v4020 = vrot.slane %v3606, 2
    %v4021 = vrot.slane %v3607, 2
    %v4022 = vsel %vm507, %v4020, %v4021
    %v4023 = vrot.slane %v3608, 2
    %v4024 = vsel %vm507, %v4021, %v4023
    %v4025 = vrot.slane %v3609, 2
    %v4026 = vrot.slane %v3610, 2
    %v4027 = vsel %vm507, %v4025, %v4026
    %v4028 = vrot.slane %v3611, 2
    %v4029 = vsel %vm507, %v4026, %v4028
    %v4030 = vrot.slane %v3612, 2
    %v4031 = vrot.slane %v3613, 2
    %v4032 = vsel %vm507, %v4030, %v4031
    %v4033 = vrot.slane %v3614, 2
    %v4034 = vsel %vm507, %v4031, %v4033
    %v4035 = vrot.slane %v3615, 2
    %v4036 = vrot.slane %v3616, 2
    %v4037 = vsel %vm507, %v4035, %v4036
    %v4038 = vrot.slane %v3617, 2
    %v4039 = vsel %vm507, %v4036, %v4038
    %v4046 = vrot.slane %v3564, 1
    %v4047 = vrot.slane %v3565, 1
    %v4048 = vsel %vm346, %v4046, %v4047
    %v4049 = vrot.slane %v3566, 1
    %v4050 = vsel %vm346, %v4047, %v4049
    %v4051 = vrot.slane %v3618, 1
    %v4052 = vrot.slane %v3619, 1
    %v4053 = vsel %vm346, %v4051, %v4052
    %v4054 = vrot.slane %v3620, 1
    %v4055 = vsel %vm346, %v4052, %v4054
    %v4120 = vrot.slane %v3564, 2
    %v4121 = vrot.slane %v3565, 2
    %v4122 = vsel %vm507, %v4120, %v4121
    %v4123 = vrot.slane %v3566, 2
    %v4124 = vsel %vm507, %v4121, %v4123
    %v4125 = vrot.slane %v3618, 2
    %v4126 = vrot.slane %v3619, 2
    %v4127 = vsel %vm507, %v4125, %v4126
    %v4128 = vrot.slane %v3620, 2
    %v4129 = vsel %vm507, %v4126, %v4128
    %v4136 = vrot.slane %v3567, 1
    %v4137 = vrot.slane %v3568, 1
    %v4138 = vsel %vm346, %v4136, %v4137
    %v4139 = vrot.slane %v3569, 1
    %v4140 = vsel %vm346, %v4137, %v4139
    %v4141 = vrot.slane %v3621, 1
    %v4142 = vrot.slane %v3622, 1
    %v4143 = vsel %vm346, %v4141, %v4142
    %v4144 = vrot.slane %v3623, 1
    %v4145 = vsel %vm346, %v4142, %v4144
    %v4146 = vrot.slane %v3567, 2
    %v4147 = vrot.slane %v3568, 2
    %v4148 = vsel %vm507, %v4146, %v4147
    %v4149 = vrot.slane %v3569, 2
    %v4150 = vsel %vm507, %v4147, %v4149
    %v4151 = vrot.slane %v3621, 2
    %v4152 = vrot.slane %v3622, 2
    %v4153 = vsel %vm507, %v4151, %v4152
    %v4154 = vrot.slane %v3623, 2
    %v4155 = vsel %vm507, %v4152, %v4154
    %4156 = vrot.lane.b32.xlu0 %v3722, 8
    %v4157 = vpop.permute.xlu0 %4156
    %4158 = vrot.lane.b32.xlu0 %v3724, 8
    %v4159 = vpop.permute.xlu0 %4158
    %4160 = vrot.lane.b32.xlu0 %v3727, 8
    %v4161 = vpop.permute.xlu0 %4160
    %4162 = vrot.lane.b32.xlu0 %v3729, 8
    %v4163 = vpop.permute.xlu0 %4162
    %4164 = vrot.lane.b32.xlu0 %v3732, 8
    %v4165 = vpop.permute.xlu0 %4164
    %4166 = vrot.lane.b32.xlu0 %v3734, 8
    %v4167 = vpop.permute.xlu0 %4166
    %4168 = vrot.lane.b32.xlu0 %v3737, 8
    %v4169 = vpop.permute.xlu0 %4168
    %4170 = vrot.lane.b32.xlu0 %v3739, 8
    %v4171 = vpop.permute.xlu0 %4170
    %4172 = vrot.lane.b32.xlu0 %v3742, 8
    %v4173 = vpop.permute.xlu0 %4172
    %4174 = vrot.lane.b32.xlu0 %v3744, 8
    %v4175 = vpop.permute.xlu0 %4174
    %4176 = vrot.lane.b32.xlu0 %v3747, 8
    %v4177 = vpop.permute.xlu0 %4176
    %4178 = vrot.lane.b32.xlu0 %v3749, 8
    %v4179 = vpop.permute.xlu0 %4178
    %4180 = vrot.lane.b32.xlu0 %v3752, 8
    %v4181 = vpop.permute.xlu0 %4180
    %4182 = vrot.lane.b32.xlu0 %v3754, 8
    %v4183 = vpop.permute.xlu0 %4182
    %4184 = vrot.lane.b32.xlu0 %v3757, 8
    %v4185 = vpop.permute.xlu0 %4184
    %4186 = vrot.lane.b32.xlu0 %v3759, 8
    %v4187 = vpop.permute.xlu0 %4186
    %4188 = vrot.lane.b32.xlu0 %v3762, 8
    %v4189 = vpop.permute.xlu0 %4188
    %4190 = vrot.lane.b32.xlu0 %v3764, 8
    %v4191 = vpop.permute.xlu0 %4190
    %4192 = vrot.lane.b32.xlu0 %v3767, 8
    %v4193 = vpop.permute.xlu0 %4192
    %4194 = vrot.lane.b32.xlu0 %v3769, 8
    %v4195 = vpop.permute.xlu0 %4194
    %4196 = vrot.lane.b32.xlu0 %v3772, 8
    %v4197 = vpop.permute.xlu0 %4196
    %4198 = vrot.lane.b32.xlu0 %v3774, 8
    %v4199 = vpop.permute.xlu0 %4198
    %4200 = vrot.lane.b32.xlu0 %v3777, 8
    %v4201 = vpop.permute.xlu0 %4200
    %4202 = vrot.lane.b32.xlu0 %v3779, 8
    %v4203 = vpop.permute.xlu0 %4202
    %4204 = vrot.lane.b32.xlu0 %v3782, 8
    %v4205 = vpop.permute.xlu0 %4204
    %4206 = vrot.lane.b32.xlu0 %v3784, 8
    %v4207 = vpop.permute.xlu0 %4206
    %4208 = vrot.lane.b32.xlu0 %v3787, 8
    %v4209 = vpop.permute.xlu0 %4208
    %4210 = vrot.lane.b32.xlu0 %v3789, 8
    %v4211 = vpop.permute.xlu0 %4210
    %4212 = vrot.lane.b32.xlu0 %v3792, 8
    %v4213 = vpop.permute.xlu0 %4212
    %4214 = vrot.lane.b32.xlu0 %v3794, 8
    %v4215 = vpop.permute.xlu0 %4214
    %4216 = vrot.lane.b32.xlu0 %v3797, 8
    %v4217 = vpop.permute.xlu0 %4216
    %4218 = vrot.lane.b32.xlu0 %v3799, 8
    %v4219 = vpop.permute.xlu0 %4218
    %4220 = vrot.lane.b32.xlu0 %v3802, 8
    %v4221 = vpop.permute.xlu0 %4220
    %4222 = vrot.lane.b32.xlu0 %v3804, 8
    %v4223 = vpop.permute.xlu0 %4222
    %4224 = vrot.lane.b32.xlu0 %v3807, 8
    %v4225 = vpop.permute.xlu0 %4224
    %4226 = vrot.lane.b32.xlu0 %v3809, 8
    %v4227 = vpop.permute.xlu0 %4226
    %4228 = vrot.lane.b32.xlu0 %v3812, 8
    %v4229 = vpop.permute.xlu0 %4228
    %4230 = vrot.lane.b32.xlu0 %v3814, 8
    %v4231 = vpop.permute.xlu0 %4230
    %4232 = vrot.lane.b32.xlu0 %v3817, 8
    %v4233 = vpop.permute.xlu0 %4232
    %4234 = vrot.lane.b32.xlu0 %v3819, 8
    %v4235 = vpop.permute.xlu0 %4234
    %4236 = vrot.lane.b32.xlu0 %v3822, 8
    %v4237 = vpop.permute.xlu0 %4236
    %4238 = vrot.lane.b32.xlu0 %v3824, 8
    %v4239 = vpop.permute.xlu0 %4238
    %4240 = vrot.lane.b32.xlu0 %v3827, 8
    %v4241 = vpop.permute.xlu0 %4240
    %4242 = vrot.lane.b32.xlu0 %v3829, 8
    %v4243 = vpop.permute.xlu0 %4242
    %4244 = vrot.lane.b32.xlu0 %v3832, 8
    %v4245 = vpop.permute.xlu0 %4244
    %4246 = vrot.lane.b32.xlu0 %v3834, 8
    %v4247 = vpop.permute.xlu0 %4246
    %4248 = vrot.lane.b32.xlu0 %v3837, 8
    %v4249 = vpop.permute.xlu0 %4248
    %4250 = vrot.lane.b32.xlu0 %v3839, 8
    %v4251 = vpop.permute.xlu0 %4250
    %4252 = vrot.lane.b32.xlu0 %v3842, 8
    %v4253 = vpop.permute.xlu0 %4252
    %4254 = vrot.lane.b32.xlu0 %v3844, 8
    %v4255 = vpop.permute.xlu0 %4254
    %4256 = vrot.lane.b32.xlu0 %v3847, 8
    %v4257 = vpop.permute.xlu0 %4256
    %4258 = vrot.lane.b32.xlu0 %v3849, 8
    %v4259 = vpop.permute.xlu0 %4258
    %4260 = vrot.lane.b32.xlu0 %v3852, 8
    %v4261 = vpop.permute.xlu0 %4260
    %4262 = vrot.lane.b32.xlu0 %v3854, 8
    %v4263 = vpop.permute.xlu0 %4262
    %4264 = vrot.lane.b32.xlu0 %v3857, 8
    %v4265 = vpop.permute.xlu0 %4264
    %4266 = vrot.lane.b32.xlu0 %v3859, 8
    %v4267 = vpop.permute.xlu0 %4266
    %4268 = vrot.lane.b32.xlu0 %v3862, 8
    %v4269 = vpop.permute.xlu0 %4268
    %4270 = vrot.lane.b32.xlu0 %v3864, 8
    %v4271 = vpop.permute.xlu0 %4270
    %4272 = vrot.lane.b32.xlu0 %v3867, 8
    %v4273 = vpop.permute.xlu0 %4272
    %4274 = vrot.lane.b32.xlu0 %v3869, 8
    %v4275 = vpop.permute.xlu0 %4274
    %4276 = vrot.lane.b32.xlu0 %v3872, 8
    %v4277 = vpop.permute.xlu0 %4276
    %4278 = vrot.lane.b32.xlu0 %v3874, 8
    %v4279 = vpop.permute.xlu0 %4278
    %4280 = vrot.lane.b32.xlu0 %v3877, 8
    %v4281 = vpop.permute.xlu0 %4280
    %4282 = vrot.lane.b32.xlu0 %v3879, 8
    %v4283 = vpop.permute.xlu0 %4282
    %4348 = vrot.lane.b32.xlu0 %v3882, 16
    %v4349 = vpop.permute.xlu0 %4348
    %4350 = vrot.lane.b32.xlu0 %v3884, 16
    %v4351 = vpop.permute.xlu0 %4350
    %4352 = vrot.lane.b32.xlu0 %v3887, 16
    %v4353 = vpop.permute.xlu0 %4352
    %4354 = vrot.lane.b32.xlu0 %v3889, 16
    %v4355 = vpop.permute.xlu0 %4354
    %4356 = vrot.lane.b32.xlu0 %v3892, 16
    %v4357 = vpop.permute.xlu0 %4356
    %4358 = vrot.lane.b32.xlu0 %v3894, 16
    %v4359 = vpop.permute.xlu0 %4358
    %4360 = vrot.lane.b32.xlu0 %v3897, 16
    %v4361 = vpop.permute.xlu0 %4360
    %4362 = vrot.lane.b32.xlu0 %v3899, 16
    %v4363 = vpop.permute.xlu0 %4362
    %4364 = vrot.lane.b32.xlu0 %v3902, 16
    %v4365 = vpop.permute.xlu0 %4364
    %4366 = vrot.lane.b32.xlu0 %v3904, 16
    %v4367 = vpop.permute.xlu0 %4366
    %4368 = vrot.lane.b32.xlu0 %v3907, 16
    %v4369 = vpop.permute.xlu0 %4368
    %4370 = vrot.lane.b32.xlu0 %v3909, 16
    %v4371 = vpop.permute.xlu0 %4370
    %4372 = vrot.lane.b32.xlu0 %v3912, 16
    %v4373 = vpop.permute.xlu0 %4372
    %4374 = vrot.lane.b32.xlu0 %v3914, 16
    %v4375 = vpop.permute.xlu0 %4374
    %4376 = vrot.lane.b32.xlu0 %v3917, 16
    %v4377 = vpop.permute.xlu0 %4376
    %4378 = vrot.lane.b32.xlu0 %v3919, 16
    %v4379 = vpop.permute.xlu0 %4378
    %4380 = vrot.lane.b32.xlu0 %v3922, 16
    %v4381 = vpop.permute.xlu0 %4380
    %4382 = vrot.lane.b32.xlu0 %v3924, 16
    %v4383 = vpop.permute.xlu0 %4382
    %4384 = vrot.lane.b32.xlu0 %v3927, 16
    %v4385 = vpop.permute.xlu0 %4384
    %4386 = vrot.lane.b32.xlu0 %v3929, 16
    %v4387 = vpop.permute.xlu0 %4386
    %4388 = vrot.lane.b32.xlu0 %v3932, 16
    %v4389 = vpop.permute.xlu0 %4388
    %4390 = vrot.lane.b32.xlu0 %v3934, 16
    %v4391 = vpop.permute.xlu0 %4390
    %4392 = vrot.lane.b32.xlu0 %v3937, 16
    %v4393 = vpop.permute.xlu0 %4392
    %4394 = vrot.lane.b32.xlu0 %v3939, 16
    %v4395 = vpop.permute.xlu0 %4394
    %4396 = vrot.lane.b32.xlu0 %v3942, 16
    %v4397 = vpop.permute.xlu0 %4396
    %4398 = vrot.lane.b32.xlu0 %v3944, 16
    %v4399 = vpop.permute.xlu0 %4398
    %4400 = vrot.lane.b32.xlu0 %v3947, 16
    %v4401 = vpop.permute.xlu0 %4400
    %4402 = vrot.lane.b32.xlu0 %v3949, 16
    %v4403 = vpop.permute.xlu0 %4402
    %4404 = vrot.lane.b32.xlu0 %v3952, 16
    %v4405 = vpop.permute.xlu0 %4404
    %4406 = vrot.lane.b32.xlu0 %v3954, 16
    %v4407 = vpop.permute.xlu0 %4406
    %4408 = vrot.lane.b32.xlu0 %v3957, 16
    %v4409 = vpop.permute.xlu0 %4408
    %4410 = vrot.lane.b32.xlu0 %v3959, 16
    %v4411 = vpop.permute.xlu0 %4410
    %4412 = vrot.lane.b32.xlu0 %v3962, 16
    %v4413 = vpop.permute.xlu0 %4412
    %4414 = vrot.lane.b32.xlu0 %v3964, 16
    %v4415 = vpop.permute.xlu0 %4414
    %4416 = vrot.lane.b32.xlu0 %v3967, 16
    %v4417 = vpop.permute.xlu0 %4416
    %4418 = vrot.lane.b32.xlu0 %v3969, 16
    %v4419 = vpop.permute.xlu0 %4418
    %4420 = vrot.lane.b32.xlu0 %v3972, 16
    %v4421 = vpop.permute.xlu0 %4420
    %4422 = vrot.lane.b32.xlu0 %v3974, 16
    %v4423 = vpop.permute.xlu0 %4422
    %4424 = vrot.lane.b32.xlu0 %v3977, 16
    %v4425 = vpop.permute.xlu0 %4424
    %4426 = vrot.lane.b32.xlu0 %v3979, 16
    %v4427 = vpop.permute.xlu0 %4426
    %4428 = vrot.lane.b32.xlu0 %v3982, 16
    %v4429 = vpop.permute.xlu0 %4428
    %4430 = vrot.lane.b32.xlu0 %v3984, 16
    %v4431 = vpop.permute.xlu0 %4430
    %4432 = vrot.lane.b32.xlu0 %v3987, 16
    %v4433 = vpop.permute.xlu0 %4432
    %4434 = vrot.lane.b32.xlu0 %v3989, 16
    %v4435 = vpop.permute.xlu0 %4434
    %4436 = vrot.lane.b32.xlu0 %v3992, 16
    %v4437 = vpop.permute.xlu0 %4436
    %4438 = vrot.lane.b32.xlu0 %v3994, 16
    %v4439 = vpop.permute.xlu0 %4438
    %4440 = vrot.lane.b32.xlu0 %v3997, 16
    %v4441 = vpop.permute.xlu0 %4440
    %4442 = vrot.lane.b32.xlu0 %v3999, 16
    %v4443 = vpop.permute.xlu0 %4442
    %4444 = vrot.lane.b32.xlu0 %v4002, 16
    %v4445 = vpop.permute.xlu0 %4444
    %4446 = vrot.lane.b32.xlu0 %v4004, 16
    %v4447 = vpop.permute.xlu0 %4446
    %4448 = vrot.lane.b32.xlu0 %v4007, 16
    %v4449 = vpop.permute.xlu0 %4448
    %4450 = vrot.lane.b32.xlu0 %v4009, 16
    %v4451 = vpop.permute.xlu0 %4450
    %4452 = vrot.lane.b32.xlu0 %v4012, 16
    %v4453 = vpop.permute.xlu0 %4452
    %4454 = vrot.lane.b32.xlu0 %v4014, 16
    %v4455 = vpop.permute.xlu0 %4454
    %4456 = vrot.lane.b32.xlu0 %v4017, 16
    %v4457 = vpop.permute.xlu0 %4456
    %4458 = vrot.lane.b32.xlu0 %v4019, 16
    %v4459 = vpop.permute.xlu0 %4458
    %4460 = vrot.lane.b32.xlu0 %v4022, 16
    %v4461 = vpop.permute.xlu0 %4460
    %4462 = vrot.lane.b32.xlu0 %v4024, 16
    %v4463 = vpop.permute.xlu0 %4462
    %4464 = vrot.lane.b32.xlu0 %v4027, 16
    %v4465 = vpop.permute.xlu0 %4464
    %4466 = vrot.lane.b32.xlu0 %v4029, 16
    %v4467 = vpop.permute.xlu0 %4466
    %4468 = vrot.lane.b32.xlu0 %v4032, 16
    %v4469 = vpop.permute.xlu0 %4468
    %4470 = vrot.lane.b32.xlu0 %v4034, 16
    %v4471 = vpop.permute.xlu0 %4470
    %4472 = vrot.lane.b32.xlu0 %v4037, 16
    %v4473 = vpop.permute.xlu0 %4472
    %4474 = vrot.lane.b32.xlu0 %v4039, 16
    %v4475 = vpop.permute.xlu0 %4474
    %4540 = vrot.lane.b32.xlu0 %v3519, 24
    %v4541 = vpop.permute.xlu0 %4540
    %4542 = vrot.lane.b32.xlu0 %v3520, 24
    %v4543 = vpop.permute.xlu0 %4542
    %4544 = vrot.lane.b32.xlu0 %v3522, 24
    %v4545 = vpop.permute.xlu0 %4544
    %4546 = vrot.lane.b32.xlu0 %v3523, 24
    %v4547 = vpop.permute.xlu0 %4546
    %4548 = vrot.lane.b32.xlu0 %v3525, 24
    %v4549 = vpop.permute.xlu0 %4548
    %4550 = vrot.lane.b32.xlu0 %v3526, 24
    %v4551 = vpop.permute.xlu0 %4550
    %4552 = vrot.lane.b32.xlu0 %v3528, 24
    %v4553 = vpop.permute.xlu0 %4552
    %4554 = vrot.lane.b32.xlu0 %v3529, 24
    %v4555 = vpop.permute.xlu0 %4554
    %4556 = vrot.lane.b32.xlu0 %v3531, 24
    %v4557 = vpop.permute.xlu0 %4556
    %4558 = vrot.lane.b32.xlu0 %v3532, 24
    %v4559 = vpop.permute.xlu0 %4558
    %4560 = vrot.lane.b32.xlu0 %v3534, 24
    %v4561 = vpop.permute.xlu0 %4560
    %4562 = vrot.lane.b32.xlu0 %v3535, 24
    %v4563 = vpop.permute.xlu0 %4562
    %4564 = vrot.lane.b32.xlu0 %v3537, 24
    %v4565 = vpop.permute.xlu0 %4564
    %4566 = vrot.lane.b32.xlu0 %v3538, 24
    %v4567 = vpop.permute.xlu0 %4566
    %4568 = vrot.lane.b32.xlu0 %v3540, 24
    %v4569 = vpop.permute.xlu0 %4568
    %4570 = vrot.lane.b32.xlu0 %v3541, 24
    %v4571 = vpop.permute.xlu0 %4570
    %4572 = vrot.lane.b32.xlu0 %v3543, 24
    %v4573 = vpop.permute.xlu0 %4572
    %4574 = vrot.lane.b32.xlu0 %v3544, 24
    %v4575 = vpop.permute.xlu0 %4574
    %4576 = vrot.lane.b32.xlu0 %v3546, 24
    %v4577 = vpop.permute.xlu0 %4576
    %4578 = vrot.lane.b32.xlu0 %v3547, 24
    %v4579 = vpop.permute.xlu0 %4578
    %4580 = vrot.lane.b32.xlu0 %v3549, 24
    %v4581 = vpop.permute.xlu0 %4580
    %4582 = vrot.lane.b32.xlu0 %v3550, 24
    %v4583 = vpop.permute.xlu0 %4582
    %4584 = vrot.lane.b32.xlu0 %v3552, 24
    %v4585 = vpop.permute.xlu0 %4584
    %4586 = vrot.lane.b32.xlu0 %v3553, 24
    %v4587 = vpop.permute.xlu0 %4586
    %4588 = vrot.lane.b32.xlu0 %v3555, 24
    %v4589 = vpop.permute.xlu0 %4588
    %4590 = vrot.lane.b32.xlu0 %v3556, 24
    %v4591 = vpop.permute.xlu0 %4590
    %4592 = vrot.lane.b32.xlu0 %v3558, 24
    %v4593 = vpop.permute.xlu0 %4592
    %4594 = vrot.lane.b32.xlu0 %v3559, 24
    %v4595 = vpop.permute.xlu0 %4594
    %4596 = vrot.lane.b32.xlu0 %v3561, 24
    %v4597 = vpop.permute.xlu0 %4596
    %4598 = vrot.lane.b32.xlu0 %v3562, 24
    %v4599 = vpop.permute.xlu0 %4598
    %4600 = vrot.lane.b32.xlu0 %v3564, 24
    %v4601 = vpop.permute.xlu0 %4600
    %4602 = vrot.lane.b32.xlu0 %v3565, 24
    %v4603 = vpop.permute.xlu0 %4602
    %4604 = vrot.lane.b32.xlu0 %v3573, 24
    %v4605 = vpop.permute.xlu0 %4604
    %4606 = vrot.lane.b32.xlu0 %v3574, 24
    %v4607 = vpop.permute.xlu0 %4606
    %4608 = vrot.lane.b32.xlu0 %v3576, 24
    %v4609 = vpop.permute.xlu0 %4608
    %4610 = vrot.lane.b32.xlu0 %v3577, 24
    %v4611 = vpop.permute.xlu0 %4610
    %4612 = vrot.lane.b32.xlu0 %v3579, 24
    %v4613 = vpop.permute.xlu0 %4612
    %4614 = vrot.lane.b32.xlu0 %v3580, 24
    %v4615 = vpop.permute.xlu0 %4614
    %4616 = vrot.lane.b32.xlu0 %v3582, 24
    %v4617 = vpop.permute.xlu0 %4616
    %4618 = vrot.lane.b32.xlu0 %v3583, 24
    %v4619 = vpop.permute.xlu0 %4618
    %4620 = vrot.lane.b32.xlu0 %v3585, 24
    %v4621 = vpop.permute.xlu0 %4620
    %4622 = vrot.lane.b32.xlu0 %v3586, 24
    %v4623 = vpop.permute.xlu0 %4622
    %4624 = vrot.lane.b32.xlu0 %v3588, 24
    %v4625 = vpop.permute.xlu0 %4624
    %4626 = vrot.lane.b32.xlu0 %v3589, 24
    %v4627 = vpop.permute.xlu0 %4626
    %4628 = vrot.lane.b32.xlu0 %v3591, 24
    %v4629 = vpop.permute.xlu0 %4628
    %4630 = vrot.lane.b32.xlu0 %v3592, 24
    %v4631 = vpop.permute.xlu0 %4630
    %4632 = vrot.lane.b32.xlu0 %v3594, 24
    %v4633 = vpop.permute.xlu0 %4632
    %4634 = vrot.lane.b32.xlu0 %v3595, 24
    %v4635 = vpop.permute.xlu0 %4634
    %4636 = vrot.lane.b32.xlu0 %v3597, 24
    %v4637 = vpop.permute.xlu0 %4636
    %4638 = vrot.lane.b32.xlu0 %v3598, 24
    %v4639 = vpop.permute.xlu0 %4638
    %4640 = vrot.lane.b32.xlu0 %v3600, 24
    %v4641 = vpop.permute.xlu0 %4640
    %4642 = vrot.lane.b32.xlu0 %v3601, 24
    %v4643 = vpop.permute.xlu0 %4642
    %4644 = vrot.lane.b32.xlu0 %v3603, 24
    %v4645 = vpop.permute.xlu0 %4644
    %4646 = vrot.lane.b32.xlu0 %v3604, 24
    %v4647 = vpop.permute.xlu0 %4646
    %4648 = vrot.lane.b32.xlu0 %v3606, 24
    %v4649 = vpop.permute.xlu0 %4648
    %4650 = vrot.lane.b32.xlu0 %v3607, 24
    %v4651 = vpop.permute.xlu0 %4650
    %4652 = vrot.lane.b32.xlu0 %v3609, 24
    %v4653 = vpop.permute.xlu0 %4652
    %4654 = vrot.lane.b32.xlu0 %v3610, 24
    %v4655 = vpop.permute.xlu0 %4654
    %4656 = vrot.lane.b32.xlu0 %v3612, 24
    %v4657 = vpop.permute.xlu0 %4656
    %4658 = vrot.lane.b32.xlu0 %v3613, 24
    %v4659 = vpop.permute.xlu0 %4658
    %4660 = vrot.lane.b32.xlu0 %v3615, 24
    %v4661 = vpop.permute.xlu0 %4660
    %4662 = vrot.lane.b32.xlu0 %v3616, 24
    %v4663 = vpop.permute.xlu0 %4662
    %4664 = vrot.lane.b32.xlu0 %v3618, 24
    %v4665 = vpop.permute.xlu0 %4664
    %4666 = vrot.lane.b32.xlu0 %v3619, 24
    %v4667 = vpop.permute.xlu0 %4666
    %4732 = vrot.lane.b32.xlu0 %v3727, 32
    %v4733 = vpop.permute.xlu0 %4732
    %4734 = vrot.lane.b32.xlu0 %v3729, 32
    %v4735 = vpop.permute.xlu0 %4734
    %4736 = vrot.lane.b32.xlu0 %v3732, 32
    %v4737 = vpop.permute.xlu0 %4736
    %4738 = vrot.lane.b32.xlu0 %v3734, 32
    %v4739 = vpop.permute.xlu0 %4738
    %4740 = vrot.lane.b32.xlu0 %v3737, 32
    %v4741 = vpop.permute.xlu0 %4740
    %4742 = vrot.lane.b32.xlu0 %v3739, 32
    %v4743 = vpop.permute.xlu0 %4742
    %4744 = vrot.lane.b32.xlu0 %v3742, 32
    %v4745 = vpop.permute.xlu0 %4744
    %4746 = vrot.lane.b32.xlu0 %v3744, 32
    %v4747 = vpop.permute.xlu0 %4746
    %4748 = vrot.lane.b32.xlu0 %v3747, 32
    %v4749 = vpop.permute.xlu0 %4748
    %4750 = vrot.lane.b32.xlu0 %v3749, 32
    %v4751 = vpop.permute.xlu0 %4750
    %4752 = vrot.lane.b32.xlu0 %v3752, 32
    %v4753 = vpop.permute.xlu0 %4752
    %4754 = vrot.lane.b32.xlu0 %v3754, 32
    %v4755 = vpop.permute.xlu0 %4754
    %4756 = vrot.lane.b32.xlu0 %v3757, 32
    %v4757 = vpop.permute.xlu0 %4756
    %4758 = vrot.lane.b32.xlu0 %v3759, 32
    %v4759 = vpop.permute.xlu0 %4758
    %4760 = vrot.lane.b32.xlu0 %v3762, 32
    %v4761 = vpop.permute.xlu0 %4760
    %4762 = vrot.lane.b32.xlu0 %v3764, 32
    %v4763 = vpop.permute.xlu0 %4762
    %4764 = vrot.lane.b32.xlu0 %v3767, 32
    %v4765 = vpop.permute.xlu0 %4764
    %4766 = vrot.lane.b32.xlu0 %v3769, 32
    %v4767 = vpop.permute.xlu0 %4766
    %4768 = vrot.lane.b32.xlu0 %v3772, 32
    %v4769 = vpop.permute.xlu0 %4768
    %4770 = vrot.lane.b32.xlu0 %v3774, 32
    %v4771 = vpop.permute.xlu0 %4770
    %4772 = vrot.lane.b32.xlu0 %v3777, 32
    %v4773 = vpop.permute.xlu0 %4772
    %4774 = vrot.lane.b32.xlu0 %v3779, 32
    %v4775 = vpop.permute.xlu0 %4774
    %4776 = vrot.lane.b32.xlu0 %v3782, 32
    %v4777 = vpop.permute.xlu0 %4776
    %4778 = vrot.lane.b32.xlu0 %v3784, 32
    %v4779 = vpop.permute.xlu0 %4778
    %4780 = vrot.lane.b32.xlu0 %v3787, 32
    %v4781 = vpop.permute.xlu0 %4780
    %4782 = vrot.lane.b32.xlu0 %v3789, 32
    %v4783 = vpop.permute.xlu0 %4782
    %4784 = vrot.lane.b32.xlu0 %v3792, 32
    %v4785 = vpop.permute.xlu0 %4784
    %4786 = vrot.lane.b32.xlu0 %v3794, 32
    %v4787 = vpop.permute.xlu0 %4786
    %4788 = vrot.lane.b32.xlu0 %v3797, 32
    %v4789 = vpop.permute.xlu0 %4788
    %4790 = vrot.lane.b32.xlu0 %v3799, 32
    %v4791 = vpop.permute.xlu0 %4790
    %4792 = vrot.lane.b32.xlu0 %v4048, 32
    %v4793 = vpop.permute.xlu0 %4792
    %4794 = vrot.lane.b32.xlu0 %v4050, 32
    %v4795 = vpop.permute.xlu0 %4794
    %4796 = vrot.lane.b32.xlu0 %v3807, 32
    %v4797 = vpop.permute.xlu0 %4796
    %4798 = vrot.lane.b32.xlu0 %v3809, 32
    %v4799 = vpop.permute.xlu0 %4798
    %4800 = vrot.lane.b32.xlu0 %v3812, 32
    %v4801 = vpop.permute.xlu0 %4800
    %4802 = vrot.lane.b32.xlu0 %v3814, 32
    %v4803 = vpop.permute.xlu0 %4802
    %4804 = vrot.lane.b32.xlu0 %v3817, 32
    %v4805 = vpop.permute.xlu0 %4804
    %4806 = vrot.lane.b32.xlu0 %v3819, 32
    %v4807 = vpop.permute.xlu0 %4806
    %4808 = vrot.lane.b32.xlu0 %v3822, 32
    %v4809 = vpop.permute.xlu0 %4808
    %4810 = vrot.lane.b32.xlu0 %v3824, 32
    %v4811 = vpop.permute.xlu0 %4810
    %4812 = vrot.lane.b32.xlu0 %v3827, 32
    %v4813 = vpop.permute.xlu0 %4812
    %4814 = vrot.lane.b32.xlu0 %v3829, 32
    %v4815 = vpop.permute.xlu0 %4814
    %4816 = vrot.lane.b32.xlu0 %v3832, 32
    %v4817 = vpop.permute.xlu0 %4816
    %4818 = vrot.lane.b32.xlu0 %v3834, 32
    %v4819 = vpop.permute.xlu0 %4818
    %4820 = vrot.lane.b32.xlu0 %v3837, 32
    %v4821 = vpop.permute.xlu0 %4820
    %4822 = vrot.lane.b32.xlu0 %v3839, 32
    %v4823 = vpop.permute.xlu0 %4822
    %4824 = vrot.lane.b32.xlu0 %v3842, 32
    %v4825 = vpop.permute.xlu0 %4824
    %4826 = vrot.lane.b32.xlu0 %v3844, 32
    %v4827 = vpop.permute.xlu0 %4826
    %4828 = vrot.lane.b32.xlu0 %v3847, 32
    %v4829 = vpop.permute.xlu0 %4828
    %4830 = vrot.lane.b32.xlu0 %v3849, 32
    %v4831 = vpop.permute.xlu0 %4830
    %4832 = vrot.lane.b32.xlu0 %v3852, 32
    %v4833 = vpop.permute.xlu0 %4832
    %4834 = vrot.lane.b32.xlu0 %v3854, 32
    %v4835 = vpop.permute.xlu0 %4834
    %4836 = vrot.lane.b32.xlu0 %v3857, 32
    %v4837 = vpop.permute.xlu0 %4836
    %4838 = vrot.lane.b32.xlu0 %v3859, 32
    %v4839 = vpop.permute.xlu0 %4838
    %4840 = vrot.lane.b32.xlu0 %v3862, 32
    %v4841 = vpop.permute.xlu0 %4840
    %4842 = vrot.lane.b32.xlu0 %v3864, 32
    %v4843 = vpop.permute.xlu0 %4842
    %4844 = vrot.lane.b32.xlu0 %v3867, 32
    %v4845 = vpop.permute.xlu0 %4844
    %4846 = vrot.lane.b32.xlu0 %v3869, 32
    %v4847 = vpop.permute.xlu0 %4846
    %4848 = vrot.lane.b32.xlu0 %v3872, 32
    %v4849 = vpop.permute.xlu0 %4848
    %4850 = vrot.lane.b32.xlu0 %v3874, 32
    %v4851 = vpop.permute.xlu0 %4850
    %4852 = vrot.lane.b32.xlu0 %v3877, 32
    %v4853 = vpop.permute.xlu0 %4852
    %4854 = vrot.lane.b32.xlu0 %v3879, 32
    %v4855 = vpop.permute.xlu0 %4854
    %4856 = vrot.lane.b32.xlu0 %v4053, 32
    %v4857 = vpop.permute.xlu0 %4856
    %4858 = vrot.lane.b32.xlu0 %v4055, 32
    %v4859 = vpop.permute.xlu0 %4858
    %4924 = vrot.lane.b32.xlu0 %v3887, 40
    %v4925 = vpop.permute.xlu0 %4924
    %4926 = vrot.lane.b32.xlu0 %v3889, 40
    %v4927 = vpop.permute.xlu0 %4926
    %4928 = vrot.lane.b32.xlu0 %v3892, 40
    %v4929 = vpop.permute.xlu0 %4928
    %4930 = vrot.lane.b32.xlu0 %v3894, 40
    %v4931 = vpop.permute.xlu0 %4930
    %4932 = vrot.lane.b32.xlu0 %v3897, 40
    %v4933 = vpop.permute.xlu0 %4932
    %4934 = vrot.lane.b32.xlu0 %v3899, 40
    %v4935 = vpop.permute.xlu0 %4934
    %4936 = vrot.lane.b32.xlu0 %v3902, 40
    %v4937 = vpop.permute.xlu0 %4936
    %4938 = vrot.lane.b32.xlu0 %v3904, 40
    %v4939 = vpop.permute.xlu0 %4938
    %4940 = vrot.lane.b32.xlu0 %v3907, 40
    %v4941 = vpop.permute.xlu0 %4940
    %4942 = vrot.lane.b32.xlu0 %v3909, 40
    %v4943 = vpop.permute.xlu0 %4942
    %4944 = vrot.lane.b32.xlu0 %v3912, 40
    %v4945 = vpop.permute.xlu0 %4944
    %4946 = vrot.lane.b32.xlu0 %v3914, 40
    %v4947 = vpop.permute.xlu0 %4946
    %4948 = vrot.lane.b32.xlu0 %v3917, 40
    %v4949 = vpop.permute.xlu0 %4948
    %4950 = vrot.lane.b32.xlu0 %v3919, 40
    %v4951 = vpop.permute.xlu0 %4950
    %4952 = vrot.lane.b32.xlu0 %v3922, 40
    %v4953 = vpop.permute.xlu0 %4952
    %4954 = vrot.lane.b32.xlu0 %v3924, 40
    %v4955 = vpop.permute.xlu0 %4954
    %4956 = vrot.lane.b32.xlu0 %v3927, 40
    %v4957 = vpop.permute.xlu0 %4956
    %4958 = vrot.lane.b32.xlu0 %v3929, 40
    %v4959 = vpop.permute.xlu0 %4958
    %4960 = vrot.lane.b32.xlu0 %v3932, 40
    %v4961 = vpop.permute.xlu0 %4960
    %4962 = vrot.lane.b32.xlu0 %v3934, 40
    %v4963 = vpop.permute.xlu0 %4962
    %4964 = vrot.lane.b32.xlu0 %v3937, 40
    %v4965 = vpop.permute.xlu0 %4964
    %4966 = vrot.lane.b32.xlu0 %v3939, 40
    %v4967 = vpop.permute.xlu0 %4966
    %4968 = vrot.lane.b32.xlu0 %v3942, 40
    %v4969 = vpop.permute.xlu0 %4968
    %4970 = vrot.lane.b32.xlu0 %v3944, 40
    %v4971 = vpop.permute.xlu0 %4970
    %4972 = vrot.lane.b32.xlu0 %v3947, 40
    %v4973 = vpop.permute.xlu0 %4972
    %4974 = vrot.lane.b32.xlu0 %v3949, 40
    %v4975 = vpop.permute.xlu0 %4974
    %4976 = vrot.lane.b32.xlu0 %v3952, 40
    %v4977 = vpop.permute.xlu0 %4976
    %4978 = vrot.lane.b32.xlu0 %v3954, 40
    %v4979 = vpop.permute.xlu0 %4978
    %4980 = vrot.lane.b32.xlu0 %v3957, 40
    %v4981 = vpop.permute.xlu0 %4980
    %4982 = vrot.lane.b32.xlu0 %v3959, 40
    %v4983 = vpop.permute.xlu0 %4982
    %4984 = vrot.lane.b32.xlu0 %v4122, 40
    %v4985 = vpop.permute.xlu0 %4984
    %4986 = vrot.lane.b32.xlu0 %v4124, 40
    %v4987 = vpop.permute.xlu0 %4986
    %4988 = vrot.lane.b32.xlu0 %v3967, 40
    %v4989 = vpop.permute.xlu0 %4988
    %4990 = vrot.lane.b32.xlu0 %v3969, 40
    %v4991 = vpop.permute.xlu0 %4990
    %4992 = vrot.lane.b32.xlu0 %v3972, 40
    %v4993 = vpop.permute.xlu0 %4992
    %4994 = vrot.lane.b32.xlu0 %v3974, 40
    %v4995 = vpop.permute.xlu0 %4994
    %4996 = vrot.lane.b32.xlu0 %v3977, 40
    %v4997 = vpop.permute.xlu0 %4996
    %4998 = vrot.lane.b32.xlu0 %v3979, 40
    %v4999 = vpop.permute.xlu0 %4998
    %5000 = vrot.lane.b32.xlu0 %v3982, 40
    %v5001 = vpop.permute.xlu0 %5000
    %5002 = vrot.lane.b32.xlu0 %v3984, 40
    %v5003 = vpop.permute.xlu0 %5002
    %5004 = vrot.lane.b32.xlu0 %v3987, 40
    %v5005 = vpop.permute.xlu0 %5004
    %5006 = vrot.lane.b32.xlu0 %v3989, 40
    %v5007 = vpop.permute.xlu0 %5006
    %5008 = vrot.lane.b32.xlu0 %v3992, 40
    %v5009 = vpop.permute.xlu0 %5008
    %5010 = vrot.lane.b32.xlu0 %v3994, 40
    %v5011 = vpop.permute.xlu0 %5010
    %5012 = vrot.lane.b32.xlu0 %v3997, 40
    %v5013 = vpop.permute.xlu0 %5012
    %5014 = vrot.lane.b32.xlu0 %v3999, 40
    %v5015 = vpop.permute.xlu0 %5014
    %5016 = vrot.lane.b32.xlu0 %v4002, 40
    %v5017 = vpop.permute.xlu0 %5016
    %5018 = vrot.lane.b32.xlu0 %v4004, 40
    %v5019 = vpop.permute.xlu0 %5018
    %5020 = vrot.lane.b32.xlu0 %v4007, 40
    %v5021 = vpop.permute.xlu0 %5020
    %5022 = vrot.lane.b32.xlu0 %v4009, 40
    %v5023 = vpop.permute.xlu0 %5022
    %5024 = vrot.lane.b32.xlu0 %v4012, 40
    %v5025 = vpop.permute.xlu0 %5024
    %5026 = vrot.lane.b32.xlu0 %v4014, 40
    %v5027 = vpop.permute.xlu0 %5026
    %5028 = vrot.lane.b32.xlu0 %v4017, 40
    %v5029 = vpop.permute.xlu0 %5028
    %5030 = vrot.lane.b32.xlu0 %v4019, 40
    %v5031 = vpop.permute.xlu0 %5030
    %5032 = vrot.lane.b32.xlu0 %v4022, 40
    %v5033 = vpop.permute.xlu0 %5032
    %5034 = vrot.lane.b32.xlu0 %v4024, 40
    %v5035 = vpop.permute.xlu0 %5034
    %5036 = vrot.lane.b32.xlu0 %v4027, 40
    %v5037 = vpop.permute.xlu0 %5036
    %5038 = vrot.lane.b32.xlu0 %v4029, 40
    %v5039 = vpop.permute.xlu0 %5038
    %5040 = vrot.lane.b32.xlu0 %v4032, 40
    %v5041 = vpop.permute.xlu0 %5040
    %5042 = vrot.lane.b32.xlu0 %v4034, 40
    %v5043 = vpop.permute.xlu0 %5042
    %5044 = vrot.lane.b32.xlu0 %v4037, 40
    %v5045 = vpop.permute.xlu0 %5044
    %5046 = vrot.lane.b32.xlu0 %v4039, 40
    %v5047 = vpop.permute.xlu0 %5046
    %5048 = vrot.lane.b32.xlu0 %v4127, 40
    %v5049 = vpop.permute.xlu0 %5048
    %5050 = vrot.lane.b32.xlu0 %v4129, 40
    %v5051 = vpop.permute.xlu0 %5050
    %5116 = vrot.lane.b32.xlu0 %v3522, 48
    %v5117 = vpop.permute.xlu0 %5116
    %5118 = vrot.lane.b32.xlu0 %v3523, 48
    %v5119 = vpop.permute.xlu0 %5118
    %5120 = vrot.lane.b32.xlu0 %v3525, 48
    %v5121 = vpop.permute.xlu0 %5120
    %5122 = vrot.lane.b32.xlu0 %v3526, 48
    %v5123 = vpop.permute.xlu0 %5122
    %5124 = vrot.lane.b32.xlu0 %v3528, 48
    %v5125 = vpop.permute.xlu0 %5124
    %5126 = vrot.lane.b32.xlu0 %v3529, 48
    %v5127 = vpop.permute.xlu0 %5126
    %5128 = vrot.lane.b32.xlu0 %v3531, 48
    %v5129 = vpop.permute.xlu0 %5128
    %5130 = vrot.lane.b32.xlu0 %v3532, 48
    %v5131 = vpop.permute.xlu0 %5130
    %5132 = vrot.lane.b32.xlu0 %v3534, 48
    %v5133 = vpop.permute.xlu0 %5132
    %5134 = vrot.lane.b32.xlu0 %v3535, 48
    %v5135 = vpop.permute.xlu0 %5134
    %5136 = vrot.lane.b32.xlu0 %v3537, 48
    %v5137 = vpop.permute.xlu0 %5136
    %5138 = vrot.lane.b32.xlu0 %v3538, 48
    %v5139 = vpop.permute.xlu0 %5138
    %5140 = vrot.lane.b32.xlu0 %v3540, 48
    %v5141 = vpop.permute.xlu0 %5140
    %5142 = vrot.lane.b32.xlu0 %v3541, 48
    %v5143 = vpop.permute.xlu0 %5142
    %5144 = vrot.lane.b32.xlu0 %v3543, 48
    %v5145 = vpop.permute.xlu0 %5144
    %5146 = vrot.lane.b32.xlu0 %v3544, 48
    %v5147 = vpop.permute.xlu0 %5146
    %5148 = vrot.lane.b32.xlu0 %v3546, 48
    %v5149 = vpop.permute.xlu0 %5148
    %5150 = vrot.lane.b32.xlu0 %v3547, 48
    %v5151 = vpop.permute.xlu0 %5150
    %5152 = vrot.lane.b32.xlu0 %v3549, 48
    %v5153 = vpop.permute.xlu0 %5152
    %5154 = vrot.lane.b32.xlu0 %v3550, 48
    %v5155 = vpop.permute.xlu0 %5154
    %5156 = vrot.lane.b32.xlu0 %v3552, 48
    %v5157 = vpop.permute.xlu0 %5156
    %5158 = vrot.lane.b32.xlu0 %v3553, 48
    %v5159 = vpop.permute.xlu0 %5158
    %5160 = vrot.lane.b32.xlu0 %v3555, 48
    %v5161 = vpop.permute.xlu0 %5160
    %5162 = vrot.lane.b32.xlu0 %v3556, 48
    %v5163 = vpop.permute.xlu0 %5162
    %5164 = vrot.lane.b32.xlu0 %v3558, 48
    %v5165 = vpop.permute.xlu0 %5164
    %5166 = vrot.lane.b32.xlu0 %v3559, 48
    %v5167 = vpop.permute.xlu0 %5166
    %5168 = vrot.lane.b32.xlu0 %v3561, 48
    %v5169 = vpop.permute.xlu0 %5168
    %5170 = vrot.lane.b32.xlu0 %v3562, 48
    %v5171 = vpop.permute.xlu0 %5170
    %5172 = vrot.lane.b32.xlu0 %v3564, 48
    %v5173 = vpop.permute.xlu0 %5172
    %5174 = vrot.lane.b32.xlu0 %v3565, 48
    %v5175 = vpop.permute.xlu0 %5174
    %5176 = vrot.lane.b32.xlu0 %v3567, 48
    %v5177 = vpop.permute.xlu0 %5176
    %5178 = vrot.lane.b32.xlu0 %v3568, 48
    %v5179 = vpop.permute.xlu0 %5178
    %5180 = vrot.lane.b32.xlu0 %v3576, 48
    %v5181 = vpop.permute.xlu0 %5180
    %5182 = vrot.lane.b32.xlu0 %v3577, 48
    %v5183 = vpop.permute.xlu0 %5182
    %5184 = vrot.lane.b32.xlu0 %v3579, 48
    %v5185 = vpop.permute.xlu0 %5184
    %5186 = vrot.lane.b32.xlu0 %v3580, 48
    %v5187 = vpop.permute.xlu0 %5186
    %5188 = vrot.lane.b32.xlu0 %v3582, 48
    %v5189 = vpop.permute.xlu0 %5188
    %5190 = vrot.lane.b32.xlu0 %v3583, 48
    %v5191 = vpop.permute.xlu0 %5190
    %5192 = vrot.lane.b32.xlu0 %v3585, 48
    %v5193 = vpop.permute.xlu0 %5192
    %5194 = vrot.lane.b32.xlu0 %v3586, 48
    %v5195 = vpop.permute.xlu0 %5194
    %5196 = vrot.lane.b32.xlu0 %v3588, 48
    %v5197 = vpop.permute.xlu0 %5196
    %5198 = vrot.lane.b32.xlu0 %v3589, 48
    %v5199 = vpop.permute.xlu0 %5198
    %5200 = vrot.lane.b32.xlu0 %v3591, 48
    %v5201 = vpop.permute.xlu0 %5200
    %5202 = vrot.lane.b32.xlu0 %v3592, 48
    %v5203 = vpop.permute.xlu0 %5202
    %5204 = vrot.lane.b32.xlu0 %v3594, 48
    %v5205 = vpop.permute.xlu0 %5204
    %5206 = vrot.lane.b32.xlu0 %v3595, 48
    %v5207 = vpop.permute.xlu0 %5206
    %5208 = vrot.lane.b32.xlu0 %v3597, 48
    %v5209 = vpop.permute.xlu0 %5208
    %5210 = vrot.lane.b32.xlu0 %v3598, 48
    %v5211 = vpop.permute.xlu0 %5210
    %5212 = vrot.lane.b32.xlu0 %v3600, 48
    %v5213 = vpop.permute.xlu0 %5212
    %5214 = vrot.lane.b32.xlu0 %v3601, 48
    %v5215 = vpop.permute.xlu0 %5214
    %5216 = vrot.lane.b32.xlu0 %v3603, 48
    %v5217 = vpop.permute.xlu0 %5216
    %5218 = vrot.lane.b32.xlu0 %v3604, 48
    %v5219 = vpop.permute.xlu0 %5218
    %5220 = vrot.lane.b32.xlu0 %v3606, 48
    %v5221 = vpop.permute.xlu0 %5220
    %5222 = vrot.lane.b32.xlu0 %v3607, 48
    %v5223 = vpop.permute.xlu0 %5222
    %5224 = vrot.lane.b32.xlu0 %v3609, 48
    %v5225 = vpop.permute.xlu0 %5224
    %5226 = vrot.lane.b32.xlu0 %v3610, 48
    %v5227 = vpop.permute.xlu0 %5226
    %5228 = vrot.lane.b32.xlu0 %v3612, 48
    %v5229 = vpop.permute.xlu0 %5228
    %5230 = vrot.lane.b32.xlu0 %v3613, 48
    %v5231 = vpop.permute.xlu0 %5230
    %5232 = vrot.lane.b32.xlu0 %v3615, 48
    %v5233 = vpop.permute.xlu0 %5232
    %5234 = vrot.lane.b32.xlu0 %v3616, 48
    %v5235 = vpop.permute.xlu0 %5234
    %5236 = vrot.lane.b32.xlu0 %v3618, 48
    %v5237 = vpop.permute.xlu0 %5236
    %5238 = vrot.lane.b32.xlu0 %v3619, 48
    %v5239 = vpop.permute.xlu0 %5238
    %5240 = vrot.lane.b32.xlu0 %v3621, 48
    %v5241 = vpop.permute.xlu0 %5240
    %5242 = vrot.lane.b32.xlu0 %v3622, 48
    %v5243 = vpop.permute.xlu0 %5242
    %5308 = vrot.lane.b32.xlu0 %v3732, 56
    %v5309 = vpop.permute.xlu0 %5308
    %5310 = vrot.lane.b32.xlu0 %v3734, 56
    %v5311 = vpop.permute.xlu0 %5310
    %5312 = vrot.lane.b32.xlu0 %v3737, 56
    %v5313 = vpop.permute.xlu0 %5312
    %5314 = vrot.lane.b32.xlu0 %v3739, 56
    %v5315 = vpop.permute.xlu0 %5314
    %5316 = vrot.lane.b32.xlu0 %v3742, 56
    %v5317 = vpop.permute.xlu0 %5316
    %5318 = vrot.lane.b32.xlu0 %v3744, 56
    %v5319 = vpop.permute.xlu0 %5318
    %5320 = vrot.lane.b32.xlu0 %v3747, 56
    %v5321 = vpop.permute.xlu0 %5320
    %5322 = vrot.lane.b32.xlu0 %v3749, 56
    %v5323 = vpop.permute.xlu0 %5322
    %5324 = vrot.lane.b32.xlu0 %v3752, 56
    %v5325 = vpop.permute.xlu0 %5324
    %5326 = vrot.lane.b32.xlu0 %v3754, 56
    %v5327 = vpop.permute.xlu0 %5326
    %5328 = vrot.lane.b32.xlu0 %v3757, 56
    %v5329 = vpop.permute.xlu0 %5328
    %5330 = vrot.lane.b32.xlu0 %v3759, 56
    %v5331 = vpop.permute.xlu0 %5330
    %5332 = vrot.lane.b32.xlu0 %v3762, 56
    %v5333 = vpop.permute.xlu0 %5332
    %5334 = vrot.lane.b32.xlu0 %v3764, 56
    %v5335 = vpop.permute.xlu0 %5334
    %5336 = vrot.lane.b32.xlu0 %v3767, 56
    %v5337 = vpop.permute.xlu0 %5336
    %5338 = vrot.lane.b32.xlu0 %v3769, 56
    %v5339 = vpop.permute.xlu0 %5338
    %5340 = vrot.lane.b32.xlu0 %v3772, 56
    %v5341 = vpop.permute.xlu0 %5340
    %5342 = vrot.lane.b32.xlu0 %v3774, 56
    %v5343 = vpop.permute.xlu0 %5342
    %5344 = vrot.lane.b32.xlu0 %v3777, 56
    %v5345 = vpop.permute.xlu0 %5344
    %5346 = vrot.lane.b32.xlu0 %v3779, 56
    %v5347 = vpop.permute.xlu0 %5346
    %5348 = vrot.lane.b32.xlu0 %v3782, 56
    %v5349 = vpop.permute.xlu0 %5348
    %5350 = vrot.lane.b32.xlu0 %v3784, 56
    %v5351 = vpop.permute.xlu0 %5350
    %5352 = vrot.lane.b32.xlu0 %v3787, 56
    %v5353 = vpop.permute.xlu0 %5352
    %5354 = vrot.lane.b32.xlu0 %v3789, 56
    %v5355 = vpop.permute.xlu0 %5354
    %5356 = vrot.lane.b32.xlu0 %v3792, 56
    %v5357 = vpop.permute.xlu0 %5356
    %5358 = vrot.lane.b32.xlu0 %v3794, 56
    %v5359 = vpop.permute.xlu0 %5358
    %5360 = vrot.lane.b32.xlu0 %v3797, 56
    %v5361 = vpop.permute.xlu0 %5360
    %5362 = vrot.lane.b32.xlu0 %v3799, 56
    %v5363 = vpop.permute.xlu0 %5362
    %5364 = vrot.lane.b32.xlu0 %v4048, 56
    %v5365 = vpop.permute.xlu0 %5364
    %5366 = vrot.lane.b32.xlu0 %v4050, 56
    %v5367 = vpop.permute.xlu0 %5366
    %5368 = vrot.lane.b32.xlu0 %v4138, 56
    %v5369 = vpop.permute.xlu0 %5368
    %5370 = vrot.lane.b32.xlu0 %v4140, 56
    %v5371 = vpop.permute.xlu0 %5370
    %5372 = vrot.lane.b32.xlu0 %v3812, 56
    %v5373 = vpop.permute.xlu0 %5372
    %5374 = vrot.lane.b32.xlu0 %v3814, 56
    %v5375 = vpop.permute.xlu0 %5374
    %5376 = vrot.lane.b32.xlu0 %v3817, 56
    %v5377 = vpop.permute.xlu0 %5376
    %5378 = vrot.lane.b32.xlu0 %v3819, 56
    %v5379 = vpop.permute.xlu0 %5378
    %5380 = vrot.lane.b32.xlu0 %v3822, 56
    %v5381 = vpop.permute.xlu0 %5380
    %5382 = vrot.lane.b32.xlu0 %v3824, 56
    %v5383 = vpop.permute.xlu0 %5382
    %5384 = vrot.lane.b32.xlu0 %v3827, 56
    %v5385 = vpop.permute.xlu0 %5384
    %5386 = vrot.lane.b32.xlu0 %v3829, 56
    %v5387 = vpop.permute.xlu0 %5386
    %5388 = vrot.lane.b32.xlu0 %v3832, 56
    %v5389 = vpop.permute.xlu0 %5388
    %5390 = vrot.lane.b32.xlu0 %v3834, 56
    %v5391 = vpop.permute.xlu0 %5390
    %5392 = vrot.lane.b32.xlu0 %v3837, 56
    %v5393 = vpop.permute.xlu0 %5392
    %5394 = vrot.lane.b32.xlu0 %v3839, 56
    %v5395 = vpop.permute.xlu0 %5394
    %5396 = vrot.lane.b32.xlu0 %v3842, 56
    %v5397 = vpop.permute.xlu0 %5396
    %5398 = vrot.lane.b32.xlu0 %v3844, 56
    %v5399 = vpop.permute.xlu0 %5398
    %5400 = vrot.lane.b32.xlu0 %v3847, 56
    %v5401 = vpop.permute.xlu0 %5400
    %5402 = vrot.lane.b32.xlu0 %v3849, 56
    %v5403 = vpop.permute.xlu0 %5402
    %5404 = vrot.lane.b32.xlu0 %v3852, 56
    %v5405 = vpop.permute.xlu0 %5404
    %5406 = vrot.lane.b32.xlu0 %v3854, 56
    %v5407 = vpop.permute.xlu0 %5406
    %5408 = vrot.lane.b32.xlu0 %v3857, 56
    %v5409 = vpop.permute.xlu0 %5408
    %5410 = vrot.lane.b32.xlu0 %v3859, 56
    %v5411 = vpop.permute.xlu0 %5410
    %5412 = vrot.lane.b32.xlu0 %v3862, 56
    %v5413 = vpop.permute.xlu0 %5412
    %5414 = vrot.lane.b32.xlu0 %v3864, 56
    %v5415 = vpop.permute.xlu0 %5414
    %5416 = vrot.lane.b32.xlu0 %v3867, 56
    %v5417 = vpop.permute.xlu0 %5416
    %5418 = vrot.lane.b32.xlu0 %v3869, 56
    %v5419 = vpop.permute.xlu0 %5418
    %5420 = vrot.lane.b32.xlu0 %v3872, 56
    %v5421 = vpop.permute.xlu0 %5420
    %5422 = vrot.lane.b32.xlu0 %v3874, 56
    %v5423 = vpop.permute.xlu0 %5422
    %5424 = vrot.lane.b32.xlu0 %v3877, 56
    %v5425 = vpop.permute.xlu0 %5424
    %5426 = vrot.lane.b32.xlu0 %v3879, 56
    %v5427 = vpop.permute.xlu0 %5426
    %5428 = vrot.lane.b32.xlu0 %v4053, 56
    %v5429 = vpop.permute.xlu0 %5428
    %5430 = vrot.lane.b32.xlu0 %v4055, 56
    %v5431 = vpop.permute.xlu0 %5430
    %5432 = vrot.lane.b32.xlu0 %v4143, 56
    %v5433 = vpop.permute.xlu0 %5432
    %5434 = vrot.lane.b32.xlu0 %v4145, 56
    %v5435 = vpop.permute.xlu0 %5434
    %5500 = vrot.lane.b32.xlu0 %v3892, 64
    %v5501 = vpop.permute.xlu0 %5500
    %5502 = vrot.lane.b32.xlu0 %v3894, 64
    %v5503 = vpop.permute.xlu0 %5502
    %5504 = vrot.lane.b32.xlu0 %v3897, 64
    %v5505 = vpop.permute.xlu0 %5504
    %5506 = vrot.lane.b32.xlu0 %v3899, 64
    %v5507 = vpop.permute.xlu0 %5506
    %5508 = vrot.lane.b32.xlu0 %v3902, 64
    %v5509 = vpop.permute.xlu0 %5508
    %5510 = vrot.lane.b32.xlu0 %v3904, 64
    %v5511 = vpop.permute.xlu0 %5510
    %5512 = vrot.lane.b32.xlu0 %v3907, 64
    %v5513 = vpop.permute.xlu0 %5512
    %5514 = vrot.lane.b32.xlu0 %v3909, 64
    %v5515 = vpop.permute.xlu0 %5514
    %5516 = vrot.lane.b32.xlu0 %v3912, 64
    %v5517 = vpop.permute.xlu0 %5516
    %5518 = vrot.lane.b32.xlu0 %v3914, 64
    %v5519 = vpop.permute.xlu0 %5518
    %5520 = vrot.lane.b32.xlu0 %v3917, 64
    %v5521 = vpop.permute.xlu0 %5520
    %5522 = vrot.lane.b32.xlu0 %v3919, 64
    %v5523 = vpop.permute.xlu0 %5522
    %5524 = vrot.lane.b32.xlu0 %v3922, 64
    %v5525 = vpop.permute.xlu0 %5524
    %5526 = vrot.lane.b32.xlu0 %v3924, 64
    %v5527 = vpop.permute.xlu0 %5526
    %5528 = vrot.lane.b32.xlu0 %v3927, 64
    %v5529 = vpop.permute.xlu0 %5528
    %5530 = vrot.lane.b32.xlu0 %v3929, 64
    %v5531 = vpop.permute.xlu0 %5530
    %5532 = vrot.lane.b32.xlu0 %v3932, 64
    %v5533 = vpop.permute.xlu0 %5532
    %5534 = vrot.lane.b32.xlu0 %v3934, 64
    %v5535 = vpop.permute.xlu0 %5534
    %5536 = vrot.lane.b32.xlu0 %v3937, 64
    %v5537 = vpop.permute.xlu0 %5536
    %5538 = vrot.lane.b32.xlu0 %v3939, 64
    %v5539 = vpop.permute.xlu0 %5538
    %5540 = vrot.lane.b32.xlu0 %v3942, 64
    %v5541 = vpop.permute.xlu0 %5540
    %5542 = vrot.lane.b32.xlu0 %v3944, 64
    %v5543 = vpop.permute.xlu0 %5542
    %5544 = vrot.lane.b32.xlu0 %v3947, 64
    %v5545 = vpop.permute.xlu0 %5544
    %5546 = vrot.lane.b32.xlu0 %v3949, 64
    %v5547 = vpop.permute.xlu0 %5546
    %5548 = vrot.lane.b32.xlu0 %v3952, 64
    %v5549 = vpop.permute.xlu0 %5548
    %5550 = vrot.lane.b32.xlu0 %v3954, 64
    %v5551 = vpop.permute.xlu0 %5550
    %5552 = vrot.lane.b32.xlu0 %v3957, 64
    %v5553 = vpop.permute.xlu0 %5552
    %5554 = vrot.lane.b32.xlu0 %v3959, 64
    %v5555 = vpop.permute.xlu0 %5554
    %5556 = vrot.lane.b32.xlu0 %v4122, 64
    %v5557 = vpop.permute.xlu0 %5556
    %5558 = vrot.lane.b32.xlu0 %v4124, 64
    %v5559 = vpop.permute.xlu0 %5558
    %5560 = vrot.lane.b32.xlu0 %v4148, 64
    %v5561 = vpop.permute.xlu0 %5560
    %5562 = vrot.lane.b32.xlu0 %v4150, 64
    %v5563 = vpop.permute.xlu0 %5562
    %5564 = vrot.lane.b32.xlu0 %v3972, 64
    %v5565 = vpop.permute.xlu0 %5564
    %5566 = vrot.lane.b32.xlu0 %v3974, 64
    %v5567 = vpop.permute.xlu0 %5566
    %5568 = vrot.lane.b32.xlu0 %v3977, 64
    %v5569 = vpop.permute.xlu0 %5568
    %5570 = vrot.lane.b32.xlu0 %v3979, 64
    %v5571 = vpop.permute.xlu0 %5570
    %5572 = vrot.lane.b32.xlu0 %v3982, 64
    %v5573 = vpop.permute.xlu0 %5572
    %5574 = vrot.lane.b32.xlu0 %v3984, 64
    %v5575 = vpop.permute.xlu0 %5574
    %5576 = vrot.lane.b32.xlu0 %v3987, 64
    %v5577 = vpop.permute.xlu0 %5576
    %5578 = vrot.lane.b32.xlu0 %v3989, 64
    %v5579 = vpop.permute.xlu0 %5578
    %5580 = vrot.lane.b32.xlu0 %v3992, 64
    %v5581 = vpop.permute.xlu0 %5580
    %5582 = vrot.lane.b32.xlu0 %v3994, 64
    %v5583 = vpop.permute.xlu0 %5582
    %5584 = vrot.lane.b32.xlu0 %v3997, 64
    %v5585 = vpop.permute.xlu0 %5584
    %5586 = vrot.lane.b32.xlu0 %v3999, 64
    %v5587 = vpop.permute.xlu0 %5586
    %5588 = vrot.lane.b32.xlu0 %v4002, 64
    %v5589 = vpop.permute.xlu0 %5588
    %5590 = vrot.lane.b32.xlu0 %v4004, 64
    %v5591 = vpop.permute.xlu0 %5590
    %5592 = vrot.lane.b32.xlu0 %v4007, 64
    %v5593 = vpop.permute.xlu0 %5592
    %5594 = vrot.lane.b32.xlu0 %v4009, 64
    %v5595 = vpop.permute.xlu0 %5594
    %5596 = vrot.lane.b32.xlu0 %v4012, 64
    %v5597 = vpop.permute.xlu0 %5596
    %5598 = vrot.lane.b32.xlu0 %v4014, 64
    %v5599 = vpop.permute.xlu0 %5598
    %5600 = vrot.lane.b32.xlu0 %v4017, 64
    %v5601 = vpop.permute.xlu0 %5600
    %5602 = vrot.lane.b32.xlu0 %v4019, 64
    %v5603 = vpop.permute.xlu0 %5602
    %5604 = vrot.lane.b32.xlu0 %v4022, 64
    %v5605 = vpop.permute.xlu0 %5604
    %5606 = vrot.lane.b32.xlu0 %v4024, 64
    %v5607 = vpop.permute.xlu0 %5606
    %5608 = vrot.lane.b32.xlu0 %v4027, 64
    %v5609 = vpop.permute.xlu0 %5608
    %5610 = vrot.lane.b32.xlu0 %v4029, 64
    %v5611 = vpop.permute.xlu0 %5610
    %5612 = vrot.lane.b32.xlu0 %v4032, 64
    %v5613 = vpop.permute.xlu0 %5612
    %5614 = vrot.lane.b32.xlu0 %v4034, 64
    %v5615 = vpop.permute.xlu0 %5614
    %5616 = vrot.lane.b32.xlu0 %v4037, 64
    %v5617 = vpop.permute.xlu0 %5616
    %5618 = vrot.lane.b32.xlu0 %v4039, 64
    %v5619 = vpop.permute.xlu0 %5618
    %5620 = vrot.lane.b32.xlu0 %v4127, 64
    %v5621 = vpop.permute.xlu0 %5620
    %5622 = vrot.lane.b32.xlu0 %v4129, 64
    %v5623 = vpop.permute.xlu0 %5622
    %5624 = vrot.lane.b32.xlu0 %v4153, 64
    %v5625 = vpop.permute.xlu0 %5624
    %5626 = vrot.lane.b32.xlu0 %v4155, 64
    %v5627 = vpop.permute.xlu0 %5626
    %v5692 = vsel %vm32, %v3516, %v4157
    %v5693 = vsel %vm32, %v3517, %v4159
    %v5694 = vsel %vm32, %v3519, %v4161
    %v5695 = vsel %vm32, %v3520, %v4163
    %v5696 = vsel %vm32, %v3522, %v4165
    %v5697 = vsel %vm32, %v3523, %v4167
    %v5698 = vsel %vm32, %v3525, %v4169
    %v5699 = vsel %vm32, %v3526, %v4171
    %v5700 = vsel %vm32, %v3528, %v4173
    %v5701 = vsel %vm32, %v3529, %v4175
    %v5702 = vsel %vm32, %v3531, %v4177
    %v5703 = vsel %vm32, %v3532, %v4179
    %v5704 = vsel %vm32, %v3534, %v4181
    %v5705 = vsel %vm32, %v3535, %v4183
    %v5706 = vsel %vm32, %v3537, %v4185
    %v5707 = vsel %vm32, %v3538, %v4187
    %v5708 = vsel %vm32, %v3540, %v4189
    %v5709 = vsel %vm32, %v3541, %v4191
    %v5710 = vsel %vm32, %v3543, %v4193
    %v5711 = vsel %vm32, %v3544, %v4195
    %v5712 = vsel %vm32, %v3546, %v4197
    %v5713 = vsel %vm32, %v3547, %v4199
    %v5714 = vsel %vm32, %v3549, %v4201
    %v5715 = vsel %vm32, %v3550, %v4203
    %v5716 = vsel %vm32, %v3552, %v4205
    %v5717 = vsel %vm32, %v3553, %v4207
    %v5718 = vsel %vm32, %v3555, %v4209
    %v5719 = vsel %vm32, %v3556, %v4211
    %v5720 = vsel %vm32, %v3558, %v4213
    %v5721 = vsel %vm32, %v3559, %v4215
    %v5722 = vsel %vm32, %v3561, %v4217
    %v5723 = vsel %vm32, %v3562, %v4219
    %v5724 = vsel %vm32, %v3570, %v4221
    %v5725 = vsel %vm32, %v3571, %v4223
    %v5726 = vsel %vm32, %v3573, %v4225
    %v5727 = vsel %vm32, %v3574, %v4227
    %v5728 = vsel %vm32, %v3576, %v4229
    %v5729 = vsel %vm32, %v3577, %v4231
    %v5730 = vsel %vm32, %v3579, %v4233
    %v5731 = vsel %vm32, %v3580, %v4235
    %v5732 = vsel %vm32, %v3582, %v4237
    %v5733 = vsel %vm32, %v3583, %v4239
    %v5734 = vsel %vm32, %v3585, %v4241
    %v5735 = vsel %vm32, %v3586, %v4243
    %v5736 = vsel %vm32, %v3588, %v4245
    %v5737 = vsel %vm32, %v3589, %v4247
    %v5738 = vsel %vm32, %v3591, %v4249
    %v5739 = vsel %vm32, %v3592, %v4251
    %v5740 = vsel %vm32, %v3594, %v4253
    %v5741 = vsel %vm32, %v3595, %v4255
    %v5742 = vsel %vm32, %v3597, %v4257
    %v5743 = vsel %vm32, %v3598, %v4259
    %v5744 = vsel %vm32, %v3600, %v4261
    %v5745 = vsel %vm32, %v3601, %v4263
    %v5746 = vsel %vm32, %v3603, %v4265
    %v5747 = vsel %vm32, %v3604, %v4267
    %v5748 = vsel %vm32, %v3606, %v4269
    %v5749 = vsel %vm32, %v3607, %v4271
    %v5750 = vsel %vm32, %v3609, %v4273
    %v5751 = vsel %vm32, %v3610, %v4275
    %v5752 = vsel %vm32, %v3612, %v4277
    %v5753 = vsel %vm32, %v3613, %v4279
    %v5754 = vsel %vm32, %v3615, %v4281
    %v5755 = vsel %vm32, %v3616, %v4283
    %vm5756 = vcmask 130048
    %v5757 = vsel %vm5756, %v5692, %v4349
    %v5758 = vsel %vm5756, %v5693, %v4351
    %v5759 = vsel %vm5756, %v5694, %v4353
    %v5760 = vsel %vm5756, %v5695, %v4355
    %v5761 = vsel %vm5756, %v5696, %v4357
    %v5762 = vsel %vm5756, %v5697, %v4359
    %v5763 = vsel %vm5756, %v5698, %v4361
    %v5764 = vsel %vm5756, %v5699, %v4363
    %v5765 = vsel %vm5756, %v5700, %v4365
    %v5766 = vsel %vm5756, %v5701, %v4367
    %v5767 = vsel %vm5756, %v5702, %v4369
    %v5768 = vsel %vm5756, %v5703, %v4371
    %v5769 = vsel %vm5756, %v5704, %v4373
    %v5770 = vsel %vm5756, %v5705, %v4375
    %v5771 = vsel %vm5756, %v5706, %v4377
    %v5772 = vsel %vm5756, %v5707, %v4379
    %v5773 = vsel %vm5756, %v5708, %v4381
    %v5774 = vsel %vm5756, %v5709, %v4383
    %v5775 = vsel %vm5756, %v5710, %v4385
    %v5776 = vsel %vm5756, %v5711, %v4387
    %v5777 = vsel %vm5756, %v5712, %v4389
    %v5778 = vsel %vm5756, %v5713, %v4391
    %v5779 = vsel %vm5756, %v5714, %v4393
    %v5780 = vsel %vm5756, %v5715, %v4395
    %v5781 = vsel %vm5756, %v5716, %v4397
    %v5782 = vsel %vm5756, %v5717, %v4399
    %v5783 = vsel %vm5756, %v5718, %v4401
    %v5784 = vsel %vm5756, %v5719, %v4403
    %v5785 = vsel %vm5756, %v5720, %v4405
    %v5786 = vsel %vm5756, %v5721, %v4407
    %v5787 = vsel %vm5756, %v5722, %v4409
    %v5788 = vsel %vm5756, %v5723, %v4411
    %v5789 = vsel %vm5756, %v5724, %v4413
    %v5790 = vsel %vm5756, %v5725, %v4415
    %v5791 = vsel %vm5756, %v5726, %v4417
    %v5792 = vsel %vm5756, %v5727, %v4419
    %v5793 = vsel %vm5756, %v5728, %v4421
    %v5794 = vsel %vm5756, %v5729, %v4423
    %v5795 = vsel %vm5756, %v5730, %v4425
    %v5796 = vsel %vm5756, %v5731, %v4427
    %v5797 = vsel %vm5756, %v5732, %v4429
    %v5798 = vsel %vm5756, %v5733, %v4431
    %v5799 = vsel %vm5756, %v5734, %v4433
    %v5800 = vsel %vm5756, %v5735, %v4435
    %v5801 = vsel %vm5756, %v5736, %v4437
    %v5802 = vsel %vm5756, %v5737, %v4439
    %v5803 = vsel %vm5756, %v5738, %v4441
    %v5804 = vsel %vm5756, %v5739, %v4443
    %v5805 = vsel %vm5756, %v5740, %v4445
    %v5806 = vsel %vm5756, %v5741, %v4447
    %v5807 = vsel %vm5756, %v5742, %v4449
    %v5808 = vsel %vm5756, %v5743, %v4451
    %v5809 = vsel %vm5756, %v5744, %v4453
    %v5810 = vsel %vm5756, %v5745, %v4455
    %v5811 = vsel %vm5756, %v5746, %v4457
    %v5812 = vsel %vm5756, %v5747, %v4459
    %v5813 = vsel %vm5756, %v5748, %v4461
    %v5814 = vsel %vm5756, %v5749, %v4463
    %v5815 = vsel %vm5756, %v5750, %v4465
    %v5816 = vsel %vm5756, %v5751, %v4467
    %v5817 = vsel %vm5756, %v5752, %v4469
    %v5818 = vsel %vm5756, %v5753, %v4471
    %v5819 = vsel %vm5756, %v5754, %v4473
    %v5820 = vsel %vm5756, %v5755, %v4475
    %v5821 = vsel %vm2711, %v5757, %v4541
    %v5822 = vsel %vm2711, %v5758, %v4543
    %v5823 = vsel %vm2711, %v5759, %v4545
    %v5824 = vsel %vm2711, %v5760, %v4547
    %v5825 = vsel %vm2711, %v5761, %v4549
    %v5826 = vsel %vm2711, %v5762, %v4551
    %v5827 = vsel %vm2711, %v5763, %v4553
    %v5828 = vsel %vm2711, %v5764, %v4555
    %v5829 = vsel %vm2711, %v5765, %v4557
    %v5830 = vsel %vm2711, %v5766, %v4559
    %v5831 = vsel %vm2711, %v5767, %v4561
    %v5832 = vsel %vm2711, %v5768, %v4563
    %v5833 = vsel %vm2711, %v5769, %v4565
    %v5834 = vsel %vm2711, %v5770, %v4567
    %v5835 = vsel %vm2711, %v5771, %v4569
    %v5836 = vsel %vm2711, %v5772, %v4571
    %v5837 = vsel %vm2711, %v5773, %v4573
    %v5838 = vsel %vm2711, %v5774, %v4575
    %v5839 = vsel %vm2711, %v5775, %v4577
    %v5840 = vsel %vm2711, %v5776, %v4579
    %v5841 = vsel %vm2711, %v5777, %v4581
    %v5842 = vsel %vm2711, %v5778, %v4583
    %v5843 = vsel %vm2711, %v5779, %v4585
    %v5844 = vsel %vm2711, %v5780, %v4587
    %v5845 = vsel %vm2711, %v5781, %v4589
    %v5846 = vsel %vm2711, %v5782, %v4591
    %v5847 = vsel %vm2711, %v5783, %v4593
    %v5848 = vsel %vm2711, %v5784, %v4595
    %v5849 = vsel %vm2711, %v5785, %v4597
    %v5850 = vsel %vm2711, %v5786, %v4599
    %v5851 = vsel %vm2711, %v5787, %v4601
    %v5852 = vsel %vm2711, %v5788, %v4603
    %v5853 = vsel %vm2711, %v5789, %v4605
    %v5854 = vsel %vm2711, %v5790, %v4607
    %v5855 = vsel %vm2711, %v5791, %v4609
    %v5856 = vsel %vm2711, %v5792, %v4611
    %v5857 = vsel %vm2711, %v5793, %v4613
    %v5858 = vsel %vm2711, %v5794, %v4615
    %v5859 = vsel %vm2711, %v5795, %v4617
    %v5860 = vsel %vm2711, %v5796, %v4619
    %v5861 = vsel %vm2711, %v5797, %v4621
    %v5862 = vsel %vm2711, %v5798, %v4623
    %v5863 = vsel %vm2711, %v5799, %v4625
    %v5864 = vsel %vm2711, %v5800, %v4627
    %v5865 = vsel %vm2711, %v5801, %v4629
    %v5866 = vsel %vm2711, %v5802, %v4631
    %v5867 = vsel %vm2711, %v5803, %v4633
    %v5868 = vsel %vm2711, %v5804, %v4635
    %v5869 = vsel %vm2711, %v5805, %v4637
    %v5870 = vsel %vm2711, %v5806, %v4639
    %v5871 = vsel %vm2711, %v5807, %v4641
    %v5872 = vsel %vm2711, %v5808, %v4643
    %v5873 = vsel %vm2711, %v5809, %v4645
    %v5874 = vsel %vm2711, %v5810, %v4647
    %v5875 = vsel %vm2711, %v5811, %v4649
    %v5876 = vsel %vm2711, %v5812, %v4651
    %v5877 = vsel %vm2711, %v5813, %v4653
    %v5878 = vsel %vm2711, %v5814, %v4655
    %v5879 = vsel %vm2711, %v5815, %v4657
    %v5880 = vsel %vm2711, %v5816, %v4659
    %v5881 = vsel %vm2711, %v5817, %v4661
    %v5882 = vsel %vm2711, %v5818, %v4663
    %v5883 = vsel %vm2711, %v5819, %v4665
    %v5884 = vsel %vm2711, %v5820, %v4667
    %vm5885 = vcmask 261120
    %v5886 = vsel %vm5885, %v5821, %v4733
    %v5887 = vsel %vm5885, %v5822, %v4735
    %v5888 = vsel %vm5885, %v5823, %v4737
    %v5889 = vsel %vm5885, %v5824, %v4739
    %v5890 = vsel %vm5885, %v5825, %v4741
    %v5891 = vsel %vm5885, %v5826, %v4743
    %v5892 = vsel %vm5885, %v5827, %v4745
    %v5893 = vsel %vm5885, %v5828, %v4747
    %v5894 = vsel %vm5885, %v5829, %v4749
    %v5895 = vsel %vm5885, %v5830, %v4751
    %v5896 = vsel %vm5885, %v5831, %v4753
    %v5897 = vsel %vm5885, %v5832, %v4755
    %v5898 = vsel %vm5885, %v5833, %v4757
    %v5899 = vsel %vm5885, %v5834, %v4759
    %v5900 = vsel %vm5885, %v5835, %v4761
    %v5901 = vsel %vm5885, %v5836, %v4763
    %v5902 = vsel %vm5885, %v5837, %v4765
    %v5903 = vsel %vm5885, %v5838, %v4767
    %v5904 = vsel %vm5885, %v5839, %v4769
    %v5905 = vsel %vm5885, %v5840, %v4771
    %v5906 = vsel %vm5885, %v5841, %v4773
    %v5907 = vsel %vm5885, %v5842, %v4775
    %v5908 = vsel %vm5885, %v5843, %v4777
    %v5909 = vsel %vm5885, %v5844, %v4779
    %v5910 = vsel %vm5885, %v5845, %v4781
    %v5911 = vsel %vm5885, %v5846, %v4783
    %v5912 = vsel %vm5885, %v5847, %v4785
    %v5913 = vsel %vm5885, %v5848, %v4787
    %v5914 = vsel %vm5885, %v5849, %v4789
    %v5915 = vsel %vm5885, %v5850, %v4791
    %v5916 = vsel %vm5885, %v5851, %v4793
    %v5917 = vsel %vm5885, %v5852, %v4795
    %v5918 = vsel %vm5885, %v5853, %v4797
    %v5919 = vsel %vm5885, %v5854, %v4799
    %v5920 = vsel %vm5885, %v5855, %v4801
    %v5921 = vsel %vm5885, %v5856, %v4803
    %v5922 = vsel %vm5885, %v5857, %v4805
    %v5923 = vsel %vm5885, %v5858, %v4807
    %v5924 = vsel %vm5885, %v5859, %v4809
    %v5925 = vsel %vm5885, %v5860, %v4811
    %v5926 = vsel %vm5885, %v5861, %v4813
    %v5927 = vsel %vm5885, %v5862, %v4815
    %v5928 = vsel %vm5885, %v5863, %v4817
    %v5929 = vsel %vm5885, %v5864, %v4819
    %v5930 = vsel %vm5885, %v5865, %v4821
    %v5931 = vsel %vm5885, %v5866, %v4823
    %v5932 = vsel %vm5885, %v5867, %v4825
    %v5933 = vsel %vm5885, %v5868, %v4827
    %v5934 = vsel %vm5885, %v5869, %v4829
    %v5935 = vsel %vm5885, %v5870, %v4831
    %v5936 = vsel %vm5885, %v5871, %v4833
    %v5937 = vsel %vm5885, %v5872, %v4835
    %v5938 = vsel %vm5885, %v5873, %v4837
    %v5939 = vsel %vm5885, %v5874, %v4839
    %v5940 = vsel %vm5885, %v5875, %v4841
    %v5941 = vsel %vm5885, %v5876, %v4843
    %v5942 = vsel %vm5885, %v5877, %v4845
    %v5943 = vsel %vm5885, %v5878, %v4847
    %v5944 = vsel %vm5885, %v5879, %v4849
    %v5945 = vsel %vm5885, %v5880, %v4851
    %v5946 = vsel %vm5885, %v5881, %v4853
    %v5947 = vsel %vm5885, %v5882, %v4855
    %v5948 = vsel %vm5885, %v5883, %v4857
    %v5949 = vsel %vm5885, %v5884, %v4859
    %vm5950 = vcmask 326656
    %v5951 = vsel %vm5950, %v5886, %v4925
    %v5952 = vsel %vm5950, %v5887, %v4927
    %v5953 = vsel %vm5950, %v5888, %v4929
    %v5954 = vsel %vm5950, %v5889, %v4931
    %v5955 = vsel %vm5950, %v5890, %v4933
    %v5956 = vsel %vm5950, %v5891, %v4935
    %v5957 = vsel %vm5950, %v5892, %v4937
    %v5958 = vsel %vm5950, %v5893, %v4939
    %v5959 = vsel %vm5950, %v5894, %v4941
    %v5960 = vsel %vm5950, %v5895, %v4943
    %v5961 = vsel %vm5950, %v5896, %v4945
    %v5962 = vsel %vm5950, %v5897, %v4947
    %v5963 = vsel %vm5950, %v5898, %v4949
    %v5964 = vsel %vm5950, %v5899, %v4951
    %v5965 = vsel %vm5950, %v5900, %v4953
    %v5966 = vsel %vm5950, %v5901, %v4955
    %v5967 = vsel %vm5950, %v5902, %v4957
    %v5968 = vsel %vm5950, %v5903, %v4959
    %v5969 = vsel %vm5950, %v5904, %v4961
    %v5970 = vsel %vm5950, %v5905, %v4963
    %v5971 = vsel %vm5950, %v5906, %v4965
    %v5972 = vsel %vm5950, %v5907, %v4967
    %v5973 = vsel %vm5950, %v5908, %v4969
    %v5974 = vsel %vm5950, %v5909, %v4971
    %v5975 = vsel %vm5950, %v5910, %v4973
    %v5976 = vsel %vm5950, %v5911, %v4975
    %v5977 = vsel %vm5950, %v5912, %v4977
    %v5978 = vsel %vm5950, %v5913, %v4979
    %v5979 = vsel %vm5950, %v5914, %v4981
    %v5980 = vsel %vm5950, %v5915, %v4983
    %v5981 = vsel %vm5950, %v5916, %v4985
    %v5982 = vsel %vm5950, %v5917, %v4987
    %v5983 = vsel %vm5950, %v5918, %v4989
    %v5984 = vsel %vm5950, %v5919, %v4991
    %v5985 = vsel %vm5950, %v5920, %v4993
    %v5986 = vsel %vm5950, %v5921, %v4995
    %v5987 = vsel %vm5950, %v5922, %v4997
    %v5988 = vsel %vm5950, %v5923, %v4999
    %v5989 = vsel %vm5950, %v5924, %v5001
    %v5990 = vsel %vm5950, %v5925, %v5003
    %v5991 = vsel %vm5950, %v5926, %v5005
    %v5992 = vsel %vm5950, %v5927, %v5007
    %v5993 = vsel %vm5950, %v5928, %v5009
    %v5994 = vsel %vm5950, %v5929, %v5011
    %v5995 = vsel %vm5950, %v5930, %v5013
    %v5996 = vsel %vm5950, %v5931, %v5015
    %v5997 = vsel %vm5950, %v5932, %v5017
    %v5998 = vsel %vm5950, %v5933, %v5019
    %v5999 = vsel %vm5950, %v5934, %v5021
    %v6000 = vsel %vm5950, %v5935, %v5023
    %v6001 = vsel %vm5950, %v5936, %v5025
    %v6002 = vsel %vm5950, %v5937, %v5027
    %v6003 = vsel %vm5950, %v5938, %v5029
    %v6004 = vsel %vm5950, %v5939, %v5031
    %v6005 = vsel %vm5950, %v5940, %v5033
    %v6006 = vsel %vm5950, %v5941, %v5035
    %v6007 = vsel %vm5950, %v5942, %v5037
    %v6008 = vsel %vm5950, %v5943, %v5039
    %v6009 = vsel %vm5950, %v5944, %v5041
    %v6010 = vsel %vm5950, %v5945, %v5043
    %v6011 = vsel %vm5950, %v5946, %v5045
    %v6012 = vsel %vm5950, %v5947, %v5047
    %v6013 = vsel %vm5950, %v5948, %v5049
    %v6014 = vsel %vm5950, %v5949, %v5051
    %vm6015 = vcmask 392192
    %v6016 = vsel %vm6015, %v5951, %v5117
    %v6017 = vsel %vm6015, %v5952, %v5119
    %v6018 = vsel %vm6015, %v5953, %v5121
    %v6019 = vsel %vm6015, %v5954, %v5123
    %v6020 = vsel %vm6015, %v5955, %v5125
    %v6021 = vsel %vm6015, %v5956, %v5127
    %v6022 = vsel %vm6015, %v5957, %v5129
    %v6023 = vsel %vm6015, %v5958, %v5131
    %v6024 = vsel %vm6015, %v5959, %v5133
    %v6025 = vsel %vm6015, %v5960, %v5135
    %v6026 = vsel %vm6015, %v5961, %v5137
    %v6027 = vsel %vm6015, %v5962, %v5139
    %v6028 = vsel %vm6015, %v5963, %v5141
    %v6029 = vsel %vm6015, %v5964, %v5143
    %v6030 = vsel %vm6015, %v5965, %v5145
    %v6031 = vsel %vm6015, %v5966, %v5147
    %v6032 = vsel %vm6015, %v5967, %v5149
    %v6033 = vsel %vm6015, %v5968, %v5151
    %v6034 = vsel %vm6015, %v5969, %v5153
    %v6035 = vsel %vm6015, %v5970, %v5155
    %v6036 = vsel %vm6015, %v5971, %v5157
    %v6037 = vsel %vm6015, %v5972, %v5159
    %v6038 = vsel %vm6015, %v5973, %v5161
    %v6039 = vsel %vm6015, %v5974, %v5163
    %v6040 = vsel %vm6015, %v5975, %v5165
    %v6041 = vsel %vm6015, %v5976, %v5167
    %v6042 = vsel %vm6015, %v5977, %v5169
    %v6043 = vsel %vm6015, %v5978, %v5171
    %v6044 = vsel %vm6015, %v5979, %v5173
    %v6045 = vsel %vm6015, %v5980, %v5175
    %v6046 = vsel %vm6015, %v5981, %v5177
    %v6047 = vsel %vm6015, %v5982, %v5179
    %v6048 = vsel %vm6015, %v5983, %v5181
    %v6049 = vsel %vm6015, %v5984, %v5183
    %v6050 = vsel %vm6015, %v5985, %v5185
    %v6051 = vsel %vm6015, %v5986, %v5187
    %v6052 = vsel %vm6015, %v5987, %v5189
    %v6053 = vsel %vm6015, %v5988, %v5191
    %v6054 = vsel %vm6015, %v5989, %v5193
    %v6055 = vsel %vm6015, %v5990, %v5195
    %v6056 = vsel %vm6015, %v5991, %v5197
    %v6057 = vsel %vm6015, %v5992, %v5199
    %v6058 = vsel %vm6015, %v5993, %v5201
    %v6059 = vsel %vm6015, %v5994, %v5203
    %v6060 = vsel %vm6015, %v5995, %v5205
    %v6061 = vsel %vm6015, %v5996, %v5207
    %v6062 = vsel %vm6015, %v5997, %v5209
    %v6063 = vsel %vm6015, %v5998, %v5211
    %v6064 = vsel %vm6015, %v5999, %v5213
    %v6065 = vsel %vm6015, %v6000, %v5215
    %v6066 = vsel %vm6015, %v6001, %v5217
    %v6067 = vsel %vm6015, %v6002, %v5219
    %v6068 = vsel %vm6015, %v6003, %v5221
    %v6069 = vsel %vm6015, %v6004, %v5223
    %v6070 = vsel %vm6015, %v6005, %v5225
    %v6071 = vsel %vm6015, %v6006, %v5227
    %v6072 = vsel %vm6015, %v6007, %v5229
    %v6073 = vsel %vm6015, %v6008, %v5231
    %v6074 = vsel %vm6015, %v6009, %v5233
    %v6075 = vsel %vm6015, %v6010, %v5235
    %v6076 = vsel %vm6015, %v6011, %v5237
    %v6077 = vsel %vm6015, %v6012, %v5239
    %v6078 = vsel %vm6015, %v6013, %v5241
    %v6079 = vsel %vm6015, %v6014, %v5243
    %vm6080 = vcmask 457728
    %v6081 = vsel %vm6080, %v6016, %v5309
    %v6082 = vsel %vm6080, %v6017, %v5311
    %v6083 = vsel %vm6080, %v6018, %v5313
    %v6084 = vsel %vm6080, %v6019, %v5315
    %v6085 = vsel %vm6080, %v6020, %v5317
    %v6086 = vsel %vm6080, %v6021, %v5319
    %v6087 = vsel %vm6080, %v6022, %v5321
    %v6088 = vsel %vm6080, %v6023, %v5323
    %v6089 = vsel %vm6080, %v6024, %v5325
    %v6090 = vsel %vm6080, %v6025, %v5327
    %v6091 = vsel %vm6080, %v6026, %v5329
    %v6092 = vsel %vm6080, %v6027, %v5331
    %v6093 = vsel %vm6080, %v6028, %v5333
    %v6094 = vsel %vm6080, %v6029, %v5335
    %v6095 = vsel %vm6080, %v6030, %v5337
    %v6096 = vsel %vm6080, %v6031, %v5339
    %v6097 = vsel %vm6080, %v6032, %v5341
    %v6098 = vsel %vm6080, %v6033, %v5343
    %v6099 = vsel %vm6080, %v6034, %v5345
    %v6100 = vsel %vm6080, %v6035, %v5347
    %v6101 = vsel %vm6080, %v6036, %v5349
    %v6102 = vsel %vm6080, %v6037, %v5351
    %v6103 = vsel %vm6080, %v6038, %v5353
    %v6104 = vsel %vm6080, %v6039, %v5355
    %v6105 = vsel %vm6080, %v6040, %v5357
    %v6106 = vsel %vm6080, %v6041, %v5359
    %v6107 = vsel %vm6080, %v6042, %v5361
    %v6108 = vsel %vm6080, %v6043, %v5363
    %v6109 = vsel %vm6080, %v6044, %v5365
    %v6110 = vsel %vm6080, %v6045, %v5367
    %v6111 = vsel %vm6080, %v6046, %v5369
    %v6112 = vsel %vm6080, %v6047, %v5371
    %v6113 = vsel %vm6080, %v6048, %v5373
    %v6114 = vsel %vm6080, %v6049, %v5375
    %v6115 = vsel %vm6080, %v6050, %v5377
    %v6116 = vsel %vm6080, %v6051, %v5379
    %v6117 = vsel %vm6080, %v6052, %v5381
    %v6118 = vsel %vm6080, %v6053, %v5383
    %v6119 = vsel %vm6080, %v6054, %v5385
    %v6120 = vsel %vm6080, %v6055, %v5387
    %v6121 = vsel %vm6080, %v6056, %v5389
    %v6122 = vsel %vm6080, %v6057, %v5391
    %v6123 = vsel %vm6080, %v6058, %v5393
    %v6124 = vsel %vm6080, %v6059, %v5395
    %v6125 = vsel %vm6080, %v6060, %v5397
    %v6126 = vsel %vm6080, %v6061, %v5399
    %v6127 = vsel %vm6080, %v6062, %v5401
    %v6128 = vsel %vm6080, %v6063, %v5403
    %v6129 = vsel %vm6080, %v6064, %v5405
    %v6130 = vsel %vm6080, %v6065, %v5407
    %v6131 = vsel %vm6080, %v6066, %v5409
    %v6132 = vsel %vm6080, %v6067, %v5411
    %v6133 = vsel %vm6080, %v6068, %v5413
    %v6134 = vsel %vm6080, %v6069, %v5415
    %v6135 = vsel %vm6080, %v6070, %v5417
    %v6136 = vsel %vm6080, %v6071, %v5419
    %v6137 = vsel %vm6080, %v6072, %v5421
    %v6138 = vsel %vm6080, %v6073, %v5423
    %v6139 = vsel %vm6080, %v6074, %v5425
    %v6140 = vsel %vm6080, %v6075, %v5427
    %v6141 = vsel %vm6080, %v6076, %v5429
    %v6142 = vsel %vm6080, %v6077, %v5431
    %v6143 = vsel %vm6080, %v6078, %v5433
    %v6144 = vsel %vm6080, %v6079, %v5435
    %vm6145 = vcmask 523264
    %v6146 = vsel %vm6145, %v6081, %v5501
    %v6147 = vsel %vm6145, %v6082, %v5503
    %v6148 = vsel %vm6145, %v6083, %v5505
    %v6149 = vsel %vm6145, %v6084, %v5507
    %v6150 = vsel %vm6145, %v6085, %v5509
    %v6151 = vsel %vm6145, %v6086, %v5511
    %v6152 = vsel %vm6145, %v6087, %v5513
    %v6153 = vsel %vm6145, %v6088, %v5515
    %v6154 = vsel %vm6145, %v6089, %v5517
    %v6155 = vsel %vm6145, %v6090, %v5519
    %v6156 = vsel %vm6145, %v6091, %v5521
    %v6157 = vsel %vm6145, %v6092, %v5523
    %v6158 = vsel %vm6145, %v6093, %v5525
    %v6159 = vsel %vm6145, %v6094, %v5527
    %v6160 = vsel %vm6145, %v6095, %v5529
    %v6161 = vsel %vm6145, %v6096, %v5531
    %v6162 = vsel %vm6145, %v6097, %v5533
    %v6163 = vsel %vm6145, %v6098, %v5535
    %v6164 = vsel %vm6145, %v6099, %v5537
    %v6165 = vsel %vm6145, %v6100, %v5539
    %v6166 = vsel %vm6145, %v6101, %v5541
    %v6167 = vsel %vm6145, %v6102, %v5543
    %v6168 = vsel %vm6145, %v6103, %v5545
    %v6169 = vsel %vm6145, %v6104, %v5547
    %v6170 = vsel %vm6145, %v6105, %v5549
    %v6171 = vsel %vm6145, %v6106, %v5551
    %v6172 = vsel %vm6145, %v6107, %v5553
    %v6173 = vsel %vm6145, %v6108, %v5555
    %v6174 = vsel %vm6145, %v6109, %v5557
    %v6175 = vsel %vm6145, %v6110, %v5559
    %v6176 = vsel %vm6145, %v6111, %v5561
    %v6177 = vsel %vm6145, %v6112, %v5563
    %v6178 = vsel %vm6145, %v6113, %v5565
    %v6179 = vsel %vm6145, %v6114, %v5567
    %v6180 = vsel %vm6145, %v6115, %v5569
    %v6181 = vsel %vm6145, %v6116, %v5571
    %v6182 = vsel %vm6145, %v6117, %v5573
    %v6183 = vsel %vm6145, %v6118, %v5575
    %v6184 = vsel %vm6145, %v6119, %v5577
    %v6185 = vsel %vm6145, %v6120, %v5579
    %v6186 = vsel %vm6145, %v6121, %v5581
    %v6187 = vsel %vm6145, %v6122, %v5583
    %v6188 = vsel %vm6145, %v6123, %v5585
    %v6189 = vsel %vm6145, %v6124, %v5587
    %v6190 = vsel %vm6145, %v6125, %v5589
    %v6191 = vsel %vm6145, %v6126, %v5591
    %v6192 = vsel %vm6145, %v6127, %v5593
    %v6193 = vsel %vm6145, %v6128, %v5595
    %v6194 = vsel %vm6145, %v6129, %v5597
    %v6195 = vsel %vm6145, %v6130, %v5599
    %v6196 = vsel %vm6145, %v6131, %v5601
    %v6197 = vsel %vm6145, %v6132, %v5603
    %v6198 = vsel %vm6145, %v6133, %v5605
    %v6199 = vsel %vm6145, %v6134, %v5607
    %v6200 = vsel %vm6145, %v6135, %v5609
    %v6201 = vsel %vm6145, %v6136, %v5611
    %v6202 = vsel %vm6145, %v6137, %v5613
    %v6203 = vsel %vm6145, %v6138, %v5615
    %v6204 = vsel %vm6145, %v6139, %v5617
    %v6205 = vsel %vm6145, %v6140, %v5619
    %v6206 = vsel %vm6145, %v6141, %v5621
    %v6207 = vsel %vm6145, %v6142, %v5623
    %v6208 = vsel %vm6145, %v6143, %v5625
    %v6209 = vsel %vm6145, %v6144, %v5627
    %v6211 = vlaneseq
    %v6212 = vshrl.u32 %v6211, 7
    %v6213 = vsub.s32 0, %v6212
    %v6214 = vrot.slane %v3507, %v6213
    %vm6216 = vcmask 588800
    %v6218 = vsel %vm6216, %v6146, 0
    %v6221 = vsel %vm6216, %v6147, 0
    %v6224 = vsel %vm6216, %v6148, 0
    %v6227 = vsel %vm6216, %v6149, 0
    %v6230 = vsel %vm6216, %v6150, 0
    %v6233 = vsel %vm6216, %v6151, 0
    %v6236 = vsel %vm6216, %v6152, 0
    %v6239 = vsel %vm6216, %v6153, 0
    %v6242 = vsel %vm6216, %v6154, 0
    %v6245 = vsel %vm6216, %v6155, 0
    %v6248 = vsel %vm6216, %v6156, 0
    %v6251 = vsel %vm6216, %v6157, 0
    %v6254 = vsel %vm6216, %v6158, 0
    %v6257 = vsel %vm6216, %v6159, 0
    %v6260 = vsel %vm6216, %v6160, 0
    %v6263 = vsel %vm6216, %v6161, 0
    %v6266 = vsel %vm6216, %v6162, 0
    %v6269 = vsel %vm6216, %v6163, 0
    %v6272 = vsel %vm6216, %v6164, 0
    %v6275 = vsel %vm6216, %v6165, 0
    %v6278 = vsel %vm6216, %v6166, 0
    %v6281 = vsel %vm6216, %v6167, 0
    %v6284 = vsel %vm6216, %v6168, 0
    %v6287 = vsel %vm6216, %v6169, 0
    %v6290 = vsel %vm6216, %v6170, 0
    %v6293 = vsel %vm6216, %v6171, 0
    %v6296 = vsel %vm6216, %v6172, 0
    %v6299 = vsel %vm6216, %v6173, 0
    %v6302 = vsel %vm6216, %v6174, 0
    %v6305 = vsel %vm6216, %v6175, 0
    %v6308 = vsel %vm6216, %v6176, 0
    %v6311 = vsel %vm6216, %v6177, 0
    %v6314 = vsel %vm6216, %v6178, 0
    %v6317 = vsel %vm6216, %v6179, 0
    %v6320 = vsel %vm6216, %v6180, 0
    %v6323 = vsel %vm6216, %v6181, 0
    %v6326 = vsel %vm6216, %v6182, 0
    %v6329 = vsel %vm6216, %v6183, 0
    %v6332 = vsel %vm6216, %v6184, 0
    %v6335 = vsel %vm6216, %v6185, 0
    %v6338 = vsel %vm6216, %v6186, 0
    %v6341 = vsel %vm6216, %v6187, 0
    %v6344 = vsel %vm6216, %v6188, 0
    %v6347 = vsel %vm6216, %v6189, 0
    %v6350 = vsel %vm6216, %v6190, 0
    %v6353 = vsel %vm6216, %v6191, 0
    %v6356 = vsel %vm6216, %v6192, 0
    %v6359 = vsel %vm6216, %v6193, 0
    %v6362 = vsel %vm6216, %v6194, 0
    %v6365 = vsel %vm6216, %v6195, 0
    %v6368 = vsel %vm6216, %v6196, 0
    %v6371 = vsel %vm6216, %v6197, 0
    %v6374 = vsel %vm6216, %v6198, 0
    %v6377 = vsel %vm6216, %v6199, 0
    %v6380 = vsel %vm6216, %v6200, 0
    %v6383 = vsel %vm6216, %v6201, 0
    %v6386 = vsel %vm6216, %v6202, 0
    %v6389 = vsel %vm6216, %v6203, 0
    %v6392 = vsel %vm6216, %v6204, 0
    %v6395 = vsel %vm6216, %v6205, 0
    %v6398 = vsel %vm6216, %v6206, 0
    %v6401 = vsel %vm6216, %v6207, 0
    %v6404 = vsel %vm6216, %v6208, 0
    %v6407 = vsel %vm6216, %v6209, 0
    %6409 = vmatprep.subr.mxu0 0.0
    %6410 = vmatpush1.msra.mxu0 %v3498
    %6411 = vmatprep.subr.mxu0 0.0
    %6412 = vmatpush1.msra.mxu0 %v3499
    %6413 = vmatprep.subr.mxu0 0.0
    %6414 = vmatpush1.msra.mxu0 %v3500
    %6415 = vmatprep.subr.mxu0 0.0
    %6416 = vmatpush1.msra.mxu0 %v3501
    %6417 = vmatprep.subr.mxu0 0.0
    %6418 = vmatpush1.msra.mxu0 %v3502
    %6419 = vmatprep.subr.mxu0 0.0
    %6420 = vmatpush1.msra.mxu0 %v3503
    %6421 = vmatprep.subr.mxu0 0.0
    %6422 = vmatpush1.msra.mxu0 %v3504
    %6423 = vmatprep.subr.mxu0 0.0
    %6424 = vmatpush1.msra.mxu0 %v3505
    %6425 = vmatprep.subr.mxu0 0.0
    %6426 = vmatpush1.msra.mxu0 %v3506
    %6427 = vmatprep.subr.mxu0 0.0
    %6428 = vmatpush1.msra.mxu0 0.0
    %6429 = vmatprep.subr.mxu0 0.0
    %6430 = vmatpush1.msra.mxu0 0.0
    %6431 = vmatprep.subr.mxu0 0.0
    %6432 = vmatpush1.msra.mxu0 0.0
    %6433 = vmatprep.subr.mxu0 0.0
    %6434 = vmatpush1.msra.mxu0 0.0
    %6435 = vmatprep.subr.mxu0 0.0
    %6436 = vmatpush1.msra.mxu0 0.0
    %6437 = vmatprep.subr.mxu0 0.0
    %6438 = vmatpush1.msra.mxu0 0.0
    %6439 = vmatprep.subr.mxu0 0.0
    %6440 = vmatpush1.msra.mxu0 0.0
    %6441 = vmatprep.subr.mxu0 0.0
    %6442 = vmatpush1.msra.mxu0 0.0
    %6443 = vmatprep.subr.mxu0 0.0
    %6444 = vmatpush1.msra.mxu0 0.0
    %6445 = vmatprep.subr.mxu0 0.0
    %6446 = vmatpush1.msra.mxu0 0.0
    %6447 = vmatprep.subr.mxu0 0.0
    %6448 = vmatpush1.msra.mxu0 0.0
    %6449 = vmatprep.subr.mxu0 0.0
    %6450 = vmatpush1.msra.mxu0 0.0
    %6451 = vmatprep.subr.mxu0 0.0
    %6452 = vmatpush1.msra.mxu0 0.0
    %6453 = vmatprep.subr.mxu0 0.0
    %6454 = vmatpush1.msra.mxu0 0.0
    %6455 = vmatprep.subr.mxu0 0.0
    %6456 = vmatpush1.msra.mxu0 0.0
    %6457 = vmatprep.subr.mxu0 0.0
    %6458 = vmatpush1.msra.mxu0 0.0
    %6459 = vmatprep.subr.mxu0 0.0
    %6460 = vmatpush1.msra.mxu0 0.0
    %6461 = vmatprep.subr.mxu0 0.0
    %6462 = vmatpush1.msra.mxu0 0.0
    %6463 = vmatprep.subr.mxu0 0.0
    %6464 = vmatpush1.msra.mxu0 0.0
    %6465 = vmatprep.subr.mxu0 0.0
    %6466 = vmatpush1.msra.mxu0 0.0
    %6467 = vmatprep.subr.mxu0 0.0
    %6468 = vmatpush1.msra.mxu0 0.0
    %6469 = vmatprep.subr.mxu0 0.0
    %6470 = vmatpush1.msra.mxu0 0.0
    %6471 = vmatprep.subr.mxu0 0.0
    %6472 = vmatpush1.msra.mxu0 0.0
    %6473 = vmatprep.mubr.f32.mxu0 0.0
    %6474 = vmatmul.mubr.f32.gmra.mrb[0].mxu0 %v6218
    %v6475 = vpop.f32.mrb[0].mxu0
    %v6476 = vadd.f32 %v6214, %v6475
    %v6477 = vpop.f32.mrb[0].mxu0
    %6478 = vmatprep.mubr.f32.mxu0 0.0
    %6479 = vmatmul.mubr.f32.gmra.mrb[0].mxu0 %v6221
    %v6480 = vpop.f32.mrb[0].mxu0
    %v6481 = vadd.f32 %v6214, %v6480
    %v6482 = vpop.f32.mrb[0].mxu0
    %6483 = vmatprep.mubr.f32.mxu0 0.0
    %6484 = vmatmul.mubr.f32.gmra.mrb[0].mxu0 %v6224
    %v6485 = vpop.f32.mrb[0].mxu0
    %v6486 = vadd.f32 %v6214, %v6485
    %v6487 = vpop.f32.mrb[0].mxu0
    %6488 = vmatprep.mubr.f32.mxu0 0.0
    %6489 = vmatmul.mubr.f32.gmra.mrb[0].mxu0 %v6227
    %v6490 = vpop.f32.mrb[0].mxu0
    %v6491 = vadd.f32 %v6214, %v6490
    %v6492 = vpop.f32.mrb[0].mxu0
    %6493 = vmatprep.mubr.f32.mxu0 0.0
    %6494 = vmatmul.mubr.f32.gmra.mrb[0].mxu0 %v6230
    %v6495 = vpop.f32.mrb[0].mxu0
    %v6496 = vadd.f32 %v6214, %v6495
    %v6497 = vpop.f32.mrb[0].mxu0
    %6498 = vmatprep.mubr.f32.mxu0 0.0
    %6499 = vmatmul.mubr.f32.gmra.mrb[0].mxu0 %v6233
    %v6500 = vpop.f32.mrb[0].mxu0
    %v6501 = vadd.f32 %v6214, %v6500
    %v6502 = vpop.f32.mrb[0].mxu0
    %6503 = vmatprep.mubr.f32.mxu0 0.0
    %6504 = vmatmul.mubr.f32.gmra.mrb[0].mxu0 %v6236
    %v6505 = vpop.f32.mrb[0].mxu0
    %v6506 = vadd.f32 %v6214, %v6505
    %v6507 = vpop.f32.mrb[0].mxu0
    %6508 = vmatprep.mubr.f32.mxu0 0.0
    %6509 = vmatmul.mubr.f32.gmra.mrb[0].mxu0 %v6239
    %v6510 = vpop.f32.mrb[0].mxu0
    %v6511 = vadd.f32 %v6214, %v6510
    %v6512 = vpop.f32.mrb[0].mxu0
    %6513 = vmatprep.mubr.f32.mxu0 0.0
    %6514 = vmatmul.mubr.f32.gmra.mrb[0].mxu0 %v6242
    %v6515 = vpop.f32.mrb[0].mxu0
    %v6516 = vadd.f32 %v6214, %v6515
    %v6517 = vpop.f32.mrb[0].mxu0
    %6518 = vmatprep.mubr.f32.mxu0 0.0
    %6519 = vmatmul.mubr.f32.gmra.mrb[0].mxu0 %v6245
    %v6520 = vpop.f32.mrb[0].mxu0
    %v6521 = vadd.f32 %v6214, %v6520
    %v6522 = vpop.f32.mrb[0].mxu0
    %6523 = vmatprep.mubr.f32.mxu0 0.0
    %6524 = vmatmul.mubr.f32.gmra.mrb[0].mxu0 %v6248
    %v6525 = vpop.f32.mrb[0].mxu0
    %v6526 = vadd.f32 %v6214, %v6525
    %v6527 = vpop.f32.mrb[0].mxu0
    %6528 = vmatprep.mubr.f32.mxu0 0.0
    %6529 = vmatmul.mubr.f32.gmra.mrb[0].mxu0 %v6251
    %v6530 = vpop.f32.mrb[0].mxu0
    %v6531 = vadd.f32 %v6214, %v6530
    %v6532 = vpop.f32.mrb[0].mxu0
    %6533 = vmatprep.mubr.f32.mxu0 0.0
    %6534 = vmatmul.mubr.f32.gmra.mrb[0].mxu0 %v6254
    %v6535 = vpop.f32.mrb[0].mxu0
    %v6536 = vadd.f32 %v6214, %v6535
    %v6537 = vpop.f32.mrb[0].mxu0
    %6538 = vmatprep.mubr.f32.mxu0 0.0
    %6539 = vmatmul.mubr.f32.gmra.mrb[0].mxu0 %v6257
    %v6540 = vpop.f32.mrb[0].mxu0
    %v6541 = vadd.f32 %v6214, %v6540
    %v6542 = vpop.f32.mrb[0].mxu0
    %6543 = vmatprep.mubr.f32.mxu0 0.0
    %6544 = vmatmul.mubr.f32.gmra.mrb[0].mxu0 %v6260
    %v6545 = vpop.f32.mrb[0].mxu0
    %v6546 = vadd.f32 %v6214, %v6545
    %v6547 = vpop.f32.mrb[0].mxu0
    %6548 = vmatprep.mubr.f32.mxu0 0.0
    %6549 = vmatmul.mubr.f32.gmra.mrb[0].mxu0 %v6263
    %v6550 = vpop.f32.mrb[0].mxu0
    %v6551 = vadd.f32 %v6214, %v6550
    %v6552 = vpop.f32.mrb[0].mxu0
    %6553 = vmatprep.mubr.f32.mxu0 0.0
    %6554 = vmatmul.mubr.f32.gmra.mrb[0].mxu0 %v6266
    %v6555 = vpop.f32.mrb[0].mxu0
    %v6556 = vadd.f32 %v6214, %v6555
    %v6557 = vpop.f32.mrb[0].mxu0
    %6558 = vmatprep.mubr.f32.mxu0 0.0
    %6559 = vmatmul.mubr.f32.gmra.mrb[0].mxu0 %v6269
    %v6560 = vpop.f32.mrb[0].mxu0
    %v6561 = vadd.f32 %v6214, %v6560
    %v6562 = vpop.f32.mrb[0].mxu0
    %6563 = vmatprep.mubr.f32.mxu0 0.0
    %6564 = vmatmul.mubr.f32.gmra.mrb[0].mxu0 %v6272
    %v6565 = vpop.f32.mrb[0].mxu0
    %v6566 = vadd.f32 %v6214, %v6565
    %v6567 = vpop.f32.mrb[0].mxu0
    %6568 = vmatprep.mubr.f32.mxu0 0.0
    %6569 = vmatmul.mubr.f32.gmra.mrb[0].mxu0 %v6275
    %v6570 = vpop.f32.mrb[0].mxu0
    %v6571 = vadd.f32 %v6214, %v6570
    %v6572 = vpop.f32.mrb[0].mxu0
    %6573 = vmatprep.mubr.f32.mxu0 0.0
    %6574 = vmatmul.mubr.f32.gmra.mrb[0].mxu0 %v6278
    %v6575 = vpop.f32.mrb[0].mxu0
    %v6576 = vadd.f32 %v6214, %v6575
    %v6577 = vpop.f32.mrb[0].mxu0
    %6578 = vmatprep.mubr.f32.mxu0 0.0
    %6579 = vmatmul.mubr.f32.gmra.mrb[0].mxu0 %v6281
    %v6580 = vpop.f32.mrb[0].mxu0
    %v6581 = vadd.f32 %v6214, %v6580
    %v6582 = vpop.f32.mrb[0].mxu0
    %6583 = vmatprep.mubr.f32.mxu0 0.0
    %6584 = vmatmul.mubr.f32.gmra.mrb[0].mxu0 %v6284
    %v6585 = vpop.f32.mrb[0].mxu0
    %v6586 = vadd.f32 %v6214, %v6585
    %v6587 = vpop.f32.mrb[0].mxu0
    %6588 = vmatprep.mubr.f32.mxu0 0.0
    %6589 = vmatmul.mubr.f32.gmra.mrb[0].mxu0 %v6287
    %v6590 = vpop.f32.mrb[0].mxu0
    %v6591 = vadd.f32 %v6214, %v6590
    %v6592 = vpop.f32.mrb[0].mxu0
    %6593 = vmatprep.mubr.f32.mxu0 0.0
    %6594 = vmatmul.mubr.f32.gmra.mrb[0].mxu0 %v6290
    %v6595 = vpop.f32.mrb[0].mxu0
    %v6596 = vadd.f32 %v6214, %v6595
    %v6597 = vpop.f32.mrb[0].mxu0
    %6598 = vmatprep.mubr.f32.mxu0 0.0
    %6599 = vmatmul.mubr.f32.gmra.mrb[0].mxu0 %v6293
    %v6600 = vpop.f32.mrb[0].mxu0
    %v6601 = vadd.f32 %v6214, %v6600
    %v6602 = vpop.f32.mrb[0].mxu0
    %6603 = vmatprep.mubr.f32.mxu0 0.0
    %6604 = vmatmul.mubr.f32.gmra.mrb[0].mxu0 %v6296
    %v6605 = vpop.f32.mrb[0].mxu0
    %v6606 = vadd.f32 %v6214, %v6605
    %v6607 = vpop.f32.mrb[0].mxu0
    %6608 = vmatprep.mubr.f32.mxu0 0.0
    %6609 = vmatmul.mubr.f32.gmra.mrb[0].mxu0 %v6299
    %v6610 = vpop.f32.mrb[0].mxu0
    %v6611 = vadd.f32 %v6214, %v6610
    %v6612 = vpop.f32.mrb[0].mxu0
    %6613 = vmatprep.mubr.f32.mxu0 0.0
    %6614 = vmatmul.mubr.f32.gmra.mrb[0].mxu0 %v6302
    %v6615 = vpop.f32.mrb[0].mxu0
    %v6616 = vadd.f32 %v6214, %v6615
    %v6617 = vpop.f32.mrb[0].mxu0
    %6618 = vmatprep.mubr.f32.mxu0 0.0
    %6619 = vmatmul.mubr.f32.gmra.mrb[0].mxu0 %v6305
    %v6620 = vpop.f32.mrb[0].mxu0
    %v6621 = vadd.f32 %v6214, %v6620
    %v6622 = vpop.f32.mrb[0].mxu0
    %6623 = vmatprep.mubr.f32.mxu0 0.0
    %6624 = vmatmul.mubr.f32.gmra.mrb[0].mxu0 %v6308
    %v6625 = vpop.f32.mrb[0].mxu0
    %v6626 = vadd.f32 %v6214, %v6625
    %v6627 = vpop.f32.mrb[0].mxu0
    %6628 = vmatprep.mubr.f32.mxu0 0.0
    %6629 = vmatmul.mubr.f32.gmra.mrb[0].mxu0 %v6311
    %v6630 = vpop.f32.mrb[0].mxu0
    %v6631 = vadd.f32 %v6214, %v6630
    %v6632 = vpop.f32.mrb[0].mxu0
    %6633 = vmatprep.mubr.f32.mxu0 0.0
    %6634 = vmatmul.mubr.f32.gmra.mrb[0].mxu0 %v6314
    %v6635 = vpop.f32.mrb[0].mxu0
    %v6636 = vadd.f32 %v6214, %v6635
    %v6637 = vpop.f32.mrb[0].mxu0
    %6638 = vmatprep.mubr.f32.mxu0 0.0
    %6639 = vmatmul.mubr.f32.gmra.mrb[0].mxu0 %v6317
    %v6640 = vpop.f32.mrb[0].mxu0
    %v6641 = vadd.f32 %v6214, %v6640
    %v6642 = vpop.f32.mrb[0].mxu0
    %6643 = vmatprep.mubr.f32.mxu0 0.0
    %6644 = vmatmul.mubr.f32.gmra.mrb[0].mxu0 %v6320
    %v6645 = vpop.f32.mrb[0].mxu0
    %v6646 = vadd.f32 %v6214, %v6645
    %v6647 = vpop.f32.mrb[0].mxu0
    %6648 = vmatprep.mubr.f32.mxu0 0.0
    %6649 = vmatmul.mubr.f32.gmra.mrb[0].mxu0 %v6323
    %v6650 = vpop.f32.mrb[0].mxu0
    %v6651 = vadd.f32 %v6214, %v6650
    %v6652 = vpop.f32.mrb[0].mxu0
    %6653 = vmatprep.mubr.f32.mxu0 0.0
    %6654 = vmatmul.mubr.f32.gmra.mrb[0].mxu0 %v6326
    %v6655 = vpop.f32.mrb[0].mxu0
    %v6656 = vadd.f32 %v6214, %v6655
    %v6657 = vpop.f32.mrb[0].mxu0
    %6658 = vmatprep.mubr.f32.mxu0 0.0
    %6659 = vmatmul.mubr.f32.gmra.mrb[0].mxu0 %v6329
    %v6660 = vpop.f32.mrb[0].mxu0
    %v6661 = vadd.f32 %v6214, %v6660
    %v6662 = vpop.f32.mrb[0].mxu0
    %6663 = vmatprep.mubr.f32.mxu0 0.0
    %6664 = vmatmul.mubr.f32.gmra.mrb[0].mxu0 %v6332
    %v6665 = vpop.f32.mrb[0].mxu0
    %v6666 = vadd.f32 %v6214, %v6665
    %v6667 = vpop.f32.mrb[0].mxu0
    %6668 = vmatprep.mubr.f32.mxu0 0.0
    %6669 = vmatmul.mubr.f32.gmra.mrb[0].mxu0 %v6335
    %v6670 = vpop.f32.mrb[0].mxu0
    %v6671 = vadd.f32 %v6214, %v6670
    %v6672 = vpop.f32.mrb[0].mxu0
    %6673 = vmatprep.mubr.f32.mxu0 0.0
    %6674 = vmatmul.mubr.f32.gmra.mrb[0].mxu0 %v6338
    %v6675 = vpop.f32.mrb[0].mxu0
    %v6676 = vadd.f32 %v6214, %v6675
    %v6677 = vpop.f32.mrb[0].mxu0
    %6678 = vmatprep.mubr.f32.mxu0 0.0
    %6679 = vmatmul.mubr.f32.gmra.mrb[0].mxu0 %v6341
    %v6680 = vpop.f32.mrb[0].mxu0
    %v6681 = vadd.f32 %v6214, %v6680
    %v6682 = vpop.f32.mrb[0].mxu0
    %6683 = vmatprep.mubr.f32.mxu0 0.0
    %6684 = vmatmul.mubr.f32.gmra.mrb[0].mxu0 %v6344
    %v6685 = vpop.f32.mrb[0].mxu0
    %v6686 = vadd.f32 %v6214, %v6685
    %v6687 = vpop.f32.mrb[0].mxu0
    %6688 = vmatprep.mubr.f32.mxu0 0.0
    %6689 = vmatmul.mubr.f32.gmra.mrb[0].mxu0 %v6347
    %v6690 = vpop.f32.mrb[0].mxu0
    %v6691 = vadd.f32 %v6214, %v6690
    %v6692 = vpop.f32.mrb[0].mxu0
    %6693 = vmatprep.mubr.f32.mxu0 0.0
    %6694 = vmatmul.mubr.f32.gmra.mrb[0].mxu0 %v6350
    %v6695 = vpop.f32.mrb[0].mxu0
    %v6696 = vadd.f32 %v6214, %v6695
    %v6697 = vpop.f32.mrb[0].mxu0
    %6698 = vmatprep.mubr.f32.mxu0 0.0
    %6699 = vmatmul.mubr.f32.gmra.mrb[0].mxu0 %v6353
    %v6700 = vpop.f32.mrb[0].mxu0
    %v6701 = vadd.f32 %v6214, %v6700
    %v6702 = vpop.f32.mrb[0].mxu0
    %6703 = vmatprep.mubr.f32.mxu0 0.0
    %6704 = vmatmul.mubr.f32.gmra.mrb[0].mxu0 %v6356
    %v6705 = vpop.f32.mrb[0].mxu0
    %v6706 = vadd.f32 %v6214, %v6705
    %v6707 = vpop.f32.mrb[0].mxu0
    %6708 = vmatprep.mubr.f32.mxu0 0.0
    %6709 = vmatmul.mubr.f32.gmra.mrb[0].mxu0 %v6359
    %v6710 = vpop.f32.mrb[0].mxu0
    %v6711 = vadd.f32 %v6214, %v6710
    %v6712 = vpop.f32.mrb[0].mxu0
    %6713 = vmatprep.mubr.f32.mxu0 0.0
    %6714 = vmatmul.mubr.f32.gmra.mrb[0].mxu0 %v6362
    %v6715 = vpop.f32.mrb[0].mxu0
    %v6716 = vadd.f32 %v6214, %v6715
    %v6717 = vpop.f32.mrb[0].mxu0
    %6718 = vmatprep.mubr.f32.mxu0 0.0
    %6719 = vmatmul.mubr.f32.gmra.mrb[0].mxu0 %v6365
    %v6720 = vpop.f32.mrb[0].mxu0
    %v6721 = vadd.f32 %v6214, %v6720
    %v6722 = vpop.f32.mrb[0].mxu0
    %6723 = vmatprep.mubr.f32.mxu0 0.0
    %6724 = vmatmul.mubr.f32.gmra.mrb[0].mxu0 %v6368
    %v6725 = vpop.f32.mrb[0].mxu0
    %v6726 = vadd.f32 %v6214, %v6725
    %v6727 = vpop.f32.mrb[0].mxu0
    %6728 = vmatprep.mubr.f32.mxu0 0.0
    %6729 = vmatmul.mubr.f32.gmra.mrb[0].mxu0 %v6371
    %v6730 = vpop.f32.mrb[0].mxu0
    %v6731 = vadd.f32 %v6214, %v6730
    %v6732 = vpop.f32.mrb[0].mxu0
    %6733 = vmatprep.mubr.f32.mxu0 0.0
    %6734 = vmatmul.mubr.f32.gmra.mrb[0].mxu0 %v6374
    %v6735 = vpop.f32.mrb[0].mxu0
    %v6736 = vadd.f32 %v6214, %v6735
    %v6737 = vpop.f32.mrb[0].mxu0
    %6738 = vmatprep.mubr.f32.mxu0 0.0
    %6739 = vmatmul.mubr.f32.gmra.mrb[0].mxu0 %v6377
    %v6740 = vpop.f32.mrb[0].mxu0
    %v6741 = vadd.f32 %v6214, %v6740
    %v6742 = vpop.f32.mrb[0].mxu0
    %6743 = vmatprep.mubr.f32.mxu0 0.0
    %6744 = vmatmul.mubr.f32.gmra.mrb[0].mxu0 %v6380
    %v6745 = vpop.f32.mrb[0].mxu0
    %v6746 = vadd.f32 %v6214, %v6745
    %v6747 = vpop.f32.mrb[0].mxu0
    %6748 = vmatprep.mubr.f32.mxu0 0.0
    %6749 = vmatmul.mubr.f32.gmra.mrb[0].mxu0 %v6383
    %v6750 = vpop.f32.mrb[0].mxu0
    %v6751 = vadd.f32 %v6214, %v6750
    %v6752 = vpop.f32.mrb[0].mxu0
    %6753 = vmatprep.mubr.f32.mxu0 0.0
    %6754 = vmatmul.mubr.f32.gmra.mrb[0].mxu0 %v6386
    %v6755 = vpop.f32.mrb[0].mxu0
    %v6756 = vadd.f32 %v6214, %v6755
    %v6757 = vpop.f32.mrb[0].mxu0
    %6758 = vmatprep.mubr.f32.mxu0 0.0
    %6759 = vmatmul.mubr.f32.gmra.mrb[0].mxu0 %v6389
    %v6760 = vpop.f32.mrb[0].mxu0
    %v6761 = vadd.f32 %v6214, %v6760
    %v6762 = vpop.f32.mrb[0].mxu0
    %6763 = vmatprep.mubr.f32.mxu0 0.0
    %6764 = vmatmul.mubr.f32.gmra.mrb[0].mxu0 %v6392
    %v6765 = vpop.f32.mrb[0].mxu0
    %v6766 = vadd.f32 %v6214, %v6765
    %v6767 = vpop.f32.mrb[0].mxu0
    %6768 = vmatprep.mubr.f32.mxu0 0.0
    %6769 = vmatmul.mubr.f32.gmra.mrb[0].mxu0 %v6395
    %v6770 = vpop.f32.mrb[0].mxu0
    %v6771 = vadd.f32 %v6214, %v6770
    %v6772 = vpop.f32.mrb[0].mxu0
    %6773 = vmatprep.mubr.f32.mxu0 0.0
    %6774 = vmatmul.mubr.f32.gmra.mrb[0].mxu0 %v6398
    %v6775 = vpop.f32.mrb[0].mxu0
    %v6776 = vadd.f32 %v6214, %v6775
    %v6777 = vpop.f32.mrb[0].mxu0
    %6778 = vmatprep.mubr.f32.mxu0 0.0
    %6779 = vmatmul.mubr.f32.gmra.mrb[0].mxu0 %v6401
    %v6780 = vpop.f32.mrb[0].mxu0
    %v6781 = vadd.f32 %v6214, %v6780
    %v6782 = vpop.f32.mrb[0].mxu0
    %6783 = vmatprep.mubr.f32.mxu0 0.0
    %6784 = vmatmul.mubr.f32.gmra.mrb[0].mxu0 %v6404
    %v6785 = vpop.f32.mrb[0].mxu0
    %v6786 = vadd.f32 %v6214, %v6785
    %v6787 = vpop.f32.mrb[0].mxu0
    %6788 = vmatprep.mubr.f32.mxu0 0.0
    %6789 = vmatmul.mubr.f32.gmra.mrb[0].mxu0 %v6407
    %v6790 = vpop.f32.mrb[0].mxu0
    %v6791 = vadd.f32 %v6214, %v6790
    %v6792 = vpop.f32.mrb[0].mxu0
    %6793 = vdwg.mxu0
    %v6794 = vsel %vm32, %v6476, 0.0
    %v6795 = vsel %vm32, %v6481, 0.0
    %v6796 = vadd.f32 %v6794, %v6795
    %v6797 = vsel %vm32, %v6486, 0.0
    %v6798 = vadd.f32 %v6796, %v6797
    %v6799 = vsel %vm32, %v6491, 0.0
    %v6800 = vadd.f32 %v6798, %v6799
    %v6801 = vsel %vm32, %v6496, 0.0
    %v6802 = vadd.f32 %v6800, %v6801
    %v6803 = vsel %vm32, %v6501, 0.0
    %v6804 = vadd.f32 %v6802, %v6803
    %v6805 = vsel %vm32, %v6506, 0.0
    %v6806 = vadd.f32 %v6804, %v6805
    %v6807 = vsel %vm32, %v6511, 0.0
    %v6808 = vadd.f32 %v6806, %v6807
    %v6809 = vsel %vm32, %v6516, 0.0
    %v6810 = vadd.f32 %v6808, %v6809
    %v6811 = vsel %vm32, %v6521, 0.0
    %v6812 = vadd.f32 %v6810, %v6811
    %v6813 = vsel %vm32, %v6526, 0.0
    %v6814 = vadd.f32 %v6812, %v6813
    %v6815 = vsel %vm32, %v6531, 0.0
    %v6816 = vadd.f32 %v6814, %v6815
    %v6817 = vsel %vm32, %v6536, 0.0
    %v6818 = vadd.f32 %v6816, %v6817
    %v6819 = vsel %vm32, %v6541, 0.0
    %v6820 = vadd.f32 %v6818, %v6819
    %v6821 = vsel %vm32, %v6546, 0.0
    %v6822 = vadd.f32 %v6820, %v6821
    %v6823 = vsel %vm32, %v6551, 0.0
    %v6824 = vadd.f32 %v6822, %v6823
    %v6825 = vsel %vm32, %v6556, 0.0
    %v6826 = vadd.f32 %v6824, %v6825
    %v6827 = vsel %vm32, %v6561, 0.0
    %v6828 = vadd.f32 %v6826, %v6827
    %v6829 = vsel %vm32, %v6566, 0.0
    %v6830 = vadd.f32 %v6828, %v6829
    %v6831 = vsel %vm32, %v6571, 0.0
    %v6832 = vadd.f32 %v6830, %v6831
    %v6833 = vsel %vm32, %v6576, 0.0
    %v6834 = vadd.f32 %v6832, %v6833
    %v6835 = vsel %vm32, %v6581, 0.0
    %v6836 = vadd.f32 %v6834, %v6835
    %v6837 = vsel %vm32, %v6586, 0.0
    %v6838 = vadd.f32 %v6836, %v6837
    %v6839 = vsel %vm32, %v6591, 0.0
    %v6840 = vadd.f32 %v6838, %v6839
    %v6841 = vsel %vm32, %v6596, 0.0
    %v6842 = vadd.f32 %v6840, %v6841
    %v6843 = vsel %vm32, %v6601, 0.0
    %v6844 = vadd.f32 %v6842, %v6843
    %v6845 = vsel %vm32, %v6606, 0.0
    %v6846 = vadd.f32 %v6844, %v6845
    %v6847 = vsel %vm32, %v6611, 0.0
    %v6848 = vadd.f32 %v6846, %v6847
    %v6849 = vsel %vm32, %v6616, 0.0
    %v6850 = vadd.f32 %v6848, %v6849
    %v6851 = vsel %vm32, %v6621, 0.0
    %v6852 = vadd.f32 %v6850, %v6851
    %v6853 = vsel %vm32, %v6626, 0.0
    %v6854 = vadd.f32 %v6852, %v6853
    %v6855 = vsel %vm32, %v6631, 0.0
    %v6856 = vadd.f32 %v6854, %v6855
    %v6857 = vsel %vm32, %v6636, 0.0
    %v6858 = vadd.f32 %v6856, %v6857
    %v6859 = vsel %vm32, %v6641, 0.0
    %v6860 = vadd.f32 %v6858, %v6859
    %v6861 = vsel %vm32, %v6646, 0.0
    %v6862 = vadd.f32 %v6860, %v6861
    %v6863 = vsel %vm32, %v6651, 0.0
    %v6864 = vadd.f32 %v6862, %v6863
    %v6865 = vsel %vm32, %v6656, 0.0
    %v6866 = vadd.f32 %v6864, %v6865
    %v6867 = vsel %vm32, %v6661, 0.0
    %v6868 = vadd.f32 %v6866, %v6867
    %v6869 = vsel %vm32, %v6666, 0.0
    %v6870 = vadd.f32 %v6868, %v6869
    %v6871 = vsel %vm32, %v6671, 0.0
    %v6872 = vadd.f32 %v6870, %v6871
    %v6873 = vsel %vm32, %v6676, 0.0
    %v6874 = vadd.f32 %v6872, %v6873
    %v6875 = vsel %vm32, %v6681, 0.0
    %v6876 = vadd.f32 %v6874, %v6875
    %v6877 = vsel %vm32, %v6686, 0.0
    %v6878 = vadd.f32 %v6876, %v6877
    %v6879 = vsel %vm32, %v6691, 0.0
    %v6880 = vadd.f32 %v6878, %v6879
    %v6881 = vsel %vm32, %v6696, 0.0
    %v6882 = vadd.f32 %v6880, %v6881
    %v6883 = vsel %vm32, %v6701, 0.0
    %v6884 = vadd.f32 %v6882, %v6883
    %v6885 = vsel %vm32, %v6706, 0.0
    %v6886 = vadd.f32 %v6884, %v6885
    %v6887 = vsel %vm32, %v6711, 0.0
    %v6888 = vadd.f32 %v6886, %v6887
    %v6889 = vsel %vm32, %v6716, 0.0
    %v6890 = vadd.f32 %v6888, %v6889
    %v6891 = vsel %vm32, %v6721, 0.0
    %v6892 = vadd.f32 %v6890, %v6891
    %v6893 = vsel %vm32, %v6726, 0.0
    %v6894 = vadd.f32 %v6892, %v6893
    %v6895 = vsel %vm32, %v6731, 0.0
    %v6896 = vadd.f32 %v6894, %v6895
    %v6897 = vsel %vm32, %v6736, 0.0
    %v6898 = vadd.f32 %v6896, %v6897
    %v6899 = vsel %vm32, %v6741, 0.0
    %v6900 = vadd.f32 %v6898, %v6899
    %v6901 = vsel %vm32, %v6746, 0.0
    %v6902 = vadd.f32 %v6900, %v6901
    %v6903 = vsel %vm32, %v6751, 0.0
    %v6904 = vadd.f32 %v6902, %v6903
    %v6905 = vsel %vm32, %v6756, 0.0
    %v6906 = vadd.f32 %v6904, %v6905
    %v6907 = vsel %vm32, %v6761, 0.0
    %v6908 = vadd.f32 %v6906, %v6907
    %v6909 = vsel %vm32, %v6766, 0.0
    %v6910 = vadd.f32 %v6908, %v6909
    %v6911 = vsel %vm32, %v6771, 0.0
    %v6912 = vadd.f32 %v6910, %v6911
    %v6913 = vsel %vm32, %v6776, 0.0
    %v6914 = vadd.f32 %v6912, %v6913
    %v6915 = vsel %vm32, %v6781, 0.0
    %v6916 = vadd.f32 %v6914, %v6915
    %v6917 = vsel %vm32, %v6786, 0.0
    %v6918 = vadd.f32 %v6916, %v6917
    %v6919 = vsel %vm32, %v6791, 0.0
    %v6920 = vadd.f32 %v6918, %v6919
    %v6921 = vrot.slane %v6920, 4
    %v6922 = vadd.f32 %v6920, %v6921
    %v6923 = vrot.slane %v6922, 2
    %v6924 = vadd.f32 %v6922, %v6923
    %v6925 = vrot.slane %v6924, 1
    %v6926 = vadd.f32 %v6924, %v6925
    %v6927 = vmul.f32 %v6926, 0.001953125
    %v6928 = vmul.f32 %v6476, %v6476
    %v6929 = vmul.f32 %v6481, %v6481
    %v6930 = vmul.f32 %v6486, %v6486
    %v6931 = vmul.f32 %v6491, %v6491
    %v6932 = vmul.f32 %v6496, %v6496
    %v6933 = vmul.f32 %v6501, %v6501
    %v6934 = vmul.f32 %v6506, %v6506
    %v6935 = vmul.f32 %v6511, %v6511
    %v6936 = vmul.f32 %v6516, %v6516
    %v6937 = vmul.f32 %v6521, %v6521
    %v6938 = vmul.f32 %v6526, %v6526
    %v6939 = vmul.f32 %v6531, %v6531
    %v6940 = vmul.f32 %v6536, %v6536
    %v6941 = vmul.f32 %v6541, %v6541
    %v6942 = vmul.f32 %v6546, %v6546
    %v6943 = vmul.f32 %v6551, %v6551
    %v6944 = vmul.f32 %v6556, %v6556
    %v6945 = vmul.f32 %v6561, %v6561
    %v6946 = vmul.f32 %v6566, %v6566
    %v6947 = vmul.f32 %v6571, %v6571
    %v6948 = vmul.f32 %v6576, %v6576
    %v6949 = vmul.f32 %v6581, %v6581
    %v6950 = vmul.f32 %v6586, %v6586
    %v6951 = vmul.f32 %v6591, %v6591
    %v6952 = vmul.f32 %v6596, %v6596
    %v6953 = vmul.f32 %v6601, %v6601
    %v6954 = vmul.f32 %v6606, %v6606
    %v6955 = vmul.f32 %v6611, %v6611
    %v6956 = vmul.f32 %v6616, %v6616
    %v6957 = vmul.f32 %v6621, %v6621
    %v6958 = vmul.f32 %v6626, %v6626
    %v6959 = vmul.f32 %v6631, %v6631
    %v6960 = vmul.f32 %v6636, %v6636
    %v6961 = vmul.f32 %v6641, %v6641
    %v6962 = vmul.f32 %v6646, %v6646
    %v6963 = vmul.f32 %v6651, %v6651
    %v6964 = vmul.f32 %v6656, %v6656
    %v6965 = vmul.f32 %v6661, %v6661
    %v6966 = vmul.f32 %v6666, %v6666
    %v6967 = vmul.f32 %v6671, %v6671
    %v6968 = vmul.f32 %v6676, %v6676
    %v6969 = vmul.f32 %v6681, %v6681
    %v6970 = vmul.f32 %v6686, %v6686
    %v6971 = vmul.f32 %v6691, %v6691
    %v6972 = vmul.f32 %v6696, %v6696
    %v6973 = vmul.f32 %v6701, %v6701
    %v6974 = vmul.f32 %v6706, %v6706
    %v6975 = vmul.f32 %v6711, %v6711
    %v6976 = vmul.f32 %v6716, %v6716
    %v6977 = vmul.f32 %v6721, %v6721
    %v6978 = vmul.f32 %v6726, %v6726
    %v6979 = vmul.f32 %v6731, %v6731
    %v6980 = vmul.f32 %v6736, %v6736
    %v6981 = vmul.f32 %v6741, %v6741
    %v6982 = vmul.f32 %v6746, %v6746
    %v6983 = vmul.f32 %v6751, %v6751
    %v6984 = vmul.f32 %v6756, %v6756
    %v6985 = vmul.f32 %v6761, %v6761
    %v6986 = vmul.f32 %v6766, %v6766
    %v6987 = vmul.f32 %v6771, %v6771
    %v6988 = vmul.f32 %v6776, %v6776
    %v6989 = vmul.f32 %v6781, %v6781
    %v6990 = vmul.f32 %v6786, %v6786
    %v6991 = vmul.f32 %v6791, %v6791
    %v6992 = vsel %vm32, %v6928, 0.0
    %v6993 = vsel %vm32, %v6929, 0.0
    %v6994 = vadd.f32 %v6992, %v6993
    %v6995 = vsel %vm32, %v6930, 0.0
    %v6996 = vadd.f32 %v6994, %v6995
    %v6997 = vsel %vm32, %v6931, 0.0
    %v6998 = vadd.f32 %v6996, %v6997
    %v6999 = vsel %vm32, %v6932, 0.0
    %v7000 = vadd.f32 %v6998, %v6999
    %v7001 = vsel %vm32, %v6933, 0.0
    %v7002 = vadd.f32 %v7000, %v7001
    %v7003 = vsel %vm32, %v6934, 0.0
    %v7004 = vadd.f32 %v7002, %v7003
    %v7005 = vsel %vm32, %v6935, 0.0
    %v7006 = vadd.f32 %v7004, %v7005
    %v7007 = vsel %vm32, %v6936, 0.0
    %v7008 = vadd.f32 %v7006, %v7007
    %v7009 = vsel %vm32, %v6937, 0.0
    %v7010 = vadd.f32 %v7008, %v7009
    %v7011 = vsel %vm32, %v6938, 0.0
    %v7012 = vadd.f32 %v7010, %v7011
    %v7013 = vsel %vm32, %v6939, 0.0
    %v7014 = vadd.f32 %v7012, %v7013
    %v7015 = vsel %vm32, %v6940, 0.0
    %v7016 = vadd.f32 %v7014, %v7015
    %v7017 = vsel %vm32, %v6941, 0.0
    %v7018 = vadd.f32 %v7016, %v7017
    %v7019 = vsel %vm32, %v6942, 0.0
    %v7020 = vadd.f32 %v7018, %v7019
    %v7021 = vsel %vm32, %v6943, 0.0
    %v7022 = vadd.f32 %v7020, %v7021
    %v7023 = vsel %vm32, %v6944, 0.0
    %v7024 = vadd.f32 %v7022, %v7023
    %v7025 = vsel %vm32, %v6945, 0.0
    %v7026 = vadd.f32 %v7024, %v7025
    %v7027 = vsel %vm32, %v6946, 0.0
    %v7028 = vadd.f32 %v7026, %v7027
    %v7029 = vsel %vm32, %v6947, 0.0
    %v7030 = vadd.f32 %v7028, %v7029
    %v7031 = vsel %vm32, %v6948, 0.0
    %v7032 = vadd.f32 %v7030, %v7031
    %v7033 = vsel %vm32, %v6949, 0.0
    %v7034 = vadd.f32 %v7032, %v7033
    %v7035 = vsel %vm32, %v6950, 0.0
    %v7036 = vadd.f32 %v7034, %v7035
    %v7037 = vsel %vm32, %v6951, 0.0
    %v7038 = vadd.f32 %v7036, %v7037
    %v7039 = vsel %vm32, %v6952, 0.0
    %v7040 = vadd.f32 %v7038, %v7039
    %v7041 = vsel %vm32, %v6953, 0.0
    %v7042 = vadd.f32 %v7040, %v7041
    %v7043 = vsel %vm32, %v6954, 0.0
    %v7044 = vadd.f32 %v7042, %v7043
    %v7045 = vsel %vm32, %v6955, 0.0
    %v7046 = vadd.f32 %v7044, %v7045
    %v7047 = vsel %vm32, %v6956, 0.0
    %v7048 = vadd.f32 %v7046, %v7047
    %v7049 = vsel %vm32, %v6957, 0.0
    %v7050 = vadd.f32 %v7048, %v7049
    %v7051 = vsel %vm32, %v6958, 0.0
    %v7052 = vadd.f32 %v7050, %v7051
    %v7053 = vsel %vm32, %v6959, 0.0
    %v7054 = vadd.f32 %v7052, %v7053
    %v7055 = vsel %vm32, %v6960, 0.0
    %v7056 = vadd.f32 %v7054, %v7055
    %v7057 = vsel %vm32, %v6961, 0.0
    %v7058 = vadd.f32 %v7056, %v7057
    %v7059 = vsel %vm32, %v6962, 0.0
    %v7060 = vadd.f32 %v7058, %v7059
    %v7061 = vsel %vm32, %v6963, 0.0
    %v7062 = vadd.f32 %v7060, %v7061
    %v7063 = vsel %vm32, %v6964, 0.0
    %v7064 = vadd.f32 %v7062, %v7063
    %v7065 = vsel %vm32, %v6965, 0.0
    %v7066 = vadd.f32 %v7064, %v7065
    %v7067 = vsel %vm32, %v6966, 0.0
    %v7068 = vadd.f32 %v7066, %v7067
    %v7069 = vsel %vm32, %v6967, 0.0
    %v7070 = vadd.f32 %v7068, %v7069
    %v7071 = vsel %vm32, %v6968, 0.0
    %v7072 = vadd.f32 %v7070, %v7071
    %v7073 = vsel %vm32, %v6969, 0.0
    %v7074 = vadd.f32 %v7072, %v7073
    %v7075 = vsel %vm32, %v6970, 0.0
    %v7076 = vadd.f32 %v7074, %v7075
    %v7077 = vsel %vm32, %v6971, 0.0
    %v7078 = vadd.f32 %v7076, %v7077
    %v7079 = vsel %vm32, %v6972, 0.0
    %v7080 = vadd.f32 %v7078, %v7079
    %v7081 = vsel %vm32, %v6973, 0.0
    %v7082 = vadd.f32 %v7080, %v7081
    %v7083 = vsel %vm32, %v6974, 0.0
    %v7084 = vadd.f32 %v7082, %v7083
    %v7085 = vsel %vm32, %v6975, 0.0
    %v7086 = vadd.f32 %v7084, %v7085
    %v7087 = vsel %vm32, %v6976, 0.0
    %v7088 = vadd.f32 %v7086, %v7087
    %v7089 = vsel %vm32, %v6977, 0.0
    %v7090 = vadd.f32 %v7088, %v7089
    %v7091 = vsel %vm32, %v6978, 0.0
    %v7092 = vadd.f32 %v7090, %v7091
    %v7093 = vsel %vm32, %v6979, 0.0
    %v7094 = vadd.f32 %v7092, %v7093
    %v7095 = vsel %vm32, %v6980, 0.0
    %v7096 = vadd.f32 %v7094, %v7095
    %v7097 = vsel %vm32, %v6981, 0.0
    %v7098 = vadd.f32 %v7096, %v7097
    %v7099 = vsel %vm32, %v6982, 0.0
    %v7100 = vadd.f32 %v7098, %v7099
    %v7101 = vsel %vm32, %v6983, 0.0
    %v7102 = vadd.f32 %v7100, %v7101
    %v7103 = vsel %vm32, %v6984, 0.0
    %v7104 = vadd.f32 %v7102, %v7103
    %v7105 = vsel %vm32, %v6985, 0.0
    %v7106 = vadd.f32 %v7104, %v7105
    %v7107 = vsel %vm32, %v6986, 0.0
    %v7108 = vadd.f32 %v7106, %v7107
    %v7109 = vsel %vm32, %v6987, 0.0
    %v7110 = vadd.f32 %v7108, %v7109
    %v7111 = vsel %vm32, %v6988, 0.0
    %v7112 = vadd.f32 %v7110, %v7111
    %v7113 = vsel %vm32, %v6989, 0.0
    %v7114 = vadd.f32 %v7112, %v7113
    %v7115 = vsel %vm32, %v6990, 0.0
    %v7116 = vadd.f32 %v7114, %v7115
    %v7117 = vsel %vm32, %v6991, 0.0
    %v7118 = vadd.f32 %v7116, %v7117
    %v7119 = vrot.slane %v7118, 4
    %v7120 = vadd.f32 %v7118, %v7119
    %v7121 = vrot.slane %v7120, 2
    %v7122 = vadd.f32 %v7120, %v7121
    %v7123 = vrot.slane %v7122, 1
    %v7124 = vadd.f32 %v7122, %v7123
    %v7125 = vmul.f32 %v7124, 0.001953125
    %v7126 = vmul.f32 %v6927, %v6927
    %v7127 = vsub.f32 %v7125, %v7126
    %v7128 = vmax.f32 %v7127, 0.0
    %v7129 = vsub.f32 %v6476, %v6927
    %v7130 = vsub.f32 %v6481, %v6927
    %v7131 = vsub.f32 %v6486, %v6927
    %v7132 = vsub.f32 %v6491, %v6927
    %v7133 = vsub.f32 %v6496, %v6927
    %v7134 = vsub.f32 %v6501, %v6927
    %v7135 = vsub.f32 %v6506, %v6927
    %v7136 = vsub.f32 %v6511, %v6927
    %v7137 = vsub.f32 %v6516, %v6927
    %v7138 = vsub.f32 %v6521, %v6927
    %v7139 = vsub.f32 %v6526, %v6927
    %v7140 = vsub.f32 %v6531, %v6927
    %v7141 = vsub.f32 %v6536, %v6927
    %v7142 = vsub.f32 %v6541, %v6927
    %v7143 = vsub.f32 %v6546, %v6927
    %v7144 = vsub.f32 %v6551, %v6927
    %v7145 = vsub.f32 %v6556, %v6927
    %v7146 = vsub.f32 %v6561, %v6927
    %v7147 = vsub.f32 %v6566, %v6927
    %v7148 = vsub.f32 %v6571, %v6927
    %v7149 = vsub.f32 %v6576, %v6927
    %v7150 = vsub.f32 %v6581, %v6927
    %v7151 = vsub.f32 %v6586, %v6927
    %v7152 = vsub.f32 %v6591, %v6927
    %v7153 = vsub.f32 %v6596, %v6927
    %v7154 = vsub.f32 %v6601, %v6927
    %v7155 = vsub.f32 %v6606, %v6927
    %v7156 = vsub.f32 %v6611, %v6927
    %v7157 = vsub.f32 %v6616, %v6927
    %v7158 = vsub.f32 %v6621, %v6927
    %v7159 = vsub.f32 %v6626, %v6927
    %v7160 = vsub.f32 %v6631, %v6927
    %v7161 = vsub.f32 %v6636, %v6927
    %v7162 = vsub.f32 %v6641, %v6927
    %v7163 = vsub.f32 %v6646, %v6927
    %v7164 = vsub.f32 %v6651, %v6927
    %v7165 = vsub.f32 %v6656, %v6927
    %v7166 = vsub.f32 %v6661, %v6927
    %v7167 = vsub.f32 %v6666, %v6927
    %v7168 = vsub.f32 %v6671, %v6927
    %v7169 = vsub.f32 %v6676, %v6927
    %v7170 = vsub.f32 %v6681, %v6927
    %v7171 = vsub.f32 %v6686, %v6927
    %v7172 = vsub.f32 %v6691, %v6927
    %v7173 = vsub.f32 %v6696, %v6927
    %v7174 = vsub.f32 %v6701, %v6927
    %v7175 = vsub.f32 %v6706, %v6927
    %v7176 = vsub.f32 %v6711, %v6927
    %v7177 = vsub.f32 %v6716, %v6927
    %v7178 = vsub.f32 %v6721, %v6927
    %v7179 = vsub.f32 %v6726, %v6927
    %v7180 = vsub.f32 %v6731, %v6927
    %v7181 = vsub.f32 %v6736, %v6927
    %v7182 = vsub.f32 %v6741, %v6927
    %v7183 = vsub.f32 %v6746, %v6927
    %v7184 = vsub.f32 %v6751, %v6927
    %v7185 = vsub.f32 %v6756, %v6927
    %v7186 = vsub.f32 %v6761, %v6927
    %v7187 = vsub.f32 %v6766, %v6927
    %v7188 = vsub.f32 %v6771, %v6927
    %v7189 = vsub.f32 %v6776, %v6927
    %v7190 = vsub.f32 %v6781, %v6927
    %v7191 = vsub.f32 %v6786, %v6927
    %v7192 = vsub.f32 %v6791, %v6927
    %v7193 = vadd.f32 %v7128, 1e-05
    %v7194 = vrsqrt.pop %v7193
    %v7195 = vmul.f32 %v7129, %v7194
    %v7196 = vmul.f32 %v7130, %v7194
    %v7197 = vmul.f32 %v7131, %v7194
    %v7198 = vmul.f32 %v7132, %v7194
    %v7199 = vmul.f32 %v7133, %v7194
    %v7200 = vmul.f32 %v7134, %v7194
    %v7201 = vmul.f32 %v7135, %v7194
    %v7202 = vmul.f32 %v7136, %v7194
    %v7203 = vmul.f32 %v7137, %v7194
    %v7204 = vmul.f32 %v7138, %v7194
    %v7205 = vmul.f32 %v7139, %v7194
    %v7206 = vmul.f32 %v7140, %v7194
    %v7207 = vmul.f32 %v7141, %v7194
    %v7208 = vmul.f32 %v7142, %v7194
    %v7209 = vmul.f32 %v7143, %v7194
    %v7210 = vmul.f32 %v7144, %v7194
    %v7211 = vmul.f32 %v7145, %v7194
    %v7212 = vmul.f32 %v7146, %v7194
    %v7213 = vmul.f32 %v7147, %v7194
    %v7214 = vmul.f32 %v7148, %v7194
    %v7215 = vmul.f32 %v7149, %v7194
    %v7216 = vmul.f32 %v7150, %v7194
    %v7217 = vmul.f32 %v7151, %v7194
    %v7218 = vmul.f32 %v7152, %v7194
    %v7219 = vmul.f32 %v7153, %v7194
    %v7220 = vmul.f32 %v7154, %v7194
    %v7221 = vmul.f32 %v7155, %v7194
    %v7222 = vmul.f32 %v7156, %v7194
    %v7223 = vmul.f32 %v7157, %v7194
    %v7224 = vmul.f32 %v7158, %v7194
    %v7225 = vmul.f32 %v7159, %v7194
    %v7226 = vmul.f32 %v7160, %v7194
    %v7227 = vmul.f32 %v7161, %v7194
    %v7228 = vmul.f32 %v7162, %v7194
    %v7229 = vmul.f32 %v7163, %v7194
    %v7230 = vmul.f32 %v7164, %v7194
    %v7231 = vmul.f32 %v7165, %v7194
    %v7232 = vmul.f32 %v7166, %v7194
    %v7233 = vmul.f32 %v7167, %v7194
    %v7234 = vmul.f32 %v7168, %v7194
    %v7235 = vmul.f32 %v7169, %v7194
    %v7236 = vmul.f32 %v7170, %v7194
    %v7237 = vmul.f32 %v7171, %v7194
    %v7238 = vmul.f32 %v7172, %v7194
    %v7239 = vmul.f32 %v7173, %v7194
    %v7240 = vmul.f32 %v7174, %v7194
    %v7241 = vmul.f32 %v7175, %v7194
    %v7242 = vmul.f32 %v7176, %v7194
    %v7243 = vmul.f32 %v7177, %v7194
    %v7244 = vmul.f32 %v7178, %v7194
    %v7245 = vmul.f32 %v7179, %v7194
    %v7246 = vmul.f32 %v7180, %v7194
    %v7247 = vmul.f32 %v7181, %v7194
    %v7248 = vmul.f32 %v7182, %v7194
    %v7249 = vmul.f32 %v7183, %v7194
    %v7250 = vmul.f32 %v7184, %v7194
    %v7251 = vmul.f32 %v7185, %v7194
    %v7252 = vmul.f32 %v7186, %v7194
    %v7253 = vmul.f32 %v7187, %v7194
    %v7254 = vmul.f32 %v7188, %v7194
    %v7255 = vmul.f32 %v7189, %v7194
    %v7256 = vmul.f32 %v7190, %v7194
    %v7257 = vmul.f32 %v7191, %v7194
    %v7258 = vmul.f32 %v7192, %v7194
    %v7260 = vlaneseq
    %v7261 = vshrl.u32 %v7260, 7
    %v7262 = vsub.s32 0, %v7261
    %v7263 = vrot.slane %v3508, %v7262
    %v7265 = vmul.f32 %v7195, %v7263
    %v7266 = vmul.f32 %v7196, %v7263
    %v7267 = vmul.f32 %v7197, %v7263
    %v7268 = vmul.f32 %v7198, %v7263
    %v7269 = vmul.f32 %v7199, %v7263
    %v7270 = vmul.f32 %v7200, %v7263
    %v7271 = vmul.f32 %v7201, %v7263
    %v7272 = vmul.f32 %v7202, %v7263
    %v7273 = vmul.f32 %v7203, %v7263
    %v7274 = vmul.f32 %v7204, %v7263
    %v7275 = vmul.f32 %v7205, %v7263
    %v7276 = vmul.f32 %v7206, %v7263
    %v7277 = vmul.f32 %v7207, %v7263
    %v7278 = vmul.f32 %v7208, %v7263
    %v7279 = vmul.f32 %v7209, %v7263
    %v7280 = vmul.f32 %v7210, %v7263
    %v7281 = vmul.f32 %v7211, %v7263
    %v7282 = vmul.f32 %v7212, %v7263
    %v7283 = vmul.f32 %v7213, %v7263
    %v7284 = vmul.f32 %v7214, %v7263
    %v7285 = vmul.f32 %v7215, %v7263
    %v7286 = vmul.f32 %v7216, %v7263
    %v7287 = vmul.f32 %v7217, %v7263
    %v7288 = vmul.f32 %v7218, %v7263
    %v7289 = vmul.f32 %v7219, %v7263
    %v7290 = vmul.f32 %v7220, %v7263
    %v7291 = vmul.f32 %v7221, %v7263
    %v7292 = vmul.f32 %v7222, %v7263
    %v7293 = vmul.f32 %v7223, %v7263
    %v7294 = vmul.f32 %v7224, %v7263
    %v7295 = vmul.f32 %v7225, %v7263
    %v7296 = vmul.f32 %v7226, %v7263
    %v7297 = vmul.f32 %v7227, %v7263
    %v7298 = vmul.f32 %v7228, %v7263
    %v7299 = vmul.f32 %v7229, %v7263
    %v7300 = vmul.f32 %v7230, %v7263
    %v7301 = vmul.f32 %v7231, %v7263
    %v7302 = vmul.f32 %v7232, %v7263
    %v7303 = vmul.f32 %v7233, %v7263
    %v7304 = vmul.f32 %v7234, %v7263
    %v7305 = vmul.f32 %v7235, %v7263
    %v7306 = vmul.f32 %v7236, %v7263
    %v7307 = vmul.f32 %v7237, %v7263
    %v7308 = vmul.f32 %v7238, %v7263
    %v7309 = vmul.f32 %v7239, %v7263
    %v7310 = vmul.f32 %v7240, %v7263
    %v7311 = vmul.f32 %v7241, %v7263
    %v7312 = vmul.f32 %v7242, %v7263
    %v7313 = vmul.f32 %v7243, %v7263
    %v7314 = vmul.f32 %v7244, %v7263
    %v7315 = vmul.f32 %v7245, %v7263
    %v7316 = vmul.f32 %v7246, %v7263
    %v7317 = vmul.f32 %v7247, %v7263
    %v7318 = vmul.f32 %v7248, %v7263
    %v7319 = vmul.f32 %v7249, %v7263
    %v7320 = vmul.f32 %v7250, %v7263
    %v7321 = vmul.f32 %v7251, %v7263
    %v7322 = vmul.f32 %v7252, %v7263
    %v7323 = vmul.f32 %v7253, %v7263
    %v7324 = vmul.f32 %v7254, %v7263
    %v7325 = vmul.f32 %v7255, %v7263
    %v7326 = vmul.f32 %v7256, %v7263
    %v7327 = vmul.f32 %v7257, %v7263
    %v7328 = vmul.f32 %v7258, %v7263
    %v7330 = vlaneseq
    %v7331 = vshrl.u32 %v7330, 7
    %v7332 = vsub.s32 0, %v7331
    %v7333 = vrot.slane %v3509, %v7332
    %v7335 = vadd.f32 %v7265, %v7333
    %v7336 = vadd.f32 %v7266, %v7333
    %v7337 = vadd.f32 %v7267, %v7333
    %v7338 = vadd.f32 %v7268, %v7333
    %v7339 = vadd.f32 %v7269, %v7333
    %v7340 = vadd.f32 %v7270, %v7333
    %v7341 = vadd.f32 %v7271, %v7333
    %v7342 = vadd.f32 %v7272, %v7333
    %v7343 = vadd.f32 %v7273, %v7333
    %v7344 = vadd.f32 %v7274, %v7333
    %v7345 = vadd.f32 %v7275, %v7333
    %v7346 = vadd.f32 %v7276, %v7333
    %v7347 = vadd.f32 %v7277, %v7333
    %v7348 = vadd.f32 %v7278, %v7333
    %v7349 = vadd.f32 %v7279, %v7333
    %v7350 = vadd.f32 %v7280, %v7333
    %v7351 = vadd.f32 %v7281, %v7333
    %v7352 = vadd.f32 %v7282, %v7333
    %v7353 = vadd.f32 %v7283, %v7333
    %v7354 = vadd.f32 %v7284, %v7333
    %v7355 = vadd.f32 %v7285, %v7333
    %v7356 = vadd.f32 %v7286, %v7333
    %v7357 = vadd.f32 %v7287, %v7333
    %v7358 = vadd.f32 %v7288, %v7333
    %v7359 = vadd.f32 %v7289, %v7333
    %v7360 = vadd.f32 %v7290, %v7333
    %v7361 = vadd.f32 %v7291, %v7333
    %v7362 = vadd.f32 %v7292, %v7333
    %v7363 = vadd.f32 %v7293, %v7333
    %v7364 = vadd.f32 %v7294, %v7333
    %v7365 = vadd.f32 %v7295, %v7333
    %v7366 = vadd.f32 %v7296, %v7333
    %v7367 = vadd.f32 %v7297, %v7333
    %v7368 = vadd.f32 %v7298, %v7333
    %v7369 = vadd.f32 %v7299, %v7333
    %v7370 = vadd.f32 %v7300, %v7333
    %v7371 = vadd.f32 %v7301, %v7333
    %v7372 = vadd.f32 %v7302, %v7333
    %v7373 = vadd.f32 %v7303, %v7333
    %v7374 = vadd.f32 %v7304, %v7333
    %v7375 = vadd.f32 %v7305, %v7333
    %v7376 = vadd.f32 %v7306, %v7333
    %v7377 = vadd.f32 %v7307, %v7333
    %v7378 = vadd.f32 %v7308, %v7333
    %v7379 = vadd.f32 %v7309, %v7333
    %v7380 = vadd.f32 %v7310, %v7333
    %v7381 = vadd.f32 %v7311, %v7333
    %v7382 = vadd.f32 %v7312, %v7333
    %v7383 = vadd.f32 %v7313, %v7333
    %v7384 = vadd.f32 %v7314, %v7333
    %v7385 = vadd.f32 %v7315, %v7333
    %v7386 = vadd.f32 %v7316, %v7333
    %v7387 = vadd.f32 %v7317, %v7333
    %v7388 = vadd.f32 %v7318, %v7333
    %v7389 = vadd.f32 %v7319, %v7333
    %v7390 = vadd.f32 %v7320, %v7333
    %v7391 = vadd.f32 %v7321, %v7333
    %v7392 = vadd.f32 %v7322, %v7333
    %v7393 = vadd.f32 %v7323, %v7333
    %v7394 = vadd.f32 %v7324, %v7333
    %v7395 = vadd.f32 %v7325, %v7333
    %v7396 = vadd.f32 %v7326, %v7333
    %v7397 = vadd.f32 %v7327, %v7333
    %v7398 = vadd.f32 %v7328, %v7333
    %v7399 = vmax.f32 %v7335, 0.0
    %v7400 = vmax.f32 %v7336, 0.0
    %v7401 = vmax.f32 %v7337, 0.0
    %v7402 = vmax.f32 %v7338, 0.0
    %v7403 = vmax.f32 %v7339, 0.0
    %v7404 = vmax.f32 %v7340, 0.0
    %v7405 = vmax.f32 %v7341, 0.0
    %v7406 = vmax.f32 %v7342, 0.0
    %v7407 = vmax.f32 %v7343, 0.0
    %v7408 = vmax.f32 %v7344, 0.0
    %v7409 = vmax.f32 %v7345, 0.0
    %v7410 = vmax.f32 %v7346, 0.0
    %v7411 = vmax.f32 %v7347, 0.0
    %v7412 = vmax.f32 %v7348, 0.0
    %v7413 = vmax.f32 %v7349, 0.0
    %v7414 = vmax.f32 %v7350, 0.0
    %v7415 = vmax.f32 %v7351, 0.0
    %v7416 = vmax.f32 %v7352, 0.0
    %v7417 = vmax.f32 %v7353, 0.0
    %v7418 = vmax.f32 %v7354, 0.0
    %v7419 = vmax.f32 %v7355, 0.0
    %v7420 = vmax.f32 %v7356, 0.0
    %v7421 = vmax.f32 %v7357, 0.0
    %v7422 = vmax.f32 %v7358, 0.0
    %v7423 = vmax.f32 %v7359, 0.0
    %v7424 = vmax.f32 %v7360, 0.0
    %v7425 = vmax.f32 %v7361, 0.0
    %v7426 = vmax.f32 %v7362, 0.0
    %v7427 = vmax.f32 %v7363, 0.0
    %v7428 = vmax.f32 %v7364, 0.0
    %v7429 = vmax.f32 %v7365, 0.0
    %v7430 = vmax.f32 %v7366, 0.0
    %v7431 = vmax.f32 %v7367, 0.0
    %v7432 = vmax.f32 %v7368, 0.0
    %v7433 = vmax.f32 %v7369, 0.0
    %v7434 = vmax.f32 %v7370, 0.0
    %v7435 = vmax.f32 %v7371, 0.0
    %v7436 = vmax.f32 %v7372, 0.0
    %v7437 = vmax.f32 %v7373, 0.0
    %v7438 = vmax.f32 %v7374, 0.0
    %v7439 = vmax.f32 %v7375, 0.0
    %v7440 = vmax.f32 %v7376, 0.0
    %v7441 = vmax.f32 %v7377, 0.0
    %v7442 = vmax.f32 %v7378, 0.0
    %v7443 = vmax.f32 %v7379, 0.0
    %v7444 = vmax.f32 %v7380, 0.0
    %v7445 = vmax.f32 %v7381, 0.0
    %v7446 = vmax.f32 %v7382, 0.0
    %v7447 = vmax.f32 %v7383, 0.0
    %v7448 = vmax.f32 %v7384, 0.0
    %v7449 = vmax.f32 %v7385, 0.0
    %v7450 = vmax.f32 %v7386, 0.0
    %v7451 = vmax.f32 %v7387, 0.0
    %v7452 = vmax.f32 %v7388, 0.0
    %v7453 = vmax.f32 %v7389, 0.0
    %v7454 = vmax.f32 %v7390, 0.0
    %v7455 = vmax.f32 %v7391, 0.0
    %v7456 = vmax.f32 %v7392, 0.0
    %v7457 = vmax.f32 %v7393, 0.0
    %v7458 = vmax.f32 %v7394, 0.0
    %v7459 = vmax.f32 %v7395, 0.0
    %v7460 = vmax.f32 %v7396, 0.0
    %v7461 = vmax.f32 %v7397, 0.0
    %v7462 = vmax.f32 %v7398, 0.0
    %v7463 = vadd.f32 %v3727, %v7399
    %v7464 = vadd.f32 %v3729, %v7400
    %v7465 = vadd.f32 %v3732, %v7401
    %v7466 = vadd.f32 %v3734, %v7402
    %v7467 = vadd.f32 %v3737, %v7403
    %v7468 = vadd.f32 %v3739, %v7404
    %v7469 = vadd.f32 %v3742, %v7405
    %v7470 = vadd.f32 %v3744, %v7406
    %v7471 = vadd.f32 %v3747, %v7407
    %v7472 = vadd.f32 %v3749, %v7408
    %v7473 = vadd.f32 %v3752, %v7409
    %v7474 = vadd.f32 %v3754, %v7410
    %v7475 = vadd.f32 %v3757, %v7411
    %v7476 = vadd.f32 %v3759, %v7412
    %v7477 = vadd.f32 %v3762, %v7413
    %v7478 = vadd.f32 %v3764, %v7414
    %v7479 = vadd.f32 %v3767, %v7415
    %v7480 = vadd.f32 %v3769, %v7416
    %v7481 = vadd.f32 %v3772, %v7417
    %v7482 = vadd.f32 %v3774, %v7418
    %v7483 = vadd.f32 %v3777, %v7419
    %v7484 = vadd.f32 %v3779, %v7420
    %v7485 = vadd.f32 %v3782, %v7421
    %v7486 = vadd.f32 %v3784, %v7422
    %v7487 = vadd.f32 %v3787, %v7423
    %v7488 = vadd.f32 %v3789, %v7424
    %v7489 = vadd.f32 %v3792, %v7425
    %v7490 = vadd.f32 %v3794, %v7426
    %v7491 = vadd.f32 %v3797, %v7427
    %v7492 = vadd.f32 %v3799, %v7428
    %v7493 = vadd.f32 %v4048, %v7429
    %v7494 = vadd.f32 %v4050, %v7430
    %v7495 = vadd.f32 %v3807, %v7431
    %v7496 = vadd.f32 %v3809, %v7432
    %v7497 = vadd.f32 %v3812, %v7433
    %v7498 = vadd.f32 %v3814, %v7434
    %v7499 = vadd.f32 %v3817, %v7435
    %v7500 = vadd.f32 %v3819, %v7436
    %v7501 = vadd.f32 %v3822, %v7437
    %v7502 = vadd.f32 %v3824, %v7438
    %v7503 = vadd.f32 %v3827, %v7439
    %v7504 = vadd.f32 %v3829, %v7440
    %v7505 = vadd.f32 %v3832, %v7441
    %v7506 = vadd.f32 %v3834, %v7442
    %v7507 = vadd.f32 %v3837, %v7443
    %v7508 = vadd.f32 %v3839, %v7444
    %v7509 = vadd.f32 %v3842, %v7445
    %v7510 = vadd.f32 %v3844, %v7446
    %v7511 = vadd.f32 %v3847, %v7447
    %v7512 = vadd.f32 %v3849, %v7448
    %v7513 = vadd.f32 %v3852, %v7449
    %v7514 = vadd.f32 %v3854, %v7450
    %v7515 = vadd.f32 %v3857, %v7451
    %v7516 = vadd.f32 %v3859, %v7452
    %v7517 = vadd.f32 %v3862, %v7453
    %v7518 = vadd.f32 %v3864, %v7454
    %v7519 = vadd.f32 %v3867, %v7455
    %v7520 = vadd.f32 %v3869, %v7456
    %v7521 = vadd.f32 %v3872, %v7457
    %v7522 = vadd.f32 %v3874, %v7458
    %v7523 = vadd.f32 %v3877, %v7459
    %v7524 = vadd.f32 %v3879, %v7460
    %v7525 = vadd.f32 %v4053, %v7461
    %v7526 = vadd.f32 %v4055, %v7462
    %7527 = vst.msk [vmem:[%s3433 + $0x1] sm:$0xff] %vm32, %v7463
    %7528 = vst.msk [vmem:[%s3433 + $0x9] sm:$0xff] %vm32, %v7464
    %7529 = vst.msk [vmem:[%s3433 + $0x19] sm:$0xff] %vm32, %v7465
    %7530 = vst.msk [vmem:[%s3433 + $0x21] sm:$0xff] %vm32, %v7466
    %7531 = vst.msk [vmem:[%s3433 + $0x31] sm:$0xff] %vm32, %v7467
    %7532 = vst.msk [vmem:[%s3433 + $0x39] sm:$0xff] %vm32, %v7468
    %7533 = vst.msk [vmem:[%s3433 + $0x49] sm:$0xff] %vm32, %v7469
    %7534 = vst.msk [vmem:[%s3433 + $0x51] sm:$0xff] %vm32, %v7470
    %7535 = vst.msk [vmem:[%s3433 + $0x61] sm:$0xff] %vm32, %v7471
    %7536 = vst.msk [vmem:[%s3433 + $0x69] sm:$0xff] %vm32, %v7472
    %7537 = vst.msk [vmem:[%s3433 + $0x79] sm:$0xff] %vm32, %v7473
    %7538 = vst.msk [vmem:[%s3433 + $0x81] sm:$0xff] %vm32, %v7474
    %7539 = vst.msk [vmem:[%s3433 + $0x91] sm:$0xff] %vm32, %v7475
    %7540 = vst.msk [vmem:[%s3433 + $0x99] sm:$0xff] %vm32, %v7476
    %7541 = vst.msk [vmem:[%s3433 + $0xa9] sm:$0xff] %vm32, %v7477
    %7542 = vst.msk [vmem:[%s3433 + $0xb1] sm:$0xff] %vm32, %v7478
    %7543 = vst.msk [vmem:[%s3433 + $0xc1] sm:$0xff] %vm32, %v7479
    %7544 = vst.msk [vmem:[%s3433 + $0xc9] sm:$0xff] %vm32, %v7480
    %7545 = vst.msk [vmem:[%s3433 + $0xd9] sm:$0xff] %vm32, %v7481
    %7546 = vst.msk [vmem:[%s3433 + $0xe1] sm:$0xff] %vm32, %v7482
    %7547 = vst.msk [vmem:[%s3433 + $0xf1] sm:$0xff] %vm32, %v7483
    %7548 = vst.msk [vmem:[%s3433 + $0xf9] sm:$0xff] %vm32, %v7484
    %7549 = vst.msk [vmem:[%s3433 + $0x109] sm:$0xff] %vm32, %v7485
    %7550 = vst.msk [vmem:[%s3433 + $0x111] sm:$0xff] %vm32, %v7486
    %7551 = vst.msk [vmem:[%s3433 + $0x121] sm:$0xff] %vm32, %v7487
    %7552 = vst.msk [vmem:[%s3433 + $0x129] sm:$0xff] %vm32, %v7488
    %7553 = vst.msk [vmem:[%s3433 + $0x139] sm:$0xff] %vm32, %v7489
    %7554 = vst.msk [vmem:[%s3433 + $0x141] sm:$0xff] %vm32, %v7490
    %7555 = vst.msk [vmem:[%s3433 + $0x151] sm:$0xff] %vm32, %v7491
    %7556 = vst.msk [vmem:[%s3433 + $0x159] sm:$0xff] %vm32, %v7492
    %7557 = vst.msk [vmem:[%s3433 + $0x169] sm:$0xff] %vm32, %v7493
    %7558 = vst.msk [vmem:[%s3433 + $0x171] sm:$0xff] %vm32, %v7494
    %7559 = vst.msk [vmem:[%s3433 + $0x1b1] sm:$0xff] %vm32, %v7495
    %7560 = vst.msk [vmem:[%s3433 + $0x1b9] sm:$0xff] %vm32, %v7496
    %7561 = vst.msk [vmem:[%s3433 + $0x1c9] sm:$0xff] %vm32, %v7497
    %7562 = vst.msk [vmem:[%s3433 + $0x1d1] sm:$0xff] %vm32, %v7498
    %7563 = vst.msk [vmem:[%s3433 + $0x1e1] sm:$0xff] %vm32, %v7499
    %7564 = vst.msk [vmem:[%s3433 + $0x1e9] sm:$0xff] %vm32, %v7500
    %7565 = vst.msk [vmem:[%s3433 + $0x1f9] sm:$0xff] %vm32, %v7501
    %7566 = vst.msk [vmem:[%s3433 + $0x201] sm:$0xff] %vm32, %v7502
    %7567 = vst.msk [vmem:[%s3433 + $0x211] sm:$0xff] %vm32, %v7503
    %7568 = vst.msk [vmem:[%s3433 + $0x219] sm:$0xff] %vm32, %v7504
    %7569 = vst.msk [vmem:[%s3433 + $0x229] sm:$0xff] %vm32, %v7505
    %7570 = vst.msk [vmem:[%s3433 + $0x231] sm:$0xff] %vm32, %v7506
    %7571 = vst.msk [vmem:[%s3433 + $0x241] sm:$0xff] %vm32, %v7507
    %7572 = vst.msk [vmem:[%s3433 + $0x249] sm:$0xff] %vm32, %v7508
    %7573 = vst.msk [vmem:[%s3433 + $0x259] sm:$0xff] %vm32, %v7509
    %7574 = vst.msk [vmem:[%s3433 + $0x261] sm:$0xff] %vm32, %v7510
    %7575 = vst.msk [vmem:[%s3433 + $0x271] sm:$0xff] %vm32, %v7511
    %7576 = vst.msk [vmem:[%s3433 + $0x279] sm:$0xff] %vm32, %v7512
    %7577 = vst.msk [vmem:[%s3433 + $0x289] sm:$0xff] %vm32, %v7513
    %7578 = vst.msk [vmem:[%s3433 + $0x291] sm:$0xff] %vm32, %v7514
    %7579 = vst.msk [vmem:[%s3433 + $0x2a1] sm:$0xff] %vm32, %v7515
    %7580 = vst.msk [vmem:[%s3433 + $0x2a9] sm:$0xff] %vm32, %v7516
    %7581 = vst.msk [vmem:[%s3433 + $0x2b9] sm:$0xff] %vm32, %v7517
    %7582 = vst.msk [vmem:[%s3433 + $0x2c1] sm:$0xff] %vm32, %v7518
    %7583 = vst.msk [vmem:[%s3433 + $0x2d1] sm:$0xff] %vm32, %v7519
    %7584 = vst.msk [vmem:[%s3433 + $0x2d9] sm:$0xff] %vm32, %v7520
    %7585 = vst.msk [vmem:[%s3433 + $0x2e9] sm:$0xff] %vm32, %v7521
    %7586 = vst.msk [vmem:[%s3433 + $0x2f1] sm:$0xff] %vm32, %v7522
    %7587 = vst.msk [vmem:[%s3433 + $0x301] sm:$0xff] %vm32, %v7523
    %7588 = vst.msk [vmem:[%s3433 + $0x309] sm:$0xff] %vm32, %v7524
    %7589 = vst.msk [vmem:[%s3433 + $0x319] sm:$0xff] %vm32, %v7525
    %7590 = vst.msk [vmem:[%s3433 + $0x321] sm:$0xff] %vm32, %v7526
  $region42: #{tpu_custom_call.1} parent=0 // loop_footer
    %s3515 = sadd.s32 1, %s3511
  $region43: #{tpu_custom_call.1} parent=0 // loop_footer_branch
    %3510 = sbr.rel target = $region39
  $region44: #{tpu_custom_call.1} parent=0 // loop_exit
    _
  %v7591 = vld [vmem:[#allocation2] sm:$0xff]
  %v7592 = vld [vmem:[#allocation2 + $0x8] sm:$0xff]
  %v7593 = vld [vmem:[#allocation2 + $0x10] sm:$0x3]
  %v7594 = vld [vmem:[#allocation2 + $0x18] sm:$0xff]
  %v7595 = vld [vmem:[#allocation2 + $0x20] sm:$0xff]
  %v7596 = vld [vmem:[#allocation2 + $0x28] sm:$0x3]
  %v7597 = vld [vmem:[#allocation2 + $0x30] sm:$0xff]
  %v7598 = vld [vmem:[#allocation2 + $0x38] sm:$0xff]
  %v7599 = vld [vmem:[#allocation2 + $0x40] sm:$0x3]
  %v7600 = vld [vmem:[#allocation2 + $0x48] sm:$0xff]
  %v7601 = vld [vmem:[#allocation2 + $0x50] sm:$0xff]
  %v7602 = vld [vmem:[#allocation2 + $0x58] sm:$0x3]
  %v7603 = vld [vmem:[#allocation2 + $0x60] sm:$0xff]
  %v7604 = vld [vmem:[#allocation2 + $0x68] sm:$0xff]
  %v7605 = vld [vmem:[#allocation2 + $0x70] sm:$0x3]
  %v7606 = vld [vmem:[#allocation2 + $0x78] sm:$0xff]
  %v7607 = vld [vmem:[#allocation2 + $0x80] sm:$0xff]
  %v7608 = vld [vmem:[#allocation2 + $0x88] sm:$0x3]
  %v7609 = vld [vmem:[#allocation2 + $0x90] sm:$0xff]
  %v7610 = vld [vmem:[#allocation2 + $0x98] sm:$0xff]
  %v7611 = vld [vmem:[#allocation2 + $0xa0] sm:$0x3]
  %v7612 = vld [vmem:[#allocation2 + $0xa8] sm:$0xff]
  %v7613 = vld [vmem:[#allocation2 + $0xb0] sm:$0xff]
  %v7614 = vld [vmem:[#allocation2 + $0xb8] sm:$0x3]
  %v7615 = vld [vmem:[#allocation2 + $0xc0] sm:$0xff]
  %v7616 = vld [vmem:[#allocation2 + $0xc8] sm:$0xff]
  %v7617 = vld [vmem:[#allocation2 + $0xd0] sm:$0x3]
  %v7618 = vld [vmem:[#allocation2 + $0xd8] sm:$0xff]
  %v7619 = vld [vmem:[#allocation2 + $0xe0] sm:$0xff]
  %v7620 = vld [vmem:[#allocation2 + $0xe8] sm:$0x3]
  %v7621 = vld [vmem:[#allocation2 + $0xf0] sm:$0xff]
  %v7622 = vld [vmem:[#allocation2 + $0xf8] sm:$0xff]
  %v7623 = vld [vmem:[#allocation2 + $0x100] sm:$0x3]
  %v7624 = vld [vmem:[#allocation2 + $0x108] sm:$0xff]
  %v7625 = vld [vmem:[#allocation2 + $0x110] sm:$0xff]
  %v7626 = vld [vmem:[#allocation2 + $0x118] sm:$0x3]
  %v7627 = vld [vmem:[#allocation2 + $0x120] sm:$0xff]
  %v7628 = vld [vmem:[#allocation2 + $0x128] sm:$0xff]
  %v7629 = vld [vmem:[#allocation2 + $0x130] sm:$0x3]
  %v7630 = vld [vmem:[#allocation2 + $0x138] sm:$0xff]
  %v7631 = vld [vmem:[#allocation2 + $0x140] sm:$0xff]
  %v7632 = vld [vmem:[#allocation2 + $0x148] sm:$0x3]
  %v7633 = vld [vmem:[#allocation2 + $0x150] sm:$0xff]
  %v7634 = vld [vmem:[#allocation2 + $0x158] sm:$0xff]
  %v7635 = vld [vmem:[#allocation2 + $0x160] sm:$0x3]
  %v7636 = vld [vmem:[#allocation2 + $0x168] sm:$0xff]
  %v7637 = vld [vmem:[#allocation2 + $0x170] sm:$0xff]
  %v7638 = vld [vmem:[#allocation2 + $0x178] sm:$0x3]
  %v7639 = vld [vmem:[#allocation2 + $0x180] sm:$0xff]
  %v7640 = vld [vmem:[#allocation2 + $0x188] sm:$0xff]
  %v7641 = vld [vmem:[#allocation2 + $0x190] sm:$0x3]
  %v7642 = vld [vmem:[#allocation2 + $0x198] sm:$0xff]
  %v7643 = vld [vmem:[#allocation2 + $0x1a0] sm:$0xff]
  %v7644 = vld [vmem:[#allocation2 + $0x1a8] sm:$0x3]
  %v7645 = vld [vmem:[#allocation2 + $0x1b0] sm:$0xff]
  %v7646 = vld [vmem:[#allocation2 + $0x1b8] sm:$0xff]
  %v7647 = vld [vmem:[#allocation2 + $0x1c0] sm:$0x3]
  %v7648 = vld [vmem:[#allocation2 + $0x1c8] sm:$0xff]
  %v7649 = vld [vmem:[#allocation2 + $0x1d0] sm:$0xff]
  %v7650 = vld [vmem:[#allocation2 + $0x1d8] sm:$0x3]
  %v7651 = vld [vmem:[#allocation2 + $0x1e0] sm:$0xff]
  %v7652 = vld [vmem:[#allocation2 + $0x1e8] sm:$0xff]
  %v7653 = vld [vmem:[#allocation2 + $0x1f0] sm:$0x3]
  %v7654 = vld [vmem:[#allocation2 + $0x1f8] sm:$0xff]
  %v7655 = vld [vmem:[#allocation2 + $0x200] sm:$0xff]
  %v7656 = vld [vmem:[#allocation2 + $0x208] sm:$0x3]
  %v7657 = vld [vmem:[#allocation2 + $0x210] sm:$0xff]
  %v7658 = vld [vmem:[#allocation2 + $0x218] sm:$0xff]
  %v7659 = vld [vmem:[#allocation2 + $0x220] sm:$0x3]
  %v7660 = vld [vmem:[#allocation2 + $0x228] sm:$0xff]
  %v7661 = vld [vmem:[#allocation2 + $0x230] sm:$0xff]
  %v7662 = vld [vmem:[#allocation2 + $0x238] sm:$0x3]
  %v7663 = vld [vmem:[#allocation2 + $0x240] sm:$0xff]
  %v7664 = vld [vmem:[#allocation2 + $0x248] sm:$0xff]
  %v7665 = vld [vmem:[#allocation2 + $0x250] sm:$0x3]
  %v7666 = vld [vmem:[#allocation2 + $0x258] sm:$0xff]
  %v7667 = vld [vmem:[#allocation2 + $0x260] sm:$0xff]
  %v7668 = vld [vmem:[#allocation2 + $0x268] sm:$0x3]
  %v7669 = vld [vmem:[#allocation2 + $0x270] sm:$0xff]
  %v7670 = vld [vmem:[#allocation2 + $0x278] sm:$0xff]
  %v7671 = vld [vmem:[#allocation2 + $0x280] sm:$0x3]
  %v7672 = vld [vmem:[#allocation2 + $0x288] sm:$0xff]
  %v7673 = vld [vmem:[#allocation2 + $0x290] sm:$0xff]
  %v7674 = vld [vmem:[#allocation2 + $0x298] sm:$0x3]
  %v7675 = vld [vmem:[#allocation2 + $0x2a0] sm:$0xff]
  %v7676 = vld [vmem:[#allocation2 + $0x2a8] sm:$0xff]
  %v7677 = vld [vmem:[#allocation2 + $0x2b0] sm:$0x3]
  %v7678 = vld [vmem:[#allocation2 + $0x2b8] sm:$0xff]
  %v7679 = vld [vmem:[#allocation2 + $0x2c0] sm:$0xff]
  %v7680 = vld [vmem:[#allocation2 + $0x2c8] sm:$0x3]
  %v7681 = vld [vmem:[#allocation2 + $0x2d0] sm:$0xff]
  %v7682 = vld [vmem:[#allocation2 + $0x2d8] sm:$0xff]
  %v7683 = vld [vmem:[#allocation2 + $0x2e0] sm:$0x3]
  %v7684 = vld [vmem:[#allocation2 + $0x2e8] sm:$0xff]
  %v7685 = vld [vmem:[#allocation2 + $0x2f0] sm:$0xff]
  %v7686 = vld [vmem:[#allocation2 + $0x2f8] sm:$0x3]
  %v7687 = vld [vmem:[#allocation2 + $0x300] sm:$0xff]
  %v7688 = vld [vmem:[#allocation2 + $0x308] sm:$0xff]
  %v7689 = vld [vmem:[#allocation2 + $0x310] sm:$0x3]
  %v7690 = vld [vmem:[#allocation2 + $0x318] sm:$0xff]
  %v7691 = vld [vmem:[#allocation2 + $0x320] sm:$0xff]
  %v7692 = vld [vmem:[#allocation2 + $0x328] sm:$0x3]
  %v7693 = vld [vmem:[#allocation2 + $0x330] sm:$0xff]
  %v7694 = vld [vmem:[#allocation2 + $0x338] sm:$0xff]
  %v7695 = vld [vmem:[#allocation2 + $0x340] sm:$0x3]
  %v7696 = vld [vmem:[#allocation2 + $0x348] sm:$0xff]
  %v7697 = vld [vmem:[#allocation2 + $0x350] sm:$0xff]
  %v7698 = vld [vmem:[#allocation2 + $0x358] sm:$0x3]
  %v7795 = vrot.slane %v7591, 1
  %v7796 = vrot.slane %v7592, 1
  %v7797 = vsel %vm346, %v7795, %v7796
  %v7798 = vrot.slane %v7593, 1
  %v7799 = vsel %vm346, %v7796, %v7798
  %v7800 = vrot.slane %v7594, 1
  %v7801 = vrot.slane %v7595, 1
  %v7802 = vsel %vm346, %v7800, %v7801
  %v7803 = vrot.slane %v7596, 1
  %v7804 = vsel %vm346, %v7801, %v7803
  %v7805 = vrot.slane %v7597, 1
  %v7806 = vrot.slane %v7598, 1
  %v7807 = vsel %vm346, %v7805, %v7806
  %v7808 = vrot.slane %v7599, 1
  %v7809 = vsel %vm346, %v7806, %v7808
  %v7810 = vrot.slane %v7600, 1
  %v7811 = vrot.slane %v7601, 1
  %v7812 = vsel %vm346, %v7810, %v7811
  %v7813 = vrot.slane %v7602, 1
  %v7814 = vsel %vm346, %v7811, %v7813
  %v7815 = vrot.slane %v7603, 1
  %v7816 = vrot.slane %v7604, 1
  %v7817 = vsel %vm346, %v7815, %v7816
  %v7818 = vrot.slane %v7605, 1
  %v7819 = vsel %vm346, %v7816, %v7818
  %v7820 = vrot.slane %v7606, 1
  %v7821 = vrot.slane %v7607, 1
  %v7822 = vsel %vm346, %v7820, %v7821
  %v7823 = vrot.slane %v7608, 1
  %v7824 = vsel %vm346, %v7821, %v7823
  %v7825 = vrot.slane %v7609, 1
  %v7826 = vrot.slane %v7610, 1
  %v7827 = vsel %vm346, %v7825, %v7826
  %v7828 = vrot.slane %v7611, 1
  %v7829 = vsel %vm346, %v7826, %v7828
  %v7830 = vrot.slane %v7612, 1
  %v7831 = vrot.slane %v7613, 1
  %v7832 = vsel %vm346, %v7830, %v7831
  %v7833 = vrot.slane %v7614, 1
  %v7834 = vsel %vm346, %v7831, %v7833
  %v7835 = vrot.slane %v7615, 1
  %v7836 = vrot.slane %v7616, 1
  %v7837 = vsel %vm346, %v7835, %v7836
  %v7838 = vrot.slane %v7617, 1
  %v7839 = vsel %vm346, %v7836, %v7838
  %v7840 = vrot.slane %v7618, 1
  %v7841 = vrot.slane %v7619, 1
  %v7842 = vsel %vm346, %v7840, %v7841
  %v7843 = vrot.slane %v7620, 1
  %v7844 = vsel %vm346, %v7841, %v7843
  %v7845 = vrot.slane %v7621, 1
  %v7846 = vrot.slane %v7622, 1
  %v7847 = vsel %vm346, %v7845, %v7846
  %v7848 = vrot.slane %v7623, 1
  %v7849 = vsel %vm346, %v7846, %v7848
  %v7850 = vrot.slane %v7624, 1
  %v7851 = vrot.slane %v7625, 1
  %v7852 = vsel %vm346, %v7850, %v7851
  %v7853 = vrot.slane %v7626, 1
  %v7854 = vsel %vm346, %v7851, %v7853
  %v7855 = vrot.slane %v7627, 1
  %v7856 = vrot.slane %v7628, 1
  %v7857 = vsel %vm346, %v7855, %v7856
  %v7858 = vrot.slane %v7629, 1
  %v7859 = vsel %vm346, %v7856, %v7858
  %v7860 = vrot.slane %v7630, 1
  %v7861 = vrot.slane %v7631, 1
  %v7862 = vsel %vm346, %v7860, %v7861
  %v7863 = vrot.slane %v7632, 1
  %v7864 = vsel %vm346, %v7861, %v7863
  %v7865 = vrot.slane %v7633, 1
  %v7866 = vrot.slane %v7634, 1
  %v7867 = vsel %vm346, %v7865, %v7866
  %v7868 = vrot.slane %v7635, 1
  %v7869 = vsel %vm346, %v7866, %v7868
  %v7870 = vrot.slane %v7636, 1
  %v7871 = vrot.slane %v7637, 1
  %v7872 = vsel %vm346, %v7870, %v7871
  %v7873 = vrot.slane %v7638, 1
  %v7874 = vsel %vm346, %v7871, %v7873
  %v7875 = vrot.slane %v7645, 1
  %v7876 = vrot.slane %v7646, 1
  %v7877 = vsel %vm346, %v7875, %v7876
  %v7878 = vrot.slane %v7647, 1
  %v7879 = vsel %vm346, %v7876, %v7878
  %v7880 = vrot.slane %v7648, 1
  %v7881 = vrot.slane %v7649, 1
  %v7882 = vsel %vm346, %v7880, %v7881
  %v7883 = vrot.slane %v7650, 1
  %v7884 = vsel %vm346, %v7881, %v7883
  %v7885 = vrot.slane %v7651, 1
  %v7886 = vrot.slane %v7652, 1
  %v7887 = vsel %vm346, %v7885, %v7886
  %v7888 = vrot.slane %v7653, 1
  %v7889 = vsel %vm346, %v7886, %v7888
  %v7890 = vrot.slane %v7654, 1
  %v7891 = vrot.slane %v7655, 1
  %v7892 = vsel %vm346, %v7890, %v7891
  %v7893 = vrot.slane %v7656, 1
  %v7894 = vsel %vm346, %v7891, %v7893
  %v7895 = vrot.slane %v7657, 1
  %v7896 = vrot.slane %v7658, 1
  %v7897 = vsel %vm346, %v7895, %v7896
  %v7898 = vrot.slane %v7659, 1
  %v7899 = vsel %vm346, %v7896, %v7898
  %v7900 = vrot.slane %v7660, 1
  %v7901 = vrot.slane %v7661, 1
  %v7902 = vsel %vm346, %v7900, %v7901
  %v7903 = vrot.slane %v7662, 1
  %v7904 = vsel %vm346, %v7901, %v7903
  %v7905 = vrot.slane %v7663, 1
  %v7906 = vrot.slane %v7664, 1
  %v7907 = vsel %vm346, %v7905, %v7906
  %v7908 = vrot.slane %v7665, 1
  %v7909 = vsel %vm346, %v7906, %v7908
  %v7910 = vrot.slane %v7666, 1
  %v7911 = vrot.slane %v7667, 1
  %v7912 = vsel %vm346, %v7910, %v7911
  %v7913 = vrot.slane %v7668, 1
  %v7914 = vsel %vm346, %v7911, %v7913
  %v7915 = vrot.slane %v7669, 1
  %v7916 = vrot.slane %v7670, 1
  %v7917 = vsel %vm346, %v7915, %v7916
  %v7918 = vrot.slane %v7671, 1
  %v7919 = vsel %vm346, %v7916, %v7918
  %v7920 = vrot.slane %v7672, 1
  %v7921 = vrot.slane %v7673, 1
  %v7922 = vsel %vm346, %v7920, %v7921
  %v7923 = vrot.slane %v7674, 1
  %v7924 = vsel %vm346, %v7921, %v7923
  %v7925 = vrot.slane %v7675, 1
  %v7926 = vrot.slane %v7676, 1
  %v7927 = vsel %vm346, %v7925, %v7926
  %v7928 = vrot.slane %v7677, 1
  %v7929 = vsel %vm346, %v7926, %v7928
  %v7930 = vrot.slane %v7678, 1
  %v7931 = vrot.slane %v7679, 1
  %v7932 = vsel %vm346, %v7930, %v7931
  %v7933 = vrot.slane %v7680, 1
  %v7934 = vsel %vm346, %v7931, %v7933
  %v7935 = vrot.slane %v7681, 1
  %v7936 = vrot.slane %v7682, 1
  %v7937 = vsel %vm346, %v7935, %v7936
  %v7938 = vrot.slane %v7683, 1
  %v7939 = vsel %vm346, %v7936, %v7938
  %v7940 = vrot.slane %v7684, 1
  %v7941 = vrot.slane %v7685, 1
  %v7942 = vsel %vm346, %v7940, %v7941
  %v7943 = vrot.slane %v7686, 1
  %v7944 = vsel %vm346, %v7941, %v7943
  %v7945 = vrot.slane %v7687, 1
  %v7946 = vrot.slane %v7688, 1
  %v7947 = vsel %vm346, %v7945, %v7946
  %v7948 = vrot.slane %v7689, 1
  %v7949 = vsel %vm346, %v7946, %v7948
  %v7950 = vrot.slane %v7690, 1
  %v7951 = vrot.slane %v7691, 1
  %v7952 = vsel %vm346, %v7950, %v7951
  %v7953 = vrot.slane %v7692, 1
  %v7954 = vsel %vm346, %v7951, %v7953
  %v7955 = vrot.slane %v7591, 2
  %v7956 = vrot.slane %v7592, 2
  %v7957 = vsel %vm507, %v7955, %v7956
  %v7958 = vrot.slane %v7593, 2
  %v7959 = vsel %vm507, %v7956, %v7958
  %v7960 = vrot.slane %v7594, 2
  %v7961 = vrot.slane %v7595, 2
  %v7962 = vsel %vm507, %v7960, %v7961
  %v7963 = vrot.slane %v7596, 2
  %v7964 = vsel %vm507, %v7961, %v7963
  %v7965 = vrot.slane %v7597, 2
  %v7966 = vrot.slane %v7598, 2
  %v7967 = vsel %vm507, %v7965, %v7966
  %v7968 = vrot.slane %v7599, 2
  %v7969 = vsel %vm507, %v7966, %v7968
  %v7970 = vrot.slane %v7600, 2
  %v7971 = vrot.slane %v7601, 2
  %v7972 = vsel %vm507, %v7970, %v7971
  %v7973 = vrot.slane %v7602, 2
  %v7974 = vsel %vm507, %v7971, %v7973
  %v7975 = vrot.slane %v7603, 2
  %v7976 = vrot.slane %v7604, 2
  %v7977 = vsel %vm507, %v7975, %v7976
  %v7978 = vrot.slane %v7605, 2
  %v7979 = vsel %vm507, %v7976, %v7978
  %v7980 = vrot.slane %v7606, 2
  %v7981 = vrot.slane %v7607, 2
  %v7982 = vsel %vm507, %v7980, %v7981
  %v7983 = vrot.slane %v7608, 2
  %v7984 = vsel %vm507, %v7981, %v7983
  %v7985 = vrot.slane %v7609, 2
  %v7986 = vrot.slane %v7610, 2
  %v7987 = vsel %vm507, %v7985, %v7986
  %v7988 = vrot.slane %v7611, 2
  %v7989 = vsel %vm507, %v7986, %v7988
  %v7990 = vrot.slane %v7612, 2
  %v7991 = vrot.slane %v7613, 2
  %v7992 = vsel %vm507, %v7990, %v7991
  %v7993 = vrot.slane %v7614, 2
  %v7994 = vsel %vm507, %v7991, %v7993
  %v7995 = vrot.slane %v7615, 2
  %v7996 = vrot.slane %v7616, 2
  %v7997 = vsel %vm507, %v7995, %v7996
  %v7998 = vrot.slane %v7617, 2
  %v7999 = vsel %vm507, %v7996, %v7998
  %v8000 = vrot.slane %v7618, 2
  %v8001 = vrot.slane %v7619, 2
  %v8002 = vsel %vm507, %v8000, %v8001
  %v8003 = vrot.slane %v7620, 2
  %v8004 = vsel %vm507, %v8001, %v8003
  %v8005 = vrot.slane %v7621, 2
  %v8006 = vrot.slane %v7622, 2
  %v8007 = vsel %vm507, %v8005, %v8006
  %v8008 = vrot.slane %v7623, 2
  %v8009 = vsel %vm507, %v8006, %v8008
  %v8010 = vrot.slane %v7624, 2
  %v8011 = vrot.slane %v7625, 2
  %v8012 = vsel %vm507, %v8010, %v8011
  %v8013 = vrot.slane %v7626, 2
  %v8014 = vsel %vm507, %v8011, %v8013
  %v8015 = vrot.slane %v7627, 2
  %v8016 = vrot.slane %v7628, 2
  %v8017 = vsel %vm507, %v8015, %v8016
  %v8018 = vrot.slane %v7629, 2
  %v8019 = vsel %vm507, %v8016, %v8018
  %v8020 = vrot.slane %v7630, 2
  %v8021 = vrot.slane %v7631, 2
  %v8022 = vsel %vm507, %v8020, %v8021
  %v8023 = vrot.slane %v7632, 2
  %v8024 = vsel %vm507, %v8021, %v8023
  %v8025 = vrot.slane %v7633, 2
  %v8026 = vrot.slane %v7634, 2
  %v8027 = vsel %vm507, %v8025, %v8026
  %v8028 = vrot.slane %v7635, 2
  %v8029 = vsel %vm507, %v8026, %v8028
  %v8030 = vrot.slane %v7636, 2
  %v8031 = vrot.slane %v7637, 2
  %v8032 = vsel %vm507, %v8030, %v8031
  %v8033 = vrot.slane %v7638, 2
  %v8034 = vsel %vm507, %v8031, %v8033
  %v8035 = vrot.slane %v7645, 2
  %v8036 = vrot.slane %v7646, 2
  %v8037 = vsel %vm507, %v8035, %v8036
  %v8038 = vrot.slane %v7647, 2
  %v8039 = vsel %vm507, %v8036, %v8038
  %v8040 = vrot.slane %v7648, 2
  %v8041 = vrot.slane %v7649, 2
  %v8042 = vsel %vm507, %v8040, %v8041
  %v8043 = vrot.slane %v7650, 2
  %v8044 = vsel %vm507, %v8041, %v8043
  %v8045 = vrot.slane %v7651, 2
  %v8046 = vrot.slane %v7652, 2
  %v8047 = vsel %vm507, %v8045, %v8046
  %v8048 = vrot.slane %v7653, 2
  %v8049 = vsel %vm507, %v8046, %v8048
  %v8050 = vrot.slane %v7654, 2
  %v8051 = vrot.slane %v7655, 2
  %v8052 = vsel %vm507, %v8050, %v8051
  %v8053 = vrot.slane %v7656, 2
  %v8054 = vsel %vm507, %v8051, %v8053
  %v8055 = vrot.slane %v7657, 2
  %v8056 = vrot.slane %v7658, 2
  %v8057 = vsel %vm507, %v8055, %v8056
  %v8058 = vrot.slane %v7659, 2
  %v8059 = vsel %vm507, %v8056, %v8058
  %v8060 = vrot.slane %v7660, 2
  %v8061 = vrot.slane %v7661, 2
  %v8062 = vsel %vm507, %v8060, %v8061
  %v8063 = vrot.slane %v7662, 2
  %v8064 = vsel %vm507, %v8061, %v8063
  %v8065 = vrot.slane %v7663, 2
  %v8066 = vrot.slane %v7664, 2
  %v8067 = vsel %vm507, %v8065, %v8066
  %v8068 = vrot.slane %v7665, 2
  %v8069 = vsel %vm507, %v8066, %v8068
  %v8070 = vrot.slane %v7666, 2
  %v8071 = vrot.slane %v7667, 2
  %v8072 = vsel %vm507, %v8070, %v8071
  %v8073 = vrot.slane %v7668, 2
  %v8074 = vsel %vm507, %v8071, %v8073
  %v8075 = vrot.slane %v7669, 2
  %v8076 = vrot.slane %v7670, 2
  %v8077 = vsel %vm507, %v8075, %v8076
  %v8078 = vrot.slane %v7671, 2
  %v8079 = vsel %vm507, %v8076, %v8078
  %v8080 = vrot.slane %v7672, 2
  %v8081 = vrot.slane %v7673, 2
  %v8082 = vsel %vm507, %v8080, %v8081
  %v8083 = vrot.slane %v7674, 2
  %v8084 = vsel %vm507, %v8081, %v8083
  %v8085 = vrot.slane %v7675, 2
  %v8086 = vrot.slane %v7676, 2
  %v8087 = vsel %vm507, %v8085, %v8086
  %v8088 = vrot.slane %v7677, 2
  %v8089 = vsel %vm507, %v8086, %v8088
  %v8090 = vrot.slane %v7678, 2
  %v8091 = vrot.slane %v7679, 2
  %v8092 = vsel %vm507, %v8090, %v8091
  %v8093 = vrot.slane %v7680, 2
  %v8094 = vsel %vm507, %v8091, %v8093
  %v8095 = vrot.slane %v7681, 2
  %v8096 = vrot.slane %v7682, 2
  %v8097 = vsel %vm507, %v8095, %v8096
  %v8098 = vrot.slane %v7683, 2
  %v8099 = vsel %vm507, %v8096, %v8098
  %v8100 = vrot.slane %v7684, 2
  %v8101 = vrot.slane %v7685, 2
  %v8102 = vsel %vm507, %v8100, %v8101
  %v8103 = vrot.slane %v7686, 2
  %v8104 = vsel %vm507, %v8101, %v8103
  %v8105 = vrot.slane %v7687, 2
  %v8106 = vrot.slane %v7688, 2
  %v8107 = vsel %vm507, %v8105, %v8106
  %v8108 = vrot.slane %v7689, 2
  %v8109 = vsel %vm507, %v8106, %v8108
  %v8110 = vrot.slane %v7690, 2
  %v8111 = vrot.slane %v7691, 2
  %v8112 = vsel %vm507, %v8110, %v8111
  %v8113 = vrot.slane %v7692, 2
  %v8114 = vsel %vm507, %v8111, %v8113
  %v8121 = vrot.slane %v7639, 1
  %v8122 = vrot.slane %v7640, 1
  %v8123 = vsel %vm346, %v8121, %v8122
  %v8124 = vrot.slane %v7641, 1
  %v8125 = vsel %vm346, %v8122, %v8124
  %v8126 = vrot.slane %v7693, 1
  %v8127 = vrot.slane %v7694, 1
  %v8128 = vsel %vm346, %v8126, %v8127
  %v8129 = vrot.slane %v7695, 1
  %v8130 = vsel %vm346, %v8127, %v8129
  %v8131 = vrot.slane %v7639, 2
  %v8132 = vrot.slane %v7640, 2
  %v8133 = vsel %vm507, %v8131, %v8132
  %v8134 = vrot.slane %v7641, 2
  %v8135 = vsel %vm507, %v8132, %v8134
  %v8136 = vrot.slane %v7693, 2
  %v8137 = vrot.slane %v7694, 2
  %v8138 = vsel %vm507, %v8136, %v8137
  %v8139 = vrot.slane %v7695, 2
  %v8140 = vsel %vm507, %v8137, %v8139
  %v8147 = vrot.slane %v7642, 1
  %v8148 = vrot.slane %v7643, 1
  %v8149 = vsel %vm346, %v8147, %v8148
  %v8150 = vrot.slane %v7644, 1
  %v8151 = vsel %vm346, %v8148, %v8150
  %v8152 = vrot.slane %v7696, 1
  %v8153 = vrot.slane %v7697, 1
  %v8154 = vsel %vm346, %v8152, %v8153
  %v8155 = vrot.slane %v7698, 1
  %v8156 = vsel %vm346, %v8153, %v8155
  %v8157 = vrot.slane %v7642, 2
  %v8158 = vrot.slane %v7643, 2
  %v8159 = vsel %vm507, %v8157, %v8158
  %v8160 = vrot.slane %v7644, 2
  %v8161 = vsel %vm507, %v8158, %v8160
  %v8162 = vrot.slane %v7696, 2
  %v8163 = vrot.slane %v7697, 2
  %v8164 = vsel %vm507, %v8162, %v8163
  %v8165 = vrot.slane %v7698, 2
  %v8166 = vsel %vm507, %v8163, %v8165
  %8167 = vrot.lane.b32.xlu0 %v7797, 8
  %v8168 = vpop.permute.xlu0 %8167
  %8169 = vrot.lane.b32.xlu0 %v7799, 8
  %v8170 = vpop.permute.xlu0 %8169
  %8171 = vrot.lane.b32.xlu0 %v7802, 8
  %v8172 = vpop.permute.xlu0 %8171
  %8173 = vrot.lane.b32.xlu0 %v7804, 8
  %v8174 = vpop.permute.xlu0 %8173
  %8175 = vrot.lane.b32.xlu0 %v7807, 8
  %v8176 = vpop.permute.xlu0 %8175
  %8177 = vrot.lane.b32.xlu0 %v7809, 8
  %v8178 = vpop.permute.xlu0 %8177
  %8179 = vrot.lane.b32.xlu0 %v7812, 8
  %v8180 = vpop.permute.xlu0 %8179
  %8181 = vrot.lane.b32.xlu0 %v7814, 8
  %v8182 = vpop.permute.xlu0 %8181
  %8183 = vrot.lane.b32.xlu0 %v7817, 8
  %v8184 = vpop.permute.xlu0 %8183
  %8185 = vrot.lane.b32.xlu0 %v7819, 8
  %v8186 = vpop.permute.xlu0 %8185
  %8187 = vrot.lane.b32.xlu0 %v7822, 8
  %v8188 = vpop.permute.xlu0 %8187
  %8189 = vrot.lane.b32.xlu0 %v7824, 8
  %v8190 = vpop.permute.xlu0 %8189
  %8191 = vrot.lane.b32.xlu0 %v7827, 8
  %v8192 = vpop.permute.xlu0 %8191
  %8193 = vrot.lane.b32.xlu0 %v7829, 8
  %v8194 = vpop.permute.xlu0 %8193
  %8195 = vrot.lane.b32.xlu0 %v7832, 8
  %v8196 = vpop.permute.xlu0 %8195
  %8197 = vrot.lane.b32.xlu0 %v7834, 8
  %v8198 = vpop.permute.xlu0 %8197
  %8199 = vrot.lane.b32.xlu0 %v7837, 8
  %v8200 = vpop.permute.xlu0 %8199
  %8201 = vrot.lane.b32.xlu0 %v7839, 8
  %v8202 = vpop.permute.xlu0 %8201
  %8203 = vrot.lane.b32.xlu0 %v7842, 8
  %v8204 = vpop.permute.xlu0 %8203
  %8205 = vrot.lane.b32.xlu0 %v7844, 8
  %v8206 = vpop.permute.xlu0 %8205
  %8207 = vrot.lane.b32.xlu0 %v7847, 8
  %v8208 = vpop.permute.xlu0 %8207
  %8209 = vrot.lane.b32.xlu0 %v7849, 8
  %v8210 = vpop.permute.xlu0 %8209
  %8211 = vrot.lane.b32.xlu0 %v7852, 8
  %v8212 = vpop.permute.xlu0 %8211
  %8213 = vrot.lane.b32.xlu0 %v7854, 8
  %v8214 = vpop.permute.xlu0 %8213
  %8215 = vrot.lane.b32.xlu0 %v7857, 8
  %v8216 = vpop.permute.xlu0 %8215
  %8217 = vrot.lane.b32.xlu0 %v7859, 8
  %v8218 = vpop.permute.xlu0 %8217
  %8219 = vrot.lane.b32.xlu0 %v7862, 8
  %v8220 = vpop.permute.xlu0 %8219
  %8221 = vrot.lane.b32.xlu0 %v7864, 8
  %v8222 = vpop.permute.xlu0 %8221
  %8223 = vrot.lane.b32.xlu0 %v7867, 8
  %v8224 = vpop.permute.xlu0 %8223
  %8225 = vrot.lane.b32.xlu0 %v7869, 8
  %v8226 = vpop.permute.xlu0 %8225
  %8227 = vrot.lane.b32.xlu0 %v7872, 8
  %v8228 = vpop.permute.xlu0 %8227
  %8229 = vrot.lane.b32.xlu0 %v7874, 8
  %v8230 = vpop.permute.xlu0 %8229
  %8231 = vrot.lane.b32.xlu0 %v7877, 8
  %v8232 = vpop.permute.xlu0 %8231
  %8233 = vrot.lane.b32.xlu0 %v7879, 8
  %v8234 = vpop.permute.xlu0 %8233
  %8235 = vrot.lane.b32.xlu0 %v7882, 8
  %v8236 = vpop.permute.xlu0 %8235
  %8237 = vrot.lane.b32.xlu0 %v7884, 8
  %v8238 = vpop.permute.xlu0 %8237
  %8239 = vrot.lane.b32.xlu0 %v7887, 8
  %v8240 = vpop.permute.xlu0 %8239
  %8241 = vrot.lane.b32.xlu0 %v7889, 8
  %v8242 = vpop.permute.xlu0 %8241
  %8243 = vrot.lane.b32.xlu0 %v7892, 8
  %v8244 = vpop.permute.xlu0 %8243
  %8245 = vrot.lane.b32.xlu0 %v7894, 8
  %v8246 = vpop.permute.xlu0 %8245
  %8247 = vrot.lane.b32.xlu0 %v7897, 8
  %v8248 = vpop.permute.xlu0 %8247
  %8249 = vrot.lane.b32.xlu0 %v7899, 8
  %v8250 = vpop.permute.xlu0 %8249
  %8251 = vrot.lane.b32.xlu0 %v7902, 8
  %v8252 = vpop.permute.xlu0 %8251
  %8253 = vrot.lane.b32.xlu0 %v7904, 8
  %v8254 = vpop.permute.xlu0 %8253
  %8255 = vrot.lane.b32.xlu0 %v7907, 8
  %v8256 = vpop.permute.xlu0 %8255
  %8257 = vrot.lane.b32.xlu0 %v7909, 8
  %v8258 = vpop.permute.xlu0 %8257
  %8259 = vrot.lane.b32.xlu0 %v7912, 8
  %v8260 = vpop.permute.xlu0 %8259
  %8261 = vrot.lane.b32.xlu0 %v7914, 8
  %v8262 = vpop.permute.xlu0 %8261
  %8263 = vrot.lane.b32.xlu0 %v7917, 8
  %v8264 = vpop.permute.xlu0 %8263
  %8265 = vrot.lane.b32.xlu0 %v7919, 8
  %v8266 = vpop.permute.xlu0 %8265
  %8267 = vrot.lane.b32.xlu0 %v7922, 8
  %v8268 = vpop.permute.xlu0 %8267
  %8269 = vrot.lane.b32.xlu0 %v7924, 8
  %v8270 = vpop.permute.xlu0 %8269
  %8271 = vrot.lane.b32.xlu0 %v7927, 8
  %v8272 = vpop.permute.xlu0 %8271
  %8273 = vrot.lane.b32.xlu0 %v7929, 8
  %v8274 = vpop.permute.xlu0 %8273
  %8275 = vrot.lane.b32.xlu0 %v7932, 8
  %v8276 = vpop.permute.xlu0 %8275
  %8277 = vrot.lane.b32.xlu0 %v7934, 8
  %v8278 = vpop.permute.xlu0 %8277
  %8279 = vrot.lane.b32.xlu0 %v7937, 8
  %v8280 = vpop.permute.xlu0 %8279
  %8281 = vrot.lane.b32.xlu0 %v7939, 8
  %v8282 = vpop.permute.xlu0 %8281
  %8283 = vrot.lane.b32.xlu0 %v7942, 8
  %v8284 = vpop.permute.xlu0 %8283
  %8285 = vrot.lane.b32.xlu0 %v7944, 8
  %v8286 = vpop.permute.xlu0 %8285
  %8287 = vrot.lane.b32.xlu0 %v7947, 8
  %v8288 = vpop.permute.xlu0 %8287
  %8289 = vrot.lane.b32.xlu0 %v7949, 8
  %v8290 = vpop.permute.xlu0 %8289
  %8291 = vrot.lane.b32.xlu0 %v7952, 8
  %v8292 = vpop.permute.xlu0 %8291
  %8293 = vrot.lane.b32.xlu0 %v7954, 8
  %v8294 = vpop.permute.xlu0 %8293
  %8359 = vrot.lane.b32.xlu0 %v7957, 16
  %v8360 = vpop.permute.xlu0 %8359
  %8361 = vrot.lane.b32.xlu0 %v7959, 16
  %v8362 = vpop.permute.xlu0 %8361
  %8363 = vrot.lane.b32.xlu0 %v7962, 16
  %v8364 = vpop.permute.xlu0 %8363
  %8365 = vrot.lane.b32.xlu0 %v7964, 16
  %v8366 = vpop.permute.xlu0 %8365
  %8367 = vrot.lane.b32.xlu0 %v7967, 16
  %v8368 = vpop.permute.xlu0 %8367
  %8369 = vrot.lane.b32.xlu0 %v7969, 16
  %v8370 = vpop.permute.xlu0 %8369
  %8371 = vrot.lane.b32.xlu0 %v7972, 16
  %v8372 = vpop.permute.xlu0 %8371
  %8373 = vrot.lane.b32.xlu0 %v7974, 16
  %v8374 = vpop.permute.xlu0 %8373
  %8375 = vrot.lane.b32.xlu0 %v7977, 16
  %v8376 = vpop.permute.xlu0 %8375
  %8377 = vrot.lane.b32.xlu0 %v7979, 16
  %v8378 = vpop.permute.xlu0 %8377
  %8379 = vrot.lane.b32.xlu0 %v7982, 16
  %v8380 = vpop.permute.xlu0 %8379
  %8381 = vrot.lane.b32.xlu0 %v7984, 16
  %v8382 = vpop.permute.xlu0 %8381
  %8383 = vrot.lane.b32.xlu0 %v7987, 16
  %v8384 = vpop.permute.xlu0 %8383
  %8385 = vrot.lane.b32.xlu0 %v7989, 16
  %v8386 = vpop.permute.xlu0 %8385
  %8387 = vrot.lane.b32.xlu0 %v7992, 16
  %v8388 = vpop.permute.xlu0 %8387
  %8389 = vrot.lane.b32.xlu0 %v7994, 16
  %v8390 = vpop.permute.xlu0 %8389
  %8391 = vrot.lane.b32.xlu0 %v7997, 16
  %v8392 = vpop.permute.xlu0 %8391
  %8393 = vrot.lane.b32.xlu0 %v7999, 16
  %v8394 = vpop.permute.xlu0 %8393
  %8395 = vrot.lane.b32.xlu0 %v8002, 16
  %v8396 = vpop.permute.xlu0 %8395
  %8397 = vrot.lane.b32.xlu0 %v8004, 16
  %v8398 = vpop.permute.xlu0 %8397
  %8399 = vrot.lane.b32.xlu0 %v8007, 16
  %v8400 = vpop.permute.xlu0 %8399
  %8401 = vrot.lane.b32.xlu0 %v8009, 16
  %v8402 = vpop.permute.xlu0 %8401
  %8403 = vrot.lane.b32.xlu0 %v8012, 16
  %v8404 = vpop.permute.xlu0 %8403
  %8405 = vrot.lane.b32.xlu0 %v8014, 16
  %v8406 = vpop.permute.xlu0 %8405
  %8407 = vrot.lane.b32.xlu0 %v8017, 16
  %v8408 = vpop.permute.xlu0 %8407
  %8409 = vrot.lane.b32.xlu0 %v8019, 16
  %v8410 = vpop.permute.xlu0 %8409
  %8411 = vrot.lane.b32.xlu0 %v8022, 16
  %v8412 = vpop.permute.xlu0 %8411
  %8413 = vrot.lane.b32.xlu0 %v8024, 16
  %v8414 = vpop.permute.xlu0 %8413
  %8415 = vrot.lane.b32.xlu0 %v8027, 16
  %v8416 = vpop.permute.xlu0 %8415
  %8417 = vrot.lane.b32.xlu0 %v8029, 16
  %v8418 = vpop.permute.xlu0 %8417
  %8419 = vrot.lane.b32.xlu0 %v8032, 16
  %v8420 = vpop.permute.xlu0 %8419
  %8421 = vrot.lane.b32.xlu0 %v8034, 16
  %v8422 = vpop.permute.xlu0 %8421
  %8423 = vrot.lane.b32.xlu0 %v8037, 16
  %v8424 = vpop.permute.xlu0 %8423
  %8425 = vrot.lane.b32.xlu0 %v8039, 16
  %v8426 = vpop.permute.xlu0 %8425
  %8427 = vrot.lane.b32.xlu0 %v8042, 16
  %v8428 = vpop.permute.xlu0 %8427
  %8429 = vrot.lane.b32.xlu0 %v8044, 16
  %v8430 = vpop.permute.xlu0 %8429
  %8431 = vrot.lane.b32.xlu0 %v8047, 16
  %v8432 = vpop.permute.xlu0 %8431
  %8433 = vrot.lane.b32.xlu0 %v8049, 16
  %v8434 = vpop.permute.xlu0 %8433
  %8435 = vrot.lane.b32.xlu0 %v8052, 16
  %v8436 = vpop.permute.xlu0 %8435
  %8437 = vrot.lane.b32.xlu0 %v8054, 16
  %v8438 = vpop.permute.xlu0 %8437
  %8439 = vrot.lane.b32.xlu0 %v8057, 16
  %v8440 = vpop.permute.xlu0 %8439
  %8441 = vrot.lane.b32.xlu0 %v8059, 16
  %v8442 = vpop.permute.xlu0 %8441
  %8443 = vrot.lane.b32.xlu0 %v8062, 16
  %v8444 = vpop.permute.xlu0 %8443
  %8445 = vrot.lane.b32.xlu0 %v8064, 16
  %v8446 = vpop.permute.xlu0 %8445
  %8447 = vrot.lane.b32.xlu0 %v8067, 16
  %v8448 = vpop.permute.xlu0 %8447
  %8449 = vrot.lane.b32.xlu0 %v8069, 16
  %v8450 = vpop.permute.xlu0 %8449
  %8451 = vrot.lane.b32.xlu0 %v8072, 16
  %v8452 = vpop.permute.xlu0 %8451
  %8453 = vrot.lane.b32.xlu0 %v8074, 16
  %v8454 = vpop.permute.xlu0 %8453
  %8455 = vrot.lane.b32.xlu0 %v8077, 16
  %v8456 = vpop.permute.xlu0 %8455
  %8457 = vrot.lane.b32.xlu0 %v8079, 16
  %v8458 = vpop.permute.xlu0 %8457
  %8459 = vrot.lane.b32.xlu0 %v8082, 16
  %v8460 = vpop.permute.xlu0 %8459
  %8461 = vrot.lane.b32.xlu0 %v8084, 16
  %v8462 = vpop.permute.xlu0 %8461
  %8463 = vrot.lane.b32.xlu0 %v8087, 16
  %v8464 = vpop.permute.xlu0 %8463
  %8465 = vrot.lane.b32.xlu0 %v8089, 16
  %v8466 = vpop.permute.xlu0 %8465
  %8467 = vrot.lane.b32.xlu0 %v8092, 16
  %v8468 = vpop.permute.xlu0 %8467
  %8469 = vrot.lane.b32.xlu0 %v8094, 16
  %v8470 = vpop.permute.xlu0 %8469
  %8471 = vrot.lane.b32.xlu0 %v8097, 16
  %v8472 = vpop.permute.xlu0 %8471
  %8473 = vrot.lane.b32.xlu0 %v8099, 16
  %v8474 = vpop.permute.xlu0 %8473
  %8475 = vrot.lane.b32.xlu0 %v8102, 16
  %v8476 = vpop.permute.xlu0 %8475
  %8477 = vrot.lane.b32.xlu0 %v8104, 16
  %v8478 = vpop.permute.xlu0 %8477
  %8479 = vrot.lane.b32.xlu0 %v8107, 16
  %v8480 = vpop.permute.xlu0 %8479
  %8481 = vrot.lane.b32.xlu0 %v8109, 16
  %v8482 = vpop.permute.xlu0 %8481
  %8483 = vrot.lane.b32.xlu0 %v8112, 16
  %v8484 = vpop.permute.xlu0 %8483
  %8485 = vrot.lane.b32.xlu0 %v8114, 16
  %v8486 = vpop.permute.xlu0 %8485
  %8551 = vrot.lane.b32.xlu0 %v7594, 24
  %v8552 = vpop.permute.xlu0 %8551
  %8553 = vrot.lane.b32.xlu0 %v7595, 24
  %v8554 = vpop.permute.xlu0 %8553
  %8555 = vrot.lane.b32.xlu0 %v7597, 24
  %v8556 = vpop.permute.xlu0 %8555
  %8557 = vrot.lane.b32.xlu0 %v7598, 24
  %v8558 = vpop.permute.xlu0 %8557
  %8559 = vrot.lane.b32.xlu0 %v7600, 24
  %v8560 = vpop.permute.xlu0 %8559
  %8561 = vrot.lane.b32.xlu0 %v7601, 24
  %v8562 = vpop.permute.xlu0 %8561
  %8563 = vrot.lane.b32.xlu0 %v7603, 24
  %v8564 = vpop.permute.xlu0 %8563
  %8565 = vrot.lane.b32.xlu0 %v7604, 24
  %v8566 = vpop.permute.xlu0 %8565
  %8567 = vrot.lane.b32.xlu0 %v7606, 24
  %v8568 = vpop.permute.xlu0 %8567
  %8569 = vrot.lane.b32.xlu0 %v7607, 24
  %v8570 = vpop.permute.xlu0 %8569
  %8571 = vrot.lane.b32.xlu0 %v7609, 24
  %v8572 = vpop.permute.xlu0 %8571
  %8573 = vrot.lane.b32.xlu0 %v7610, 24
  %v8574 = vpop.permute.xlu0 %8573
  %8575 = vrot.lane.b32.xlu0 %v7612, 24
  %v8576 = vpop.permute.xlu0 %8575
  %8577 = vrot.lane.b32.xlu0 %v7613, 24
  %v8578 = vpop.permute.xlu0 %8577
  %8579 = vrot.lane.b32.xlu0 %v7615, 24
  %v8580 = vpop.permute.xlu0 %8579
  %8581 = vrot.lane.b32.xlu0 %v7616, 24
  %v8582 = vpop.permute.xlu0 %8581
  %8583 = vrot.lane.b32.xlu0 %v7618, 24
  %v8584 = vpop.permute.xlu0 %8583
  %8585 = vrot.lane.b32.xlu0 %v7619, 24
  %v8586 = vpop.permute.xlu0 %8585
  %8587 = vrot.lane.b32.xlu0 %v7621, 24
  %v8588 = vpop.permute.xlu0 %8587
  %8589 = vrot.lane.b32.xlu0 %v7622, 24
  %v8590 = vpop.permute.xlu0 %8589
  %8591 = vrot.lane.b32.xlu0 %v7624, 24
  %v8592 = vpop.permute.xlu0 %8591
  %8593 = vrot.lane.b32.xlu0 %v7625, 24
  %v8594 = vpop.permute.xlu0 %8593
  %8595 = vrot.lane.b32.xlu0 %v7627, 24
  %v8596 = vpop.permute.xlu0 %8595
  %8597 = vrot.lane.b32.xlu0 %v7628, 24
  %v8598 = vpop.permute.xlu0 %8597
  %8599 = vrot.lane.b32.xlu0 %v7630, 24
  %v8600 = vpop.permute.xlu0 %8599
  %8601 = vrot.lane.b32.xlu0 %v7631, 24
  %v8602 = vpop.permute.xlu0 %8601
  %8603 = vrot.lane.b32.xlu0 %v7633, 24
  %v8604 = vpop.permute.xlu0 %8603
  %8605 = vrot.lane.b32.xlu0 %v7634, 24
  %v8606 = vpop.permute.xlu0 %8605
  %8607 = vrot.lane.b32.xlu0 %v7636, 24
  %v8608 = vpop.permute.xlu0 %8607
  %8609 = vrot.lane.b32.xlu0 %v7637, 24
  %v8610 = vpop.permute.xlu0 %8609
  %8611 = vrot.lane.b32.xlu0 %v7639, 24
  %v8612 = vpop.permute.xlu0 %8611
  %8613 = vrot.lane.b32.xlu0 %v7640, 24
  %v8614 = vpop.permute.xlu0 %8613
  %8615 = vrot.lane.b32.xlu0 %v7648, 24
  %v8616 = vpop.permute.xlu0 %8615
  %8617 = vrot.lane.b32.xlu0 %v7649, 24
  %v8618 = vpop.permute.xlu0 %8617
  %8619 = vrot.lane.b32.xlu0 %v7651, 24
  %v8620 = vpop.permute.xlu0 %8619
  %8621 = vrot.lane.b32.xlu0 %v7652, 24
  %v8622 = vpop.permute.xlu0 %8621
  %8623 = vrot.lane.b32.xlu0 %v7654, 24
  %v8624 = vpop.permute.xlu0 %8623
  %8625 = vrot.lane.b32.xlu0 %v7655, 24
  %v8626 = vpop.permute.xlu0 %8625
  %8627 = vrot.lane.b32.xlu0 %v7657, 24
  %v8628 = vpop.permute.xlu0 %8627
  %8629 = vrot.lane.b32.xlu0 %v7658, 24
  %v8630 = vpop.permute.xlu0 %8629
  %8631 = vrot.lane.b32.xlu0 %v7660, 24
  %v8632 = vpop.permute.xlu0 %8631
  %8633 = vrot.lane.b32.xlu0 %v7661, 24
  %v8634 = vpop.permute.xlu0 %8633
  %8635 = vrot.lane.b32.xlu0 %v7663, 24
  %v8636 = vpop.permute.xlu0 %8635
  %8637 = vrot.lane.b32.xlu0 %v7664, 24
  %v8638 = vpop.permute.xlu0 %8637
  %8639 = vrot.lane.b32.xlu0 %v7666, 24
  %v8640 = vpop.permute.xlu0 %8639
  %8641 = vrot.lane.b32.xlu0 %v7667, 24
  %v8642 = vpop.permute.xlu0 %8641
  %8643 = vrot.lane.b32.xlu0 %v7669, 24
  %v8644 = vpop.permute.xlu0 %8643
  %8645 = vrot.lane.b32.xlu0 %v7670, 24
  %v8646 = vpop.permute.xlu0 %8645
  %8647 = vrot.lane.b32.xlu0 %v7672, 24
  %v8648 = vpop.permute.xlu0 %8647
  %8649 = vrot.lane.b32.xlu0 %v7673, 24
  %v8650 = vpop.permute.xlu0 %8649
  %8651 = vrot.lane.b32.xlu0 %v7675, 24
  %v8652 = vpop.permute.xlu0 %8651
  %8653 = vrot.lane.b32.xlu0 %v7676, 24
  %v8654 = vpop.permute.xlu0 %8653
  %8655 = vrot.lane.b32.xlu0 %v7678, 24
  %v8656 = vpop.permute.xlu0 %8655
  %8657 = vrot.lane.b32.xlu0 %v7679, 24
  %v8658 = vpop.permute.xlu0 %8657
  %8659 = vrot.lane.b32.xlu0 %v7681, 24
  %v8660 = vpop.permute.xlu0 %8659
  %8661 = vrot.lane.b32.xlu0 %v7682, 24
  %v8662 = vpop.permute.xlu0 %8661
  %8663 = vrot.lane.b32.xlu0 %v7684, 24
  %v8664 = vpop.permute.xlu0 %8663
  %8665 = vrot.lane.b32.xlu0 %v7685, 24
  %v8666 = vpop.permute.xlu0 %8665
  %8667 = vrot.lane.b32.xlu0 %v7687, 24
  %v8668 = vpop.permute.xlu0 %8667
  %8669 = vrot.lane.b32.xlu0 %v7688, 24
  %v8670 = vpop.permute.xlu0 %8669
  %8671 = vrot.lane.b32.xlu0 %v7690, 24
  %v8672 = vpop.permute.xlu0 %8671
  %8673 = vrot.lane.b32.xlu0 %v7691, 24
  %v8674 = vpop.permute.xlu0 %8673
  %8675 = vrot.lane.b32.xlu0 %v7693, 24
  %v8676 = vpop.permute.xlu0 %8675
  %8677 = vrot.lane.b32.xlu0 %v7694, 24
  %v8678 = vpop.permute.xlu0 %8677
  %8743 = vrot.lane.b32.xlu0 %v7802, 32
  %v8744 = vpop.permute.xlu0 %8743
  %8745 = vrot.lane.b32.xlu0 %v7804, 32
  %v8746 = vpop.permute.xlu0 %8745
  %8747 = vrot.lane.b32.xlu0 %v7807, 32
  %v8748 = vpop.permute.xlu0 %8747
  %8749 = vrot.lane.b32.xlu0 %v7809, 32
  %v8750 = vpop.permute.xlu0 %8749
  %8751 = vrot.lane.b32.xlu0 %v7812, 32
  %v8752 = vpop.permute.xlu0 %8751
  %8753 = vrot.lane.b32.xlu0 %v7814, 32
  %v8754 = vpop.permute.xlu0 %8753
  %8755 = vrot.lane.b32.xlu0 %v7817, 32
  %v8756 = vpop.permute.xlu0 %8755
  %8757 = vrot.lane.b32.xlu0 %v7819, 32
  %v8758 = vpop.permute.xlu0 %8757
  %8759 = vrot.lane.b32.xlu0 %v7822, 32
  %v8760 = vpop.permute.xlu0 %8759
  %8761 = vrot.lane.b32.xlu0 %v7824, 32
  %v8762 = vpop.permute.xlu0 %8761
  %8763 = vrot.lane.b32.xlu0 %v7827, 32
  %v8764 = vpop.permute.xlu0 %8763
  %8765 = vrot.lane.b32.xlu0 %v7829, 32
  %v8766 = vpop.permute.xlu0 %8765
  %8767 = vrot.lane.b32.xlu0 %v7832, 32
  %v8768 = vpop.permute.xlu0 %8767
  %8769 = vrot.lane.b32.xlu0 %v7834, 32
  %v8770 = vpop.permute.xlu0 %8769
  %8771 = vrot.lane.b32.xlu0 %v7837, 32
  %v8772 = vpop.permute.xlu0 %8771
  %8773 = vrot.lane.b32.xlu0 %v7839, 32
  %v8774 = vpop.permute.xlu0 %8773
  %8775 = vrot.lane.b32.xlu0 %v7842, 32
  %v8776 = vpop.permute.xlu0 %8775
  %8777 = vrot.lane.b32.xlu0 %v7844, 32
  %v8778 = vpop.permute.xlu0 %8777
  %8779 = vrot.lane.b32.xlu0 %v7847, 32
  %v8780 = vpop.permute.xlu0 %8779
  %8781 = vrot.lane.b32.xlu0 %v7849, 32
  %v8782 = vpop.permute.xlu0 %8781
  %8783 = vrot.lane.b32.xlu0 %v7852, 32
  %v8784 = vpop.permute.xlu0 %8783
  %8785 = vrot.lane.b32.xlu0 %v7854, 32
  %v8786 = vpop.permute.xlu0 %8785
  %8787 = vrot.lane.b32.xlu0 %v7857, 32
  %v8788 = vpop.permute.xlu0 %8787
  %8789 = vrot.lane.b32.xlu0 %v7859, 32
  %v8790 = vpop.permute.xlu0 %8789
  %8791 = vrot.lane.b32.xlu0 %v7862, 32
  %v8792 = vpop.permute.xlu0 %8791
  %8793 = vrot.lane.b32.xlu0 %v7864, 32
  %v8794 = vpop.permute.xlu0 %8793
  %8795 = vrot.lane.b32.xlu0 %v7867, 32
  %v8796 = vpop.permute.xlu0 %8795
  %8797 = vrot.lane.b32.xlu0 %v7869, 32
  %v8798 = vpop.permute.xlu0 %8797
  %8799 = vrot.lane.b32.xlu0 %v7872, 32
  %v8800 = vpop.permute.xlu0 %8799
  %8801 = vrot.lane.b32.xlu0 %v7874, 32
  %v8802 = vpop.permute.xlu0 %8801
  %8803 = vrot.lane.b32.xlu0 %v8123, 32
  %v8804 = vpop.permute.xlu0 %8803
  %8805 = vrot.lane.b32.xlu0 %v8125, 32
  %v8806 = vpop.permute.xlu0 %8805
  %8807 = vrot.lane.b32.xlu0 %v7882, 32
  %v8808 = vpop.permute.xlu0 %8807
  %8809 = vrot.lane.b32.xlu0 %v7884, 32
  %v8810 = vpop.permute.xlu0 %8809
  %8811 = vrot.lane.b32.xlu0 %v7887, 32
  %v8812 = vpop.permute.xlu0 %8811
  %8813 = vrot.lane.b32.xlu0 %v7889, 32
  %v8814 = vpop.permute.xlu0 %8813
  %8815 = vrot.lane.b32.xlu0 %v7892, 32
  %v8816 = vpop.permute.xlu0 %8815
  %8817 = vrot.lane.b32.xlu0 %v7894, 32
  %v8818 = vpop.permute.xlu0 %8817
  %8819 = vrot.lane.b32.xlu0 %v7897, 32
  %v8820 = vpop.permute.xlu0 %8819
  %8821 = vrot.lane.b32.xlu0 %v7899, 32
  %v8822 = vpop.permute.xlu0 %8821
  %8823 = vrot.lane.b32.xlu0 %v7902, 32
  %v8824 = vpop.permute.xlu0 %8823
  %8825 = vrot.lane.b32.xlu0 %v7904, 32
  %v8826 = vpop.permute.xlu0 %8825
  %8827 = vrot.lane.b32.xlu0 %v7907, 32
  %v8828 = vpop.permute.xlu0 %8827
  %8829 = vrot.lane.b32.xlu0 %v7909, 32
  %v8830 = vpop.permute.xlu0 %8829
  %8831 = vrot.lane.b32.xlu0 %v7912, 32
  %v8832 = vpop.permute.xlu0 %8831
  %8833 = vrot.lane.b32.xlu0 %v7914, 32
  %v8834 = vpop.permute.xlu0 %8833
  %8835 = vrot.lane.b32.xlu0 %v7917, 32
  %v8836 = vpop.permute.xlu0 %8835
  %8837 = vrot.lane.b32.xlu0 %v7919, 32
  %v8838 = vpop.permute.xlu0 %8837
  %8839 = vrot.lane.b32.xlu0 %v7922, 32
  %v8840 = vpop.permute.xlu0 %8839
  %8841 = vrot.lane.b32.xlu0 %v7924, 32
  %v8842 = vpop.permute.xlu0 %8841
  %8843 = vrot.lane.b32.xlu0 %v7927, 32
  %v8844 = vpop.permute.xlu0 %8843
  %8845 = vrot.lane.b32.xlu0 %v7929, 32
  %v8846 = vpop.permute.xlu0 %8845
  %8847 = vrot.lane.b32.xlu0 %v7932, 32
  %v8848 = vpop.permute.xlu0 %8847
  %8849 = vrot.lane.b32.xlu0 %v7934, 32
  %v8850 = vpop.permute.xlu0 %8849
  %8851 = vrot.lane.b32.xlu0 %v7937, 32
  %v8852 = vpop.permute.xlu0 %8851
  %8853 = vrot.lane.b32.xlu0 %v7939, 32
  %v8854 = vpop.permute.xlu0 %8853
  %8855 = vrot.lane.b32.xlu0 %v7942, 32
  %v8856 = vpop.permute.xlu0 %8855
  %8857 = vrot.lane.b32.xlu0 %v7944, 32
  %v8858 = vpop.permute.xlu0 %8857
  %8859 = vrot.lane.b32.xlu0 %v7947, 32
  %v8860 = vpop.permute.xlu0 %8859
  %8861 = vrot.lane.b32.xlu0 %v7949, 32
  %v8862 = vpop.permute.xlu0 %8861
  %8863 = vrot.lane.b32.xlu0 %v7952, 32
  %v8864 = vpop.permute.xlu0 %8863
  %8865 = vrot.lane.b32.xlu0 %v7954, 32
  %v8866 = vpop.permute.xlu0 %8865
  %8867 = vrot.lane.b32.xlu0 %v8128, 32
  %v8868 = vpop.permute.xlu0 %8867
  %8869 = vrot.lane.b32.xlu0 %v8130, 32
  %v8870 = vpop.permute.xlu0 %8869
  %8935 = vrot.lane.b32.xlu0 %v7962, 40
  %v8936 = vpop.permute.xlu0 %8935
  %8937 = vrot.lane.b32.xlu0 %v7964, 40
  %v8938 = vpop.permute.xlu0 %8937
  %8939 = vrot.lane.b32.xlu0 %v7967, 40
  %v8940 = vpop.permute.xlu0 %8939
  %8941 = vrot.lane.b32.xlu0 %v7969, 40
  %v8942 = vpop.permute.xlu0 %8941
  %8943 = vrot.lane.b32.xlu0 %v7972, 40
  %v8944 = vpop.permute.xlu0 %8943
  %8945 = vrot.lane.b32.xlu0 %v7974, 40
  %v8946 = vpop.permute.xlu0 %8945
  %8947 = vrot.lane.b32.xlu0 %v7977, 40
  %v8948 = vpop.permute.xlu0 %8947
  %8949 = vrot.lane.b32.xlu0 %v7979, 40
  %v8950 = vpop.permute.xlu0 %8949
  %8951 = vrot.lane.b32.xlu0 %v7982, 40
  %v8952 = vpop.permute.xlu0 %8951
  %8953 = vrot.lane.b32.xlu0 %v7984, 40
  %v8954 = vpop.permute.xlu0 %8953
  %8955 = vrot.lane.b32.xlu0 %v7987, 40
  %v8956 = vpop.permute.xlu0 %8955
  %8957 = vrot.lane.b32.xlu0 %v7989, 40
  %v8958 = vpop.permute.xlu0 %8957
  %8959 = vrot.lane.b32.xlu0 %v7992, 40
  %v8960 = vpop.permute.xlu0 %8959
  %8961 = vrot.lane.b32.xlu0 %v7994, 40
  %v8962 = vpop.permute.xlu0 %8961
  %8963 = vrot.lane.b32.xlu0 %v7997, 40
  %v8964 = vpop.permute.xlu0 %8963
  %8965 = vrot.lane.b32.xlu0 %v7999, 40
  %v8966 = vpop.permute.xlu0 %8965
  %8967 = vrot.lane.b32.xlu0 %v8002, 40
  %v8968 = vpop.permute.xlu0 %8967
  %8969 = vrot.lane.b32.xlu0 %v8004, 40
  %v8970 = vpop.permute.xlu0 %8969
  %8971 = vrot.lane.b32.xlu0 %v8007, 40
  %v8972 = vpop.permute.xlu0 %8971
  %8973 = vrot.lane.b32.xlu0 %v8009, 40
  %v8974 = vpop.permute.xlu0 %8973
  %8975 = vrot.lane.b32.xlu0 %v8012, 40
  %v8976 = vpop.permute.xlu0 %8975
  %8977 = vrot.lane.b32.xlu0 %v8014, 40
  %v8978 = vpop.permute.xlu0 %8977
  %8979 = vrot.lane.b32.xlu0 %v8017, 40
  %v8980 = vpop.permute.xlu0 %8979
  %8981 = vrot.lane.b32.xlu0 %v8019, 40
  %v8982 = vpop.permute.xlu0 %8981
  %8983 = vrot.lane.b32.xlu0 %v8022, 40
  %v8984 = vpop.permute.xlu0 %8983
  %8985 = vrot.lane.b32.xlu0 %v8024, 40
  %v8986 = vpop.permute.xlu0 %8985
  %8987 = vrot.lane.b32.xlu0 %v8027, 40
  %v8988 = vpop.permute.xlu0 %8987
  %8989 = vrot.lane.b32.xlu0 %v8029, 40
  %v8990 = vpop.permute.xlu0 %8989
  %8991 = vrot.lane.b32.xlu0 %v8032, 40
  %v8992 = vpop.permute.xlu0 %8991
  %8993 = vrot.lane.b32.xlu0 %v8034, 40
  %v8994 = vpop.permute.xlu0 %8993
  %8995 = vrot.lane.b32.xlu0 %v8133, 40
  %v8996 = vpop.permute.xlu0 %8995
  %8997 = vrot.lane.b32.xlu0 %v8135, 40
  %v8998 = vpop.permute.xlu0 %8997
  %8999 = vrot.lane.b32.xlu0 %v8042, 40
  %v9000 = vpop.permute.xlu0 %8999
  %9001 = vrot.lane.b32.xlu0 %v8044, 40
  %v9002 = vpop.permute.xlu0 %9001
  %9003 = vrot.lane.b32.xlu0 %v8047, 40
  %v9004 = vpop.permute.xlu0 %9003
  %9005 = vrot.lane.b32.xlu0 %v8049, 40
  %v9006 = vpop.permute.xlu0 %9005
  %9007 = vrot.lane.b32.xlu0 %v8052, 40
  %v9008 = vpop.permute.xlu0 %9007
  %9009 = vrot.lane.b32.xlu0 %v8054, 40
  %v9010 = vpop.permute.xlu0 %9009
  %9011 = vrot.lane.b32.xlu0 %v8057, 40
  %v9012 = vpop.permute.xlu0 %9011
  %9013 = vrot.lane.b32.xlu0 %v8059, 40
  %v9014 = vpop.permute.xlu0 %9013
  %9015 = vrot.lane.b32.xlu0 %v8062, 40
  %v9016 = vpop.permute.xlu0 %9015
  %9017 = vrot.lane.b32.xlu0 %v8064, 40
  %v9018 = vpop.permute.xlu0 %9017
  %9019 = vrot.lane.b32.xlu0 %v8067, 40
  %v9020 = vpop.permute.xlu0 %9019
  %9021 = vrot.lane.b32.xlu0 %v8069, 40
  %v9022 = vpop.permute.xlu0 %9021
  %9023 = vrot.lane.b32.xlu0 %v8072, 40
  %v9024 = vpop.permute.xlu0 %9023
  %9025 = vrot.lane.b32.xlu0 %v8074, 40
  %v9026 = vpop.permute.xlu0 %9025
  %9027 = vrot.lane.b32.xlu0 %v8077, 40
  %v9028 = vpop.permute.xlu0 %9027
  %9029 = vrot.lane.b32.xlu0 %v8079, 40
  %v9030 = vpop.permute.xlu0 %9029
  %9031 = vrot.lane.b32.xlu0 %v8082, 40
  %v9032 = vpop.permute.xlu0 %9031
  %9033 = vrot.lane.b32.xlu0 %v8084, 40
  %v9034 = vpop.permute.xlu0 %9033
  %9035 = vrot.lane.b32.xlu0 %v8087, 40
  %v9036 = vpop.permute.xlu0 %9035
  %9037 = vrot.lane.b32.xlu0 %v8089, 40
  %v9038 = vpop.permute.xlu0 %9037
  %9039 = vrot.lane.b32.xlu0 %v8092, 40
  %v9040 = vpop.permute.xlu0 %9039
  %9041 = vrot.lane.b32.xlu0 %v8094, 40
  %v9042 = vpop.permute.xlu0 %9041
  %9043 = vrot.lane.b32.xlu0 %v8097, 40
  %v9044 = vpop.permute.xlu0 %9043
  %9045 = vrot.lane.b32.xlu0 %v8099, 40
  %v9046 = vpop.permute.xlu0 %9045
  %9047 = vrot.lane.b32.xlu0 %v8102, 40
  %v9048 = vpop.permute.xlu0 %9047
  %9049 = vrot.lane.b32.xlu0 %v8104, 40
  %v9050 = vpop.permute.xlu0 %9049
  %9051 = vrot.lane.b32.xlu0 %v8107, 40
  %v9052 = vpop.permute.xlu0 %9051
  %9053 = vrot.lane.b32.xlu0 %v8109, 40
  %v9054 = vpop.permute.xlu0 %9053
  %9055 = vrot.lane.b32.xlu0 %v8112, 40
  %v9056 = vpop.permute.xlu0 %9055
  %9057 = vrot.lane.b32.xlu0 %v8114, 40
  %v9058 = vpop.permute.xlu0 %9057
  %9059 = vrot.lane.b32.xlu0 %v8138, 40
  %v9060 = vpop.permute.xlu0 %9059
  %9061 = vrot.lane.b32.xlu0 %v8140, 40
  %v9062 = vpop.permute.xlu0 %9061
  %9127 = vrot.lane.b32.xlu0 %v7597, 48
  %v9128 = vpop.permute.xlu0 %9127
  %9129 = vrot.lane.b32.xlu0 %v7598, 48
  %v9130 = vpop.permute.xlu0 %9129
  %9131 = vrot.lane.b32.xlu0 %v7600, 48
  %v9132 = vpop.permute.xlu0 %9131
  %9133 = vrot.lane.b32.xlu0 %v7601, 48
  %v9134 = vpop.permute.xlu0 %9133
  %9135 = vrot.lane.b32.xlu0 %v7603, 48
  %v9136 = vpop.permute.xlu0 %9135
  %9137 = vrot.lane.b32.xlu0 %v7604, 48
  %v9138 = vpop.permute.xlu0 %9137
  %9139 = vrot.lane.b32.xlu0 %v7606, 48
  %v9140 = vpop.permute.xlu0 %9139
  %9141 = vrot.lane.b32.xlu0 %v7607, 48
  %v9142 = vpop.permute.xlu0 %9141
  %9143 = vrot.lane.b32.xlu0 %v7609, 48
  %v9144 = vpop.permute.xlu0 %9143
  %9145 = vrot.lane.b32.xlu0 %v7610, 48
  %v9146 = vpop.permute.xlu0 %9145
  %9147 = vrot.lane.b32.xlu0 %v7612, 48
  %v9148 = vpop.permute.xlu0 %9147
  %9149 = vrot.lane.b32.xlu0 %v7613, 48
  %v9150 = vpop.permute.xlu0 %9149
  %9151 = vrot.lane.b32.xlu0 %v7615, 48
  %v9152 = vpop.permute.xlu0 %9151
  %9153 = vrot.lane.b32.xlu0 %v7616, 48
  %v9154 = vpop.permute.xlu0 %9153
  %9155 = vrot.lane.b32.xlu0 %v7618, 48
  %v9156 = vpop.permute.xlu0 %9155
  %9157 = vrot.lane.b32.xlu0 %v7619, 48
  %v9158 = vpop.permute.xlu0 %9157
  %9159 = vrot.lane.b32.xlu0 %v7621, 48
  %v9160 = vpop.permute.xlu0 %9159
  %9161 = vrot.lane.b32.xlu0 %v7622, 48
  %v9162 = vpop.permute.xlu0 %9161
  %9163 = vrot.lane.b32.xlu0 %v7624, 48
  %v9164 = vpop.permute.xlu0 %9163
  %9165 = vrot.lane.b32.xlu0 %v7625, 48
  %v9166 = vpop.permute.xlu0 %9165
  %9167 = vrot.lane.b32.xlu0 %v7627, 48
  %v9168 = vpop.permute.xlu0 %9167
  %9169 = vrot.lane.b32.xlu0 %v7628, 48
  %v9170 = vpop.permute.xlu0 %9169
  %9171 = vrot.lane.b32.xlu0 %v7630, 48
  %v9172 = vpop.permute.xlu0 %9171
  %9173 = vrot.lane.b32.xlu0 %v7631, 48
  %v9174 = vpop.permute.xlu0 %9173
  %9175 = vrot.lane.b32.xlu0 %v7633, 48
  %v9176 = vpop.permute.xlu0 %9175
  %9177 = vrot.lane.b32.xlu0 %v7634, 48
  %v9178 = vpop.permute.xlu0 %9177
  %9179 = vrot.lane.b32.xlu0 %v7636, 48
  %v9180 = vpop.permute.xlu0 %9179
  %9181 = vrot.lane.b32.xlu0 %v7637, 48
  %v9182 = vpop.permute.xlu0 %9181
  %9183 = vrot.lane.b32.xlu0 %v7639, 48
  %v9184 = vpop.permute.xlu0 %9183
  %9185 = vrot.lane.b32.xlu0 %v7640, 48
  %v9186 = vpop.permute.xlu0 %9185
  %9187 = vrot.lane.b32.xlu0 %v7642, 48
  %v9188 = vpop.permute.xlu0 %9187
  %9189 = vrot.lane.b32.xlu0 %v7643, 48
  %v9190 = vpop.permute.xlu0 %9189
  %9191 = vrot.lane.b32.xlu0 %v7651, 48
  %v9192 = vpop.permute.xlu0 %9191
  %9193 = vrot.lane.b32.xlu0 %v7652, 48
  %v9194 = vpop.permute.xlu0 %9193
  %9195 = vrot.lane.b32.xlu0 %v7654, 48
  %v9196 = vpop.permute.xlu0 %9195
  %9197 = vrot.lane.b32.xlu0 %v7655, 48
  %v9198 = vpop.permute.xlu0 %9197
  %9199 = vrot.lane.b32.xlu0 %v7657, 48
  %v9200 = vpop.permute.xlu0 %9199
  %9201 = vrot.lane.b32.xlu0 %v7658, 48
  %v9202 = vpop.permute.xlu0 %9201
  %9203 = vrot.lane.b32.xlu0 %v7660, 48
  %v9204 = vpop.permute.xlu0 %9203
  %9205 = vrot.lane.b32.xlu0 %v7661, 48
  %v9206 = vpop.permute.xlu0 %9205
  %9207 = vrot.lane.b32.xlu0 %v7663, 48
  %v9208 = vpop.permute.xlu0 %9207
  %9209 = vrot.lane.b32.xlu0 %v7664, 48
  %v9210 = vpop.permute.xlu0 %9209
  %9211 = vrot.lane.b32.xlu0 %v7666, 48
  %v9212 = vpop.permute.xlu0 %9211
  %9213 = vrot.lane.b32.xlu0 %v7667, 48
  %v9214 = vpop.permute.xlu0 %9213
  %9215 = vrot.lane.b32.xlu0 %v7669, 48
  %v9216 = vpop.permute.xlu0 %9215
  %9217 = vrot.lane.b32.xlu0 %v7670, 48
  %v9218 = vpop.permute.xlu0 %9217
  %9219 = vrot.lane.b32.xlu0 %v7672, 48
  %v9220 = vpop.permute.xlu0 %9219
  %9221 = vrot.lane.b32.xlu0 %v7673, 48
  %v9222 = vpop.permute.xlu0 %9221
  %9223 = vrot.lane.b32.xlu0 %v7675, 48
  %v9224 = vpop.permute.xlu0 %9223
  %9225 = vrot.lane.b32.xlu0 %v7676, 48
  %v9226 = vpop.permute.xlu0 %9225
  %9227 = vrot.lane.b32.xlu0 %v7678, 48
  %v9228 = vpop.permute.xlu0 %9227
  %9229 = vrot.lane.b32.xlu0 %v7679, 48
  %v9230 = vpop.permute.xlu0 %9229
  %9231 = vrot.lane.b32.xlu0 %v7681, 48
  %v9232 = vpop.permute.xlu0 %9231
  %9233 = vrot.lane.b32.xlu0 %v7682, 48
  %v9234 = vpop.permute.xlu0 %9233
  %9235 = vrot.lane.b32.xlu0 %v7684, 48
  %v9236 = vpop.permute.xlu0 %9235
  %9237 = vrot.lane.b32.xlu0 %v7685, 48
  %v9238 = vpop.permute.xlu0 %9237
  %9239 = vrot.lane.b32.xlu0 %v7687, 48
  %v9240 = vpop.permute.xlu0 %9239
  %9241 = vrot.lane.b32.xlu0 %v7688, 48
  %v9242 = vpop.permute.xlu0 %9241
  %9243 = vrot.lane.b32.xlu0 %v7690, 48
  %v9244 = vpop.permute.xlu0 %9243
  %9245 = vrot.lane.b32.xlu0 %v7691, 48
  %v9246 = vpop.permute.xlu0 %9245
  %9247 = vrot.lane.b32.xlu0 %v7693, 48
  %v9248 = vpop.permute.xlu0 %9247
  %9249 = vrot.lane.b32.xlu0 %v7694, 48
  %v9250 = vpop.permute.xlu0 %9249
  %9251 = vrot.lane.b32.xlu0 %v7696, 48
  %v9252 = vpop.permute.xlu0 %9251
  %9253 = vrot.lane.b32.xlu0 %v7697, 48
  %v9254 = vpop.permute.xlu0 %9253
  %9319 = vrot.lane.b32.xlu0 %v7807, 56
  %v9320 = vpop.permute.xlu0 %9319
  %9321 = vrot.lane.b32.xlu0 %v7809, 56
  %v9322 = vpop.permute.xlu0 %9321
  %9323 = vrot.lane.b32.xlu0 %v7812, 56
  %v9324 = vpop.permute.xlu0 %9323
  %9325 = vrot.lane.b32.xlu0 %v7814, 56
  %v9326 = vpop.permute.xlu0 %9325
  %9327 = vrot.lane.b32.xlu0 %v7817, 56
  %v9328 = vpop.permute.xlu0 %9327
  %9329 = vrot.lane.b32.xlu0 %v7819, 56
  %v9330 = vpop.permute.xlu0 %9329
  %9331 = vrot.lane.b32.xlu0 %v7822, 56
  %v9332 = vpop.permute.xlu0 %9331
  %9333 = vrot.lane.b32.xlu0 %v7824, 56
  %v9334 = vpop.permute.xlu0 %9333
  %9335 = vrot.lane.b32.xlu0 %v7827, 56
  %v9336 = vpop.permute.xlu0 %9335
  %9337 = vrot.lane.b32.xlu0 %v7829, 56
  %v9338 = vpop.permute.xlu0 %9337
  %9339 = vrot.lane.b32.xlu0 %v7832, 56
  %v9340 = vpop.permute.xlu0 %9339
  %9341 = vrot.lane.b32.xlu0 %v7834, 56
  %v9342 = vpop.permute.xlu0 %9341
  %9343 = vrot.lane.b32.xlu0 %v7837, 56
  %v9344 = vpop.permute.xlu0 %9343
  %9345 = vrot.lane.b32.xlu0 %v7839, 56
  %v9346 = vpop.permute.xlu0 %9345
  %9347 = vrot.lane.b32.xlu0 %v7842, 56
  %v9348 = vpop.permute.xlu0 %9347
  %9349 = vrot.lane.b32.xlu0 %v7844, 56
  %v9350 = vpop.permute.xlu0 %9349
  %9351 = vrot.lane.b32.xlu0 %v7847, 56
  %v9352 = vpop.permute.xlu0 %9351
  %9353 = vrot.lane.b32.xlu0 %v7849, 56
  %v9354 = vpop.permute.xlu0 %9353
  %9355 = vrot.lane.b32.xlu0 %v7852, 56
  %v9356 = vpop.permute.xlu0 %9355
  %9357 = vrot.lane.b32.xlu0 %v7854, 56
  %v9358 = vpop.permute.xlu0 %9357
  %9359 = vrot.lane.b32.xlu0 %v7857, 56
  %v9360 = vpop.permute.xlu0 %9359
  %9361 = vrot.lane.b32.xlu0 %v7859, 56
  %v9362 = vpop.permute.xlu0 %9361
  %9363 = vrot.lane.b32.xlu0 %v7862, 56
  %v9364 = vpop.permute.xlu0 %9363
  %9365 = vrot.lane.b32.xlu0 %v7864, 56
  %v9366 = vpop.permute.xlu0 %9365
  %9367 = vrot.lane.b32.xlu0 %v7867, 56
  %v9368 = vpop.permute.xlu0 %9367
  %9369 = vrot.lane.b32.xlu0 %v7869, 56
  %v9370 = vpop.permute.xlu0 %9369
  %9371 = vrot.lane.b32.xlu0 %v7872, 56
  %v9372 = vpop.permute.xlu0 %9371
  %9373 = vrot.lane.b32.xlu0 %v7874, 56
  %v9374 = vpop.permute.xlu0 %9373
  %9375 = vrot.lane.b32.xlu0 %v8123, 56
  %v9376 = vpop.permute.xlu0 %9375
  %9377 = vrot.lane.b32.xlu0 %v8125, 56
  %v9378 = vpop.permute.xlu0 %9377
  %9379 = vrot.lane.b32.xlu0 %v8149, 56
  %v9380 = vpop.permute.xlu0 %9379
  %9381 = vrot.lane.b32.xlu0 %v8151, 56
  %v9382 = vpop.permute.xlu0 %9381
  %9383 = vrot.lane.b32.xlu0 %v7887, 56
  %v9384 = vpop.permute.xlu0 %9383
  %9385 = vrot.lane.b32.xlu0 %v7889, 56
  %v9386 = vpop.permute.xlu0 %9385
  %9387 = vrot.lane.b32.xlu0 %v7892, 56
  %v9388 = vpop.permute.xlu0 %9387
  %9389 = vrot.lane.b32.xlu0 %v7894, 56
  %v9390 = vpop.permute.xlu0 %9389
  %9391 = vrot.lane.b32.xlu0 %v7897, 56
  %v9392 = vpop.permute.xlu0 %9391
  %9393 = vrot.lane.b32.xlu0 %v7899, 56
  %v9394 = vpop.permute.xlu0 %9393
  %9395 = vrot.lane.b32.xlu0 %v7902, 56
  %v9396 = vpop.permute.xlu0 %9395
  %9397 = vrot.lane.b32.xlu0 %v7904, 56
  %v9398 = vpop.permute.xlu0 %9397
  %9399 = vrot.lane.b32.xlu0 %v7907, 56
  %v9400 = vpop.permute.xlu0 %9399
  %9401 = vrot.lane.b32.xlu0 %v7909, 56
  %v9402 = vpop.permute.xlu0 %9401
  %9403 = vrot.lane.b32.xlu0 %v7912, 56
  %v9404 = vpop.permute.xlu0 %9403
  %9405 = vrot.lane.b32.xlu0 %v7914, 56
  %v9406 = vpop.permute.xlu0 %9405
  %9407 = vrot.lane.b32.xlu0 %v7917, 56
  %v9408 = vpop.permute.xlu0 %9407
  %9409 = vrot.lane.b32.xlu0 %v7919, 56
  %v9410 = vpop.permute.xlu0 %9409
  %9411 = vrot.lane.b32.xlu0 %v7922, 56
  %v9412 = vpop.permute.xlu0 %9411
  %9413 = vrot.lane.b32.xlu0 %v7924, 56
  %v9414 = vpop.permute.xlu0 %9413
  %9415 = vrot.lane.b32.xlu0 %v7927, 56
  %v9416 = vpop.permute.xlu0 %9415
  %9417 = vrot.lane.b32.xlu0 %v7929, 56
  %v9418 = vpop.permute.xlu0 %9417
  %9419 = vrot.lane.b32.xlu0 %v7932, 56
  %v9420 = vpop.permute.xlu0 %9419
  %9421 = vrot.lane.b32.xlu0 %v7934, 56
  %v9422 = vpop.permute.xlu0 %9421
  %9423 = vrot.lane.b32.xlu0 %v7937, 56
  %v9424 = vpop.permute.xlu0 %9423
  %9425 = vrot.lane.b32.xlu0 %v7939, 56
  %v9426 = vpop.permute.xlu0 %9425
  %9427 = vrot.lane.b32.xlu0 %v7942, 56
  %v9428 = vpop.permute.xlu0 %9427
  %9429 = vrot.lane.b32.xlu0 %v7944, 56
  %v9430 = vpop.permute.xlu0 %9429
  %9431 = vrot.lane.b32.xlu0 %v7947, 56
  %v9432 = vpop.permute.xlu0 %9431
  %9433 = vrot.lane.b32.xlu0 %v7949, 56
  %v9434 = vpop.permute.xlu0 %9433
  %9435 = vrot.lane.b32.xlu0 %v7952, 56
  %v9436 = vpop.permute.xlu0 %9435
  %9437 = vrot.lane.b32.xlu0 %v7954, 56
  %v9438 = vpop.permute.xlu0 %9437
  %9439 = vrot.lane.b32.xlu0 %v8128, 56
  %v9440 = vpop.permute.xlu0 %9439
  %9441 = vrot.lane.b32.xlu0 %v8130, 56
  %v9442 = vpop.permute.xlu0 %9441
  %9443 = vrot.lane.b32.xlu0 %v8154, 56
  %v9444 = vpop.permute.xlu0 %9443
  %9445 = vrot.lane.b32.xlu0 %v8156, 56
  %v9446 = vpop.permute.xlu0 %9445
  %9511 = vrot.lane.b32.xlu0 %v7967, 64
  %v9512 = vpop.permute.xlu0 %9511
  %9513 = vrot.lane.b32.xlu0 %v7969, 64
  %v9514 = vpop.permute.xlu0 %9513
  %9515 = vrot.lane.b32.xlu0 %v7972, 64
  %v9516 = vpop.permute.xlu0 %9515
  %9517 = vrot.lane.b32.xlu0 %v7974, 64
  %v9518 = vpop.permute.xlu0 %9517
  %9519 = vrot.lane.b32.xlu0 %v7977, 64
  %v9520 = vpop.permute.xlu0 %9519
  %9521 = vrot.lane.b32.xlu0 %v7979, 64
  %v9522 = vpop.permute.xlu0 %9521
  %9523 = vrot.lane.b32.xlu0 %v7982, 64
  %v9524 = vpop.permute.xlu0 %9523
  %9525 = vrot.lane.b32.xlu0 %v7984, 64
  %v9526 = vpop.permute.xlu0 %9525
  %9527 = vrot.lane.b32.xlu0 %v7987, 64
  %v9528 = vpop.permute.xlu0 %9527
  %9529 = vrot.lane.b32.xlu0 %v7989, 64
  %v9530 = vpop.permute.xlu0 %9529
  %9531 = vrot.lane.b32.xlu0 %v7992, 64
  %v9532 = vpop.permute.xlu0 %9531
  %9533 = vrot.lane.b32.xlu0 %v7994, 64
  %v9534 = vpop.permute.xlu0 %9533
  %9535 = vrot.lane.b32.xlu0 %v7997, 64
  %v9536 = vpop.permute.xlu0 %9535
  %9537 = vrot.lane.b32.xlu0 %v7999, 64
  %v9538 = vpop.permute.xlu0 %9537
  %9539 = vrot.lane.b32.xlu0 %v8002, 64
  %v9540 = vpop.permute.xlu0 %9539
  %9541 = vrot.lane.b32.xlu0 %v8004, 64
  %v9542 = vpop.permute.xlu0 %9541
  %9543 = vrot.lane.b32.xlu0 %v8007, 64
  %v9544 = vpop.permute.xlu0 %9543
  %9545 = vrot.lane.b32.xlu0 %v8009, 64
  %v9546 = vpop.permute.xlu0 %9545
  %9547 = vrot.lane.b32.xlu0 %v8012, 64
  %v9548 = vpop.permute.xlu0 %9547
  %9549 = vrot.lane.b32.xlu0 %v8014, 64
  %v9550 = vpop.permute.xlu0 %9549
  %9551 = vrot.lane.b32.xlu0 %v8017, 64
  %v9552 = vpop.permute.xlu0 %9551
  %9553 = vrot.lane.b32.xlu0 %v8019, 64
  %v9554 = vpop.permute.xlu0 %9553
  %9555 = vrot.lane.b32.xlu0 %v8022, 64
  %v9556 = vpop.permute.xlu0 %9555
  %9557 = vrot.lane.b32.xlu0 %v8024, 64
  %v9558 = vpop.permute.xlu0 %9557
  %9559 = vrot.lane.b32.xlu0 %v8027, 64
  %v9560 = vpop.permute.xlu0 %9559
  %9561 = vrot.lane.b32.xlu0 %v8029, 64
  %v9562 = vpop.permute.xlu0 %9561
  %9563 = vrot.lane.b32.xlu0 %v8032, 64
  %v9564 = vpop.permute.xlu0 %9563
  %9565 = vrot.lane.b32.xlu0 %v8034, 64
  %v9566 = vpop.permute.xlu0 %9565
  %9567 = vrot.lane.b32.xlu0 %v8133, 64
  %v9568 = vpop.permute.xlu0 %9567
  %9569 = vrot.lane.b32.xlu0 %v8135, 64
  %v9570 = vpop.permute.xlu0 %9569
  %9571 = vrot.lane.b32.xlu0 %v8159, 64
  %v9572 = vpop.permute.xlu0 %9571
  %9573 = vrot.lane.b32.xlu0 %v8161, 64
  %v9574 = vpop.permute.xlu0 %9573
  %9575 = vrot.lane.b32.xlu0 %v8047, 64
  %v9576 = vpop.permute.xlu0 %9575
  %9577 = vrot.lane.b32.xlu0 %v8049, 64
  %v9578 = vpop.permute.xlu0 %9577
  %9579 = vrot.lane.b32.xlu0 %v8052, 64
  %v9580 = vpop.permute.xlu0 %9579
  %9581 = vrot.lane.b32.xlu0 %v8054, 64
  %v9582 = vpop.permute.xlu0 %9581
  %9583 = vrot.lane.b32.xlu0 %v8057, 64
  %v9584 = vpop.permute.xlu0 %9583
  %9585 = vrot.lane.b32.xlu0 %v8059, 64
  %v9586 = vpop.permute.xlu0 %9585
  %9587 = vrot.lane.b32.xlu0 %v8062, 64
  %v9588 = vpop.permute.xlu0 %9587
  %9589 = vrot.lane.b32.xlu0 %v8064, 64
  %v9590 = vpop.permute.xlu0 %9589
  %9591 = vrot.lane.b32.xlu0 %v8067, 64
  %v9592 = vpop.permute.xlu0 %9591
  %9593 = vrot.lane.b32.xlu0 %v8069, 64
  %v9594 = vpop.permute.xlu0 %9593
  %9595 = vrot.lane.b32.xlu0 %v8072, 64
  %v9596 = vpop.permute.xlu0 %9595
  %9597 = vrot.lane.b32.xlu0 %v8074, 64
  %v9598 = vpop.permute.xlu0 %9597
  %9599 = vrot.lane.b32.xlu0 %v8077, 64
  %v9600 = vpop.permute.xlu0 %9599
  %9601 = vrot.lane.b32.xlu0 %v8079, 64
  %v9602 = vpop.permute.xlu0 %9601
  %9603 = vrot.lane.b32.xlu0 %v8082, 64
  %v9604 = vpop.permute.xlu0 %9603
  %9605 = vrot.lane.b32.xlu0 %v8084, 64
  %v9606 = vpop.permute.xlu0 %9605
  %9607 = vrot.lane.b32.xlu0 %v8087, 64
  %v9608 = vpop.permute.xlu0 %9607
  %9609 = vrot.lane.b32.xlu0 %v8089, 64
  %v9610 = vpop.permute.xlu0 %9609
  %9611 = vrot.lane.b32.xlu0 %v8092, 64
  %v9612 = vpop.permute.xlu0 %9611
  %9613 = vrot.lane.b32.xlu0 %v8094, 64
  %v9614 = vpop.permute.xlu0 %9613
  %9615 = vrot.lane.b32.xlu0 %v8097, 64
  %v9616 = vpop.permute.xlu0 %9615
  %9617 = vrot.lane.b32.xlu0 %v8099, 64
  %v9618 = vpop.permute.xlu0 %9617
  %9619 = vrot.lane.b32.xlu0 %v8102, 64
  %v9620 = vpop.permute.xlu0 %9619
  %9621 = vrot.lane.b32.xlu0 %v8104, 64
  %v9622 = vpop.permute.xlu0 %9621
  %9623 = vrot.lane.b32.xlu0 %v8107, 64
  %v9624 = vpop.permute.xlu0 %9623
  %9625 = vrot.lane.b32.xlu0 %v8109, 64
  %v9626 = vpop.permute.xlu0 %9625
  %9627 = vrot.lane.b32.xlu0 %v8112, 64
  %v9628 = vpop.permute.xlu0 %9627
  %9629 = vrot.lane.b32.xlu0 %v8114, 64
  %v9630 = vpop.permute.xlu0 %9629
  %9631 = vrot.lane.b32.xlu0 %v8138, 64
  %v9632 = vpop.permute.xlu0 %9631
  %9633 = vrot.lane.b32.xlu0 %v8140, 64
  %v9634 = vpop.permute.xlu0 %9633
  %9635 = vrot.lane.b32.xlu0 %v8164, 64
  %v9636 = vpop.permute.xlu0 %9635
  %9637 = vrot.lane.b32.xlu0 %v8166, 64
  %v9638 = vpop.permute.xlu0 %9637
  %v9703 = vsel %vm32, %v7591, %v8168
  %v9704 = vsel %vm32, %v7592, %v8170
  %v9705 = vsel %vm32, %v7594, %v8172
  %v9706 = vsel %vm32, %v7595, %v8174
  %v9707 = vsel %vm32, %v7597, %v8176
  %v9708 = vsel %vm32, %v7598, %v8178
  %v9709 = vsel %vm32, %v7600, %v8180
  %v9710 = vsel %vm32, %v7601, %v8182
  %v9711 = vsel %vm32, %v7603, %v8184
  %v9712 = vsel %vm32, %v7604, %v8186
  %v9713 = vsel %vm32, %v7606, %v8188
  %v9714 = vsel %vm32, %v7607, %v8190
  %v9715 = vsel %vm32, %v7609, %v8192
  %v9716 = vsel %vm32, %v7610, %v8194
  %v9717 = vsel %vm32, %v7612, %v8196
  %v9718 = vsel %vm32, %v7613, %v8198
  %v9719 = vsel %vm32, %v7615, %v8200
  %v9720 = vsel %vm32, %v7616, %v8202
  %v9721 = vsel %vm32, %v7618, %v8204
  %v9722 = vsel %vm32, %v7619, %v8206
  %v9723 = vsel %vm32, %v7621, %v8208
  %v9724 = vsel %vm32, %v7622, %v8210
  %v9725 = vsel %vm32, %v7624, %v8212
  %v9726 = vsel %vm32, %v7625, %v8214
  %v9727 = vsel %vm32, %v7627, %v8216
  %v9728 = vsel %vm32, %v7628, %v8218
  %v9729 = vsel %vm32, %v7630, %v8220
  %v9730 = vsel %vm32, %v7631, %v8222
  %v9731 = vsel %vm32, %v7633, %v8224
  %v9732 = vsel %vm32, %v7634, %v8226
  %v9733 = vsel %vm32, %v7636, %v8228
  %v9734 = vsel %vm32, %v7637, %v8230
  %v9735 = vsel %vm32, %v7645, %v8232
  %v9736 = vsel %vm32, %v7646, %v8234
  %v9737 = vsel %vm32, %v7648, %v8236
  %v9738 = vsel %vm32, %v7649, %v8238
  %v9739 = vsel %vm32, %v7651, %v8240
  %v9740 = vsel %vm32, %v7652, %v8242
  %v9741 = vsel %vm32, %v7654, %v8244
  %v9742 = vsel %vm32, %v7655, %v8246
  %v9743 = vsel %vm32, %v7657, %v8248
  %v9744 = vsel %vm32, %v7658, %v8250
  %v9745 = vsel %vm32, %v7660, %v8252
  %v9746 = vsel %vm32, %v7661, %v8254
  %v9747 = vsel %vm32, %v7663, %v8256
  %v9748 = vsel %vm32, %v7664, %v8258
  %v9749 = vsel %vm32, %v7666, %v8260
  %v9750 = vsel %vm32, %v7667, %v8262
  %v9751 = vsel %vm32, %v7669, %v8264
  %v9752 = vsel %vm32, %v7670, %v8266
  %v9753 = vsel %vm32, %v7672, %v8268
  %v9754 = vsel %vm32, %v7673, %v8270
  %v9755 = vsel %vm32, %v7675, %v8272
  %v9756 = vsel %vm32, %v7676, %v8274
  %v9757 = vsel %vm32, %v7678, %v8276
  %v9758 = vsel %vm32, %v7679, %v8278
  %v9759 = vsel %vm32, %v7681, %v8280
  %v9760 = vsel %vm32, %v7682, %v8282
  %v9761 = vsel %vm32, %v7684, %v8284
  %v9762 = vsel %vm32, %v7685, %v8286
  %v9763 = vsel %vm32, %v7687, %v8288
  %v9764 = vsel %vm32, %v7688, %v8290
  %v9765 = vsel %vm32, %v7690, %v8292
  %v9766 = vsel %vm32, %v7691, %v8294
  %vm9767 = vcmask 130048
  %v9768 = vsel %vm9767, %v9703, %v8360
  %v9769 = vsel %vm9767, %v9704, %v8362
  %v9770 = vsel %vm9767, %v9705, %v8364
  %v9771 = vsel %vm9767, %v9706, %v8366
  %v9772 = vsel %vm9767, %v9707, %v8368
  %v9773 = vsel %vm9767, %v9708, %v8370
  %v9774 = vsel %vm9767, %v9709, %v8372
  %v9775 = vsel %vm9767, %v9710, %v8374
  %v9776 = vsel %vm9767, %v9711, %v8376
  %v9777 = vsel %vm9767, %v9712, %v8378
  %v9778 = vsel %vm9767, %v9713, %v8380
  %v9779 = vsel %vm9767, %v9714, %v8382
  %v9780 = vsel %vm9767, %v9715, %v8384
  %v9781 = vsel %vm9767, %v9716, %v8386
  %v9782 = vsel %vm9767, %v9717, %v8388
  %v9783 = vsel %vm9767, %v9718, %v8390
  %v9784 = vsel %vm9767, %v9719, %v8392
  %v9785 = vsel %vm9767, %v9720, %v8394
  %v9786 = vsel %vm9767, %v9721, %v8396
  %v9787 = vsel %vm9767, %v9722, %v8398
  %v9788 = vsel %vm9767, %v9723, %v8400
  %v9789 = vsel %vm9767, %v9724, %v8402
  %v9790 = vsel %vm9767, %v9725, %v8404
  %v9791 = vsel %vm9767, %v9726, %v8406
  %v9792 = vsel %vm9767, %v9727, %v8408
  %v9793 = vsel %vm9767, %v9728, %v8410
  %v9794 = vsel %vm9767, %v9729, %v8412
  %v9795 = vsel %vm9767, %v9730, %v8414
  %v9796 = vsel %vm9767, %v9731, %v8416
  %v9797 = vsel %vm9767, %v9732, %v8418
  %v9798 = vsel %vm9767, %v9733, %v8420
  %v9799 = vsel %vm9767, %v9734, %v8422
  %v9800 = vsel %vm9767, %v9735, %v8424
  %v9801 = vsel %vm9767, %v9736, %v8426
  %v9802 = vsel %vm9767, %v9737, %v8428
  %v9803 = vsel %vm9767, %v9738, %v8430
  %v9804 = vsel %vm9767, %v9739, %v8432
  %v9805 = vsel %vm9767, %v9740, %v8434
  %v9806 = vsel %vm9767, %v9741, %v8436
  %v9807 = vsel %vm9767, %v9742, %v8438
  %v9808 = vsel %vm9767, %v9743, %v8440
  %v9809 = vsel %vm9767, %v9744, %v8442
  %v9810 = vsel %vm9767, %v9745, %v8444
  %v9811 = vsel %vm9767, %v9746, %v8446
  %v9812 = vsel %vm9767, %v9747, %v8448
  %v9813 = vsel %vm9767, %v9748, %v8450
  %v9814 = vsel %vm9767, %v9749, %v8452
  %v9815 = vsel %vm9767, %v9750, %v8454
  %v9816 = vsel %vm9767, %v9751, %v8456
  %v9817 = vsel %vm9767, %v9752, %v8458
  %v9818 = vsel %vm9767, %v9753, %v8460
  %v9819 = vsel %vm9767, %v9754, %v8462
  %v9820 = vsel %vm9767, %v9755, %v8464
  %v9821 = vsel %vm9767, %v9756, %v8466
  %v9822 = vsel %vm9767, %v9757, %v8468
  %v9823 = vsel %vm9767, %v9758, %v8470
  %v9824 = vsel %vm9767, %v9759, %v8472
  %v9825 = vsel %vm9767, %v9760, %v8474
  %v9826 = vsel %vm9767, %v9761, %v8476
  %v9827 = vsel %vm9767, %v9762, %v8478
  %v9828 = vsel %vm9767, %v9763, %v8480
  %v9829 = vsel %vm9767, %v9764, %v8482
  %v9830 = vsel %vm9767, %v9765, %v8484
  %v9831 = vsel %vm9767, %v9766, %v8486
  %v9832 = vsel %vm2711, %v9768, %v8552
  %v9833 = vsel %vm2711, %v9769, %v8554
  %v9834 = vsel %vm2711, %v9770, %v8556
  %v9835 = vsel %vm2711, %v9771, %v8558
  %v9836 = vsel %vm2711, %v9772, %v8560
  %v9837 = vsel %vm2711, %v9773, %v8562
  %v9838 = vsel %vm2711, %v9774, %v8564
  %v9839 = vsel %vm2711, %v9775, %v8566
  %v9840 = vsel %vm2711, %v9776, %v8568
  %v9841 = vsel %vm2711, %v9777, %v8570
  %v9842 = vsel %vm2711, %v9778, %v8572
  %v9843 = vsel %vm2711, %v9779, %v8574
  %v9844 = vsel %vm2711, %v9780, %v8576
  %v9845 = vsel %vm2711, %v9781, %v8578
  %v9846 = vsel %vm2711, %v9782, %v8580
  %v9847 = vsel %vm2711, %v9783, %v8582
  %v9848 = vsel %vm2711, %v9784, %v8584
  %v9849 = vsel %vm2711, %v9785, %v8586
  %v9850 = vsel %vm2711, %v9786, %v8588
  %v9851 = vsel %vm2711, %v9787, %v8590
  %v9852 = vsel %vm2711, %v9788, %v8592
  %v9853 = vsel %vm2711, %v9789, %v8594
  %v9854 = vsel %vm2711, %v9790, %v8596
  %v9855 = vsel %vm2711, %v9791, %v8598
  %v9856 = vsel %vm2711, %v9792, %v8600
  %v9857 = vsel %vm2711, %v9793, %v8602
  %v9858 = vsel %vm2711, %v9794, %v8604
  %v9859 = vsel %vm2711, %v9795, %v8606
  %v9860 = vsel %vm2711, %v9796, %v8608
  %v9861 = vsel %vm2711, %v9797, %v8610
  %v9862 = vsel %vm2711, %v9798, %v8612
  %v9863 = vsel %vm2711, %v9799, %v8614
  %v9864 = vsel %vm2711, %v9800, %v8616
  %v9865 = vsel %vm2711, %v9801, %v8618
  %v9866 = vsel %vm2711, %v9802, %v8620
  %v9867 = vsel %vm2711, %v9803, %v8622
  %v9868 = vsel %vm2711, %v9804, %v8624
  %v9869 = vsel %vm2711, %v9805, %v8626
  %v9870 = vsel %vm2711, %v9806, %v8628
  %v9871 = vsel %vm2711, %v9807, %v8630
  %v9872 = vsel %vm2711, %v9808, %v8632
  %v9873 = vsel %vm2711, %v9809, %v8634
  %v9874 = vsel %vm2711, %v9810, %v8636
  %v9875 = vsel %vm2711, %v9811, %v8638
  %v9876 = vsel %vm2711, %v9812, %v8640
  %v9877 = vsel %vm2711, %v9813, %v8642
  %v9878 = vsel %vm2711, %v9814, %v8644
  %v9879 = vsel %vm2711, %v9815, %v8646
  %v9880 = vsel %vm2711, %v9816, %v8648
  %v9881 = vsel %vm2711, %v9817, %v8650
  %v9882 = vsel %vm2711, %v9818, %v8652
  %v9883 = vsel %vm2711, %v9819, %v8654
  %v9884 = vsel %vm2711, %v9820, %v8656
  %v9885 = vsel %vm2711, %v9821, %v8658
  %v9886 = vsel %vm2711, %v9822, %v8660
  %v9887 = vsel %vm2711, %v9823, %v8662
  %v9888 = vsel %vm2711, %v9824, %v8664
  %v9889 = vsel %vm2711, %v9825, %v8666
  %v9890 = vsel %vm2711, %v9826, %v8668
  %v9891 = vsel %vm2711, %v9827, %v8670
  %v9892 = vsel %vm2711, %v9828, %v8672
  %v9893 = vsel %vm2711, %v9829, %v8674
  %v9894 = vsel %vm2711, %v9830, %v8676
  %v9895 = vsel %vm2711, %v9831, %v8678
  %vm9896 = vcmask 261120
  %v9897 = vsel %vm9896, %v9832, %v8744
  %v9898 = vsel %vm9896, %v9833, %v8746
  %v9899 = vsel %vm9896, %v9834, %v8748
  %v9900 = vsel %vm9896, %v9835, %v8750
  %v9901 = vsel %vm9896, %v9836, %v8752
  %v9902 = vsel %vm9896, %v9837, %v8754
  %v9903 = vsel %vm9896, %v9838, %v8756
  %v9904 = vsel %vm9896, %v9839, %v8758
  %v9905 = vsel %vm9896, %v9840, %v8760
  %v9906 = vsel %vm9896, %v9841, %v8762
  %v9907 = vsel %vm9896, %v9842, %v8764
  %v9908 = vsel %vm9896, %v9843, %v8766
  %v9909 = vsel %vm9896, %v9844, %v8768
  %v9910 = vsel %vm9896, %v9845, %v8770
  %v9911 = vsel %vm9896, %v9846, %v8772
  %v9912 = vsel %vm9896, %v9847, %v8774
  %v9913 = vsel %vm9896, %v9848, %v8776
  %v9914 = vsel %vm9896, %v9849, %v8778
  %v9915 = vsel %vm9896, %v9850, %v8780
  %v9916 = vsel %vm9896, %v9851, %v8782
  %v9917 = vsel %vm9896, %v9852, %v8784
  %v9918 = vsel %vm9896, %v9853, %v8786
  %v9919 = vsel %vm9896, %v9854, %v8788
  %v9920 = vsel %vm9896, %v9855, %v8790
  %v9921 = vsel %vm9896, %v9856, %v8792
  %v9922 = vsel %vm9896, %v9857, %v8794
  %v9923 = vsel %vm9896, %v9858, %v8796
  %v9924 = vsel %vm9896, %v9859, %v8798
  %v9925 = vsel %vm9896, %v9860, %v8800
  %v9926 = vsel %vm9896, %v9861, %v8802
  %v9927 = vsel %vm9896, %v9862, %v8804
  %v9928 = vsel %vm9896, %v9863, %v8806
  %v9929 = vsel %vm9896, %v9864, %v8808
  %v9930 = vsel %vm9896, %v9865, %v8810
  %v9931 = vsel %vm9896, %v9866, %v8812
  %v9932 = vsel %vm9896, %v9867, %v8814
  %v9933 = vsel %vm9896, %v9868, %v8816
  %v9934 = vsel %vm9896, %v9869, %v8818
  %v9935 = vsel %vm9896, %v9870, %v8820
  %v9936 = vsel %vm9896, %v9871, %v8822
  %v9937 = vsel %vm9896, %v9872, %v8824
  %v9938 = vsel %vm9896, %v9873, %v8826
  %v9939 = vsel %vm9896, %v9874, %v8828
  %v9940 = vsel %vm9896, %v9875, %v8830
  %v9941 = vsel %vm9896, %v9876, %v8832
  %v9942 = vsel %vm9896, %v9877, %v8834
  %v9943 = vsel %vm9896, %v9878, %v8836
  %v9944 = vsel %vm9896, %v9879, %v8838
  %v9945 = vsel %vm9896, %v9880, %v8840
  %v9946 = vsel %vm9896, %v9881, %v8842
  %v9947 = vsel %vm9896, %v9882, %v8844
  %v9948 = vsel %vm9896, %v9883, %v8846
  %v9949 = vsel %vm9896, %v9884, %v8848
  %v9950 = vsel %vm9896, %v9885, %v8850
  %v9951 = vsel %vm9896, %v9886, %v8852
  %v9952 = vsel %vm9896, %v9887, %v8854
  %v9953 = vsel %vm9896, %v9888, %v8856
  %v9954 = vsel %vm9896, %v9889, %v8858
  %v9955 = vsel %vm9896, %v9890, %v8860
  %v9956 = vsel %vm9896, %v9891, %v8862
  %v9957 = vsel %vm9896, %v9892, %v8864
  %v9958 = vsel %vm9896, %v9893, %v8866
  %v9959 = vsel %vm9896, %v9894, %v8868
  %v9960 = vsel %vm9896, %v9895, %v8870
  %vm9961 = vcmask 326656
  %v9962 = vsel %vm9961, %v9897, %v8936
  %v9963 = vsel %vm9961, %v9898, %v8938
  %v9964 = vsel %vm9961, %v9899, %v8940
  %v9965 = vsel %vm9961, %v9900, %v8942
  %v9966 = vsel %vm9961, %v9901, %v8944
  %v9967 = vsel %vm9961, %v9902, %v8946
  %v9968 = vsel %vm9961, %v9903, %v8948
  %v9969 = vsel %vm9961, %v9904, %v8950
  %v9970 = vsel %vm9961, %v9905, %v8952
  %v9971 = vsel %vm9961, %v9906, %v8954
  %v9972 = vsel %vm9961, %v9907, %v8956
  %v9973 = vsel %vm9961, %v9908, %v8958
  %v9974 = vsel %vm9961, %v9909, %v8960
  %v9975 = vsel %vm9961, %v9910, %v8962
  %v9976 = vsel %vm9961, %v9911, %v8964
  %v9977 = vsel %vm9961, %v9912, %v8966
  %v9978 = vsel %vm9961, %v9913, %v8968
  %v9979 = vsel %vm9961, %v9914, %v8970
  %v9980 = vsel %vm9961, %v9915, %v8972
  %v9981 = vsel %vm9961, %v9916, %v8974
  %v9982 = vsel %vm9961, %v9917, %v8976
  %v9983 = vsel %vm9961, %v9918, %v8978
  %v9984 = vsel %vm9961, %v9919, %v8980
  %v9985 = vsel %vm9961, %v9920, %v8982
  %v9986 = vsel %vm9961, %v9921, %v8984
  %v9987 = vsel %vm9961, %v9922, %v8986
  %v9988 = vsel %vm9961, %v9923, %v8988
  %v9989 = vsel %vm9961, %v9924, %v8990
  %v9990 = vsel %vm9961, %v9925, %v8992
  %v9991 = vsel %vm9961, %v9926, %v8994
  %v9992 = vsel %vm9961, %v9927, %v8996
  %v9993 = vsel %vm9961, %v9928, %v8998
  %v9994 = vsel %vm9961, %v9929, %v9000
  %v9995 = vsel %vm9961, %v9930, %v9002
  %v9996 = vsel %vm9961, %v9931, %v9004
  %v9997 = vsel %vm9961, %v9932, %v9006
  %v9998 = vsel %vm9961, %v9933, %v9008
  %v9999 = vsel %vm9961, %v9934, %v9010
  %v10000 = vsel %vm9961, %v9935, %v9012
  %v10001 = vsel %vm9961, %v9936, %v9014
  %v10002 = vsel %vm9961, %v9937, %v9016
  %v10003 = vsel %vm9961, %v9938, %v9018
  %v10004 = vsel %vm9961, %v9939, %v9020
  %v10005 = vsel %vm9961, %v9940, %v9022
  %v10006 = vsel %vm9961, %v9941, %v9024
  %v10007 = vsel %vm9961, %v9942, %v9026
  %v10008 = vsel %vm9961, %v9943, %v9028
  %v10009 = vsel %vm9961, %v9944, %v9030
  %v10010 = vsel %vm9961, %v9945, %v9032
  %v10011 = vsel %vm9961, %v9946, %v9034
  %v10012 = vsel %vm9961, %v9947, %v9036
  %v10013 = vsel %vm9961, %v9948, %v9038
  %v10014 = vsel %vm9961, %v9949, %v9040
  %v10015 = vsel %vm9961, %v9950, %v9042
  %v10016 = vsel %vm9961, %v9951, %v9044
  %v10017 = vsel %vm9961, %v9952, %v9046
  %v10018 = vsel %vm9961, %v9953, %v9048
  %v10019 = vsel %vm9961, %v9954, %v9050
  %v10020 = vsel %vm9961, %v9955, %v9052
  %v10021 = vsel %vm9961, %v9956, %v9054
  %v10022 = vsel %vm9961, %v9957, %v9056
  %v10023 = vsel %vm9961, %v9958, %v9058
  %v10024 = vsel %vm9961, %v9959, %v9060
  %v10025 = vsel %vm9961, %v9960, %v9062
  %vm10026 = vcmask 392192
  %v10027 = vsel %vm10026, %v9962, %v9128
  %v10028 = vsel %vm10026, %v9963, %v9130
  %v10029 = vsel %vm10026, %v9964, %v9132
  %v10030 = vsel %vm10026, %v9965, %v9134
  %v10031 = vsel %vm10026, %v9966, %v9136
  %v10032 = vsel %vm10026, %v9967, %v9138
  %v10033 = vsel %vm10026, %v9968, %v9140
  %v10034 = vsel %vm10026, %v9969, %v9142
  %v10035 = vsel %vm10026, %v9970, %v9144
  %v10036 = vsel %vm10026, %v9971, %v9146
  %v10037 = vsel %vm10026, %v9972, %v9148
  %v10038 = vsel %vm10026, %v9973, %v9150
  %v10039 = vsel %vm10026, %v9974, %v9152
  %v10040 = vsel %vm10026, %v9975, %v9154
  %v10041 = vsel %vm10026, %v9976, %v9156
  %v10042 = vsel %vm10026, %v9977, %v9158
  %v10043 = vsel %vm10026, %v9978, %v9160
  %v10044 = vsel %vm10026, %v9979, %v9162
  %v10045 = vsel %vm10026, %v9980, %v9164
  %v10046 = vsel %vm10026, %v9981, %v9166
  %v10047 = vsel %vm10026, %v9982, %v9168
  %v10048 = vsel %vm10026, %v9983, %v9170
  %v10049 = vsel %vm10026, %v9984, %v9172
  %v10050 = vsel %vm10026, %v9985, %v9174
  %v10051 = vsel %vm10026, %v9986, %v9176
  %v10052 = vsel %vm10026, %v9987, %v9178
  %v10053 = vsel %vm10026, %v9988, %v9180
  %v10054 = vsel %vm10026, %v9989, %v9182
  %v10055 = vsel %vm10026, %v9990, %v9184
  %v10056 = vsel %vm10026, %v9991, %v9186
  %v10057 = vsel %vm10026, %v9992, %v9188
  %v10058 = vsel %vm10026, %v9993, %v9190
  %v10059 = vsel %vm10026, %v9994, %v9192
  %v10060 = vsel %vm10026, %v9995, %v9194
  %v10061 = vsel %vm10026, %v9996, %v9196
  %v10062 = vsel %vm10026, %v9997, %v9198
  %v10063 = vsel %vm10026, %v9998, %v9200
  %v10064 = vsel %vm10026, %v9999, %v9202
  %v10065 = vsel %vm10026, %v10000, %v9204
  %v10066 = vsel %vm10026, %v10001, %v9206
  %v10067 = vsel %vm10026, %v10002, %v9208
  %v10068 = vsel %vm10026, %v10003, %v9210
  %v10069 = vsel %vm10026, %v10004, %v9212
  %v10070 = vsel %vm10026, %v10005, %v9214
  %v10071 = vsel %vm10026, %v10006, %v9216
  %v10072 = vsel %vm10026, %v10007, %v9218
  %v10073 = vsel %vm10026, %v10008, %v9220
  %v10074 = vsel %vm10026, %v10009, %v9222
  %v10075 = vsel %vm10026, %v10010, %v9224
  %v10076 = vsel %vm10026, %v10011, %v9226
  %v10077 = vsel %vm10026, %v10012, %v9228
  %v10078 = vsel %vm10026, %v10013, %v9230
  %v10079 = vsel %vm10026, %v10014, %v9232
  %v10080 = vsel %vm10026, %v10015, %v9234
  %v10081 = vsel %vm10026, %v10016, %v9236
  %v10082 = vsel %vm10026, %v10017, %v9238
  %v10083 = vsel %vm10026, %v10018, %v9240
  %v10084 = vsel %vm10026, %v10019, %v9242
  %v10085 = vsel %vm10026, %v10020, %v9244
  %v10086 = vsel %vm10026, %v10021, %v9246
  %v10087 = vsel %vm10026, %v10022, %v9248
  %v10088 = vsel %vm10026, %v10023, %v9250
  %v10089 = vsel %vm10026, %v10024, %v9252
  %v10090 = vsel %vm10026, %v10025, %v9254
  %vm10091 = vcmask 457728
  %v10092 = vsel %vm10091, %v10027, %v9320
  %v10093 = vsel %vm10091, %v10028, %v9322
  %v10094 = vsel %vm10091, %v10029, %v9324
  %v10095 = vsel %vm10091, %v10030, %v9326
  %v10096 = vsel %vm10091, %v10031, %v9328
  %v10097 = vsel %vm10091, %v10032, %v9330
  %v10098 = vsel %vm10091, %v10033, %v9332
  %v10099 = vsel %vm10091, %v10034, %v9334
  %v10100 = vsel %vm10091, %v10035, %v9336
  %v10101 = vsel %vm10091, %v10036, %v9338
  %v10102 = vsel %vm10091, %v10037, %v9340
  %v10103 = vsel %vm10091, %v10038, %v9342
  %v10104 = vsel %vm10091, %v10039, %v9344
  %v10105 = vsel %vm10091, %v10040, %v9346
  %v10106 = vsel %vm10091, %v10041, %v9348
  %v10107 = vsel %vm10091, %v10042, %v9350
  %v10108 = vsel %vm10091, %v10043, %v9352
  %v10109 = vsel %vm10091, %v10044, %v9354
  %v10110 = vsel %vm10091, %v10045, %v9356
  %v10111 = vsel %vm10091, %v10046, %v9358
  %v10112 = vsel %vm10091, %v10047, %v9360
  %v10113 = vsel %vm10091, %v10048, %v9362
  %v10114 = vsel %vm10091, %v10049, %v9364
  %v10115 = vsel %vm10091, %v10050, %v9366
  %v10116 = vsel %vm10091, %v10051, %v9368
  %v10117 = vsel %vm10091, %v10052, %v9370
  %v10118 = vsel %vm10091, %v10053, %v9372
  %v10119 = vsel %vm10091, %v10054, %v9374
  %v10120 = vsel %vm10091, %v10055, %v9376
  %v10121 = vsel %vm10091, %v10056, %v9378
  %v10122 = vsel %vm10091, %v10057, %v9380
  %v10123 = vsel %vm10091, %v10058, %v9382
  %v10124 = vsel %vm10091, %v10059, %v9384
  %v10125 = vsel %vm10091, %v10060, %v9386
  %v10126 = vsel %vm10091, %v10061, %v9388
  %v10127 = vsel %vm10091, %v10062, %v9390
  %v10128 = vsel %vm10091, %v10063, %v9392
  %v10129 = vsel %vm10091, %v10064, %v9394
  %v10130 = vsel %vm10091, %v10065, %v9396
  %v10131 = vsel %vm10091, %v10066, %v9398
  %v10132 = vsel %vm10091, %v10067, %v9400
  %v10133 = vsel %vm10091, %v10068, %v9402
  %v10134 = vsel %vm10091, %v10069, %v9404
  %v10135 = vsel %vm10091, %v10070, %v9406
  %v10136 = vsel %vm10091, %v10071, %v9408
  %v10137 = vsel %vm10091, %v10072, %v9410
  %v10138 = vsel %vm10091, %v10073, %v9412
  %v10139 = vsel %vm10091, %v10074, %v9414
  %v10140 = vsel %vm10091, %v10075, %v9416
  %v10141 = vsel %vm10091, %v10076, %v9418
  %v10142 = vsel %vm10091, %v10077, %v9420
  %v10143 = vsel %vm10091, %v10078, %v9422
  %v10144 = vsel %vm10091, %v10079, %v9424
  %v10145 = vsel %vm10091, %v10080, %v9426
  %v10146 = vsel %vm10091, %v10081, %v9428
  %v10147 = vsel %vm10091, %v10082, %v9430
  %v10148 = vsel %vm10091, %v10083, %v9432
  %v10149 = vsel %vm10091, %v10084, %v9434
  %v10150 = vsel %vm10091, %v10085, %v9436
  %v10151 = vsel %vm10091, %v10086, %v9438
  %v10152 = vsel %vm10091, %v10087, %v9440
  %v10153 = vsel %vm10091, %v10088, %v9442
  %v10154 = vsel %vm10091, %v10089, %v9444
  %v10155 = vsel %vm10091, %v10090, %v9446
  %vm10156 = vcmask 523264
  %v10157 = vsel %vm10156, %v10092, %v9512
  %v10158 = vsel %vm10156, %v10093, %v9514
  %v10159 = vsel %vm10156, %v10094, %v9516
  %v10160 = vsel %vm10156, %v10095, %v9518
  %v10161 = vsel %vm10156, %v10096, %v9520
  %v10162 = vsel %vm10156, %v10097, %v9522
  %v10163 = vsel %vm10156, %v10098, %v9524
  %v10164 = vsel %vm10156, %v10099, %v9526
  %v10165 = vsel %vm10156, %v10100, %v9528
  %v10166 = vsel %vm10156, %v10101, %v9530
  %v10167 = vsel %vm10156, %v10102, %v9532
  %v10168 = vsel %vm10156, %v10103, %v9534
  %v10169 = vsel %vm10156, %v10104, %v9536
  %v10170 = vsel %vm10156, %v10105, %v9538
  %v10171 = vsel %vm10156, %v10106, %v9540
  %v10172 = vsel %vm10156, %v10107, %v9542
  %v10173 = vsel %vm10156, %v10108, %v9544
  %v10174 = vsel %vm10156, %v10109, %v9546
  %v10175 = vsel %vm10156, %v10110, %v9548
  %v10176 = vsel %vm10156, %v10111, %v9550
  %v10177 = vsel %vm10156, %v10112, %v9552
  %v10178 = vsel %vm10156, %v10113, %v9554
  %v10179 = vsel %vm10156, %v10114, %v9556
  %v10180 = vsel %vm10156, %v10115, %v9558
  %v10181 = vsel %vm10156, %v10116, %v9560
  %v10182 = vsel %vm10156, %v10117, %v9562
  %v10183 = vsel %vm10156, %v10118, %v9564
  %v10184 = vsel %vm10156, %v10119, %v9566
  %v10185 = vsel %vm10156, %v10120, %v9568
  %v10186 = vsel %vm10156, %v10121, %v9570
  %v10187 = vsel %vm10156, %v10122, %v9572
  %v10188 = vsel %vm10156, %v10123, %v9574
  %v10189 = vsel %vm10156, %v10124, %v9576
  %v10190 = vsel %vm10156, %v10125, %v9578
  %v10191 = vsel %vm10156, %v10126, %v9580
  %v10192 = vsel %vm10156, %v10127, %v9582
  %v10193 = vsel %vm10156, %v10128, %v9584
  %v10194 = vsel %vm10156, %v10129, %v9586
  %v10195 = vsel %vm10156, %v10130, %v9588
  %v10196 = vsel %vm10156, %v10131, %v9590
  %v10197 = vsel %vm10156, %v10132, %v9592
  %v10198 = vsel %vm10156, %v10133, %v9594
  %v10199 = vsel %vm10156, %v10134, %v9596
  %v10200 = vsel %vm10156, %v10135, %v9598
  %v10201 = vsel %vm10156, %v10136, %v9600
  %v10202 = vsel %vm10156, %v10137, %v9602
  %v10203 = vsel %vm10156, %v10138, %v9604
  %v10204 = vsel %vm10156, %v10139, %v9606
  %v10205 = vsel %vm10156, %v10140, %v9608
  %v10206 = vsel %vm10156, %v10141, %v9610
  %v10207 = vsel %vm10156, %v10142, %v9612
  %v10208 = vsel %vm10156, %v10143, %v9614
  %v10209 = vsel %vm10156, %v10144, %v9616
  %v10210 = vsel %vm10156, %v10145, %v9618
  %v10211 = vsel %vm10156, %v10146, %v9620
  %v10212 = vsel %vm10156, %v10147, %v9622
  %v10213 = vsel %vm10156, %v10148, %v9624
  %v10214 = vsel %vm10156, %v10149, %v9626
  %v10215 = vsel %vm10156, %v10150, %v9628
  %v10216 = vsel %vm10156, %v10151, %v9630
  %v10217 = vsel %vm10156, %v10152, %v9632
  %v10218 = vsel %vm10156, %v10153, %v9634
  %v10219 = vsel %vm10156, %v10154, %v9636
  %v10220 = vsel %vm10156, %v10155, %v9638
  %v10221 = vld [vmem:[%s7] sm:$0xff]
  %v10222 = vld [vmem:[%s7 + $0x8] sm:$0xff]
  %v10223 = vld [vmem:[%s7 + $0x10] sm:$0xff]
  %v10224 = vld [vmem:[%s7 + $0x18] sm:$0xff]
  %v10225 = vld [vmem:[%s7 + $0x20] sm:$0xff]
  %v10226 = vld [vmem:[%s7 + $0x28] sm:$0xff]
  %v10227 = vld [vmem:[%s7 + $0x30] sm:$0xff]
  %v10228 = vld [vmem:[%s7 + $0x38] sm:$0xff]
  %v10229 = vld [vmem:[%s7 + $0x40] sm:$0xff]
  %v10230 = vld [vmem:[%s8] sm:$0x1]
  %v10232 = vlaneseq
  %v10233 = vshrl.u32 %v10232, 7
  %v10234 = vsub.s32 0, %v10233
  %v10235 = vrot.slane %v10230, %v10234
  %vm10237 = vcmask 588800
  %v10239 = vsel %vm10237, %v10157, 0
  %v10242 = vsel %vm10237, %v10158, 0
  %v10245 = vsel %vm10237, %v10159, 0
  %v10248 = vsel %vm10237, %v10160, 0
  %v10251 = vsel %vm10237, %v10161, 0
  %v10254 = vsel %vm10237, %v10162, 0
  %v10257 = vsel %vm10237, %v10163, 0
  %v10260 = vsel %vm10237, %v10164, 0
  %v10263 = vsel %vm10237, %v10165, 0
  %v10266 = vsel %vm10237, %v10166, 0
  %v10269 = vsel %vm10237, %v10167, 0
  %v10272 = vsel %vm10237, %v10168, 0
  %v10275 = vsel %vm10237, %v10169, 0
  %v10278 = vsel %vm10237, %v10170, 0
  %v10281 = vsel %vm10237, %v10171, 0
  %v10284 = vsel %vm10237, %v10172, 0
  %v10287 = vsel %vm10237, %v10173, 0
  %v10290 = vsel %vm10237, %v10174, 0
  %v10293 = vsel %vm10237, %v10175, 0
  %v10296 = vsel %vm10237, %v10176, 0
  %v10299 = vsel %vm10237, %v10177, 0
  %v10302 = vsel %vm10237, %v10178, 0
  %v10305 = vsel %vm10237, %v10179, 0
  %v10308 = vsel %vm10237, %v10180, 0
  %v10311 = vsel %vm10237, %v10181, 0
  %v10314 = vsel %vm10237, %v10182, 0
  %v10317 = vsel %vm10237, %v10183, 0
  %v10320 = vsel %vm10237, %v10184, 0
  %v10323 = vsel %vm10237, %v10185, 0
  %v10326 = vsel %vm10237, %v10186, 0
  %v10329 = vsel %vm10237, %v10187, 0
  %v10332 = vsel %vm10237, %v10188, 0
  %v10335 = vsel %vm10237, %v10189, 0
  %v10338 = vsel %vm10237, %v10190, 0
  %v10341 = vsel %vm10237, %v10191, 0
  %v10344 = vsel %vm10237, %v10192, 0
  %v10347 = vsel %vm10237, %v10193, 0
  %v10350 = vsel %vm10237, %v10194, 0
  %v10353 = vsel %vm10237, %v10195, 0
  %v10356 = vsel %vm10237, %v10196, 0
  %v10359 = vsel %vm10237, %v10197, 0
  %v10362 = vsel %vm10237, %v10198, 0
  %v10365 = vsel %vm10237, %v10199, 0
  %v10368 = vsel %vm10237, %v10200, 0
  %v10371 = vsel %vm10237, %v10201, 0
  %v10374 = vsel %vm10237, %v10202, 0
  %v10377 = vsel %vm10237, %v10203, 0
  %v10380 = vsel %vm10237, %v10204, 0
  %v10383 = vsel %vm10237, %v10205, 0
  %v10386 = vsel %vm10237, %v10206, 0
  %v10389 = vsel %vm10237, %v10207, 0
  %v10392 = vsel %vm10237, %v10208, 0
  %v10395 = vsel %vm10237, %v10209, 0
  %v10398 = vsel %vm10237, %v10210, 0
  %v10401 = vsel %vm10237, %v10211, 0
  %v10404 = vsel %vm10237, %v10212, 0
  %v10407 = vsel %vm10237, %v10213, 0
  %v10410 = vsel %vm10237, %v10214, 0
  %v10413 = vsel %vm10237, %v10215, 0
  %v10416 = vsel %vm10237, %v10216, 0
  %v10419 = vsel %vm10237, %v10217, 0
  %v10422 = vsel %vm10237, %v10218, 0
  %v10425 = vsel %vm10237, %v10219, 0
  %v10428 = vsel %vm10237, %v10220, 0
  %10430 = vmatprep.subr.mxu0 0.0
  %10431 = vmatpush1.msra.mxu0 %v10221
  %10432 = vmatprep.subr.mxu0 0.0
  %10433 = vmatpush1.msra.mxu0 %v10222
  %10434 = vmatprep.subr.mxu0 0.0
  %10435 = vmatpush1.msra.mxu0 %v10223
  %10436 = vmatprep.subr.mxu0 0.0
  %10437 = vmatpush1.msra.mxu0 %v10224
  %10438 = vmatprep.subr.mxu0 0.0
  %10439 = vmatpush1.msra.mxu0 %v10225
  %10440 = vmatprep.subr.mxu0 0.0
  %10441 = vmatpush1.msra.mxu0 %v10226
  %10442 = vmatprep.subr.mxu0 0.0
  %10443 = vmatpush1.msra.mxu0 %v10227
  %10444 = vmatprep.subr.mxu0 0.0
  %10445 = vmatpush1.msra.mxu0 %v10228
  %10446 = vmatprep.subr.mxu0 0.0
  %10447 = vmatpush1.msra.mxu0 %v10229
  %10448 = vmatprep.subr.mxu0 0.0
  %10449 = vmatpush1.msra.mxu0 0.0
  %10450 = vmatprep.subr.mxu0 0.0
  %10451 = vmatpush1.msra.mxu0 0.0
  %10452 = vmatprep.subr.mxu0 0.0
  %10453 = vmatpush1.msra.mxu0 0.0
  %10454 = vmatprep.subr.mxu0 0.0
  %10455 = vmatpush1.msra.mxu0 0.0
  %10456 = vmatprep.subr.mxu0 0.0
  %10457 = vmatpush1.msra.mxu0 0.0
  %10458 = vmatprep.subr.mxu0 0.0
  %10459 = vmatpush1.msra.mxu0 0.0
  %10460 = vmatprep.subr.mxu0 0.0
  %10461 = vmatpush1.msra.mxu0 0.0
  %10462 = vmatprep.subr.mxu0 0.0
  %10463 = vmatpush1.msra.mxu0 0.0
  %10464 = vmatprep.subr.mxu0 0.0
  %10465 = vmatpush1.msra.mxu0 0.0
  %10466 = vmatprep.subr.mxu0 0.0
  %10467 = vmatpush1.msra.mxu0 0.0
  %10468 = vmatprep.subr.mxu0 0.0
  %10469 = vmatpush1.msra.mxu0 0.0
  %10470 = vmatprep.subr.mxu0 0.0
  %10471 = vmatpush1.msra.mxu0 0.0
  %10472 = vmatprep.subr.mxu0 0.0
  %10473 = vmatpush1.msra.mxu0 0.0
  %10474 = vmatprep.subr.mxu0 0.0
  %10475 = vmatpush1.msra.mxu0 0.0
  %10476 = vmatprep.subr.mxu0 0.0
  %10477 = vmatpush1.msra.mxu0 0.0
  %10478 = vmatprep.subr.mxu0 0.0
  %10479 = vmatpush1.msra.mxu0 0.0
  %10480 = vmatprep.subr.mxu0 0.0
  %10481 = vmatpush1.msra.mxu0 0.0
  %10482 = vmatprep.subr.mxu0 0.0
  %10483 = vmatpush1.msra.mxu0 0.0
  %10484 = vmatprep.subr.mxu0 0.0
  %10485 = vmatpush1.msra.mxu0 0.0
  %10486 = vmatprep.subr.mxu0 0.0
  %10487 = vmatpush1.msra.mxu0 0.0
  %10488 = vmatprep.subr.mxu0 0.0
  %10489 = vmatpush1.msra.mxu0 0.0
  %10490 = vmatprep.subr.mxu0 0.0
  %10491 = vmatpush1.msra.mxu0 0.0
  %10492 = vmatprep.subr.mxu0 0.0
  %10493 = vmatpush1.msra.mxu0 0.0
  %10494 = vmatprep.mubr.f32.mxu0 0.0
  %10495 = vmatmul.mubr.f32.gmra.mrb[0].mxu0 %v10239
  %v10496 = vpop.f32.mrb[0].mxu0
  %v10497 = vadd.f32 %v10235, %v10496
  %v10498 = vpop.f32.mrb[0].mxu0
  %10499 = vmatprep.mubr.f32.mxu0 0.0
  %10500 = vmatmul.mubr.f32.gmra.mrb[0].mxu0 %v10242
  %v10501 = vpop.f32.mrb[0].mxu0
  %v10502 = vadd.f32 %v10235, %v10501
  %v10503 = vpop.f32.mrb[0].mxu0
  %10504 = vmatprep.mubr.f32.mxu0 0.0
  %10505 = vmatmul.mubr.f32.gmra.mrb[0].mxu0 %v10245
  %v10506 = vpop.f32.mrb[0].mxu0
  %v10507 = vadd.f32 %v10235, %v10506
  %v10508 = vpop.f32.mrb[0].mxu0
  %10509 = vmatprep.mubr.f32.mxu0 0.0
  %10510 = vmatmul.mubr.f32.gmra.mrb[0].mxu0 %v10248
  %v10511 = vpop.f32.mrb[0].mxu0
  %v10512 = vadd.f32 %v10235, %v10511
  %v10513 = vpop.f32.mrb[0].mxu0
  %10514 = vmatprep.mubr.f32.mxu0 0.0
  %10515 = vmatmul.mubr.f32.gmra.mrb[0].mxu0 %v10251
  %v10516 = vpop.f32.mrb[0].mxu0
  %v10517 = vadd.f32 %v10235, %v10516
  %v10518 = vpop.f32.mrb[0].mxu0
  %10519 = vmatprep.mubr.f32.mxu0 0.0
  %10520 = vmatmul.mubr.f32.gmra.mrb[0].mxu0 %v10254
  %v10521 = vpop.f32.mrb[0].mxu0
  %v10522 = vadd.f32 %v10235, %v10521
  %v10523 = vpop.f32.mrb[0].mxu0
  %10524 = vmatprep.mubr.f32.mxu0 0.0
  %10525 = vmatmul.mubr.f32.gmra.mrb[0].mxu0 %v10257
  %v10526 = vpop.f32.mrb[0].mxu0
  %v10527 = vadd.f32 %v10235, %v10526
  %v10528 = vpop.f32.mrb[0].mxu0
  %10529 = vmatprep.mubr.f32.mxu0 0.0
  %10530 = vmatmul.mubr.f32.gmra.mrb[0].mxu0 %v10260
  %v10531 = vpop.f32.mrb[0].mxu0
  %v10532 = vadd.f32 %v10235, %v10531
  %v10533 = vpop.f32.mrb[0].mxu0
  %10534 = vmatprep.mubr.f32.mxu0 0.0
  %10535 = vmatmul.mubr.f32.gmra.mrb[0].mxu0 %v10263
  %v10536 = vpop.f32.mrb[0].mxu0
  %v10537 = vadd.f32 %v10235, %v10536
  %v10538 = vpop.f32.mrb[0].mxu0
  %10539 = vmatprep.mubr.f32.mxu0 0.0
  %10540 = vmatmul.mubr.f32.gmra.mrb[0].mxu0 %v10266
  %v10541 = vpop.f32.mrb[0].mxu0
  %v10542 = vadd.f32 %v10235, %v10541
  %v10543 = vpop.f32.mrb[0].mxu0
  %10544 = vmatprep.mubr.f32.mxu0 0.0
  %10545 = vmatmul.mubr.f32.gmra.mrb[0].mxu0 %v10269
  %v10546 = vpop.f32.mrb[0].mxu0
  %v10547 = vadd.f32 %v10235, %v10546
  %v10548 = vpop.f32.mrb[0].mxu0
  %10549 = vmatprep.mubr.f32.mxu0 0.0
  %10550 = vmatmul.mubr.f32.gmra.mrb[0].mxu0 %v10272
  %v10551 = vpop.f32.mrb[0].mxu0
  %v10552 = vadd.f32 %v10235, %v10551
  %v10553 = vpop.f32.mrb[0].mxu0
  %10554 = vmatprep.mubr.f32.mxu0 0.0
  %10555 = vmatmul.mubr.f32.gmra.mrb[0].mxu0 %v10275
  %v10556 = vpop.f32.mrb[0].mxu0
  %v10557 = vadd.f32 %v10235, %v10556
  %v10558 = vpop.f32.mrb[0].mxu0
  %10559 = vmatprep.mubr.f32.mxu0 0.0
  %10560 = vmatmul.mubr.f32.gmra.mrb[0].mxu0 %v10278
  %v10561 = vpop.f32.mrb[0].mxu0
  %v10562 = vadd.f32 %v10235, %v10561
  %v10563 = vpop.f32.mrb[0].mxu0
  %10564 = vmatprep.mubr.f32.mxu0 0.0
  %10565 = vmatmul.mubr.f32.gmra.mrb[0].mxu0 %v10281
  %v10566 = vpop.f32.mrb[0].mxu0
  %v10567 = vadd.f32 %v10235, %v10566
  %v10568 = vpop.f32.mrb[0].mxu0
  %10569 = vmatprep.mubr.f32.mxu0 0.0
  %10570 = vmatmul.mubr.f32.gmra.mrb[0].mxu0 %v10284
  %v10571 = vpop.f32.mrb[0].mxu0
  %v10572 = vadd.f32 %v10235, %v10571
  %v10573 = vpop.f32.mrb[0].mxu0
  %10574 = vmatprep.mubr.f32.mxu0 0.0
  %10575 = vmatmul.mubr.f32.gmra.mrb[0].mxu0 %v10287
  %v10576 = vpop.f32.mrb[0].mxu0
  %v10577 = vadd.f32 %v10235, %v10576
  %v10578 = vpop.f32.mrb[0].mxu0
  %10579 = vmatprep.mubr.f32.mxu0 0.0
  %10580 = vmatmul.mubr.f32.gmra.mrb[0].mxu0 %v10290
  %v10581 = vpop.f32.mrb[0].mxu0
  %v10582 = vadd.f32 %v10235, %v10581
  %v10583 = vpop.f32.mrb[0].mxu0
  %10584 = vmatprep.mubr.f32.mxu0 0.0
  %10585 = vmatmul.mubr.f32.gmra.mrb[0].mxu0 %v10293
  %v10586 = vpop.f32.mrb[0].mxu0
  %v10587 = vadd.f32 %v10235, %v10586
  %v10588 = vpop.f32.mrb[0].mxu0
  %10589 = vmatprep.mubr.f32.mxu0 0.0
  %10590 = vmatmul.mubr.f32.gmra.mrb[0].mxu0 %v10296
  %v10591 = vpop.f32.mrb[0].mxu0
  %v10592 = vadd.f32 %v10235, %v10591
  %v10593 = vpop.f32.mrb[0].mxu0
  %10594 = vmatprep.mubr.f32.mxu0 0.0
  %10595 = vmatmul.mubr.f32.gmra.mrb[0].mxu0 %v10299
  %v10596 = vpop.f32.mrb[0].mxu0
  %v10597 = vadd.f32 %v10235, %v10596
  %v10598 = vpop.f32.mrb[0].mxu0
  %10599 = vmatprep.mubr.f32.mxu0 0.0
  %10600 = vmatmul.mubr.f32.gmra.mrb[0].mxu0 %v10302
  %v10601 = vpop.f32.mrb[0].mxu0
  %v10602 = vadd.f32 %v10235, %v10601
  %v10603 = vpop.f32.mrb[0].mxu0
  %10604 = vmatprep.mubr.f32.mxu0 0.0
  %10605 = vmatmul.mubr.f32.gmra.mrb[0].mxu0 %v10305
  %v10606 = vpop.f32.mrb[0].mxu0
  %v10607 = vadd.f32 %v10235, %v10606
  %v10608 = vpop.f32.mrb[0].mxu0
  %10609 = vmatprep.mubr.f32.mxu0 0.0
  %10610 = vmatmul.mubr.f32.gmra.mrb[0].mxu0 %v10308
  %v10611 = vpop.f32.mrb[0].mxu0
  %v10612 = vadd.f32 %v10235, %v10611
  %v10613 = vpop.f32.mrb[0].mxu0
  %10614 = vmatprep.mubr.f32.mxu0 0.0
  %10615 = vmatmul.mubr.f32.gmra.mrb[0].mxu0 %v10311
  %v10616 = vpop.f32.mrb[0].mxu0
  %v10617 = vadd.f32 %v10235, %v10616
  %v10618 = vpop.f32.mrb[0].mxu0
  %10619 = vmatprep.mubr.f32.mxu0 0.0
  %10620 = vmatmul.mubr.f32.gmra.mrb[0].mxu0 %v10314
  %v10621 = vpop.f32.mrb[0].mxu0
  %v10622 = vadd.f32 %v10235, %v10621
  %v10623 = vpop.f32.mrb[0].mxu0
  %10624 = vmatprep.mubr.f32.mxu0 0.0
  %10625 = vmatmul.mubr.f32.gmra.mrb[0].mxu0 %v10317
  %v10626 = vpop.f32.mrb[0].mxu0
  %v10627 = vadd.f32 %v10235, %v10626
  %v10628 = vpop.f32.mrb[0].mxu0
  %10629 = vmatprep.mubr.f32.mxu0 0.0
  %10630 = vmatmul.mubr.f32.gmra.mrb[0].mxu0 %v10320
  %v10631 = vpop.f32.mrb[0].mxu0
  %v10632 = vadd.f32 %v10235, %v10631
  %v10633 = vpop.f32.mrb[0].mxu0
  %10634 = vmatprep.mubr.f32.mxu0 0.0
  %10635 = vmatmul.mubr.f32.gmra.mrb[0].mxu0 %v10323
  %v10636 = vpop.f32.mrb[0].mxu0
  %v10637 = vadd.f32 %v10235, %v10636
  %v10638 = vpop.f32.mrb[0].mxu0
  %10639 = vmatprep.mubr.f32.mxu0 0.0
  %10640 = vmatmul.mubr.f32.gmra.mrb[0].mxu0 %v10326
  %v10641 = vpop.f32.mrb[0].mxu0
  %v10642 = vadd.f32 %v10235, %v10641
  %v10643 = vpop.f32.mrb[0].mxu0
  %10644 = vmatprep.mubr.f32.mxu0 0.0
  %10645 = vmatmul.mubr.f32.gmra.mrb[0].mxu0 %v10329
  %v10646 = vpop.f32.mrb[0].mxu0
  %v10647 = vadd.f32 %v10235, %v10646
  %v10648 = vpop.f32.mrb[0].mxu0
  %10649 = vmatprep.mubr.f32.mxu0 0.0
  %10650 = vmatmul.mubr.f32.gmra.mrb[0].mxu0 %v10332
  %v10651 = vpop.f32.mrb[0].mxu0
  %v10652 = vadd.f32 %v10235, %v10651
  %v10653 = vpop.f32.mrb[0].mxu0
  %10654 = vmatprep.mubr.f32.mxu0 0.0
  %10655 = vmatmul.mubr.f32.gmra.mrb[0].mxu0 %v10335
  %v10656 = vpop.f32.mrb[0].mxu0
  %v10657 = vadd.f32 %v10235, %v10656
  %v10658 = vpop.f32.mrb[0].mxu0
  %10659 = vmatprep.mubr.f32.mxu0 0.0
  %10660 = vmatmul.mubr.f32.gmra.mrb[0].mxu0 %v10338
  %v10661 = vpop.f32.mrb[0].mxu0
  %v10662 = vadd.f32 %v10235, %v10661
  %v10663 = vpop.f32.mrb[0].mxu0
  %10664 = vmatprep.mubr.f32.mxu0 0.0
  %10665 = vmatmul.mubr.f32.gmra.mrb[0].mxu0 %v10341
  %v10666 = vpop.f32.mrb[0].mxu0
  %v10667 = vadd.f32 %v10235, %v10666
  %v10668 = vpop.f32.mrb[0].mxu0
  %10669 = vmatprep.mubr.f32.mxu0 0.0
  %10670 = vmatmul.mubr.f32.gmra.mrb[0].mxu0 %v10344
  %v10671 = vpop.f32.mrb[0].mxu0
  %v10672 = vadd.f32 %v10235, %v10671
  %v10673 = vpop.f32.mrb[0].mxu0
  %10674 = vmatprep.mubr.f32.mxu0 0.0
  %10675 = vmatmul.mubr.f32.gmra.mrb[0].mxu0 %v10347
  %v10676 = vpop.f32.mrb[0].mxu0
  %v10677 = vadd.f32 %v10235, %v10676
  %v10678 = vpop.f32.mrb[0].mxu0
  %10679 = vmatprep.mubr.f32.mxu0 0.0
  %10680 = vmatmul.mubr.f32.gmra.mrb[0].mxu0 %v10350
  %v10681 = vpop.f32.mrb[0].mxu0
  %v10682 = vadd.f32 %v10235, %v10681
  %v10683 = vpop.f32.mrb[0].mxu0
  %10684 = vmatprep.mubr.f32.mxu0 0.0
  %10685 = vmatmul.mubr.f32.gmra.mrb[0].mxu0 %v10353
  %v10686 = vpop.f32.mrb[0].mxu0
  %v10687 = vadd.f32 %v10235, %v10686
  %v10688 = vpop.f32.mrb[0].mxu0
  %10689 = vmatprep.mubr.f32.mxu0 0.0
  %10690 = vmatmul.mubr.f32.gmra.mrb[0].mxu0 %v10356
  %v10691 = vpop.f32.mrb[0].mxu0
  %v10692 = vadd.f32 %v10235, %v10691
  %v10693 = vpop.f32.mrb[0].mxu0
  %10694 = vmatprep.mubr.f32.mxu0 0.0
  %10695 = vmatmul.mubr.f32.gmra.mrb[0].mxu0 %v10359
  %v10696 = vpop.f32.mrb[0].mxu0
  %v10697 = vadd.f32 %v10235, %v10696
  %v10698 = vpop.f32.mrb[0].mxu0
  %10699 = vmatprep.mubr.f32.mxu0 0.0
  %10700 = vmatmul.mubr.f32.gmra.mrb[0].mxu0 %v10362
  %v10701 = vpop.f32.mrb[0].mxu0
  %v10702 = vadd.f32 %v10235, %v10701
  %v10703 = vpop.f32.mrb[0].mxu0
  %10704 = vmatprep.mubr.f32.mxu0 0.0
  %10705 = vmatmul.mubr.f32.gmra.mrb[0].mxu0 %v10365
  %v10706 = vpop.f32.mrb[0].mxu0
  %v10707 = vadd.f32 %v10235, %v10706
  %v10708 = vpop.f32.mrb[0].mxu0
  %10709 = vmatprep.mubr.f32.mxu0 0.0
  %10710 = vmatmul.mubr.f32.gmra.mrb[0].mxu0 %v10368
  %v10711 = vpop.f32.mrb[0].mxu0
  %v10712 = vadd.f32 %v10235, %v10711
  %v10713 = vpop.f32.mrb[0].mxu0
  %10714 = vmatprep.mubr.f32.mxu0 0.0
  %10715 = vmatmul.mubr.f32.gmra.mrb[0].mxu0 %v10371
  %v10716 = vpop.f32.mrb[0].mxu0
  %v10717 = vadd.f32 %v10235, %v10716
  %v10718 = vpop.f32.mrb[0].mxu0
  %10719 = vmatprep.mubr.f32.mxu0 0.0
  %10720 = vmatmul.mubr.f32.gmra.mrb[0].mxu0 %v10374
  %v10721 = vpop.f32.mrb[0].mxu0
  %v10722 = vadd.f32 %v10235, %v10721
  %v10723 = vpop.f32.mrb[0].mxu0
  %10724 = vmatprep.mubr.f32.mxu0 0.0
  %10725 = vmatmul.mubr.f32.gmra.mrb[0].mxu0 %v10377
  %v10726 = vpop.f32.mrb[0].mxu0
  %v10727 = vadd.f32 %v10235, %v10726
  %v10728 = vpop.f32.mrb[0].mxu0
  %10729 = vmatprep.mubr.f32.mxu0 0.0
  %10730 = vmatmul.mubr.f32.gmra.mrb[0].mxu0 %v10380
  %v10731 = vpop.f32.mrb[0].mxu0
  %v10732 = vadd.f32 %v10235, %v10731
  %v10733 = vpop.f32.mrb[0].mxu0
  %10734 = vmatprep.mubr.f32.mxu0 0.0
  %10735 = vmatmul.mubr.f32.gmra.mrb[0].mxu0 %v10383
  %v10736 = vpop.f32.mrb[0].mxu0
  %v10737 = vadd.f32 %v10235, %v10736
  %v10738 = vpop.f32.mrb[0].mxu0
  %10739 = vmatprep.mubr.f32.mxu0 0.0
  %10740 = vmatmul.mubr.f32.gmra.mrb[0].mxu0 %v10386
  %v10741 = vpop.f32.mrb[0].mxu0
  %v10742 = vadd.f32 %v10235, %v10741
  %v10743 = vpop.f32.mrb[0].mxu0
  %10744 = vmatprep.mubr.f32.mxu0 0.0
  %10745 = vmatmul.mubr.f32.gmra.mrb[0].mxu0 %v10389
  %v10746 = vpop.f32.mrb[0].mxu0
  %v10747 = vadd.f32 %v10235, %v10746
  %v10748 = vpop.f32.mrb[0].mxu0
  %10749 = vmatprep.mubr.f32.mxu0 0.0
  %10750 = vmatmul.mubr.f32.gmra.mrb[0].mxu0 %v10392
  %v10751 = vpop.f32.mrb[0].mxu0
  %v10752 = vadd.f32 %v10235, %v10751
  %v10753 = vpop.f32.mrb[0].mxu0
  %10754 = vmatprep.mubr.f32.mxu0 0.0
  %10755 = vmatmul.mubr.f32.gmra.mrb[0].mxu0 %v10395
  %v10756 = vpop.f32.mrb[0].mxu0
  %v10757 = vadd.f32 %v10235, %v10756
  %v10758 = vpop.f32.mrb[0].mxu0
  %10759 = vmatprep.mubr.f32.mxu0 0.0
  %10760 = vmatmul.mubr.f32.gmra.mrb[0].mxu0 %v10398
  %v10761 = vpop.f32.mrb[0].mxu0
  %v10762 = vadd.f32 %v10235, %v10761
  %v10763 = vpop.f32.mrb[0].mxu0
  %10764 = vmatprep.mubr.f32.mxu0 0.0
  %10765 = vmatmul.mubr.f32.gmra.mrb[0].mxu0 %v10401
  %v10766 = vpop.f32.mrb[0].mxu0
  %v10767 = vadd.f32 %v10235, %v10766
  %v10768 = vpop.f32.mrb[0].mxu0
  %10769 = vmatprep.mubr.f32.mxu0 0.0
  %10770 = vmatmul.mubr.f32.gmra.mrb[0].mxu0 %v10404
  %v10771 = vpop.f32.mrb[0].mxu0
  %v10772 = vadd.f32 %v10235, %v10771
  %v10773 = vpop.f32.mrb[0].mxu0
  %10774 = vmatprep.mubr.f32.mxu0 0.0
  %10775 = vmatmul.mubr.f32.gmra.mrb[0].mxu0 %v10407
  %v10776 = vpop.f32.mrb[0].mxu0
  %v10777 = vadd.f32 %v10235, %v10776
  %v10778 = vpop.f32.mrb[0].mxu0
  %10779 = vmatprep.mubr.f32.mxu0 0.0
  %10780 = vmatmul.mubr.f32.gmra.mrb[0].mxu0 %v10410
  %v10781 = vpop.f32.mrb[0].mxu0
  %v10782 = vadd.f32 %v10235, %v10781
  %v10783 = vpop.f32.mrb[0].mxu0
  %10784 = vmatprep.mubr.f32.mxu0 0.0
  %10785 = vmatmul.mubr.f32.gmra.mrb[0].mxu0 %v10413
  %v10786 = vpop.f32.mrb[0].mxu0
  %v10787 = vadd.f32 %v10235, %v10786
  %v10788 = vpop.f32.mrb[0].mxu0
  %10789 = vmatprep.mubr.f32.mxu0 0.0
  %10790 = vmatmul.mubr.f32.gmra.mrb[0].mxu0 %v10416
  %v10791 = vpop.f32.mrb[0].mxu0
  %v10792 = vadd.f32 %v10235, %v10791
  %v10793 = vpop.f32.mrb[0].mxu0
  %10794 = vmatprep.mubr.f32.mxu0 0.0
  %10795 = vmatmul.mubr.f32.gmra.mrb[0].mxu0 %v10419
  %v10796 = vpop.f32.mrb[0].mxu0
  %v10797 = vadd.f32 %v10235, %v10796
  %v10798 = vpop.f32.mrb[0].mxu0
  %10799 = vmatprep.mubr.f32.mxu0 0.0
  %10800 = vmatmul.mubr.f32.gmra.mrb[0].mxu0 %v10422
  %v10801 = vpop.f32.mrb[0].mxu0
  %v10802 = vadd.f32 %v10235, %v10801
  %v10803 = vpop.f32.mrb[0].mxu0
  %10804 = vmatprep.mubr.f32.mxu0 0.0
  %10805 = vmatmul.mubr.f32.gmra.mrb[0].mxu0 %v10425
  %v10806 = vpop.f32.mrb[0].mxu0
  %v10807 = vadd.f32 %v10235, %v10806
  %v10808 = vpop.f32.mrb[0].mxu0
  %10809 = vmatprep.mubr.f32.mxu0 0.0
  %10810 = vmatmul.mubr.f32.gmra.mrb[0].mxu0 %v10428
  %v10811 = vpop.f32.mrb[0].mxu0
  %v10812 = vadd.f32 %v10235, %v10811
  %v10813 = vpop.f32.mrb[0].mxu0
  %10814 = vdwg.mxu0
  %v10815 = vxor.u32 %v10497, 2147483648
  %v10816 = vxor.u32 %v10502, 2147483648
  %v10817 = vxor.u32 %v10507, 2147483648
  %v10818 = vxor.u32 %v10512, 2147483648
  %v10819 = vxor.u32 %v10517, 2147483648
  %v10820 = vxor.u32 %v10522, 2147483648
  %v10821 = vxor.u32 %v10527, 2147483648
  %v10822 = vxor.u32 %v10532, 2147483648
  %v10823 = vxor.u32 %v10537, 2147483648
  %v10824 = vxor.u32 %v10542, 2147483648
  %v10825 = vxor.u32 %v10547, 2147483648
  %v10826 = vxor.u32 %v10552, 2147483648
  %v10827 = vxor.u32 %v10557, 2147483648
  %v10828 = vxor.u32 %v10562, 2147483648
  %v10829 = vxor.u32 %v10567, 2147483648
  %v10830 = vxor.u32 %v10572, 2147483648
  %v10831 = vxor.u32 %v10577, 2147483648
  %v10832 = vxor.u32 %v10582, 2147483648
  %v10833 = vxor.u32 %v10587, 2147483648
  %v10834 = vxor.u32 %v10592, 2147483648
  %v10835 = vxor.u32 %v10597, 2147483648
  %v10836 = vxor.u32 %v10602, 2147483648
  %v10837 = vxor.u32 %v10607, 2147483648
  %v10838 = vxor.u32 %v10612, 2147483648
  %v10839 = vxor.u32 %v10617, 2147483648
  %v10840 = vxor.u32 %v10622, 2147483648
  %v10841 = vxor.u32 %v10627, 2147483648
  %v10842 = vxor.u32 %v10632, 2147483648
  %v10843 = vxor.u32 %v10637, 2147483648
  %v10844 = vxor.u32 %v10642, 2147483648
  %v10845 = vxor.u32 %v10647, 2147483648
  %v10846 = vxor.u32 %v10652, 2147483648
  %v10847 = vxor.u32 %v10657, 2147483648
  %v10848 = vxor.u32 %v10662, 2147483648
  %v10849 = vxor.u32 %v10667, 2147483648
  %v10850 = vxor.u32 %v10672, 2147483648
  %v10851 = vxor.u32 %v10677, 2147483648
  %v10852 = vxor.u32 %v10682, 2147483648
  %v10853 = vxor.u32 %v10687, 2147483648
  %v10854 = vxor.u32 %v10692, 2147483648
  %v10855 = vxor.u32 %v10697, 2147483648
  %v10856 = vxor.u32 %v10702, 2147483648
  %v10857 = vxor.u32 %v10707, 2147483648
  %v10858 = vxor.u32 %v10712, 2147483648
  %v10859 = vxor.u32 %v10717, 2147483648
  %v10860 = vxor.u32 %v10722, 2147483648
  %v10861 = vxor.u32 %v10727, 2147483648
  %v10862 = vxor.u32 %v10732, 2147483648
  %v10863 = vxor.u32 %v10737, 2147483648
  %v10864 = vxor.u32 %v10742, 2147483648
  %v10865 = vxor.u32 %v10747, 2147483648
  %v10866 = vxor.u32 %v10752, 2147483648
  %v10867 = vxor.u32 %v10757, 2147483648
  %v10868 = vxor.u32 %v10762, 2147483648
  %v10869 = vxor.u32 %v10767, 2147483648
  %v10870 = vxor.u32 %v10772, 2147483648
  %v10871 = vxor.u32 %v10777, 2147483648
  %v10872 = vxor.u32 %v10782, 2147483648
  %v10873 = vxor.u32 %v10787, 2147483648
  %v10874 = vxor.u32 %v10792, 2147483648
  %v10875 = vxor.u32 %v10797, 2147483648
  %v10876 = vxor.u32 %v10802, 2147483648
  %v10877 = vxor.u32 %v10807, 2147483648
  %v10878 = vxor.u32 %v10812, 2147483648
  %v10879 = vmul.f32 %v10815, 1.442695
  %v10880 = vpow.pop %v10879
  %v10881 = vmul.f32 %v10816, 1.442695
  %v10882 = vpow.pop %v10881
  %v10883 = vmul.f32 %v10817, 1.442695
  %v10884 = vpow.pop %v10883
  %v10885 = vmul.f32 %v10818, 1.442695
  %v10886 = vpow.pop %v10885
  %v10887 = vmul.f32 %v10819, 1.442695
  %v10888 = vpow.pop %v10887
  %v10889 = vmul.f32 %v10820, 1.442695
  %v10890 = vpow.pop %v10889
  %v10891 = vmul.f32 %v10821, 1.442695
  %v10892 = vpow.pop %v10891
  %v10893 = vmul.f32 %v10822, 1.442695
  %v10894 = vpow.pop %v10893
  %v10895 = vmul.f32 %v10823, 1.442695
  %v10896 = vpow.pop %v10895
  %v10897 = vmul.f32 %v10824, 1.442695
  %v10898 = vpow.pop %v10897
  %v10899 = vmul.f32 %v10825, 1.442695
  %v10900 = vpow.pop %v10899
  %v10901 = vmul.f32 %v10826, 1.442695
  %v10902 = vpow.pop %v10901
  %v10903 = vmul.f32 %v10827, 1.442695
  %v10904 = vpow.pop %v10903
  %v10905 = vmul.f32 %v10828, 1.442695
  %v10906 = vpow.pop %v10905
  %v10907 = vmul.f32 %v10829, 1.442695
  %v10908 = vpow.pop %v10907
  %v10909 = vmul.f32 %v10830, 1.442695
  %v10910 = vpow.pop %v10909
  %v10911 = vmul.f32 %v10831, 1.442695
  %v10912 = vpow.pop %v10911
  %v10913 = vmul.f32 %v10832, 1.442695
  %v10914 = vpow.pop %v10913
  %v10915 = vmul.f32 %v10833, 1.442695
  %v10916 = vpow.pop %v10915
  %v10917 = vmul.f32 %v10834, 1.442695
  %v10918 = vpow.pop %v10917
  %v10919 = vmul.f32 %v10835, 1.442695
  %v10920 = vpow.pop %v10919
  %v10921 = vmul.f32 %v10836, 1.442695
  %v10922 = vpow.pop %v10921
  %v10923 = vmul.f32 %v10837, 1.442695
  %v10924 = vpow.pop %v10923
  %v10925 = vmul.f32 %v10838, 1.442695
  %v10926 = vpow.pop %v10925
  %v10927 = vmul.f32 %v10839, 1.442695
  %v10928 = vpow.pop %v10927
  %v10929 = vmul.f32 %v10840, 1.442695
  %v10930 = vpow.pop %v10929
  %v10931 = vmul.f32 %v10841, 1.442695
  %v10932 = vpow.pop %v10931
  %v10933 = vmul.f32 %v10842, 1.442695
  %v10934 = vpow.pop %v10933
  %v10935 = vmul.f32 %v10843, 1.442695
  %v10936 = vpow.pop %v10935
  %v10937 = vmul.f32 %v10844, 1.442695
  %v10938 = vpow.pop %v10937
  %v10939 = vmul.f32 %v10845, 1.442695
  %v10940 = vpow.pop %v10939
  %v10941 = vmul.f32 %v10846, 1.442695
  %v10942 = vpow.pop %v10941
  %v10943 = vmul.f32 %v10847, 1.442695
  %v10944 = vpow.pop %v10943
  %v10945 = vmul.f32 %v10848, 1.442695
  %v10946 = vpow.pop %v10945
  %v10947 = vmul.f32 %v10849, 1.442695
  %v10948 = vpow.pop %v10947
  %v10949 = vmul.f32 %v10850, 1.442695
  %v10950 = vpow.pop %v10949
  %v10951 = vmul.f32 %v10851, 1.442695
  %v10952 = vpow.pop %v10951
  %v10953 = vmul.f32 %v10852, 1.442695
  %v10954 = vpow.pop %v10953
  %v10955 = vmul.f32 %v10853, 1.442695
  %v10956 = vpow.pop %v10955
  %v10957 = vmul.f32 %v10854, 1.442695
  %v10958 = vpow.pop %v10957
  %v10959 = vmul.f32 %v10855, 1.442695
  %v10960 = vpow.pop %v10959
  %v10961 = vmul.f32 %v10856, 1.442695
  %v10962 = vpow.pop %v10961
  %v10963 = vmul.f32 %v10857, 1.442695
  %v10964 = vpow.pop %v10963
  %v10965 = vmul.f32 %v10858, 1.442695
  %v10966 = vpow.pop %v10965
  %v10967 = vmul.f32 %v10859, 1.442695
  %v10968 = vpow.pop %v10967
  %v10969 = vmul.f32 %v10860, 1.442695
  %v10970 = vpow.pop %v10969
  %v10971 = vmul.f32 %v10861, 1.442695
  %v10972 = vpow.pop %v10971
  %v10973 = vmul.f32 %v10862, 1.442695
  %v10974 = vpow.pop %v10973
  %v10975 = vmul.f32 %v10863, 1.442695
  %v10976 = vpow.pop %v10975
  %v10977 = vmul.f32 %v10864, 1.442695
  %v10978 = vpow.pop %v10977
  %v10979 = vmul.f32 %v10865, 1.442695
  %v10980 = vpow.pop %v10979
  %v10981 = vmul.f32 %v10866, 1.442695
  %v10982 = vpow.pop %v10981
  %v10983 = vmul.f32 %v10867, 1.442695
  %v10984 = vpow.pop %v10983
  %v10985 = vmul.f32 %v10868, 1.442695
  %v10986 = vpow.pop %v10985
  %v10987 = vmul.f32 %v10869, 1.442695
  %v10988 = vpow.pop %v10987
  %v10989 = vmul.f32 %v10870, 1.442695
  %v10990 = vpow.pop %v10989
  %v10991 = vmul.f32 %v10871, 1.442695
  %v10992 = vpow.pop %v10991
  %v10993 = vmul.f32 %v10872, 1.442695
  %v10994 = vpow.pop %v10993
  %v10995 = vmul.f32 %v10873, 1.442695
  %v10996 = vpow.pop %v10995
  %v10997 = vmul.f32 %v10874, 1.442695
  %v10998 = vpow.pop %v10997
  %v10999 = vmul.f32 %v10875, 1.442695
  %v11000 = vpow.pop %v10999
  %v11001 = vmul.f32 %v10876, 1.442695
  %v11002 = vpow.pop %v11001
  %v11003 = vmul.f32 %v10877, 1.442695
  %v11004 = vpow.pop %v11003
  %v11005 = vmul.f32 %v10878, 1.442695
  %v11006 = vpow.pop %v11005
  %v11007 = vadd.f32 %v10880, 1.0
  %v11008 = vadd.f32 %v10882, 1.0
  %v11009 = vadd.f32 %v10884, 1.0
  %v11010 = vadd.f32 %v10886, 1.0
  %v11011 = vadd.f32 %v10888, 1.0
  %v11012 = vadd.f32 %v10890, 1.0
  %v11013 = vadd.f32 %v10892, 1.0
  %v11014 = vadd.f32 %v10894, 1.0
  %v11015 = vadd.f32 %v10896, 1.0
  %v11016 = vadd.f32 %v10898, 1.0
  %v11017 = vadd.f32 %v10900, 1.0
  %v11018 = vadd.f32 %v10902, 1.0
  %v11019 = vadd.f32 %v10904, 1.0
  %v11020 = vadd.f32 %v10906, 1.0
  %v11021 = vadd.f32 %v10908, 1.0
  %v11022 = vadd.f32 %v10910, 1.0
  %v11023 = vadd.f32 %v10912, 1.0
  %v11024 = vadd.f32 %v10914, 1.0
  %v11025 = vadd.f32 %v10916, 1.0
  %v11026 = vadd.f32 %v10918, 1.0
  %v11027 = vadd.f32 %v10920, 1.0
  %v11028 = vadd.f32 %v10922, 1.0
  %v11029 = vadd.f32 %v10924, 1.0
  %v11030 = vadd.f32 %v10926, 1.0
  %v11031 = vadd.f32 %v10928, 1.0
  %v11032 = vadd.f32 %v10930, 1.0
  %v11033 = vadd.f32 %v10932, 1.0
  %v11034 = vadd.f32 %v10934, 1.0
  %v11035 = vadd.f32 %v10936, 1.0
  %v11036 = vadd.f32 %v10938, 1.0
  %v11037 = vadd.f32 %v10940, 1.0
  %v11038 = vadd.f32 %v10942, 1.0
  %v11039 = vadd.f32 %v10944, 1.0
  %v11040 = vadd.f32 %v10946, 1.0
  %v11041 = vadd.f32 %v10948, 1.0
  %v11042 = vadd.f32 %v10950, 1.0
  %v11043 = vadd.f32 %v10952, 1.0
  %v11044 = vadd.f32 %v10954, 1.0
  %v11045 = vadd.f32 %v10956, 1.0
  %v11046 = vadd.f32 %v10958, 1.0
  %v11047 = vadd.f32 %v10960, 1.0
  %v11048 = vadd.f32 %v10962, 1.0
  %v11049 = vadd.f32 %v10964, 1.0
  %v11050 = vadd.f32 %v10966, 1.0
  %v11051 = vadd.f32 %v10968, 1.0
  %v11052 = vadd.f32 %v10970, 1.0
  %v11053 = vadd.f32 %v10972, 1.0
  %v11054 = vadd.f32 %v10974, 1.0
  %v11055 = vadd.f32 %v10976, 1.0
  %v11056 = vadd.f32 %v10978, 1.0
  %v11057 = vadd.f32 %v10980, 1.0
  %v11058 = vadd.f32 %v10982, 1.0
  %v11059 = vadd.f32 %v10984, 1.0
  %v11060 = vadd.f32 %v10986, 1.0
  %v11061 = vadd.f32 %v10988, 1.0
  %v11062 = vadd.f32 %v10990, 1.0
  %v11063 = vadd.f32 %v10992, 1.0
  %v11064 = vadd.f32 %v10994, 1.0
  %v11065 = vadd.f32 %v10996, 1.0
  %v11066 = vadd.f32 %v10998, 1.0
  %v11067 = vadd.f32 %v11000, 1.0
  %v11068 = vadd.f32 %v11002, 1.0
  %v11069 = vadd.f32 %v11004, 1.0
  %v11070 = vadd.f32 %v11006, 1.0
  %v11071 = vrcp.pop %v11007
  %v11072 = vmul.f32 1.0, %v11071
  %v11073 = vrcp.pop %v11008
  %v11074 = vmul.f32 1.0, %v11073
  %v11075 = vrcp.pop %v11009
  %v11076 = vmul.f32 1.0, %v11075
  %v11077 = vrcp.pop %v11010
  %v11078 = vmul.f32 1.0, %v11077
  %v11079 = vrcp.pop %v11011
  %v11080 = vmul.f32 1.0, %v11079
  %v11081 = vrcp.pop %v11012
  %v11082 = vmul.f32 1.0, %v11081
  %v11083 = vrcp.pop %v11013
  %v11084 = vmul.f32 1.0, %v11083
  %v11085 = vrcp.pop %v11014
  %v11086 = vmul.f32 1.0, %v11085
  %v11087 = vrcp.pop %v11015
  %v11088 = vmul.f32 1.0, %v11087
  %v11089 = vrcp.pop %v11016
  %v11090 = vmul.f32 1.0, %v11089
  %v11091 = vrcp.pop %v11017
  %v11092 = vmul.f32 1.0, %v11091
  %v11093 = vrcp.pop %v11018
  %v11094 = vmul.f32 1.0, %v11093
  %v11095 = vrcp.pop %v11019
  %v11096 = vmul.f32 1.0, %v11095
  %v11097 = vrcp.pop %v11020
  %v11098 = vmul.f32 1.0, %v11097
  %v11099 = vrcp.pop %v11021
  %v11100 = vmul.f32 1.0, %v11099
  %v11101 = vrcp.pop %v11022
  %v11102 = vmul.f32 1.0, %v11101
  %v11103 = vrcp.pop %v11023
  %v11104 = vmul.f32 1.0, %v11103
  %v11105 = vrcp.pop %v11024
  %v11106 = vmul.f32 1.0, %v11105
  %v11107 = vrcp.pop %v11025
  %v11108 = vmul.f32 1.0, %v11107
  %v11109 = vrcp.pop %v11026
  %v11110 = vmul.f32 1.0, %v11109
  %v11111 = vrcp.pop %v11027
  %v11112 = vmul.f32 1.0, %v11111
  %v11113 = vrcp.pop %v11028
  %v11114 = vmul.f32 1.0, %v11113
  %v11115 = vrcp.pop %v11029
  %v11116 = vmul.f32 1.0, %v11115
  %v11117 = vrcp.pop %v11030
  %v11118 = vmul.f32 1.0, %v11117
  %v11119 = vrcp.pop %v11031
  %v11120 = vmul.f32 1.0, %v11119
  %v11121 = vrcp.pop %v11032
  %v11122 = vmul.f32 1.0, %v11121
  %v11123 = vrcp.pop %v11033
  %v11124 = vmul.f32 1.0, %v11123
  %v11125 = vrcp.pop %v11034
  %v11126 = vmul.f32 1.0, %v11125
  %v11127 = vrcp.pop %v11035
  %v11128 = vmul.f32 1.0, %v11127
  %v11129 = vrcp.pop %v11036
  %v11130 = vmul.f32 1.0, %v11129
  %v11131 = vrcp.pop %v11037
  %v11132 = vmul.f32 1.0, %v11131
  %v11133 = vrcp.pop %v11038
  %v11134 = vmul.f32 1.0, %v11133
  %v11135 = vrcp.pop %v11039
  %v11136 = vmul.f32 1.0, %v11135
  %v11137 = vrcp.pop %v11040
  %v11138 = vmul.f32 1.0, %v11137
  %v11139 = vrcp.pop %v11041
  %v11140 = vmul.f32 1.0, %v11139
  %v11141 = vrcp.pop %v11042
  %v11142 = vmul.f32 1.0, %v11141
  %v11143 = vrcp.pop %v11043
  %v11144 = vmul.f32 1.0, %v11143
  %v11145 = vrcp.pop %v11044
  %v11146 = vmul.f32 1.0, %v11145
  %v11147 = vrcp.pop %v11045
  %v11148 = vmul.f32 1.0, %v11147
  %v11149 = vrcp.pop %v11046
  %v11150 = vmul.f32 1.0, %v11149
  %v11151 = vrcp.pop %v11047
  %v11152 = vmul.f32 1.0, %v11151
  %v11153 = vrcp.pop %v11048
  %v11154 = vmul.f32 1.0, %v11153
  %v11155 = vrcp.pop %v11049
  %v11156 = vmul.f32 1.0, %v11155
  %v11157 = vrcp.pop %v11050
  %v11158 = vmul.f32 1.0, %v11157
  %v11159 = vrcp.pop %v11051
  %v11160 = vmul.f32 1.0, %v11159
  %v11161 = vrcp.pop %v11052
  %v11162 = vmul.f32 1.0, %v11161
  %v11163 = vrcp.pop %v11053
  %v11164 = vmul.f32 1.0, %v11163
  %v11165 = vrcp.pop %v11054
  %v11166 = vmul.f32 1.0, %v11165
  %v11167 = vrcp.pop %v11055
  %v11168 = vmul.f32 1.0, %v11167
  %v11169 = vrcp.pop %v11056
  %v11170 = vmul.f32 1.0, %v11169
  %v11171 = vrcp.pop %v11057
  %v11172 = vmul.f32 1.0, %v11171
  %v11173 = vrcp.pop %v11058
  %v11174 = vmul.f32 1.0, %v11173
  %v11175 = vrcp.pop %v11059
  %v11176 = vmul.f32 1.0, %v11175
  %v11177 = vrcp.pop %v11060
  %v11178 = vmul.f32 1.0, %v11177
  %v11179 = vrcp.pop %v11061
  %v11180 = vmul.f32 1.0, %v11179
  %v11181 = vrcp.pop %v11062
  %v11182 = vmul.f32 1.0, %v11181
  %v11183 = vrcp.pop %v11063
  %v11184 = vmul.f32 1.0, %v11183
  %v11185 = vrcp.pop %v11064
  %v11186 = vmul.f32 1.0, %v11185
  %v11187 = vrcp.pop %v11065
  %v11188 = vmul.f32 1.0, %v11187
  %v11189 = vrcp.pop %v11066
  %v11190 = vmul.f32 1.0, %v11189
  %v11191 = vrcp.pop %v11067
  %v11192 = vmul.f32 1.0, %v11191
  %v11193 = vrcp.pop %v11068
  %v11194 = vmul.f32 1.0, %v11193
  %v11195 = vrcp.pop %v11069
  %v11196 = vmul.f32 1.0, %v11195
  %v11197 = vrcp.pop %v11070
  %v11198 = vmul.f32 1.0, %v11197
  %s11199 = scalar_lea.vmem %s0, 24
  %v11200 = vld [vmem:[%s11199 + $0x1] sm:$0xff]
  %v11201 = vld [vmem:[%s11199 + $0x9] sm:$0xff]
  %v11202 = vld [vmem:[%s11199 + $0x19] sm:$0xff]
  %v11203 = vld [vmem:[%s11199 + $0x21] sm:$0xff]
  %v11204 = vld [vmem:[%s11199 + $0x31] sm:$0xff]
  %v11205 = vld [vmem:[%s11199 + $0x39] sm:$0xff]
  %v11206 = vld [vmem:[%s11199 + $0x49] sm:$0xff]
  %v11207 = vld [vmem:[%s11199 + $0x51] sm:$0xff]
  %v11208 = vld [vmem:[%s11199 + $0x61] sm:$0xff]
  %v11209 = vld [vmem:[%s11199 + $0x69] sm:$0xff]
  %v11210 = vld [vmem:[%s11199 + $0x79] sm:$0xff]
  %v11211 = vld [vmem:[%s11199 + $0x81] sm:$0xff]
  %v11212 = vld [vmem:[%s11199 + $0x91] sm:$0xff]
  %v11213 = vld [vmem:[%s11199 + $0x99] sm:$0xff]
  %v11214 = vld [vmem:[%s11199 + $0xa9] sm:$0xff]
  %v11215 = vld [vmem:[%s11199 + $0xb1] sm:$0xff]
  %v11216 = vld [vmem:[%s11199 + $0xc1] sm:$0xff]
  %v11217 = vld [vmem:[%s11199 + $0xc9] sm:$0xff]
  %v11218 = vld [vmem:[%s11199 + $0xd9] sm:$0xff]
  %v11219 = vld [vmem:[%s11199 + $0xe1] sm:$0xff]
  %v11220 = vld [vmem:[%s11199 + $0xf1] sm:$0xff]
  %v11221 = vld [vmem:[%s11199 + $0xf9] sm:$0xff]
  %v11222 = vld [vmem:[%s11199 + $0x109] sm:$0xff]
  %v11223 = vld [vmem:[%s11199 + $0x111] sm:$0xff]
  %v11224 = vld [vmem:[%s11199 + $0x121] sm:$0xff]
  %v11225 = vld [vmem:[%s11199 + $0x129] sm:$0xff]
  %v11226 = vld [vmem:[%s11199 + $0x139] sm:$0xff]
  %v11227 = vld [vmem:[%s11199 + $0x141] sm:$0xff]
  %v11228 = vld [vmem:[%s11199 + $0x151] sm:$0xff]
  %v11229 = vld [vmem:[%s11199 + $0x159] sm:$0xff]
  %v11230 = vld [vmem:[%s11199 + $0x169] sm:$0xff]
  %v11231 = vld [vmem:[%s11199 + $0x171] sm:$0xff]
  %v11232 = vld [vmem:[%s11199 + $0x1b1] sm:$0xff]
  %v11233 = vld [vmem:[%s11199 + $0x1b9] sm:$0xff]
  %v11234 = vld [vmem:[%s11199 + $0x1c9] sm:$0xff]
  %v11235 = vld [vmem:[%s11199 + $0x1d1] sm:$0xff]
  %v11236 = vld [vmem:[%s11199 + $0x1e1] sm:$0xff]
  %v11237 = vld [vmem:[%s11199 + $0x1e9] sm:$0xff]
  %v11238 = vld [vmem:[%s11199 + $0x1f9] sm:$0xff]
  %v11239 = vld [vmem:[%s11199 + $0x201] sm:$0xff]
  %v11240 = vld [vmem:[%s11199 + $0x211] sm:$0xff]
  %v11241 = vld [vmem:[%s11199 + $0x219] sm:$0xff]
  %v11242 = vld [vmem:[%s11199 + $0x229] sm:$0xff]
  %v11243 = vld [vmem:[%s11199 + $0x231] sm:$0xff]
  %v11244 = vld [vmem:[%s11199 + $0x241] sm:$0xff]
  %v11245 = vld [vmem:[%s11199 + $0x249] sm:$0xff]
  %v11246 = vld [vmem:[%s11199 + $0x259] sm:$0xff]
  %v11247 = vld [vmem:[%s11199 + $0x261] sm:$0xff]
  %v11248 = vld [vmem:[%s11199 + $0x271] sm:$0xff]
  %v11249 = vld [vmem:[%s11199 + $0x279] sm:$0xff]
  %v11250 = vld [vmem:[%s11199 + $0x289] sm:$0xff]
  %v11251 = vld [vmem:[%s11199 + $0x291] sm:$0xff]
  %v11252 = vld [vmem:[%s11199 + $0x2a1] sm:$0xff]
  %v11253 = vld [vmem:[%s11199 + $0x2a9] sm:$0xff]
  %v11254 = vld [vmem:[%s11199 + $0x2b9] sm:$0xff]
  %v11255 = vld [vmem:[%s11199 + $0x2c1] sm:$0xff]
  %v11256 = vld [vmem:[%s11199 + $0x2d1] sm:$0xff]
  %v11257 = vld [vmem:[%s11199 + $0x2d9] sm:$0xff]
  %v11258 = vld [vmem:[%s11199 + $0x2e9] sm:$0xff]
  %v11259 = vld [vmem:[%s11199 + $0x2f1] sm:$0xff]
  %v11260 = vld [vmem:[%s11199 + $0x301] sm:$0xff]
  %v11261 = vld [vmem:[%s11199 + $0x309] sm:$0xff]
  %v11262 = vld [vmem:[%s11199 + $0x319] sm:$0xff]
  %v11263 = vld [vmem:[%s11199 + $0x321] sm:$0xff]
  %v11264 = vadd.f32 %v11072, %v11200
  %v11265 = vadd.f32 %v11074, %v11201
  %v11266 = vadd.f32 %v11076, %v11202
  %v11267 = vadd.f32 %v11078, %v11203
  %v11268 = vadd.f32 %v11080, %v11204
  %v11269 = vadd.f32 %v11082, %v11205
  %v11270 = vadd.f32 %v11084, %v11206
  %v11271 = vadd.f32 %v11086, %v11207
  %v11272 = vadd.f32 %v11088, %v11208
  %v11273 = vadd.f32 %v11090, %v11209
  %v11274 = vadd.f32 %v11092, %v11210
  %v11275 = vadd.f32 %v11094, %v11211
  %v11276 = vadd.f32 %v11096, %v11212
  %v11277 = vadd.f32 %v11098, %v11213
  %v11278 = vadd.f32 %v11100, %v11214
  %v11279 = vadd.f32 %v11102, %v11215
  %v11280 = vadd.f32 %v11104, %v11216
  %v11281 = vadd.f32 %v11106, %v11217
  %v11282 = vadd.f32 %v11108, %v11218
  %v11283 = vadd.f32 %v11110, %v11219
  %v11284 = vadd.f32 %v11112, %v11220
  %v11285 = vadd.f32 %v11114, %v11221
  %v11286 = vadd.f32 %v11116, %v11222
  %v11287 = vadd.f32 %v11118, %v11223
  %v11288 = vadd.f32 %v11120, %v11224
  %v11289 = vadd.f32 %v11122, %v11225
  %v11290 = vadd.f32 %v11124, %v11226
  %v11291 = vadd.f32 %v11126, %v11227
  %v11292 = vadd.f32 %v11128, %v11228
  %v11293 = vadd.f32 %v11130, %v11229
  %v11294 = vadd.f32 %v11132, %v11230
  %v11295 = vadd.f32 %v11134, %v11231
  %v11296 = vadd.f32 %v11136, %v11232
  %v11297 = vadd.f32 %v11138, %v11233
  %v11298 = vadd.f32 %v11140, %v11234
  %v11299 = vadd.f32 %v11142, %v11235
  %v11300 = vadd.f32 %v11144, %v11236
  %v11301 = vadd.f32 %v11146, %v11237
  %v11302 = vadd.f32 %v11148, %v11238
  %v11303 = vadd.f32 %v11150, %v11239
  %v11304 = vadd.f32 %v11152, %v11240
  %v11305 = vadd.f32 %v11154, %v11241
  %v11306 = vadd.f32 %v11156, %v11242
  %v11307 = vadd.f32 %v11158, %v11243
  %v11308 = vadd.f32 %v11160, %v11244
  %v11309 = vadd.f32 %v11162, %v11245
  %v11310 = vadd.f32 %v11164, %v11246
  %v11311 = vadd.f32 %v11166, %v11247
  %v11312 = vadd.f32 %v11168, %v11248
  %v11313 = vadd.f32 %v11170, %v11249
  %v11314 = vadd.f32 %v11172, %v11250
  %v11315 = vadd.f32 %v11174, %v11251
  %v11316 = vadd.f32 %v11176, %v11252
  %v11317 = vadd.f32 %v11178, %v11253
  %v11318 = vadd.f32 %v11180, %v11254
  %v11319 = vadd.f32 %v11182, %v11255
  %v11320 = vadd.f32 %v11184, %v11256
  %v11321 = vadd.f32 %v11186, %v11257
  %v11322 = vadd.f32 %v11188, %v11258
  %v11323 = vadd.f32 %v11190, %v11259
  %v11324 = vadd.f32 %v11192, %v11260
  %v11325 = vadd.f32 %v11194, %v11261
  %v11326 = vadd.f32 %v11196, %v11262
  %v11327 = vadd.f32 %v11198, %v11263
  %v11328 = vmax.f32 %v11264, 0.0001
  %v11329 = vmax.f32 %v11265, 0.0001
  %v11330 = vmax.f32 %v11266, 0.0001
  %v11331 = vmax.f32 %v11267, 0.0001
  %v11332 = vmax.f32 %v11268, 0.0001
  %v11333 = vmax.f32 %v11269, 0.0001
  %v11334 = vmax.f32 %v11270, 0.0001
  %v11335 = vmax.f32 %v11271, 0.0001
  %v11336 = vmax.f32 %v11272, 0.0001
  %v11337 = vmax.f32 %v11273, 0.0001
  %v11338 = vmax.f32 %v11274, 0.0001
  %v11339 = vmax.f32 %v11275, 0.0001
  %v11340 = vmax.f32 %v11276, 0.0001
  %v11341 = vmax.f32 %v11277, 0.0001
  %v11342 = vmax.f32 %v11278, 0.0001
  %v11343 = vmax.f32 %v11279, 0.0001
  %v11344 = vmax.f32 %v11280, 0.0001
  %v11345 = vmax.f32 %v11281, 0.0001
  %v11346 = vmax.f32 %v11282, 0.0001
  %v11347 = vmax.f32 %v11283, 0.0001
  %v11348 = vmax.f32 %v11284, 0.0001
  %v11349 = vmax.f32 %v11285, 0.0001
  %v11350 = vmax.f32 %v11286, 0.0001
  %v11351 = vmax.f32 %v11287, 0.0001
  %v11352 = vmax.f32 %v11288, 0.0001
  %v11353 = vmax.f32 %v11289, 0.0001
  %v11354 = vmax.f32 %v11290, 0.0001
  %v11355 = vmax.f32 %v11291, 0.0001
  %v11356 = vmax.f32 %v11292, 0.0001
  %v11357 = vmax.f32 %v11293, 0.0001
  %v11358 = vmax.f32 %v11294, 0.0001
  %v11359 = vmax.f32 %v11295, 0.0001
  %v11360 = vmax.f32 %v11296, 0.0001
  %v11361 = vmax.f32 %v11297, 0.0001
  %v11362 = vmax.f32 %v11298, 0.0001
  %v11363 = vmax.f32 %v11299, 0.0001
  %v11364 = vmax.f32 %v11300, 0.0001
  %v11365 = vmax.f32 %v11301, 0.0001
  %v11366 = vmax.f32 %v11302, 0.0001
  %v11367 = vmax.f32 %v11303, 0.0001
  %v11368 = vmax.f32 %v11304, 0.0001
  %v11369 = vmax.f32 %v11305, 0.0001
  %v11370 = vmax.f32 %v11306, 0.0001
  %v11371 = vmax.f32 %v11307, 0.0001
  %v11372 = vmax.f32 %v11308, 0.0001
  %v11373 = vmax.f32 %v11309, 0.0001
  %v11374 = vmax.f32 %v11310, 0.0001
  %v11375 = vmax.f32 %v11311, 0.0001
  %v11376 = vmax.f32 %v11312, 0.0001
  %v11377 = vmax.f32 %v11313, 0.0001
  %v11378 = vmax.f32 %v11314, 0.0001
  %v11379 = vmax.f32 %v11315, 0.0001
  %v11380 = vmax.f32 %v11316, 0.0001
  %v11381 = vmax.f32 %v11317, 0.0001
  %v11382 = vmax.f32 %v11318, 0.0001
  %v11383 = vmax.f32 %v11319, 0.0001
  %v11384 = vmax.f32 %v11320, 0.0001
  %v11385 = vmax.f32 %v11321, 0.0001
  %v11386 = vmax.f32 %v11322, 0.0001
  %v11387 = vmax.f32 %v11323, 0.0001
  %v11388 = vmax.f32 %v11324, 0.0001
  %v11389 = vmax.f32 %v11325, 0.0001
  %v11390 = vmax.f32 %v11326, 0.0001
  %v11391 = vmax.f32 %v11327, 0.0001
  %v11392 = vmin.f32 %v11328, 1.0
  %v11393 = vmin.f32 %v11329, 1.0
  %v11394 = vmin.f32 %v11330, 1.0
  %v11395 = vmin.f32 %v11331, 1.0
  %v11396 = vmin.f32 %v11332, 1.0
  %v11397 = vmin.f32 %v11333, 1.0
  %v11398 = vmin.f32 %v11334, 1.0
  %v11399 = vmin.f32 %v11335, 1.0
  %v11400 = vmin.f32 %v11336, 1.0
  %v11401 = vmin.f32 %v11337, 1.0
  %v11402 = vmin.f32 %v11338, 1.0
  %v11403 = vmin.f32 %v11339, 1.0
  %v11404 = vmin.f32 %v11340, 1.0
  %v11405 = vmin.f32 %v11341, 1.0
  %v11406 = vmin.f32 %v11342, 1.0
  %v11407 = vmin.f32 %v11343, 1.0
  %v11408 = vmin.f32 %v11344, 1.0
  %v11409 = vmin.f32 %v11345, 1.0
  %v11410 = vmin.f32 %v11346, 1.0
  %v11411 = vmin.f32 %v11347, 1.0
  %v11412 = vmin.f32 %v11348, 1.0
  %v11413 = vmin.f32 %v11349, 1.0
  %v11414 = vmin.f32 %v11350, 1.0
  %v11415 = vmin.f32 %v11351, 1.0
  %v11416 = vmin.f32 %v11352, 1.0
  %v11417 = vmin.f32 %v11353, 1.0
  %v11418 = vmin.f32 %v11354, 1.0
  %v11419 = vmin.f32 %v11355, 1.0
  %v11420 = vmin.f32 %v11356, 1.0
  %v11421 = vmin.f32 %v11357, 1.0
  %v11422 = vmin.f32 %v11358, 1.0
  %v11423 = vmin.f32 %v11359, 1.0
  %v11424 = vmin.f32 %v11360, 1.0
  %v11425 = vmin.f32 %v11361, 1.0
  %v11426 = vmin.f32 %v11362, 1.0
  %v11427 = vmin.f32 %v11363, 1.0
  %v11428 = vmin.f32 %v11364, 1.0
  %v11429 = vmin.f32 %v11365, 1.0
  %v11430 = vmin.f32 %v11366, 1.0
  %v11431 = vmin.f32 %v11367, 1.0
  %v11432 = vmin.f32 %v11368, 1.0
  %v11433 = vmin.f32 %v11369, 1.0
  %v11434 = vmin.f32 %v11370, 1.0
  %v11435 = vmin.f32 %v11371, 1.0
  %v11436 = vmin.f32 %v11372, 1.0
  %v11437 = vmin.f32 %v11373, 1.0
  %v11438 = vmin.f32 %v11374, 1.0
  %v11439 = vmin.f32 %v11375, 1.0
  %v11440 = vmin.f32 %v11376, 1.0
  %v11441 = vmin.f32 %v11377, 1.0
  %v11442 = vmin.f32 %v11378, 1.0
  %v11443 = vmin.f32 %v11379, 1.0
  %v11444 = vmin.f32 %v11380, 1.0
  %v11445 = vmin.f32 %v11381, 1.0
  %v11446 = vmin.f32 %v11382, 1.0
  %v11447 = vmin.f32 %v11383, 1.0
  %v11448 = vmin.f32 %v11384, 1.0
  %v11449 = vmin.f32 %v11385, 1.0
  %v11450 = vmin.f32 %v11386, 1.0
  %v11451 = vmin.f32 %v11387, 1.0
  %v11452 = vmin.f32 %v11388, 1.0
  %v11453 = vmin.f32 %v11389, 1.0
  %v11454 = vmin.f32 %v11390, 1.0
  %v11455 = vmin.f32 %v11391, 1.0
  %11456 = vst.msk [vmem:[%s9] sm:$0xff] %vm2256, %v11392
  %11457 = vst.msk [vmem:[%s9 + $0x8] sm:$0xff] %vm2256, %v11393
  %11458 = vst.msk [vmem:[%s9 + $0x10] sm:$0xff] %vm2256, %v11394
  %11459 = vst.msk [vmem:[%s9 + $0x18] sm:$0xff] %vm2256, %v11395
  %11460 = vst.msk [vmem:[%s9 + $0x20] sm:$0xff] %vm2256, %v11396
  %11461 = vst.msk [vmem:[%s9 + $0x28] sm:$0xff] %vm2256, %v11397
  %11462 = vst.msk [vmem:[%s9 + $0x30] sm:$0xff] %vm2256, %v11398
  %11463 = vst.msk [vmem:[%s9 + $0x38] sm:$0xff] %vm2256, %v11399
  %11464 = vst.msk [vmem:[%s9 + $0x40] sm:$0xff] %vm2256, %v11400
  %11465 = vst.msk [vmem:[%s9 + $0x48] sm:$0xff] %vm2256, %v11401
  %11466 = vst.msk [vmem:[%s9 + $0x50] sm:$0xff] %vm2256, %v11402
  %11467 = vst.msk [vmem:[%s9 + $0x58] sm:$0xff] %vm2256, %v11403
  %11468 = vst.msk [vmem:[%s9 + $0x60] sm:$0xff] %vm2256, %v11404
  %11469 = vst.msk [vmem:[%s9 + $0x68] sm:$0xff] %vm2256, %v11405
  %11470 = vst.msk [vmem:[%s9 + $0x70] sm:$0xff] %vm2256, %v11406
  %11471 = vst.msk [vmem:[%s9 + $0x78] sm:$0xff] %vm2256, %v11407
  %11472 = vst.msk [vmem:[%s9 + $0x80] sm:$0xff] %vm2256, %v11408
  %11473 = vst.msk [vmem:[%s9 + $0x88] sm:$0xff] %vm2256, %v11409
  %11474 = vst.msk [vmem:[%s9 + $0x90] sm:$0xff] %vm2256, %v11410
  %11475 = vst.msk [vmem:[%s9 + $0x98] sm:$0xff] %vm2256, %v11411
  %11476 = vst.msk [vmem:[%s9 + $0xa0] sm:$0xff] %vm2256, %v11412
  %11477 = vst.msk [vmem:[%s9 + $0xa8] sm:$0xff] %vm2256, %v11413
  %11478 = vst.msk [vmem:[%s9 + $0xb0] sm:$0xff] %vm2256, %v11414
  %11479 = vst.msk [vmem:[%s9 + $0xb8] sm:$0xff] %vm2256, %v11415
  %11480 = vst.msk [vmem:[%s9 + $0xc0] sm:$0xff] %vm2256, %v11416
  %11481 = vst.msk [vmem:[%s9 + $0xc8] sm:$0xff] %vm2256, %v11417
  %11482 = vst.msk [vmem:[%s9 + $0xd0] sm:$0xff] %vm2256, %v11418
  %11483 = vst.msk [vmem:[%s9 + $0xd8] sm:$0xff] %vm2256, %v11419
  %11484 = vst.msk [vmem:[%s9 + $0xe0] sm:$0xff] %vm2256, %v11420
  %11485 = vst.msk [vmem:[%s9 + $0xe8] sm:$0xff] %vm2256, %v11421
  %11486 = vst.msk [vmem:[%s9 + $0xf0] sm:$0xff] %vm2256, %v11422
  %11487 = vst.msk [vmem:[%s9 + $0xf8] sm:$0xff] %vm2256, %v11423
  %11488 = vst.msk [vmem:[%s9 + $0x100] sm:$0xff] %vm2256, %v11424
  %11489 = vst.msk [vmem:[%s9 + $0x108] sm:$0xff] %vm2256, %v11425
  %11490 = vst.msk [vmem:[%s9 + $0x110] sm:$0xff] %vm2256, %v11426
  %11491 = vst.msk [vmem:[%s9 + $0x118] sm:$0xff] %vm2256, %v11427
  %11492 = vst.msk [vmem:[%s9 + $0x120] sm:$0xff] %vm2256, %v11428
  %11493 = vst.msk [vmem:[%s9 + $0x128] sm:$0xff] %vm2256, %v11429
  %11494 = vst.msk [vmem:[%s9 + $0x130] sm:$0xff] %vm2256, %v11430
  %11495 = vst.msk [vmem:[%s9 + $0x138] sm:$0xff] %vm2256, %v11431
  %11496 = vst.msk [vmem:[%s9 + $0x140] sm:$0xff] %vm2256, %v11432
  %11497 = vst.msk [vmem:[%s9 + $0x148] sm:$0xff] %vm2256, %v11433
  %11498 = vst.msk [vmem:[%s9 + $0x150] sm:$0xff] %vm2256, %v11434
  %11499 = vst.msk [vmem:[%s9 + $0x158] sm:$0xff] %vm2256, %v11435
  %11500 = vst.msk [vmem:[%s9 + $0x160] sm:$0xff] %vm2256, %v11436
  %11501 = vst.msk [vmem:[%s9 + $0x168] sm:$0xff] %vm2256, %v11437
  %11502 = vst.msk [vmem:[%s9 + $0x170] sm:$0xff] %vm2256, %v11438
  %11503 = vst.msk [vmem:[%s9 + $0x178] sm:$0xff] %vm2256, %v11439
  %11504 = vst.msk [vmem:[%s9 + $0x180] sm:$0xff] %vm2256, %v11440
  %11505 = vst.msk [vmem:[%s9 + $0x188] sm:$0xff] %vm2256, %v11441
  %11506 = vst.msk [vmem:[%s9 + $0x190] sm:$0xff] %vm2256, %v11442
  %11507 = vst.msk [vmem:[%s9 + $0x198] sm:$0xff] %vm2256, %v11443
  %11508 = vst.msk [vmem:[%s9 + $0x1a0] sm:$0xff] %vm2256, %v11444
  %11509 = vst.msk [vmem:[%s9 + $0x1a8] sm:$0xff] %vm2256, %v11445
  %11510 = vst.msk [vmem:[%s9 + $0x1b0] sm:$0xff] %vm2256, %v11446
  %11511 = vst.msk [vmem:[%s9 + $0x1b8] sm:$0xff] %vm2256, %v11447
  %11512 = vst.msk [vmem:[%s9 + $0x1c0] sm:$0xff] %vm2256, %v11448
  %11513 = vst.msk [vmem:[%s9 + $0x1c8] sm:$0xff] %vm2256, %v11449
  %11514 = vst.msk [vmem:[%s9 + $0x1d0] sm:$0xff] %vm2256, %v11450
  %11515 = vst.msk [vmem:[%s9 + $0x1d8] sm:$0xff] %vm2256, %v11451
  %11516 = vst.msk [vmem:[%s9 + $0x1e0] sm:$0xff] %vm2256, %v11452
  %11517 = vst.msk [vmem:[%s9 + $0x1e8] sm:$0xff] %vm2256, %v11453
  %11518 = vst.msk [vmem:[%s9 + $0x1f0] sm:$0xff] %vm2256, %v11454
  %11519 = vst.msk [vmem:[%s9 + $0x1f8] sm:$0xff] %vm2256, %v11455
  // Predicated region
  $region45: #{tpu_custom_call.1} parent=0 // pred_check
    _
  $region46: #{tpu_custom_call.1} parent=0 // pred_check_branch
    %11521 = sbr.rel (0) target = $region48
  $region47: #{tpu_custom_call.1} parent=0 // pred_region
    _
  $region48: #{tpu_custom_call.1} parent=0 // pred_fallthru
    _
  // Predicated region
  $region49: #{tpu_custom_call.1} parent=0 // pred_check
    _
  $region50: #{tpu_custom_call.1} parent=0 // pred_check_branch
    %11523 = sbr.rel (0) target = $region52
  $region51: #{tpu_custom_call.1} parent=0 // pred_region
    _
  $region52: #{tpu_custom_call.1} parent=0 // pred_fallthru
    _

</llo_original>
